<compile_context>
chip_gen: v5e
topology: v5e:2x2
jax: 0.10.0
libtpu: 0.0.40
codegen_flags: <defaults>
</compile_context>

<pallas_src>
import functools

import jax
import jax.numpy as jnp
from jax.experimental import pallas as pl
from jax.experimental.pallas import tpu as pltpu

IN_DIM = 28 * 28      # 784
HIDDEN = 1000
OUT_DIM = 10

HID_PAD = 1024        # 1000 -> 1024 (multiple of 128)
OUT_PAD = 128         # 10   -> 128  (lane-dense stores / full MXU columns)


# ---------------------------------------------------------------------------
# Kernels
# ---------------------------------------------------------------------------
def fused_gemm_stats_kernel(x_ref, w1_ref, b1_ref, w2_ref, b2_ref,
                            logits_ref, m_ref, l_ref, *, tb, valid_b, mask_rows):
    # x: (TB, 784) bf16 ; w1: (784, 1024) bf16 ; b1: (1, 1024) f32
    # w2: (1024, 128) bf16 ; b2: (1, 128) f32
    # logits out: (TB, 128) f32 ; m/l out: (1, 1, 128) f32 per-tile partials
    x = x_ref[...]
    h = jnp.dot(x, w1_ref[...], preferred_element_type=jnp.float32) + b1_ref[...]
    h = jnp.maximum(h, 0.0)
    logits = jnp.dot(h.astype(jnp.bfloat16), w2_ref[...],
                     preferred_element_type=jnp.float32) + b2_ref[...]
    logits_ref[...] = logits

    # per-tile dim-0 (batch) softmax partials; mask padded rows only if any exist
    if mask_rows:
        row = (pl.program_id(0) * tb
               + jax.lax.broadcasted_iota(jnp.int32, logits.shape, 0))
        logits = jnp.where(row < valid_b, logits, -jnp.inf)
    m = jnp.max(logits, axis=0, keepdims=True)                      # (1, 128)
    m_ref[...] = m[None]                                            # (1, 1, 128)
    l_ref[...] = jnp.sum(jnp.exp(logits - m), axis=0, keepdims=True)[None]


def softmax_norm_kernel(logits_ref, m_ref, inv_l_ref, o_ref):
    # pure exp + mul: 1/l is precomputed (exactly) outside the kernel
    o_ref[...] = (jnp.exp(logits_ref[...] - m_ref[...])
                  * inv_l_ref[...]).astype(o_ref.dtype)


# ---------------------------------------------------------------------------
# Tile-size selection
# ---------------------------------------------------------------------------
def _pick_tb(B):
    # Largest batch tile in {512, 256, 128} giving an even tile count >= 2 so
    # the "parallel" grid axis load-balances across v7x's two TensorCores;
    # larger tiles amortize per-step overhead on v5e/v6e.
    for tb in (512, 256, 128):
        nb = -(-B // tb)
        if nb >= 2 and nb % 2 == 0:
            return tb
    for tb in (128, 256, 512):   # e.g. B <= 128: single tile covering B
        if B <= tb:
            return tb
    return 512


def _pick_norm_tile(Bp):
    # Normalization pass has no weight-residency constraint -> fat tiles.
    for t in (1024, 512, 256, 128):
        if t <= Bp and Bp % t == 0:
            return t
    return Bp


# ---------------------------------------------------------------------------
# Forward wrapper
# ---------------------------------------------------------------------------
def net1seq_forward(x, w1p, b1p, w2p, b2p):
    """x: (B, 784); (w1p, b1p, w2p, b2p): padded / bf16 params from prepare_params."""
    B = x.shape[0]
    tb = _pick_tb(B)
    nb = -(-B // tb)
    Bp = nb * tb

    xb = x.astype(jnp.bfloat16)
    if Bp != B:
        xb = jnp.pad(xb, ((0, Bp - B), (0, 0)))

    # ---- pass 1: (Linear + ReLU + Linear) + per-tile softmax stats ----------
    kernel = functools.partial(fused_gemm_stats_kernel,
                               tb=tb, valid_b=B, mask_rows=(Bp != B))
    logits, m_part, l_part = pl.pallas_call(
        kernel,
        out_shape=(jax.ShapeDtypeStruct((Bp, OUT_PAD), jnp.float32),
                   jax.ShapeDtypeStruct((nb, 1, OUT_PAD), jnp.float32),
                   jax.ShapeDtypeStruct((nb, 1, OUT_PAD), jnp.float32)),
        grid=(nb,),
        in_specs=[
            pl.BlockSpec((tb, IN_DIM), lambda i: (i, 0)),         # x tile
            pl.BlockSpec((IN_DIM, HID_PAD), lambda i: (0, 0)),    # w1 resident
            pl.BlockSpec((1, HID_PAD), lambda i: (0, 0)),         # b1 resident
            pl.BlockSpec((HID_PAD, OUT_PAD), lambda i: (0, 0)),   # w2 resident
            pl.BlockSpec((1, OUT_PAD), lambda i: (0, 0)),         # b2 resident
        ],
        out_specs=(pl.BlockSpec((tb, OUT_PAD), lambda i: (i, 0)),
                   pl.BlockSpec((1, 1, OUT_PAD), lambda i: (i, 0, 0)),
                   pl.BlockSpec((1, 1, OUT_PAD), lambda i: (i, 0, 0))),
        compiler_params=pltpu.CompilerParams(
            dimension_semantics=("parallel",),
            vmem_limit_bytes=32 << 20,
        ),
    )(xb, w1p, b1p, w2p, b2p)

    # ---- combine per-tile stats (nb x 128, negligible) in plain JAX ---------
    m = jnp.max(m_part, axis=0)                                     # (1, 128)
    l = jnp.sum(l_part * jnp.exp(m_part - m), axis=0)               # (1, 128)
    inv_l = 1.0 / l                                                 # exact reciprocal

    # ---- pass 2: normalize (fat tiles, pure exp * mul) ----------------------
    tn = _pick_norm_tile(Bp)
    probs = pl.pallas_call(
        softmax_norm_kernel,
        out_shape=jax.ShapeDtypeStruct((Bp, OUT_PAD), jnp.float32),
        grid=(Bp // tn,),
        in_specs=[
            pl.BlockSpec((tn, OUT_PAD), lambda i: (i, 0)),
            pl.BlockSpec((1, OUT_PAD), lambda i: (0, 0)),
            pl.BlockSpec((1, OUT_PAD), lambda i: (0, 0)),
        ],
        out_specs=pl.BlockSpec((tn, OUT_PAD), lambda i: (i, 0)),
        compiler_params=pltpu.CompilerParams(
            dimension_semantics=("parallel",),
        ),
    )(logits, m, inv_l)

    # drop padded batch rows and padded output columns
    return probs[:B, :OUT_DIM]


# ---------------------------------------------------------------------------
# Parameter helpers
# ---------------------------------------------------------------------------
def init_params(key):
    # Mimics nn.Linear's uniform(-1/sqrt(fan_in), 1/sqrt(fan_in)); weights stored
    # pre-transposed as (in, out).
    k1, k2, k3, k4 = jax.random.split(key, 4)
    lim1 = 1.0 / (IN_DIM ** 0.5)
    lim2 = 1.0 / (HIDDEN ** 0.5)
    w1 = jax.random.uniform(k1, (IN_DIM, HIDDEN), jnp.float32, -lim1, lim1)
    b1 = jax.random.uniform(k2, (1, HIDDEN), jnp.float32, -lim1, lim1)
    w2 = jax.random.uniform(k3, (HIDDEN, OUT_DIM), jnp.float32, -lim2, lim2)
    b2 = jax.random.uniform(k4, (1, OUT_DIM), jnp.float32, -lim2, lim2)
    return w1, b1, w2, b2


def prepare_params(w1, b1, w2, b2):
    """One-time prep: zero-pad hidden 1000->1024 and out 10->128, cast weights to bf16."""
    w1p = jnp.pad(w1, ((0, 0), (0, HID_PAD - HIDDEN))).astype(jnp.bfloat16)
    b1p = jnp.pad(b1, ((0, 0), (0, HID_PAD - HIDDEN)))
    w2p = jnp.pad(w2, ((0, HID_PAD - HIDDEN), (0, OUT_PAD - OUT_DIM))).astype(jnp.bfloat16)
    b2p = jnp.pad(b2, ((0, 0), (0, OUT_PAD - OUT_DIM)))
    return w1p, b1p, w2p, b2p


if __name__ == "__main__":
    key = jax.random.PRNGKey(0)
    kx, kp = jax.random.split(key)

    B = 200  # not a multiple of the tile -> exercises batch padding + row masking
    x = jax.random.normal(kx, (B, IN_DIM), jnp.float32)
    w1, b1, w2, b2 = init_params(kp)
    w1p, b1p, w2p, b2p = prepare_params(w1, b1, w2, b2)

    fwd = jax.jit(net1seq_forward)
    out = jax.block_until_ready(fwd(x, w1p, b1p, w2p, b2p))

    # Reference with the same bf16-matmul / f32-accumulate numerics.
    h = jnp.dot(x.astype(jnp.bfloat16), w1.astype(jnp.bfloat16),
                preferred_element_type=jnp.float32) + b1
    h = jnp.maximum(h, 0.0)
    logits = jnp.dot(h.astype(jnp.bfloat16), w2.astype(jnp.bfloat16),
                     preferred_element_type=jnp.float32) + b2
    ref = jax.nn.softmax(logits, axis=0)

    assert out.shape == (B, OUT_DIM)
    assert bool(jnp.all(jnp.isfinite(out)))
    assert jnp.allclose(out, ref, atol=5e-3, rtol=0.0), float(jnp.max(jnp.abs(out - ref)))
    # softmax over dim=0 -> every column sums to 1
    assert jnp.allclose(jnp.sum(out, axis=0), jnp.ones((OUT_DIM,)), atol=5e-3)

    print("KERNEL_OK")
</pallas_src>

<mosaic_0001>
module attributes {stable_mosaic.version = 11 : i64} {
  func.func @fused_gemm_stats_kernel(%arg0: i32, %arg1: memref<128x784xbf16, #tpu.memory_space<vmem>>, %arg2: memref<784x1024xbf16, #tpu.memory_space<vmem>>, %arg3: memref<1x1024xf32, #tpu.memory_space<vmem>>, %arg4: memref<1024x128xbf16, #tpu.memory_space<vmem>>, %arg5: memref<1x128xf32, #tpu.memory_space<vmem>>, %arg6: memref<128x128xf32, #tpu.memory_space<vmem>>, %arg7: memref<1x1x128xf32, #tpu.memory_space<vmem>>, %arg8: memref<1x1x128xf32, #tpu.memory_space<vmem>>) attributes {dimension_semantics = [#tpu.dimension_semantics<parallel>], iteration_bounds = array<i64: 2>, scalar_prefetch = 0 : i64, scratch_operands = 0 : i64, tpu.core_type = #tpu.core_type<tc>, window_params = [{transform_indices = @transform_0, window_bounds = array<i64: 128, 784>}, {pipeline_mode = #tpu.pipeline_mode<synchronous>, transform_indices = @transform_1, window_bounds = array<i64: 784, 1024>}, {pipeline_mode = #tpu.pipeline_mode<synchronous>, transform_indices = @transform_2, window_bounds = array<i64: 1, 1024>}, {pipeline_mode = #tpu.pipeline_mode<synchronous>, transform_indices = @transform_3, window_bounds = array<i64: 1024, 128>}, {pipeline_mode = #tpu.pipeline_mode<synchronous>, transform_indices = @transform_4, window_bounds = array<i64: 1, 128>}, {transform_indices = @transform_5, window_bounds = array<i64: 128, 128>}, {transform_indices = @transform_6, window_bounds = array<i64: 1, 1, 128>}, {transform_indices = @transform_7, window_bounds = array<i64: 1, 1, 128>}]} {
    %c0 = arith.constant 0 : index
    %c0_0 = arith.constant 0 : index
    %0 = vector.load %arg1[%c0, %c0_0] : memref<128x784xbf16, #tpu.memory_space<vmem>>, vector<128x784xbf16>
    %c0_1 = arith.constant 0 : index
    %c0_2 = arith.constant 0 : index
    %1 = vector.load %arg2[%c0_1, %c0_2] : memref<784x1024xbf16, #tpu.memory_space<vmem>>, vector<784x1024xbf16>
    %cst = arith.constant dense<0.000000e+00> : vector<128x1024xf32>
    %2 = tpu.matmul %0, %1, %cst {dimension_numbers = #tpu.dot_dimension_numbers<[1], [0], [0], [1], [0, 0, 1, 1], [], []>} : vector<128x784xbf16>, vector<784x1024xbf16>, vector<128x1024xf32> -> vector<128x1024xf32>
    %c0_3 = arith.constant 0 : index
    %c0_4 = arith.constant 0 : index
    %3 = vector.load %arg3[%c0_3, %c0_4] : memref<1x1024xf32, #tpu.memory_space<vmem>>, vector<1x1024xf32>
    %4 = vector.broadcast %3 : vector<1x1024xf32> to vector<128x1024xf32>
    %5 = arith.addf %2, %4 : vector<128x1024xf32>
    %cst_5 = arith.constant 0.000000e+00 : f32
    %6 = vector.broadcast %cst_5 : f32 to vector<128x1024xf32>
    %7 = arith.maximumf %5, %6 : vector<128x1024xf32>
    %8 = arith.truncf %7 : vector<128x1024xf32> to vector<128x1024xbf16>
    %c0_6 = arith.constant 0 : index
    %c0_7 = arith.constant 0 : index
    %9 = vector.load %arg4[%c0_6, %c0_7] : memref<1024x128xbf16, #tpu.memory_space<vmem>>, vector<1024x128xbf16>
    %cst_8 = arith.constant dense<0.000000e+00> : vector<128x128xf32>
    %10 = tpu.matmul %8, %9, %cst_8 {dimension_numbers = #tpu.dot_dimension_numbers<[1], [0], [0], [1], [0, 0, 1, 1], [], []>} : vector<128x1024xbf16>, vector<1024x128xbf16>, vector<128x128xf32> -> vector<128x128xf32>
    %c0_9 = arith.constant 0 : index
    %c0_10 = arith.constant 0 : index
    %11 = vector.load %arg5[%c0_9, %c0_10] : memref<1x128xf32, #tpu.memory_space<vmem>>, vector<1x128xf32>
    %12 = vector.broadcast %11 : vector<1x128xf32> to vector<128x128xf32>
    %13 = arith.addf %10, %12 : vector<128x128xf32>
    %c0_11 = arith.constant 0 : index
    %c0_12 = arith.constant 0 : index
    %14 = vector.load %arg6[%c0_11, %c0_12] : memref<128x128xf32, #tpu.memory_space<vmem>>, vector<128x128xf32>
    tpu.vector_store %arg6[%c0_11, %c0_12], %13 {strides = array<i32>} : memref<128x128xf32, #tpu.memory_space<vmem>>, vector<128x128xf32>,
    %c128_i32 = arith.constant 128 : i32
    %15 = arith.muli %arg0, %c128_i32 : i32
    %16 = tpu.iota {dimensions = array<i32: 0>} : vector<128x128xi32>
    %17 = vector.broadcast %15 : i32 to vector<128x128xi32>
    %18 = arith.addi %17, %16 : vector<128x128xi32>
    %c200_i32 = arith.constant 200 : i32
    %19 = vector.broadcast %c200_i32 : i32 to vector<128x128xi32>
    %20 = arith.cmpi slt, %18, %19 : vector<128x128xi32>
    %cst_13 = arith.constant 0xFF800000 : f32
    %21 = vector.broadcast %cst_13 : f32 to vector<128x128xf32>
    %22 = arith.select %20, %13, %21 : vector<128x128xi1>, vector<128x128xf32>
    %cst_14 = arith.constant dense<0xFF800000> : vector<128xf32>
    %23 = vector.multi_reduction <maximumf>, %22, %cst_14 [0] : vector<128x128xf32> to vector<128xf32>
    %24 = vector.shape_cast %23 : vector<128xf32> to vector<1x128xf32>
    %25 = vector.shape_cast %24 : vector<1x128xf32> to vector<1x1x128xf32>
    %c0_15 = arith.constant 0 : index
    %c0_16 = arith.constant 0 : index
    %c0_17 = arith.constant 0 : index
    %26 = vector.load %arg7[%c0_15, %c0_16, %c0_17] : memref<1x1x128xf32, #tpu.memory_space<vmem>>, vector<1x1x128xf32>
    tpu.vector_store %arg7[%c0_15, %c0_16, %c0_17], %25 {strides = array<i32>} : memref<1x1x128xf32, #tpu.memory_space<vmem>>, vector<1x1x128xf32>,
    %27 = vector.broadcast %24 : vector<1x128xf32> to vector<128x128xf32>
    %28 = arith.subf %22, %27 : vector<128x128xf32>
    %29 = math.exp %28 : vector<128x128xf32>
    %cst_18 = arith.constant dense<0.000000e+00> : vector<128xf32>
    %30 = vector.multi_reduction <add>, %29, %cst_18 [0] : vector<128x128xf32> to vector<128xf32>
    %31 = vector.shape_cast %30 : vector<128xf32> to vector<1x128xf32>
    %32 = vector.shape_cast %31 : vector<1x128xf32> to vector<1x1x128xf32>
    %c0_19 = arith.constant 0 : index
    %c0_20 = arith.constant 0 : index
    %c0_21 = arith.constant 0 : index
    %33 = vector.load %arg8[%c0_19, %c0_20, %c0_21] : memref<1x1x128xf32, #tpu.memory_space<vmem>>, vector<1x1x128xf32>
    tpu.vector_store %arg8[%c0_19, %c0_20, %c0_21], %32 {strides = array<i32>} : memref<1x1x128xf32, #tpu.memory_space<vmem>>, vector<1x1x128xf32>,
    return
  }
  func.func @transform_0(%arg0: i32) -> (i32, i32) {
    %c0_i32 = arith.constant 0 : i32
    %c0_i32_0 = arith.constant 0 : i32
    return %arg0, %c0_i32 : i32, i32
  }
  func.func @transform_1(%arg0: i32) -> (i32, i32) {
    %c0_i32 = arith.constant 0 : i32
    %c0_i32_0 = arith.constant 0 : i32
    %c0_i32_1 = arith.constant 0 : i32
    return %c0_i32, %c0_i32_0 : i32, i32
  }
  func.func @transform_2(%arg0: i32) -> (i32, i32) {
    %c0_i32 = arith.constant 0 : i32
    %c0_i32_0 = arith.constant 0 : i32
    %c0_i32_1 = arith.constant 0 : i32
    return %c0_i32, %c0_i32_0 : i32, i32
  }
  func.func @transform_3(%arg0: i32) -> (i32, i32) {
    %c0_i32 = arith.constant 0 : i32
    %c0_i32_0 = arith.constant 0 : i32
    %c0_i32_1 = arith.constant 0 : i32
    return %c0_i32, %c0_i32_0 : i32, i32
  }
  func.func @transform_4(%arg0: i32) -> (i32, i32) {
    %c0_i32 = arith.constant 0 : i32
    %c0_i32_0 = arith.constant 0 : i32
    %c0_i32_1 = arith.constant 0 : i32
    return %c0_i32, %c0_i32_0 : i32, i32
  }
  func.func @transform_5(%arg0: i32) -> (i32, i32) {
    %c0_i32 = arith.constant 0 : i32
    %c0_i32_0 = arith.constant 0 : i32
    return %arg0, %c0_i32 : i32, i32
  }
  func.func @transform_6(%arg0: i32) -> (i32, i32, i32) {
    %c0_i32 = arith.constant 0 : i32
    %c0_i32_0 = arith.constant 0 : i32
    %c0_i32_1 = arith.constant 0 : i32
    return %arg0, %c0_i32, %c0_i32_0 : i32, i32, i32
  }
  func.func @transform_7(%arg0: i32) -> (i32, i32, i32) {
    %c0_i32 = arith.constant 0 : i32
    %c0_i32_0 = arith.constant 0 : i32
    %c0_i32_1 = arith.constant 0 : i32
    return %arg0, %c0_i32, %c0_i32_0 : i32, i32, i32
  }
}

module attributes {stable_mosaic.version = 11 : i64} {
  func.func @softmax_norm_kernel(%arg0: i32, %arg1: memref<256x128xf32, #tpu.memory_space<vmem>>, %arg2: memref<1x128xf32, #tpu.memory_space<vmem>>, %arg3: memref<1x128xf32, #tpu.memory_space<vmem>>, %arg4: memref<256x128xf32, #tpu.memory_space<vmem>>) attributes {dimension_semantics = [#tpu.dimension_semantics<parallel>], iteration_bounds = array<i64: 1>, scalar_prefetch = 0 : i64, scratch_operands = 0 : i64, tpu.core_type = #tpu.core_type<tc>, window_params = [{transform_indices = @transform_0, window_bounds = array<i64: 256, 128>}, {pipeline_mode = #tpu.pipeline_mode<synchronous>, transform_indices = @transform_1, window_bounds = array<i64: 1, 128>}, {pipeline_mode = #tpu.pipeline_mode<synchronous>, transform_indices = @transform_2, window_bounds = array<i64: 1, 128>}, {transform_indices = @transform_3, window_bounds = array<i64: 256, 128>}]} {
    %c0 = arith.constant 0 : index
    %c0_0 = arith.constant 0 : index
    %0 = vector.load %arg1[%c0, %c0_0] : memref<256x128xf32, #tpu.memory_space<vmem>>, vector<256x128xf32>
    %c0_1 = arith.constant 0 : index
    %c0_2 = arith.constant 0 : index
    %1 = vector.load %arg2[%c0_1, %c0_2] : memref<1x128xf32, #tpu.memory_space<vmem>>, vector<1x128xf32>
    %2 = vector.broadcast %1 : vector<1x128xf32> to vector<256x128xf32>
    %3 = arith.subf %0, %2 : vector<256x128xf32>
    %4 = math.exp %3 : vector<256x128xf32>
    %c0_3 = arith.constant 0 : index
    %c0_4 = arith.constant 0 : index
    %5 = vector.load %arg3[%c0_3, %c0_4] : memref<1x128xf32, #tpu.memory_space<vmem>>, vector<1x128xf32>
    %6 = vector.broadcast %5 : vector<1x128xf32> to vector<256x128xf32>
    %7 = arith.mulf %4, %6 : vector<256x128xf32>
    %c0_5 = arith.constant 0 : index
    %c0_6 = arith.constant 0 : index
    %8 = vector.load %arg4[%c0_5, %c0_6] : memref<256x128xf32, #tpu.memory_space<vmem>>, vector<256x128xf32>
    tpu.vector_store %arg4[%c0_5, %c0_6], %7 {strides = array<i32>} : memref<256x128xf32, #tpu.memory_space<vmem>>, vector<256x128xf32>,
    return
  }
  func.func @transform_0(%arg0: i32) -> (i32, i32) {
    %c0_i32 = arith.constant 0 : i32
    %c0_i32_0 = arith.constant 0 : i32
    return %arg0, %c0_i32 : i32, i32
  }
  func.func @transform_1(%arg0: i32) -> (i32, i32) {
    %c0_i32 = arith.constant 0 : i32
    %c0_i32_0 = arith.constant 0 : i32
    %c0_i32_1 = arith.constant 0 : i32
    return %c0_i32, %c0_i32_0 : i32, i32
  }
  func.func @transform_2(%arg0: i32) -> (i32, i32) {
    %c0_i32 = arith.constant 0 : i32
    %c0_i32_0 = arith.constant 0 : i32
    %c0_i32_1 = arith.constant 0 : i32
    return %c0_i32, %c0_i32_0 : i32, i32
  }
  func.func @transform_3(%arg0: i32) -> (i32, i32) {
    %c0_i32 = arith.constant 0 : i32
    %c0_i32_0 = arith.constant 0 : i32
    return %arg0, %c0_i32 : i32, i32
  }
}

</mosaic_0001>

<llo_original>
// kernel: net1seq_forward.3
$region0: #{net1seq_forward.3}
  #allocation0 [shape = 'u32[]', space=smem, size = 0x4, offset = 0x4, fixed_abs, tag = 'smem constant byte address 0x4 - core index']
  #allocation1 [shape = 'u32[72,128]{1,0:T(1,128)}', space=vmem, size = 0x9000, scoped, tag = 'internal scratch']
  %s0 = inlined_call_operand.vmem [shape: f32[256,128], index: 0, kind: input, shape index: {}]
  %s1 = inlined_call_operand.vmem [shape: f32[1,128], index: 1, kind: input, shape index: {}]
  %s2 = inlined_call_operand.vmem [shape: f32[1,128], index: 2, kind: input, shape index: {}]
  %s3 = inlined_call_operand.vmem [shape: f32[256,128], index: 3, kind: output, shape index: {}]
  %s4 = sld [smem:[#allocation0]]
  $region22: #{net1seq_forward.3} parent=0
    _
  %s6 = ssub.s32 1, %s4
  %s7 = scalar_select 0, %s6, %s4
  // Predicated region
  $region2: #{net1seq_forward.3} parent=0 // pred_check
    _
  $region3: #{net1seq_forward.3} parent=0 // pred_check_branch
    %9 = sbr.rel (0) target = $region5
  $region4: #{net1seq_forward.3} parent=0 // pred_region
    _
  $region5: #{net1seq_forward.3} parent=0 // pred_fallthru
    _
  // Predicated region
  $region6: #{net1seq_forward.3} parent=0 // pred_check
    _
  $region7: #{net1seq_forward.3} parent=0 // pred_check_branch
    %11 = sbr.rel (0) target = $region9
  $region8: #{net1seq_forward.3} parent=0 // pred_region
    _
  $region9: #{net1seq_forward.3} parent=0 // pred_fallthru
    _
  // Predicated region
  $region10: #{net1seq_forward.3} parent=0 // pred_check
    _
  $region11: #{net1seq_forward.3} parent=0 // pred_check_branch
    %13 = sbr.rel (0) target = $region13
  $region12: #{net1seq_forward.3} parent=0 // pred_region
    _
  $region13: #{net1seq_forward.3} parent=0 // pred_fallthru
    _
  %v14 = vld [vmem:[%s0] sm:$0xff]
  %v15 = vld [vmem:[%s0 + $0x8] sm:$0xff]
  %v16 = vld [vmem:[%s0 + $0x10] sm:$0xff]
  %v17 = vld [vmem:[%s0 + $0x18] sm:$0xff]
  %v18 = vld [vmem:[%s0 + $0x20] sm:$0xff]
  %v19 = vld [vmem:[%s0 + $0x28] sm:$0xff]
  %v20 = vld [vmem:[%s0 + $0x30] sm:$0xff]
  %v21 = vld [vmem:[%s0 + $0x38] sm:$0xff]
  %v22 = vld [vmem:[%s0 + $0x40] sm:$0xff]
  %v23 = vld [vmem:[%s0 + $0x48] sm:$0xff]
  %v24 = vld [vmem:[%s0 + $0x50] sm:$0xff]
  %v25 = vld [vmem:[%s0 + $0x58] sm:$0xff]
  %v26 = vld [vmem:[%s0 + $0x60] sm:$0xff]
  %v27 = vld [vmem:[%s0 + $0x68] sm:$0xff]
  %v28 = vld [vmem:[%s0 + $0x70] sm:$0xff]
  %v29 = vld [vmem:[%s0 + $0x78] sm:$0xff]
  %v30 = vld [vmem:[%s0 + $0x80] sm:$0xff]
  %v31 = vld [vmem:[%s0 + $0x88] sm:$0xff]
  %v32 = vld [vmem:[%s0 + $0x90] sm:$0xff]
  %v33 = vld [vmem:[%s0 + $0x98] sm:$0xff]
  %v34 = vld [vmem:[%s0 + $0xa0] sm:$0xff]
  %v35 = vld [vmem:[%s0 + $0xa8] sm:$0xff]
  %v36 = vld [vmem:[%s0 + $0xb0] sm:$0xff]
  %v37 = vld [vmem:[%s0 + $0xb8] sm:$0xff]
  %v38 = vld [vmem:[%s0 + $0xc0] sm:$0xff]
  %v39 = vld [vmem:[%s0 + $0xc8] sm:$0xff]
  %v40 = vld [vmem:[%s0 + $0xd0] sm:$0xff]
  %v41 = vld [vmem:[%s0 + $0xd8] sm:$0xff]
  %v42 = vld [vmem:[%s0 + $0xe0] sm:$0xff]
  %v43 = vld [vmem:[%s0 + $0xe8] sm:$0xff]
  %v44 = vld [vmem:[%s0 + $0xf0] sm:$0xff]
  %v45 = vld [vmem:[%s0 + $0xf8] sm:$0xff]
  %v46 = vld [vmem:[%s1] sm:$0x1]
  %v48 = vperm.slane %v46, 0
  %v50 = vsub.f32 %v14, %v48
  %v51 = vsub.f32 %v15, %v48
  %v52 = vsub.f32 %v16, %v48
  %v53 = vsub.f32 %v17, %v48
  %v54 = vsub.f32 %v18, %v48
  %v55 = vsub.f32 %v19, %v48
  %v56 = vsub.f32 %v20, %v48
  %v57 = vsub.f32 %v21, %v48
  %v58 = vsub.f32 %v22, %v48
  %v59 = vsub.f32 %v23, %v48
  %v60 = vsub.f32 %v24, %v48
  %v61 = vsub.f32 %v25, %v48
  %v62 = vsub.f32 %v26, %v48
  %v63 = vsub.f32 %v27, %v48
  %v64 = vsub.f32 %v28, %v48
  %v65 = vsub.f32 %v29, %v48
  %v66 = vsub.f32 %v30, %v48
  %v67 = vsub.f32 %v31, %v48
  %v68 = vsub.f32 %v32, %v48
  %v69 = vsub.f32 %v33, %v48
  %v70 = vsub.f32 %v34, %v48
  %v71 = vsub.f32 %v35, %v48
  %v72 = vsub.f32 %v36, %v48
  %v73 = vsub.f32 %v37, %v48
  %v74 = vsub.f32 %v38, %v48
  %v75 = vsub.f32 %v39, %v48
  %v76 = vsub.f32 %v40, %v48
  %v77 = vsub.f32 %v41, %v48
  %v78 = vsub.f32 %v42, %v48
  %v79 = vsub.f32 %v43, %v48
  %v80 = vsub.f32 %v44, %v48
  %v81 = vsub.f32 %v45, %v48
  %v82 = vmul.f32 %v50, 1.442695
  %v83 = vpow.pop %v82
  %v84 = vmul.f32 %v51, 1.442695
  %v85 = vpow.pop %v84
  %v86 = vmul.f32 %v52, 1.442695
  %v87 = vpow.pop %v86
  %v88 = vmul.f32 %v53, 1.442695
  %v89 = vpow.pop %v88
  %v90 = vmul.f32 %v54, 1.442695
  %v91 = vpow.pop %v90
  %v92 = vmul.f32 %v55, 1.442695
  %v93 = vpow.pop %v92
  %v94 = vmul.f32 %v56, 1.442695
  %v95 = vpow.pop %v94
  %v96 = vmul.f32 %v57, 1.442695
  %v97 = vpow.pop %v96
  %v98 = vmul.f32 %v58, 1.442695
  %v99 = vpow.pop %v98
  %v100 = vmul.f32 %v59, 1.442695
  %v101 = vpow.pop %v100
  %v102 = vmul.f32 %v60, 1.442695
  %v103 = vpow.pop %v102
  %v104 = vmul.f32 %v61, 1.442695
  %v105 = vpow.pop %v104
  %v106 = vmul.f32 %v62, 1.442695
  %v107 = vpow.pop %v106
  %v108 = vmul.f32 %v63, 1.442695
  %v109 = vpow.pop %v108
  %v110 = vmul.f32 %v64, 1.442695
  %v111 = vpow.pop %v110
  %v112 = vmul.f32 %v65, 1.442695
  %v113 = vpow.pop %v112
  %v114 = vmul.f32 %v66, 1.442695
  %v115 = vpow.pop %v114
  %v116 = vmul.f32 %v67, 1.442695
  %v117 = vpow.pop %v116
  %v118 = vmul.f32 %v68, 1.442695
  %v119 = vpow.pop %v118
  %v120 = vmul.f32 %v69, 1.442695
  %v121 = vpow.pop %v120
  %v122 = vmul.f32 %v70, 1.442695
  %v123 = vpow.pop %v122
  %v124 = vmul.f32 %v71, 1.442695
  %v125 = vpow.pop %v124
  %v126 = vmul.f32 %v72, 1.442695
  %v127 = vpow.pop %v126
  %v128 = vmul.f32 %v73, 1.442695
  %v129 = vpow.pop %v128
  %v130 = vmul.f32 %v74, 1.442695
  %v131 = vpow.pop %v130
  %v132 = vmul.f32 %v75, 1.442695
  %v133 = vpow.pop %v132
  %v134 = vmul.f32 %v76, 1.442695
  %v135 = vpow.pop %v134
  %v136 = vmul.f32 %v77, 1.442695
  %v137 = vpow.pop %v136
  %v138 = vmul.f32 %v78, 1.442695
  %v139 = vpow.pop %v138
  %v140 = vmul.f32 %v79, 1.442695
  %v141 = vpow.pop %v140
  %v142 = vmul.f32 %v80, 1.442695
  %v143 = vpow.pop %v142
  %v144 = vmul.f32 %v81, 1.442695
  %v145 = vpow.pop %v144
  %v146 = vld [vmem:[%s2] sm:$0x1]
  %v148 = vperm.slane %v146, 0
  %v150 = vmul.f32 %v83, %v148
  %v151 = vmul.f32 %v85, %v148
  %v152 = vmul.f32 %v87, %v148
  %v153 = vmul.f32 %v89, %v148
  %v154 = vmul.f32 %v91, %v148
  %v155 = vmul.f32 %v93, %v148
  %v156 = vmul.f32 %v95, %v148
  %v157 = vmul.f32 %v97, %v148
  %v158 = vmul.f32 %v99, %v148
  %v159 = vmul.f32 %v101, %v148
  %v160 = vmul.f32 %v103, %v148
  %v161 = vmul.f32 %v105, %v148
  %v162 = vmul.f32 %v107, %v148
  %v163 = vmul.f32 %v109, %v148
  %v164 = vmul.f32 %v111, %v148
  %v165 = vmul.f32 %v113, %v148
  %v166 = vmul.f32 %v115, %v148
  %v167 = vmul.f32 %v117, %v148
  %v168 = vmul.f32 %v119, %v148
  %v169 = vmul.f32 %v121, %v148
  %v170 = vmul.f32 %v123, %v148
  %v171 = vmul.f32 %v125, %v148
  %v172 = vmul.f32 %v127, %v148
  %v173 = vmul.f32 %v129, %v148
  %v174 = vmul.f32 %v131, %v148
  %v175 = vmul.f32 %v133, %v148
  %v176 = vmul.f32 %v135, %v148
  %v177 = vmul.f32 %v137, %v148
  %v178 = vmul.f32 %v139, %v148
  %v179 = vmul.f32 %v141, %v148
  %v180 = vmul.f32 %v143, %v148
  %v181 = vmul.f32 %v145, %v148
  %182 = vst [vmem:[%s3] sm:$0xff] %v150
  %183 = vst [vmem:[%s3 + $0x8] sm:$0xff] %v151
  %184 = vst [vmem:[%s3 + $0x10] sm:$0xff] %v152
  %185 = vst [vmem:[%s3 + $0x18] sm:$0xff] %v153
  %186 = vst [vmem:[%s3 + $0x20] sm:$0xff] %v154
  %187 = vst [vmem:[%s3 + $0x28] sm:$0xff] %v155
  %188 = vst [vmem:[%s3 + $0x30] sm:$0xff] %v156
  %189 = vst [vmem:[%s3 + $0x38] sm:$0xff] %v157
  %190 = vst [vmem:[%s3 + $0x40] sm:$0xff] %v158
  %191 = vst [vmem:[%s3 + $0x48] sm:$0xff] %v159
  %192 = vst [vmem:[%s3 + $0x50] sm:$0xff] %v160
  %193 = vst [vmem:[%s3 + $0x58] sm:$0xff] %v161
  %194 = vst [vmem:[%s3 + $0x60] sm:$0xff] %v162
  %195 = vst [vmem:[%s3 + $0x68] sm:$0xff] %v163
  %196 = vst [vmem:[%s3 + $0x70] sm:$0xff] %v164
  %197 = vst [vmem:[%s3 + $0x78] sm:$0xff] %v165
  %198 = vst [vmem:[%s3 + $0x80] sm:$0xff] %v166
  %199 = vst [vmem:[%s3 + $0x88] sm:$0xff] %v167
  %200 = vst [vmem:[%s3 + $0x90] sm:$0xff] %v168
  %201 = vst [vmem:[%s3 + $0x98] sm:$0xff] %v169
  %202 = vst [vmem:[%s3 + $0xa0] sm:$0xff] %v170
  %203 = vst [vmem:[%s3 + $0xa8] sm:$0xff] %v171
  %204 = vst [vmem:[%s3 + $0xb0] sm:$0xff] %v172
  %205 = vst [vmem:[%s3 + $0xb8] sm:$0xff] %v173
  %206 = vst [vmem:[%s3 + $0xc0] sm:$0xff] %v174
  %207 = vst [vmem:[%s3 + $0xc8] sm:$0xff] %v175
  %208 = vst [vmem:[%s3 + $0xd0] sm:$0xff] %v176
  %209 = vst [vmem:[%s3 + $0xd8] sm:$0xff] %v177
  %210 = vst [vmem:[%s3 + $0xe0] sm:$0xff] %v178
  %211 = vst [vmem:[%s3 + $0xe8] sm:$0xff] %v179
  %212 = vst [vmem:[%s3 + $0xf0] sm:$0xff] %v180
  %213 = vst [vmem:[%s3 + $0xf8] sm:$0xff] %v181
  // Predicated region
  $region14: #{net1seq_forward.3} parent=0 // pred_check
    _
  $region15: #{net1seq_forward.3} parent=0 // pred_check_branch
    %215 = sbr.rel (0) target = $region17
  $region16: #{net1seq_forward.3} parent=0 // pred_region
    _
  $region17: #{net1seq_forward.3} parent=0 // pred_fallthru
    _
  // Predicated region
  $region18: #{net1seq_forward.3} parent=0 // pred_check
    _
  $region19: #{net1seq_forward.3} parent=0 // pred_check_branch
    %217 = sbr.rel (0) target = $region21
  $region20: #{net1seq_forward.3} parent=0 // pred_region
    _
  $region21: #{net1seq_forward.3} parent=0 // pred_fallthru
    _

// kernel: net1seq_forward.2
$region0: #{net1seq_forward.2}
  #allocation0 [shape = 'u32[]', space=smem, size = 0x4, offset = 0x4, fixed_abs, tag = 'smem constant byte address 0x4 - core index']
  #allocation1 [shape = 'u32[72,128]{1,0:T(1,128)}', space=vmem, size = 0x9000, scoped, tag = 'internal scratch']
  %s0 = inlined_call_operand.vmem [shape: bf16[256,784], index: 0, kind: input, shape index: {}]
  %s1 = inlined_call_operand.vmem [shape: bf16[784,1024], index: 1, kind: input, shape index: {}]
  %s2 = inlined_call_operand.vmem [shape: f32[1,1024], index: 2, kind: input, shape index: {}]
  %s3 = inlined_call_operand.vmem [shape: bf16[1024,128], index: 3, kind: input, shape index: {}]
  %s4 = inlined_call_operand.vmem [shape: f32[1,128], index: 4, kind: input, shape index: {}]
  %s5 = inlined_call_operand.vmem [shape: f32[256,128], index: 5, kind: output, shape index: {0}]
  %s6 = inlined_call_operand.vmem [shape: f32[2,1,128], index: 6, kind: output, shape index: {1}]
  %s7 = inlined_call_operand.vmem [shape: f32[2,1,128], index: 7, kind: output, shape index: {2}]
  %8 = xla_tuple %s5, %s6, %s7
  %s9 = sld [smem:[#allocation0]]
  $region69: #{net1seq_forward.2} parent=0
    _
  %s11 = ssub.s32 1, %s9
  %s12 = scalar_select 0, %s11, %s9
  loop: start=0, step=1, limit=4
  $region2: #{net1seq_forward.2} parent=0 // loop_pre_header
    _
  $region3: #{net1seq_forward.2} parent=0 // loop_header
    %s14 = sphi 0, %s18
    %p15 = scmp.ge.s32.totalorder %s14, 4
    %s24 = sphi 0, %s26
    %s27 = sphi 0, %s24
    %s28 = sphi 0, %s27
    %s44 = sphi 0, %s28
    %s48 = sphi 0, %s48
    %s50 = sphi 0, %s48
    %s51 = sphi 0, %s50
    %s65 = sphi 0, %s51
    %s69 = sphi 0, %s69
    %s71 = sphi 0, %s69
    %s72 = sphi 0, %s71
    %s86 = sphi 0, %s72
    %s90 = sphi 0, %s90
    %s92 = sphi 0, %s90
    %s93 = sphi 0, %s92
    %s107 = sphi 0, %s93
    %s111 = sphi 0, %s111
    %s113 = sphi 0, %s111
    %s114 = sphi 0, %s113
    %s128 = sphi 0, %s114
    %s134 = sphi 0, %s136
    %s137 = sphi 0, %s134
    %s138 = sphi 0, %s137
    %s154 = sphi 0, %s138
    %s160 = sphi 0, %s162
    %s163 = sphi 0, %s160
    %s164 = sphi 0, %s163
    %s180 = sphi 0, %s164
    %s186 = sphi 0, %s188
    %s189 = sphi 0, %s186
    %s190 = sphi 0, %s189
    %s206 = sphi 0, %s190
  $region4: #{net1seq_forward.2} parent=0 // loop_header_branch
    %17 = sbr.rel (%p15) target = $region8
  $region5: #{net1seq_forward.2} parent=0 // loop_body
    %s19 = ssub.s32 %s14, 1
    %s20 = ssub.s32 %s14, 2
    %s21 = sadd.s32 %s14, 1
    %s22 = ssub.s32 %s14, %s21
    %p23 = scmp.eq.s32.totalorder %s22, 0
    %s25 = sadd.s32 %s24, 1
    %s26 = scalar_select %p23, %s24, %s25
    %p29 = pneg %p23
    %p30 = scmp.eq.s32.totalorder %s14, 1
    %p31 = por %p29, %p30
    %p32 = scmp.ne.s32.totalorder %s24, %s27
    %p33 = scmp.eq.s32.totalorder %s14, 0
    %p34 = por %p32, %p33
    %p35 = scmp.ne.s32.totalorder %s24, %s27
    %p36 = scmp.eq.s32.totalorder %s19, 1
    %p37 = por %p35, %p36
    %p38 = scmp.ne.s32.totalorder %s27, %s28
    %p39 = scmp.eq.s32.totalorder %s19, 0
    %p40 = por %p38, %p39
    %p41 = scmp.ne.s32.totalorder %s27, %s28
    %p42 = scmp.eq.s32.totalorder %s20, 1
    %p43 = por %p41, %p42
    %p45 = scmp.ne.s32.totalorder %s28, %s44
    %p46 = scmp.eq.s32.totalorder %s20, 0
    %p47 = por %p45, %p46
    %s49 = sadd.s32 %s48, 1
    %p52 = scmp.eq.s32.totalorder %s14, 1
    %p53 = scmp.ne.s32.totalorder %s48, %s50
    %p54 = scmp.eq.s32.totalorder %s14, 0
    %p55 = por %p53, %p54
    %p56 = scmp.ne.s32.totalorder %s48, %s50
    %p57 = scmp.eq.s32.totalorder %s19, 1
    %p58 = por %p56, %p57
    %p59 = scmp.ne.s32.totalorder %s50, %s51
    %p60 = scmp.eq.s32.totalorder %s19, 0
    %p61 = por %p59, %p60
    %p62 = scmp.ne.s32.totalorder %s50, %s51
    %p63 = scmp.eq.s32.totalorder %s20, 1
    %p64 = por %p62, %p63
    %p66 = scmp.ne.s32.totalorder %s51, %s65
    %p67 = scmp.eq.s32.totalorder %s20, 0
    %p68 = por %p66, %p67
    %s70 = sadd.s32 %s69, 1
    %p73 = scmp.eq.s32.totalorder %s14, 1
    %p74 = scmp.ne.s32.totalorder %s69, %s71
    %p75 = scmp.eq.s32.totalorder %s14, 0
    %p76 = por %p74, %p75
    %p77 = scmp.ne.s32.totalorder %s69, %s71
    %p78 = scmp.eq.s32.totalorder %s19, 1
    %p79 = por %p77, %p78
    %p80 = scmp.ne.s32.totalorder %s71, %s72
    %p81 = scmp.eq.s32.totalorder %s19, 0
    %p82 = por %p80, %p81
    %p83 = scmp.ne.s32.totalorder %s71, %s72
    %p84 = scmp.eq.s32.totalorder %s20, 1
    %p85 = por %p83, %p84
    %p87 = scmp.ne.s32.totalorder %s72, %s86
    %p88 = scmp.eq.s32.totalorder %s20, 0
    %p89 = por %p87, %p88
    %s91 = sadd.s32 %s90, 1
    %p94 = scmp.eq.s32.totalorder %s14, 1
    %p95 = scmp.ne.s32.totalorder %s90, %s92
    %p96 = scmp.eq.s32.totalorder %s14, 0
    %p97 = por %p95, %p96
    %p98 = scmp.ne.s32.totalorder %s90, %s92
    %p99 = scmp.eq.s32.totalorder %s19, 1
    %p100 = por %p98, %p99
    %p101 = scmp.ne.s32.totalorder %s92, %s93
    %p102 = scmp.eq.s32.totalorder %s19, 0
    %p103 = por %p101, %p102
    %p104 = scmp.ne.s32.totalorder %s92, %s93
    %p105 = scmp.eq.s32.totalorder %s20, 1
    %p106 = por %p104, %p105
    %p108 = scmp.ne.s32.totalorder %s93, %s107
    %p109 = scmp.eq.s32.totalorder %s20, 0
    %p110 = por %p108, %p109
    %s112 = sadd.s32 %s111, 1
    %p115 = scmp.eq.s32.totalorder %s14, 1
    %p116 = scmp.ne.s32.totalorder %s111, %s113
    %p117 = scmp.eq.s32.totalorder %s14, 0
    %p118 = por %p116, %p117
    %p119 = scmp.ne.s32.totalorder %s111, %s113
    %p120 = scmp.eq.s32.totalorder %s19, 1
    %p121 = por %p119, %p120
    %p122 = scmp.ne.s32.totalorder %s113, %s114
    %p123 = scmp.eq.s32.totalorder %s19, 0
    %p124 = por %p122, %p123
    %p125 = scmp.ne.s32.totalorder %s113, %s114
    %p126 = scmp.eq.s32.totalorder %s20, 1
    %p127 = por %p125, %p126
    %p129 = scmp.ne.s32.totalorder %s114, %s128
    %p130 = scmp.eq.s32.totalorder %s20, 0
    %p131 = por %p129, %p130
    %s132 = ssub.s32 %s14, %s21
    %p133 = scmp.eq.s32.totalorder %s132, 0
    %s135 = sadd.s32 %s134, 1
    %s136 = scalar_select %p133, %s134, %s135
    %p139 = pneg %p133
    %p140 = scmp.eq.s32.totalorder %s14, 1
    %p141 = por %p139, %p140
    %p142 = scmp.ne.s32.totalorder %s134, %s137
    %p143 = scmp.eq.s32.totalorder %s14, 0
    %p144 = por %p142, %p143
    %p145 = scmp.ne.s32.totalorder %s134, %s137
    %p146 = scmp.eq.s32.totalorder %s19, 1
    %p147 = por %p145, %p146
    %p148 = scmp.ne.s32.totalorder %s137, %s138
    %p149 = scmp.eq.s32.totalorder %s19, 0
    %p150 = por %p148, %p149
    %p151 = scmp.ne.s32.totalorder %s137, %s138
    %p152 = scmp.eq.s32.totalorder %s20, 1
    %p153 = por %p151, %p152
    %p155 = scmp.ne.s32.totalorder %s138, %s154
    %p156 = scmp.eq.s32.totalorder %s20, 0
    %p157 = por %p155, %p156
    %s158 = ssub.s32 %s14, %s21
    %p159 = scmp.eq.s32.totalorder %s158, 0
    %s161 = sadd.s32 %s160, 1
    %s162 = scalar_select %p159, %s160, %s161
    %p165 = pneg %p159
    %p166 = scmp.eq.s32.totalorder %s14, 1
    %p167 = por %p165, %p166
    %p168 = scmp.ne.s32.totalorder %s160, %s163
    %p169 = scmp.eq.s32.totalorder %s14, 0
    %p170 = por %p168, %p169
    %p171 = scmp.ne.s32.totalorder %s160, %s163
    %p172 = scmp.eq.s32.totalorder %s19, 1
    %p173 = por %p171, %p172
    %p174 = scmp.ne.s32.totalorder %s163, %s164
    %p175 = scmp.eq.s32.totalorder %s19, 0
    %p176 = por %p174, %p175
    %p177 = scmp.ne.s32.totalorder %s163, %s164
    %p178 = scmp.eq.s32.totalorder %s20, 1
    %p179 = por %p177, %p178
    %p181 = scmp.ne.s32.totalorder %s164, %s180
    %p182 = scmp.eq.s32.totalorder %s20, 0
    %p183 = por %p181, %p182
    %s184 = ssub.s32 %s14, %s21
    %p185 = scmp.eq.s32.totalorder %s184, 0
    %s187 = sadd.s32 %s186, 1
    %s188 = scalar_select %p185, %s186, %s187
    %p191 = pneg %p185
    %p192 = scmp.eq.s32.totalorder %s14, 1
    %p193 = por %p191, %p192
    %p194 = scmp.ne.s32.totalorder %s186, %s189
    %p195 = scmp.eq.s32.totalorder %s14, 0
    %p196 = por %p194, %p195
    %p197 = scmp.ne.s32.totalorder %s186, %s189
    %p198 = scmp.eq.s32.totalorder %s19, 1
    %p199 = por %p197, %p198
    %p200 = scmp.ne.s32.totalorder %s189, %s190
    %p201 = scmp.eq.s32.totalorder %s19, 0
    %p202 = por %p200, %p201
    %p203 = scmp.ne.s32.totalorder %s189, %s190
    %p204 = scmp.eq.s32.totalorder %s20, 1
    %p205 = por %p203, %p204
    %p207 = scmp.ne.s32.totalorder %s190, %s206
    %p208 = scmp.eq.s32.totalorder %s20, 0
    %p209 = por %p207, %p208
    %p210 = scmp.le.s32.totalorder 1, %s14
    %p211 = scmp.lt.s32.totalorder %s14, 3
    %p212 = pnand %p210, %p211
    %p213 = pneg %p212
    // Predicated region
    $region9: #{net1seq_forward.2} parent=5 // pred_check
      _
    $region10: #{net1seq_forward.2} parent=5 // pred_check_branch
      %215 = sbr.rel (%p212) target = $region12
    $region11: #{net1seq_forward.2} parent=5 // pred_region
      %s216 = ssub.s32 %s14, 1
      // Predicated region
      $region13: #{net1seq_forward.2} parent=11 // pred_check
        %p217 = pneg %p61
      $region14: #{net1seq_forward.2} parent=11 // pred_check_branch
        %219 = sbr.rel (%p217) target = $region16
      $region15: #{net1seq_forward.2} parent=11 // pred_region
        _
      $region16: #{net1seq_forward.2} parent=11 // pred_fallthru
        _
      // Predicated region
      $region17: #{net1seq_forward.2} parent=11 // pred_check
        %p220 = pneg %p82
      $region18: #{net1seq_forward.2} parent=11 // pred_check_branch
        %222 = sbr.rel (%p220) target = $region20
      $region19: #{net1seq_forward.2} parent=11 // pred_region
        _
      $region20: #{net1seq_forward.2} parent=11 // pred_fallthru
        _
      // Predicated region
      $region21: #{net1seq_forward.2} parent=11 // pred_check
        %p223 = pneg %p103
      $region22: #{net1seq_forward.2} parent=11 // pred_check_branch
        %225 = sbr.rel (%p223) target = $region24
      $region23: #{net1seq_forward.2} parent=11 // pred_region
        _
      $region24: #{net1seq_forward.2} parent=11 // pred_fallthru
        _
      // Predicated region
      $region25: #{net1seq_forward.2} parent=11 // pred_check
        %p226 = pneg %p124
      $region26: #{net1seq_forward.2} parent=11 // pred_check_branch
        %228 = sbr.rel (%p226) target = $region28
      $region27: #{net1seq_forward.2} parent=11 // pred_region
        _
      $region28: #{net1seq_forward.2} parent=11 // pred_fallthru
        _
    $region12: #{net1seq_forward.2} parent=5 // pred_fallthru
      _
    %p229 = scmp.lt.s32.totalorder %s14, 2
    // Predicated region
    $region29: #{net1seq_forward.2} parent=5 // pred_check
      %p230 = pneg %p229
    $region30: #{net1seq_forward.2} parent=5 // pred_check_branch
      %232 = sbr.rel (%p230) target = $region32
    $region31: #{net1seq_forward.2} parent=5 // pred_region
      // Predicated region
      $region33: #{net1seq_forward.2} parent=31 // pred_check
        %p233 = pneg %p34
      $region34: #{net1seq_forward.2} parent=31 // pred_check_branch
        %235 = sbr.rel (%p233) target = $region36
      $region35: #{net1seq_forward.2} parent=31 // pred_region
        %s236 = smul.u32 16, %s14
        %p237 = scmp.lt.s32.totalorder %s236, 31
        %s238 = scalar_select %p237, %s236, 31
        %s239 = smul.addr %s238, 7
        %s240 = smul.addr %s239, 4
        %s241 = scalar_lea.vmem %s0, %s240
        %s242 = smul.u32 16, %s14
      $region36: #{net1seq_forward.2} parent=31 // pred_fallthru
        _
    $region32: #{net1seq_forward.2} parent=5 // pred_fallthru
      _
    %p243 = scmp.le.s32.totalorder 1, %s14
    %p244 = scmp.lt.s32.totalorder %s14, 3
    %p245 = pnand %p243, %p244
    %p246 = pneg %p245
    // Predicated region
    $region37: #{net1seq_forward.2} parent=5 // pred_check
      _
    $region38: #{net1seq_forward.2} parent=5 // pred_check_branch
      %248 = sbr.rel (%p245) target = $region40
    $region39: #{net1seq_forward.2} parent=5 // pred_region
      %s249 = ssub.s32 %s14, 1
      %s250 = smul.u32 16, %s19
      %p251 = scmp.lt.s32.totalorder %s250, 31
      %s252 = scalar_select %p251, %s250, 31
      %s253 = smul.addr %s252, 7
      %s254 = smul.addr %s253, 4
      %s255 = scalar_lea.vmem %s0, %s254
      %p256 = pneg %p40
      %p257 = pneg %p37
      %p258 = pneg %p61
      %p259 = pneg %p58
      %p260 = pneg %p82
      %p261 = pneg %p79
      %p262 = pneg %p103
      %p263 = pneg %p100
      %p264 = pneg %p124
      %p265 = pneg %p121
      %p266 = pneg %p150
      %p267 = pneg %p147
      %s268 = smul.u32 16, %s19
      %p269 = scmp.lt.s32.totalorder %s268, 31
      %s270 = scalar_select %p269, %s268, 31
      %s271 = smul.addr %s270, 8
      %s272 = scalar_lea.vmem %s5, %s271
      %p273 = pneg %p176
      %p274 = pneg %p173
      %p275 = scmp.lt.s32.totalorder %s19, 1
      %s276 = scalar_select %p275, %s19, 1
      %s277 = scalar_lea.vmem %s6, %s276
      %p278 = pneg %p202
      %p279 = pneg %p199
      %p280 = scmp.lt.s32.totalorder %s19, 1
      %s281 = scalar_select %p280, %s19, 1
      %s282 = scalar_lea.vmem %s7, %s281
      %s283 = smul.u32 16, %s19
      %p284 = scmp.lt.s32.totalorder %s283, 31
      %s285 = scalar_select %p284, %s283, 31
      %s286 = smul.addr %s285, 7
      %s287 = smul.addr %s286, 4
      %s288 = scalar_lea.vmem %s0, %s287
      %s289 = smul.u32 16, %s19
      %s290 = smul.u32 16, %s19
      %p291 = scmp.lt.s32.totalorder %s290, 31
      %s292 = scalar_select %p291, %s290, 31
      %s293 = smul.addr %s292, 8
      %s294 = scalar_lea.vmem %s5, %s293
      %s295 = smul.u32 16, %s19
      %p296 = scmp.lt.s32.totalorder %s19, 1
      %s297 = scalar_select %p296, %s19, 1
      %s298 = scalar_lea.vmem %s6, %s297
      %p299 = scmp.lt.s32.totalorder %s19, 1
      %s300 = scalar_select %p299, %s19, 1
      %s301 = scalar_lea.vmem %s7, %s300
      %v303 = vld [vmem:[%s288] sm:$0xff]
      %v304 = vld [vmem:[%s288 + $0x8] sm:$0xff]
      %v305 = vld [vmem:[%s288 + $0x10] sm:$0xff]
      %v306 = vld [vmem:[%s288 + $0x18] sm:$0xf]
      %v307 = vld [vmem:[%s288 + $0x1c] sm:$0xff]
      %v308 = vld [vmem:[%s288 + $0x24] sm:$0xff]
      %v309 = vld [vmem:[%s288 + $0x2c] sm:$0xff]
      %v310 = vld [vmem:[%s288 + $0x34] sm:$0xf]
      %v311 = vld [vmem:[%s288 + $0x38] sm:$0xff]
      %v312 = vld [vmem:[%s288 + $0x40] sm:$0xff]
      %v313 = vld [vmem:[%s288 + $0x48] sm:$0xff]
      %v314 = vld [vmem:[%s288 + $0x50] sm:$0xf]
      %v315 = vld [vmem:[%s288 + $0x54] sm:$0xff]
      %v316 = vld [vmem:[%s288 + $0x5c] sm:$0xff]
      %v317 = vld [vmem:[%s288 + $0x64] sm:$0xff]
      %v318 = vld [vmem:[%s288 + $0x6c] sm:$0xf]
      %v319 = vld [vmem:[%s288 + $0x70] sm:$0xff]
      %v320 = vld [vmem:[%s288 + $0x78] sm:$0xff]
      %v321 = vld [vmem:[%s288 + $0x80] sm:$0xff]
      %v322 = vld [vmem:[%s288 + $0x88] sm:$0xf]
      %v323 = vld [vmem:[%s288 + $0x8c] sm:$0xff]
      %v324 = vld [vmem:[%s288 + $0x94] sm:$0xff]
      %v325 = vld [vmem:[%s288 + $0x9c] sm:$0xff]
      %v326 = vld [vmem:[%s288 + $0xa4] sm:$0xf]
      %v327 = vld [vmem:[%s288 + $0xa8] sm:$0xff]
      %v328 = vld [vmem:[%s288 + $0xb0] sm:$0xff]
      %v329 = vld [vmem:[%s288 + $0xb8] sm:$0xff]
      %v330 = vld [vmem:[%s288 + $0xc0] sm:$0xf]
      %v331 = vld [vmem:[%s288 + $0xc4] sm:$0xff]
      %v332 = vld [vmem:[%s288 + $0xcc] sm:$0xff]
      %v333 = vld [vmem:[%s288 + $0xd4] sm:$0xff]
      %v334 = vld [vmem:[%s288 + $0xdc] sm:$0xf]
      %v335 = vld [vmem:[%s288 + $0xe0] sm:$0xff]
      %v336 = vld [vmem:[%s288 + $0xe8] sm:$0xff]
      %v337 = vld [vmem:[%s288 + $0xf0] sm:$0xff]
      %v338 = vld [vmem:[%s288 + $0xf8] sm:$0xf]
      %v339 = vld [vmem:[%s288 + $0xfc] sm:$0xff]
      %v340 = vld [vmem:[%s288 + $0x104] sm:$0xff]
      %v341 = vld [vmem:[%s288 + $0x10c] sm:$0xff]
      %v342 = vld [vmem:[%s288 + $0x114] sm:$0xf]
      %v343 = vld [vmem:[%s288 + $0x118] sm:$0xff]
      %v344 = vld [vmem:[%s288 + $0x120] sm:$0xff]
      %v345 = vld [vmem:[%s288 + $0x128] sm:$0xff]
      %v346 = vld [vmem:[%s288 + $0x130] sm:$0xf]
      %v347 = vld [vmem:[%s288 + $0x134] sm:$0xff]
      %v348 = vld [vmem:[%s288 + $0x13c] sm:$0xff]
      %v349 = vld [vmem:[%s288 + $0x144] sm:$0xff]
      %v350 = vld [vmem:[%s288 + $0x14c] sm:$0xf]
      %v351 = vld [vmem:[%s288 + $0x150] sm:$0xff]
      %v352 = vld [vmem:[%s288 + $0x158] sm:$0xff]
      %v353 = vld [vmem:[%s288 + $0x160] sm:$0xff]
      %v354 = vld [vmem:[%s288 + $0x168] sm:$0xf]
      %v355 = vld [vmem:[%s288 + $0x16c] sm:$0xff]
      %v356 = vld [vmem:[%s288 + $0x174] sm:$0xff]
      %v357 = vld [vmem:[%s288 + $0x17c] sm:$0xff]
      %v358 = vld [vmem:[%s288 + $0x184] sm:$0xf]
      %v359 = vld [vmem:[%s288 + $0x188] sm:$0xff]
      %v360 = vld [vmem:[%s288 + $0x190] sm:$0xff]
      %v361 = vld [vmem:[%s288 + $0x198] sm:$0xff]
      %v362 = vld [vmem:[%s288 + $0x1a0] sm:$0xf]
      %v363 = vld [vmem:[%s288 + $0x1a4] sm:$0xff]
      %v364 = vld [vmem:[%s288 + $0x1ac] sm:$0xff]
      %v365 = vld [vmem:[%s288 + $0x1b4] sm:$0xff]
      %v366 = vld [vmem:[%s288 + $0x1bc] sm:$0xf]
      %v367 = vld [vmem:[%s1] sm:$0xff]
      %v368 = vld [vmem:[%s1 + $0x8] sm:$0xff]
      %v369 = vld [vmem:[%s1 + $0x10] sm:$0xff]
      %v370 = vld [vmem:[%s1 + $0x18] sm:$0xff]
      %v371 = vld [vmem:[%s1 + $0x20] sm:$0xff]
      %v372 = vld [vmem:[%s1 + $0x28] sm:$0xff]
      %v373 = vld [vmem:[%s1 + $0x30] sm:$0xff]
      %v374 = vld [vmem:[%s1 + $0x38] sm:$0xff]
      %v375 = vld [vmem:[%s1 + $0x40] sm:$0xff]
      %v376 = vld [vmem:[%s1 + $0x48] sm:$0xff]
      %v377 = vld [vmem:[%s1 + $0x50] sm:$0xff]
      %v378 = vld [vmem:[%s1 + $0x58] sm:$0xff]
      %v379 = vld [vmem:[%s1 + $0x60] sm:$0xff]
      %v380 = vld [vmem:[%s1 + $0x68] sm:$0xff]
      %v381 = vld [vmem:[%s1 + $0x70] sm:$0xff]
      %v382 = vld [vmem:[%s1 + $0x78] sm:$0xff]
      %v383 = vld [vmem:[%s1 + $0x80] sm:$0xff]
      %v384 = vld [vmem:[%s1 + $0x88] sm:$0xff]
      %v385 = vld [vmem:[%s1 + $0x90] sm:$0xff]
      %v386 = vld [vmem:[%s1 + $0x98] sm:$0xff]
      %v387 = vld [vmem:[%s1 + $0xa0] sm:$0xff]
      %v388 = vld [vmem:[%s1 + $0xa8] sm:$0xff]
      %v389 = vld [vmem:[%s1 + $0xb0] sm:$0xff]
      %v390 = vld [vmem:[%s1 + $0xb8] sm:$0xff]
      %v391 = vld [vmem:[%s1 + $0xc0] sm:$0xff]
      %v392 = vld [vmem:[%s1 + $0xc8] sm:$0xff]
      %v393 = vld [vmem:[%s1 + $0xd0] sm:$0xff]
      %v394 = vld [vmem:[%s1 + $0xd8] sm:$0xff]
      %v395 = vld [vmem:[%s1 + $0xe0] sm:$0xff]
      %v396 = vld [vmem:[%s1 + $0xe8] sm:$0xff]
      %v397 = vld [vmem:[%s1 + $0xf0] sm:$0xff]
      %v398 = vld [vmem:[%s1 + $0xf8] sm:$0xff]
      %v399 = vld [vmem:[%s1 + $0x100] sm:$0xff]
      %v400 = vld [vmem:[%s1 + $0x108] sm:$0xff]
      %v401 = vld [vmem:[%s1 + $0x110] sm:$0xff]
      %v402 = vld [vmem:[%s1 + $0x118] sm:$0xff]
      %v403 = vld [vmem:[%s1 + $0x120] sm:$0xff]
      %v404 = vld [vmem:[%s1 + $0x128] sm:$0xff]
      %v405 = vld [vmem:[%s1 + $0x130] sm:$0xff]
      %v406 = vld [vmem:[%s1 + $0x138] sm:$0xff]
      %v407 = vld [vmem:[%s1 + $0x140] sm:$0xff]
      %v408 = vld [vmem:[%s1 + $0x148] sm:$0xff]
      %v409 = vld [vmem:[%s1 + $0x150] sm:$0xff]
      %v410 = vld [vmem:[%s1 + $0x158] sm:$0xff]
      %v411 = vld [vmem:[%s1 + $0x160] sm:$0xff]
      %v412 = vld [vmem:[%s1 + $0x168] sm:$0xff]
      %v413 = vld [vmem:[%s1 + $0x170] sm:$0xff]
      %v414 = vld [vmem:[%s1 + $0x178] sm:$0xff]
      %v415 = vld [vmem:[%s1 + $0x180] sm:$0xff]
      %v416 = vld [vmem:[%s1 + $0x188] sm:$0xff]
      %v417 = vld [vmem:[%s1 + $0x190] sm:$0xff]
      %v418 = vld [vmem:[%s1 + $0x198] sm:$0xff]
      %v419 = vld [vmem:[%s1 + $0x1a0] sm:$0xff]
      %v420 = vld [vmem:[%s1 + $0x1a8] sm:$0xff]
      %v421 = vld [vmem:[%s1 + $0x1b0] sm:$0xff]
      %v422 = vld [vmem:[%s1 + $0x1b8] sm:$0xff]
      %v423 = vld [vmem:[%s1 + $0x1c0] sm:$0xff]
      %v424 = vld [vmem:[%s1 + $0x1c8] sm:$0xff]
      %v425 = vld [vmem:[%s1 + $0x1d0] sm:$0xff]
      %v426 = vld [vmem:[%s1 + $0x1d8] sm:$0xff]
      %v427 = vld [vmem:[%s1 + $0x1e0] sm:$0xff]
      %v428 = vld [vmem:[%s1 + $0x1e8] sm:$0xff]
      %v429 = vld [vmem:[%s1 + $0x1f0] sm:$0xff]
      %v430 = vld [vmem:[%s1 + $0x1f8] sm:$0xff]
      %v431 = vld [vmem:[%s1 + $0x200] sm:$0xff]
      %v432 = vld [vmem:[%s1 + $0x208] sm:$0xff]
      %v433 = vld [vmem:[%s1 + $0x210] sm:$0xff]
      %v434 = vld [vmem:[%s1 + $0x218] sm:$0xff]
      %v435 = vld [vmem:[%s1 + $0x220] sm:$0xff]
      %v436 = vld [vmem:[%s1 + $0x228] sm:$0xff]
      %v437 = vld [vmem:[%s1 + $0x230] sm:$0xff]
      %v438 = vld [vmem:[%s1 + $0x238] sm:$0xff]
      %v439 = vld [vmem:[%s1 + $0x240] sm:$0xff]
      %v440 = vld [vmem:[%s1 + $0x248] sm:$0xff]
      %v441 = vld [vmem:[%s1 + $0x250] sm:$0xff]
      %v442 = vld [vmem:[%s1 + $0x258] sm:$0xff]
      %v443 = vld [vmem:[%s1 + $0x260] sm:$0xff]
      %v444 = vld [vmem:[%s1 + $0x268] sm:$0xff]
      %v445 = vld [vmem:[%s1 + $0x270] sm:$0xff]
      %v446 = vld [vmem:[%s1 + $0x278] sm:$0xff]
      %v447 = vld [vmem:[%s1 + $0x280] sm:$0xff]
      %v448 = vld [vmem:[%s1 + $0x288] sm:$0xff]
      %v449 = vld [vmem:[%s1 + $0x290] sm:$0xff]
      %v450 = vld [vmem:[%s1 + $0x298] sm:$0xff]
      %v451 = vld [vmem:[%s1 + $0x2a0] sm:$0xff]
      %v452 = vld [vmem:[%s1 + $0x2a8] sm:$0xff]
      %v453 = vld [vmem:[%s1 + $0x2b0] sm:$0xff]
      %v454 = vld [vmem:[%s1 + $0x2b8] sm:$0xff]
      %v455 = vld [vmem:[%s1 + $0x2c0] sm:$0xff]
      %v456 = vld [vmem:[%s1 + $0x2c8] sm:$0xff]
      %v457 = vld [vmem:[%s1 + $0x2d0] sm:$0xff]
      %v458 = vld [vmem:[%s1 + $0x2d8] sm:$0xff]
      %v459 = vld [vmem:[%s1 + $0x2e0] sm:$0xff]
      %v460 = vld [vmem:[%s1 + $0x2e8] sm:$0xff]
      %v461 = vld [vmem:[%s1 + $0x2f0] sm:$0xff]
      %v462 = vld [vmem:[%s1 + $0x2f8] sm:$0xff]
      %v463 = vld [vmem:[%s1 + $0x300] sm:$0xff]
      %v464 = vld [vmem:[%s1 + $0x308] sm:$0xff]
      %v465 = vld [vmem:[%s1 + $0x310] sm:$0xff]
      %v466 = vld [vmem:[%s1 + $0x318] sm:$0xff]
      %v467 = vld [vmem:[%s1 + $0x320] sm:$0xff]
      %v468 = vld [vmem:[%s1 + $0x328] sm:$0xff]
      %v469 = vld [vmem:[%s1 + $0x330] sm:$0xff]
      %v470 = vld [vmem:[%s1 + $0x338] sm:$0xff]
      %v471 = vld [vmem:[%s1 + $0x340] sm:$0xff]
      %v472 = vld [vmem:[%s1 + $0x348] sm:$0xff]
      %v473 = vld [vmem:[%s1 + $0x350] sm:$0xff]
      %v474 = vld [vmem:[%s1 + $0x358] sm:$0xff]
      %v475 = vld [vmem:[%s1 + $0x360] sm:$0xff]
      %v476 = vld [vmem:[%s1 + $0x368] sm:$0xff]
      %v477 = vld [vmem:[%s1 + $0x370] sm:$0xff]
      %v478 = vld [vmem:[%s1 + $0x378] sm:$0xff]
      %v479 = vld [vmem:[%s1 + $0x380] sm:$0xff]
      %v480 = vld [vmem:[%s1 + $0x388] sm:$0xff]
      %v481 = vld [vmem:[%s1 + $0x390] sm:$0xff]
      %v482 = vld [vmem:[%s1 + $0x398] sm:$0xff]
      %v483 = vld [vmem:[%s1 + $0x3a0] sm:$0xff]
      %v484 = vld [vmem:[%s1 + $0x3a8] sm:$0xff]
      %v485 = vld [vmem:[%s1 + $0x3b0] sm:$0xff]
      %v486 = vld [vmem:[%s1 + $0x3b8] sm:$0xff]
      %v487 = vld [vmem:[%s1 + $0x3c0] sm:$0xff]
      %v488 = vld [vmem:[%s1 + $0x3c8] sm:$0xff]
      %v489 = vld [vmem:[%s1 + $0x3d0] sm:$0xff]
      %v490 = vld [vmem:[%s1 + $0x3d8] sm:$0xff]
      %v491 = vld [vmem:[%s1 + $0x3e0] sm:$0xff]
      %v492 = vld [vmem:[%s1 + $0x3e8] sm:$0xff]
      %v493 = vld [vmem:[%s1 + $0x3f0] sm:$0xff]
      %v494 = vld [vmem:[%s1 + $0x3f8] sm:$0xff]
      %v495 = vld [vmem:[%s1 + $0x400] sm:$0xff]
      %v496 = vld [vmem:[%s1 + $0x408] sm:$0xff]
      %v497 = vld [vmem:[%s1 + $0x410] sm:$0xff]
      %v498 = vld [vmem:[%s1 + $0x418] sm:$0xff]
      %v499 = vld [vmem:[%s1 + $0x420] sm:$0xff]
      %v500 = vld [vmem:[%s1 + $0x428] sm:$0xff]
      %v501 = vld [vmem:[%s1 + $0x430] sm:$0xff]
      %v502 = vld [vmem:[%s1 + $0x438] sm:$0xff]
      %v503 = vld [vmem:[%s1 + $0x440] sm:$0xff]
      %v504 = vld [vmem:[%s1 + $0x448] sm:$0xff]
      %v505 = vld [vmem:[%s1 + $0x450] sm:$0xff]
      %v506 = vld [vmem:[%s1 + $0x458] sm:$0xff]
      %v507 = vld [vmem:[%s1 + $0x460] sm:$0xff]
      %v508 = vld [vmem:[%s1 + $0x468] sm:$0xff]
      %v509 = vld [vmem:[%s1 + $0x470] sm:$0xff]
      %v510 = vld [vmem:[%s1 + $0x478] sm:$0xff]
      %v511 = vld [vmem:[%s1 + $0x480] sm:$0xff]
      %v512 = vld [vmem:[%s1 + $0x488] sm:$0xff]
      %v513 = vld [vmem:[%s1 + $0x490] sm:$0xff]
      %v514 = vld [vmem:[%s1 + $0x498] sm:$0xff]
      %v515 = vld [vmem:[%s1 + $0x4a0] sm:$0xff]
      %v516 = vld [vmem:[%s1 + $0x4a8] sm:$0xff]
      %v517 = vld [vmem:[%s1 + $0x4b0] sm:$0xff]
      %v518 = vld [vmem:[%s1 + $0x4b8] sm:$0xff]
      %v519 = vld [vmem:[%s1 + $0x4c0] sm:$0xff]
      %v520 = vld [vmem:[%s1 + $0x4c8] sm:$0xff]
      %v521 = vld [vmem:[%s1 + $0x4d0] sm:$0xff]
      %v522 = vld [vmem:[%s1 + $0x4d8] sm:$0xff]
      %v523 = vld [vmem:[%s1 + $0x4e0] sm:$0xff]
      %v524 = vld [vmem:[%s1 + $0x4e8] sm:$0xff]
      %v525 = vld [vmem:[%s1 + $0x4f0] sm:$0xff]
      %v526 = vld [vmem:[%s1 + $0x4f8] sm:$0xff]
      %v527 = vld [vmem:[%s1 + $0x500] sm:$0xff]
      %v528 = vld [vmem:[%s1 + $0x508] sm:$0xff]
      %v529 = vld [vmem:[%s1 + $0x510] sm:$0xff]
      %v530 = vld [vmem:[%s1 + $0x518] sm:$0xff]
      %v531 = vld [vmem:[%s1 + $0x520] sm:$0xff]
      %v532 = vld [vmem:[%s1 + $0x528] sm:$0xff]
      %v533 = vld [vmem:[%s1 + $0x530] sm:$0xff]
      %v534 = vld [vmem:[%s1 + $0x538] sm:$0xff]
      %v535 = vld [vmem:[%s1 + $0x540] sm:$0xff]
      %v536 = vld [vmem:[%s1 + $0x548] sm:$0xff]
      %v537 = vld [vmem:[%s1 + $0x550] sm:$0xff]
      %v538 = vld [vmem:[%s1 + $0x558] sm:$0xff]
      %v539 = vld [vmem:[%s1 + $0x560] sm:$0xff]
      %v540 = vld [vmem:[%s1 + $0x568] sm:$0xff]
      %v541 = vld [vmem:[%s1 + $0x570] sm:$0xff]
      %v542 = vld [vmem:[%s1 + $0x578] sm:$0xff]
      %v543 = vld [vmem:[%s1 + $0x580] sm:$0xff]
      %v544 = vld [vmem:[%s1 + $0x588] sm:$0xff]
      %v545 = vld [vmem:[%s1 + $0x590] sm:$0xff]
      %v546 = vld [vmem:[%s1 + $0x598] sm:$0xff]
      %v547 = vld [vmem:[%s1 + $0x5a0] sm:$0xff]
      %v548 = vld [vmem:[%s1 + $0x5a8] sm:$0xff]
      %v549 = vld [vmem:[%s1 + $0x5b0] sm:$0xff]
      %v550 = vld [vmem:[%s1 + $0x5b8] sm:$0xff]
      %v551 = vld [vmem:[%s1 + $0x5c0] sm:$0xff]
      %v552 = vld [vmem:[%s1 + $0x5c8] sm:$0xff]
      %v553 = vld [vmem:[%s1 + $0x5d0] sm:$0xff]
      %v554 = vld [vmem:[%s1 + $0x5d8] sm:$0xff]
      %v555 = vld [vmem:[%s1 + $0x5e0] sm:$0xff]
      %v556 = vld [vmem:[%s1 + $0x5e8] sm:$0xff]
      %v557 = vld [vmem:[%s1 + $0x5f0] sm:$0xff]
      %v558 = vld [vmem:[%s1 + $0x5f8] sm:$0xff]
      %v559 = vld [vmem:[%s1 + $0x600] sm:$0xff]
      %v560 = vld [vmem:[%s1 + $0x608] sm:$0xff]
      %v561 = vld [vmem:[%s1 + $0x610] sm:$0xff]
      %v562 = vld [vmem:[%s1 + $0x618] sm:$0xff]
      %v563 = vld [vmem:[%s1 + $0x620] sm:$0xff]
      %v564 = vld [vmem:[%s1 + $0x628] sm:$0xff]
      %v565 = vld [vmem:[%s1 + $0x630] sm:$0xff]
      %v566 = vld [vmem:[%s1 + $0x638] sm:$0xff]
      %v567 = vld [vmem:[%s1 + $0x640] sm:$0xff]
      %v568 = vld [vmem:[%s1 + $0x648] sm:$0xff]
      %v569 = vld [vmem:[%s1 + $0x650] sm:$0xff]
      %v570 = vld [vmem:[%s1 + $0x658] sm:$0xff]
      %v571 = vld [vmem:[%s1 + $0x660] sm:$0xff]
      %v572 = vld [vmem:[%s1 + $0x668] sm:$0xff]
      %v573 = vld [vmem:[%s1 + $0x670] sm:$0xff]
      %v574 = vld [vmem:[%s1 + $0x678] sm:$0xff]
      %v575 = vld [vmem:[%s1 + $0x680] sm:$0xff]
      %v576 = vld [vmem:[%s1 + $0x688] sm:$0xff]
      %v577 = vld [vmem:[%s1 + $0x690] sm:$0xff]
      %v578 = vld [vmem:[%s1 + $0x698] sm:$0xff]
      %v579 = vld [vmem:[%s1 + $0x6a0] sm:$0xff]
      %v580 = vld [vmem:[%s1 + $0x6a8] sm:$0xff]
      %v581 = vld [vmem:[%s1 + $0x6b0] sm:$0xff]
      %v582 = vld [vmem:[%s1 + $0x6b8] sm:$0xff]
      %v583 = vld [vmem:[%s1 + $0x6c0] sm:$0xff]
      %v584 = vld [vmem:[%s1 + $0x6c8] sm:$0xff]
      %v585 = vld [vmem:[%s1 + $0x6d0] sm:$0xff]
      %v586 = vld [vmem:[%s1 + $0x6d8] sm:$0xff]
      %v587 = vld [vmem:[%s1 + $0x6e0] sm:$0xff]
      %v588 = vld [vmem:[%s1 + $0x6e8] sm:$0xff]
      %v589 = vld [vmem:[%s1 + $0x6f0] sm:$0xff]
      %v590 = vld [vmem:[%s1 + $0x6f8] sm:$0xff]
      %v591 = vld [vmem:[%s1 + $0x700] sm:$0xff]
      %v592 = vld [vmem:[%s1 + $0x708] sm:$0xff]
      %v593 = vld [vmem:[%s1 + $0x710] sm:$0xff]
      %v594 = vld [vmem:[%s1 + $0x718] sm:$0xff]
      %v595 = vld [vmem:[%s1 + $0x720] sm:$0xff]
      %v596 = vld [vmem:[%s1 + $0x728] sm:$0xff]
      %v597 = vld [vmem:[%s1 + $0x730] sm:$0xff]
      %v598 = vld [vmem:[%s1 + $0x738] sm:$0xff]
      %v599 = vld [vmem:[%s1 + $0x740] sm:$0xff]
      %v600 = vld [vmem:[%s1 + $0x748] sm:$0xff]
      %v601 = vld [vmem:[%s1 + $0x750] sm:$0xff]
      %v602 = vld [vmem:[%s1 + $0x758] sm:$0xff]
      %v603 = vld [vmem:[%s1 + $0x760] sm:$0xff]
      %v604 = vld [vmem:[%s1 + $0x768] sm:$0xff]
      %v605 = vld [vmem:[%s1 + $0x770] sm:$0xff]
      %v606 = vld [vmem:[%s1 + $0x778] sm:$0xff]
      %v607 = vld [vmem:[%s1 + $0x780] sm:$0xff]
      %v608 = vld [vmem:[%s1 + $0x788] sm:$0xff]
      %v609 = vld [vmem:[%s1 + $0x790] sm:$0xff]
      %v610 = vld [vmem:[%s1 + $0x798] sm:$0xff]
      %v611 = vld [vmem:[%s1 + $0x7a0] sm:$0xff]
      %v612 = vld [vmem:[%s1 + $0x7a8] sm:$0xff]
      %v613 = vld [vmem:[%s1 + $0x7b0] sm:$0xff]
      %v614 = vld [vmem:[%s1 + $0x7b8] sm:$0xff]
      %v615 = vld [vmem:[%s1 + $0x7c0] sm:$0xff]
      %v616 = vld [vmem:[%s1 + $0x7c8] sm:$0xff]
      %v617 = vld [vmem:[%s1 + $0x7d0] sm:$0xff]
      %v618 = vld [vmem:[%s1 + $0x7d8] sm:$0xff]
      %v619 = vld [vmem:[%s1 + $0x7e0] sm:$0xff]
      %v620 = vld [vmem:[%s1 + $0x7e8] sm:$0xff]
      %v621 = vld [vmem:[%s1 + $0x7f0] sm:$0xff]
      %v622 = vld [vmem:[%s1 + $0x7f8] sm:$0xff]
      %v623 = vld [vmem:[%s1 + $0x800] sm:$0xff]
      %v624 = vld [vmem:[%s1 + $0x808] sm:$0xff]
      %v625 = vld [vmem:[%s1 + $0x810] sm:$0xff]
      %v626 = vld [vmem:[%s1 + $0x818] sm:$0xff]
      %v627 = vld [vmem:[%s1 + $0x820] sm:$0xff]
      %v628 = vld [vmem:[%s1 + $0x828] sm:$0xff]
      %v629 = vld [vmem:[%s1 + $0x830] sm:$0xff]
      %v630 = vld [vmem:[%s1 + $0x838] sm:$0xff]
      %v631 = vld [vmem:[%s1 + $0x840] sm:$0xff]
      %v632 = vld [vmem:[%s1 + $0x848] sm:$0xff]
      %v633 = vld [vmem:[%s1 + $0x850] sm:$0xff]
      %v634 = vld [vmem:[%s1 + $0x858] sm:$0xff]
      %v635 = vld [vmem:[%s1 + $0x860] sm:$0xff]
      %v636 = vld [vmem:[%s1 + $0x868] sm:$0xff]
      %v637 = vld [vmem:[%s1 + $0x870] sm:$0xff]
      %v638 = vld [vmem:[%s1 + $0x878] sm:$0xff]
      %v639 = vld [vmem:[%s1 + $0x880] sm:$0xff]
      %v640 = vld [vmem:[%s1 + $0x888] sm:$0xff]
      %v641 = vld [vmem:[%s1 + $0x890] sm:$0xff]
      %v642 = vld [vmem:[%s1 + $0x898] sm:$0xff]
      %v643 = vld [vmem:[%s1 + $0x8a0] sm:$0xff]
      %v644 = vld [vmem:[%s1 + $0x8a8] sm:$0xff]
      %v645 = vld [vmem:[%s1 + $0x8b0] sm:$0xff]
      %v646 = vld [vmem:[%s1 + $0x8b8] sm:$0xff]
      %v647 = vld [vmem:[%s1 + $0x8c0] sm:$0xff]
      %v648 = vld [vmem:[%s1 + $0x8c8] sm:$0xff]
      %v649 = vld [vmem:[%s1 + $0x8d0] sm:$0xff]
      %v650 = vld [vmem:[%s1 + $0x8d8] sm:$0xff]
      %v651 = vld [vmem:[%s1 + $0x8e0] sm:$0xff]
      %v652 = vld [vmem:[%s1 + $0x8e8] sm:$0xff]
      %v653 = vld [vmem:[%s1 + $0x8f0] sm:$0xff]
      %v654 = vld [vmem:[%s1 + $0x8f8] sm:$0xff]
      %v655 = vld [vmem:[%s1 + $0x900] sm:$0xff]
      %v656 = vld [vmem:[%s1 + $0x908] sm:$0xff]
      %v657 = vld [vmem:[%s1 + $0x910] sm:$0xff]
      %v658 = vld [vmem:[%s1 + $0x918] sm:$0xff]
      %v659 = vld [vmem:[%s1 + $0x920] sm:$0xff]
      %v660 = vld [vmem:[%s1 + $0x928] sm:$0xff]
      %v661 = vld [vmem:[%s1 + $0x930] sm:$0xff]
      %v662 = vld [vmem:[%s1 + $0x938] sm:$0xff]
      %v663 = vld [vmem:[%s1 + $0x940] sm:$0xff]
      %v664 = vld [vmem:[%s1 + $0x948] sm:$0xff]
      %v665 = vld [vmem:[%s1 + $0x950] sm:$0xff]
      %v666 = vld [vmem:[%s1 + $0x958] sm:$0xff]
      %v667 = vld [vmem:[%s1 + $0x960] sm:$0xff]
      %v668 = vld [vmem:[%s1 + $0x968] sm:$0xff]
      %v669 = vld [vmem:[%s1 + $0x970] sm:$0xff]
      %v670 = vld [vmem:[%s1 + $0x978] sm:$0xff]
      %v671 = vld [vmem:[%s1 + $0x980] sm:$0xff]
      %v672 = vld [vmem:[%s1 + $0x988] sm:$0xff]
      %v673 = vld [vmem:[%s1 + $0x990] sm:$0xff]
      %v674 = vld [vmem:[%s1 + $0x998] sm:$0xff]
      %v675 = vld [vmem:[%s1 + $0x9a0] sm:$0xff]
      %v676 = vld [vmem:[%s1 + $0x9a8] sm:$0xff]
      %v677 = vld [vmem:[%s1 + $0x9b0] sm:$0xff]
      %v678 = vld [vmem:[%s1 + $0x9b8] sm:$0xff]
      %v679 = vld [vmem:[%s1 + $0x9c0] sm:$0xff]
      %v680 = vld [vmem:[%s1 + $0x9c8] sm:$0xff]
      %v681 = vld [vmem:[%s1 + $0x9d0] sm:$0xff]
      %v682 = vld [vmem:[%s1 + $0x9d8] sm:$0xff]
      %v683 = vld [vmem:[%s1 + $0x9e0] sm:$0xff]
      %v684 = vld [vmem:[%s1 + $0x9e8] sm:$0xff]
      %v685 = vld [vmem:[%s1 + $0x9f0] sm:$0xff]
      %v686 = vld [vmem:[%s1 + $0x9f8] sm:$0xff]
      %v687 = vld [vmem:[%s1 + $0xa00] sm:$0xff]
      %v688 = vld [vmem:[%s1 + $0xa08] sm:$0xff]
      %v689 = vld [vmem:[%s1 + $0xa10] sm:$0xff]
      %v690 = vld [vmem:[%s1 + $0xa18] sm:$0xff]
      %v691 = vld [vmem:[%s1 + $0xa20] sm:$0xff]
      %v692 = vld [vmem:[%s1 + $0xa28] sm:$0xff]
      %v693 = vld [vmem:[%s1 + $0xa30] sm:$0xff]
      %v694 = vld [vmem:[%s1 + $0xa38] sm:$0xff]
      %v695 = vld [vmem:[%s1 + $0xa40] sm:$0xff]
      %v696 = vld [vmem:[%s1 + $0xa48] sm:$0xff]
      %v697 = vld [vmem:[%s1 + $0xa50] sm:$0xff]
      %v698 = vld [vmem:[%s1 + $0xa58] sm:$0xff]
      %v699 = vld [vmem:[%s1 + $0xa60] sm:$0xff]
      %v700 = vld [vmem:[%s1 + $0xa68] sm:$0xff]
      %v701 = vld [vmem:[%s1 + $0xa70] sm:$0xff]
      %v702 = vld [vmem:[%s1 + $0xa78] sm:$0xff]
      %v703 = vld [vmem:[%s1 + $0xa80] sm:$0xff]
      %v704 = vld [vmem:[%s1 + $0xa88] sm:$0xff]
      %v705 = vld [vmem:[%s1 + $0xa90] sm:$0xff]
      %v706 = vld [vmem:[%s1 + $0xa98] sm:$0xff]
      %v707 = vld [vmem:[%s1 + $0xaa0] sm:$0xff]
      %v708 = vld [vmem:[%s1 + $0xaa8] sm:$0xff]
      %v709 = vld [vmem:[%s1 + $0xab0] sm:$0xff]
      %v710 = vld [vmem:[%s1 + $0xab8] sm:$0xff]
      %v711 = vld [vmem:[%s1 + $0xac0] sm:$0xff]
      %v712 = vld [vmem:[%s1 + $0xac8] sm:$0xff]
      %v713 = vld [vmem:[%s1 + $0xad0] sm:$0xff]
      %v714 = vld [vmem:[%s1 + $0xad8] sm:$0xff]
      %v715 = vld [vmem:[%s1 + $0xae0] sm:$0xff]
      %v716 = vld [vmem:[%s1 + $0xae8] sm:$0xff]
      %v717 = vld [vmem:[%s1 + $0xaf0] sm:$0xff]
      %v718 = vld [vmem:[%s1 + $0xaf8] sm:$0xff]
      %v719 = vld [vmem:[%s1 + $0xb00] sm:$0xff]
      %v720 = vld [vmem:[%s1 + $0xb08] sm:$0xff]
      %v721 = vld [vmem:[%s1 + $0xb10] sm:$0xff]
      %v722 = vld [vmem:[%s1 + $0xb18] sm:$0xff]
      %v723 = vld [vmem:[%s1 + $0xb20] sm:$0xff]
      %v724 = vld [vmem:[%s1 + $0xb28] sm:$0xff]
      %v725 = vld [vmem:[%s1 + $0xb30] sm:$0xff]
      %v726 = vld [vmem:[%s1 + $0xb38] sm:$0xff]
      %v727 = vld [vmem:[%s1 + $0xb40] sm:$0xff]
      %v728 = vld [vmem:[%s1 + $0xb48] sm:$0xff]
      %v729 = vld [vmem:[%s1 + $0xb50] sm:$0xff]
      %v730 = vld [vmem:[%s1 + $0xb58] sm:$0xff]
      %v731 = vld [vmem:[%s1 + $0xb60] sm:$0xff]
      %v732 = vld [vmem:[%s1 + $0xb68] sm:$0xff]
      %v733 = vld [vmem:[%s1 + $0xb70] sm:$0xff]
      %v734 = vld [vmem:[%s1 + $0xb78] sm:$0xff]
      %v735 = vld [vmem:[%s1 + $0xb80] sm:$0xff]
      %v736 = vld [vmem:[%s1 + $0xb88] sm:$0xff]
      %v737 = vld [vmem:[%s1 + $0xb90] sm:$0xff]
      %v738 = vld [vmem:[%s1 + $0xb98] sm:$0xff]
      %v739 = vld [vmem:[%s1 + $0xba0] sm:$0xff]
      %v740 = vld [vmem:[%s1 + $0xba8] sm:$0xff]
      %v741 = vld [vmem:[%s1 + $0xbb0] sm:$0xff]
      %v742 = vld [vmem:[%s1 + $0xbb8] sm:$0xff]
      %v743 = vld [vmem:[%s1 + $0xbc0] sm:$0xff]
      %v744 = vld [vmem:[%s1 + $0xbc8] sm:$0xff]
      %v745 = vld [vmem:[%s1 + $0xbd0] sm:$0xff]
      %v746 = vld [vmem:[%s1 + $0xbd8] sm:$0xff]
      %v747 = vld [vmem:[%s1 + $0xbe0] sm:$0xff]
      %v748 = vld [vmem:[%s1 + $0xbe8] sm:$0xff]
      %v749 = vld [vmem:[%s1 + $0xbf0] sm:$0xff]
      %v750 = vld [vmem:[%s1 + $0xbf8] sm:$0xff]
      %v751 = vld [vmem:[%s1 + $0xc00] sm:$0xff]
      %v752 = vld [vmem:[%s1 + $0xc08] sm:$0xff]
      %v753 = vld [vmem:[%s1 + $0xc10] sm:$0xff]
      %v754 = vld [vmem:[%s1 + $0xc18] sm:$0xff]
      %v755 = vld [vmem:[%s1 + $0xc20] sm:$0xff]
      %v756 = vld [vmem:[%s1 + $0xc28] sm:$0xff]
      %v757 = vld [vmem:[%s1 + $0xc30] sm:$0xff]
      %v758 = vld [vmem:[%s1 + $0xc38] sm:$0xff]
      %v759 = vld [vmem:[%s2] sm:$0xff]
      %v761 = vperm.slane %v759, 0
      %v762 = vperm.slane %v759, 1
      %v763 = vperm.slane %v759, 2
      %v764 = vperm.slane %v759, 3
      %v765 = vperm.slane %v759, 4
      %v766 = vperm.slane %v759, 5
      %v767 = vperm.slane %v759, 6
      %v768 = vperm.slane %v759, 7
      %v841 = vunpack.c.l.b16 %v303
      %v842 = vunpack.c.h.b16 %v303
      %v843 = vunpack.c.l.b16 %v304
      %v844 = vunpack.c.h.b16 %v304
      %v845 = vunpack.c.l.b16 %v305
      %v846 = vunpack.c.h.b16 %v305
      %v847 = vunpack.c.l.b16 %v306
      %v848 = vunpack.c.l.b16 %v307
      %v849 = vunpack.c.h.b16 %v307
      %v850 = vunpack.c.l.b16 %v308
      %v851 = vunpack.c.h.b16 %v308
      %v852 = vunpack.c.l.b16 %v309
      %v853 = vunpack.c.h.b16 %v309
      %v854 = vunpack.c.l.b16 %v310
      %v855 = vunpack.c.l.b16 %v311
      %v856 = vunpack.c.h.b16 %v311
      %v857 = vunpack.c.l.b16 %v312
      %v858 = vunpack.c.h.b16 %v312
      %v859 = vunpack.c.l.b16 %v313
      %v860 = vunpack.c.h.b16 %v313
      %v861 = vunpack.c.l.b16 %v314
      %v862 = vunpack.c.l.b16 %v315
      %v863 = vunpack.c.h.b16 %v315
      %v864 = vunpack.c.l.b16 %v316
      %v865 = vunpack.c.h.b16 %v316
      %v866 = vunpack.c.l.b16 %v317
      %v867 = vunpack.c.h.b16 %v317
      %v868 = vunpack.c.l.b16 %v318
      %v869 = vunpack.c.l.b16 %v319
      %v870 = vunpack.c.h.b16 %v319
      %v871 = vunpack.c.l.b16 %v320
      %v872 = vunpack.c.h.b16 %v320
      %v873 = vunpack.c.l.b16 %v321
      %v874 = vunpack.c.h.b16 %v321
      %v875 = vunpack.c.l.b16 %v322
      %v876 = vunpack.c.l.b16 %v323
      %v877 = vunpack.c.h.b16 %v323
      %v878 = vunpack.c.l.b16 %v324
      %v879 = vunpack.c.h.b16 %v324
      %v880 = vunpack.c.l.b16 %v325
      %v881 = vunpack.c.h.b16 %v325
      %v882 = vunpack.c.l.b16 %v326
      %v883 = vunpack.c.l.b16 %v327
      %v884 = vunpack.c.h.b16 %v327
      %v885 = vunpack.c.l.b16 %v328
      %v886 = vunpack.c.h.b16 %v328
      %v887 = vunpack.c.l.b16 %v329
      %v888 = vunpack.c.h.b16 %v329
      %v889 = vunpack.c.l.b16 %v330
      %v890 = vunpack.c.l.b16 %v331
      %v891 = vunpack.c.h.b16 %v331
      %v892 = vunpack.c.l.b16 %v332
      %v893 = vunpack.c.h.b16 %v332
      %v894 = vunpack.c.l.b16 %v333
      %v895 = vunpack.c.h.b16 %v333
      %v896 = vunpack.c.l.b16 %v334
      %v897 = vunpack.c.l.b16 %v335
      %v898 = vunpack.c.h.b16 %v335
      %v899 = vunpack.c.l.b16 %v336
      %v900 = vunpack.c.h.b16 %v336
      %v901 = vunpack.c.l.b16 %v337
      %v902 = vunpack.c.h.b16 %v337
      %v903 = vunpack.c.l.b16 %v338
      %v904 = vunpack.c.l.b16 %v339
      %v905 = vunpack.c.h.b16 %v339
      %v906 = vunpack.c.l.b16 %v340
      %v907 = vunpack.c.h.b16 %v340
      %v908 = vunpack.c.l.b16 %v341
      %v909 = vunpack.c.h.b16 %v341
      %v910 = vunpack.c.l.b16 %v342
      %v911 = vunpack.c.l.b16 %v343
      %v912 = vunpack.c.h.b16 %v343
      %v913 = vunpack.c.l.b16 %v344
      %v914 = vunpack.c.h.b16 %v344
      %v915 = vunpack.c.l.b16 %v345
      %v916 = vunpack.c.h.b16 %v345
      %v917 = vunpack.c.l.b16 %v346
      %v918 = vunpack.c.l.b16 %v347
      %v919 = vunpack.c.h.b16 %v347
      %v920 = vunpack.c.l.b16 %v348
      %v921 = vunpack.c.h.b16 %v348
      %v922 = vunpack.c.l.b16 %v349
      %v923 = vunpack.c.h.b16 %v349
      %v924 = vunpack.c.l.b16 %v350
      %v925 = vunpack.c.l.b16 %v351
      %v926 = vunpack.c.h.b16 %v351
      %v927 = vunpack.c.l.b16 %v352
      %v928 = vunpack.c.h.b16 %v352
      %v929 = vunpack.c.l.b16 %v353
      %v930 = vunpack.c.h.b16 %v353
      %v931 = vunpack.c.l.b16 %v354
      %v932 = vunpack.c.l.b16 %v355
      %v933 = vunpack.c.h.b16 %v355
      %v934 = vunpack.c.l.b16 %v356
      %v935 = vunpack.c.h.b16 %v356
      %v936 = vunpack.c.l.b16 %v357
      %v937 = vunpack.c.h.b16 %v357
      %v938 = vunpack.c.l.b16 %v358
      %v939 = vunpack.c.l.b16 %v359
      %v940 = vunpack.c.h.b16 %v359
      %v941 = vunpack.c.l.b16 %v360
      %v942 = vunpack.c.h.b16 %v360
      %v943 = vunpack.c.l.b16 %v361
      %v944 = vunpack.c.h.b16 %v361
      %v945 = vunpack.c.l.b16 %v362
      %v946 = vunpack.c.l.b16 %v363
      %v947 = vunpack.c.h.b16 %v363
      %v948 = vunpack.c.l.b16 %v364
      %v949 = vunpack.c.h.b16 %v364
      %v950 = vunpack.c.l.b16 %v365
      %v951 = vunpack.c.h.b16 %v365
      %v952 = vunpack.c.l.b16 %v366
      %v953 = vpack.c.b16 %v848, %v841
      %v954 = vpack.c.b16 %v849, %v842
      %v955 = vpack.c.b16 %v850, %v843
      %v956 = vpack.c.b16 %v851, %v844
      %v957 = vpack.c.b16 %v852, %v845
      %v958 = vpack.c.b16 %v853, %v846
      %v959 = vpack.c.b16 %v854, %v847
      %v960 = vpack.c.b16 %v862, %v855
      %v961 = vpack.c.b16 %v863, %v856
      %v962 = vpack.c.b16 %v864, %v857
      %v963 = vpack.c.b16 %v865, %v858
      %v964 = vpack.c.b16 %v866, %v859
      %v965 = vpack.c.b16 %v867, %v860
      %v966 = vpack.c.b16 %v868, %v861
      %v967 = vpack.c.b16 %v876, %v869
      %v968 = vpack.c.b16 %v877, %v870
      %v969 = vpack.c.b16 %v878, %v871
      %v970 = vpack.c.b16 %v879, %v872
      %v971 = vpack.c.b16 %v880, %v873
      %v972 = vpack.c.b16 %v881, %v874
      %v973 = vpack.c.b16 %v882, %v875
      %v974 = vpack.c.b16 %v890, %v883
      %v975 = vpack.c.b16 %v891, %v884
      %v976 = vpack.c.b16 %v892, %v885
      %v977 = vpack.c.b16 %v893, %v886
      %v978 = vpack.c.b16 %v894, %v887
      %v979 = vpack.c.b16 %v895, %v888
      %v980 = vpack.c.b16 %v896, %v889
      %v981 = vpack.c.b16 %v904, %v897
      %v982 = vpack.c.b16 %v905, %v898
      %v983 = vpack.c.b16 %v906, %v899
      %v984 = vpack.c.b16 %v907, %v900
      %v985 = vpack.c.b16 %v908, %v901
      %v986 = vpack.c.b16 %v909, %v902
      %v987 = vpack.c.b16 %v910, %v903
      %v988 = vpack.c.b16 %v918, %v911
      %v989 = vpack.c.b16 %v919, %v912
      %v990 = vpack.c.b16 %v920, %v913
      %v991 = vpack.c.b16 %v921, %v914
      %v992 = vpack.c.b16 %v922, %v915
      %v993 = vpack.c.b16 %v923, %v916
      %v994 = vpack.c.b16 %v924, %v917
      %v995 = vpack.c.b16 %v932, %v925
      %v996 = vpack.c.b16 %v933, %v926
      %v997 = vpack.c.b16 %v934, %v927
      %v998 = vpack.c.b16 %v935, %v928
      %v999 = vpack.c.b16 %v936, %v929
      %v1000 = vpack.c.b16 %v937, %v930
      %v1001 = vpack.c.b16 %v938, %v931
      %v1002 = vpack.c.b16 %v946, %v939
      %v1003 = vpack.c.b16 %v947, %v940
      %v1004 = vpack.c.b16 %v948, %v941
      %v1005 = vpack.c.b16 %v949, %v942
      %v1006 = vpack.c.b16 %v950, %v943
      %v1007 = vpack.c.b16 %v951, %v944
      %v1008 = vpack.c.b16 %v952, %v945
      %v1449 = vunpack.c.l.b16 %v367
      %v1450 = vunpack.c.h.b16 %v367
      %v1451 = vunpack.c.l.b16 %v368
      %v1452 = vunpack.c.h.b16 %v368
      %v1453 = vunpack.c.l.b16 %v369
      %v1454 = vunpack.c.h.b16 %v369
      %v1455 = vunpack.c.l.b16 %v370
      %v1456 = vunpack.c.h.b16 %v370
      %v1457 = vunpack.c.l.b16 %v371
      %v1458 = vunpack.c.h.b16 %v371
      %v1459 = vunpack.c.l.b16 %v372
      %v1460 = vunpack.c.h.b16 %v372
      %v1461 = vunpack.c.l.b16 %v373
      %v1462 = vunpack.c.h.b16 %v373
      %v1463 = vunpack.c.l.b16 %v374
      %v1464 = vunpack.c.h.b16 %v374
      %v1465 = vunpack.c.l.b16 %v375
      %v1466 = vunpack.c.h.b16 %v375
      %v1467 = vunpack.c.l.b16 %v376
      %v1468 = vunpack.c.h.b16 %v376
      %v1469 = vunpack.c.l.b16 %v377
      %v1470 = vunpack.c.h.b16 %v377
      %v1471 = vunpack.c.l.b16 %v378
      %v1472 = vunpack.c.h.b16 %v378
      %v1473 = vunpack.c.l.b16 %v379
      %v1474 = vunpack.c.h.b16 %v379
      %v1475 = vunpack.c.l.b16 %v380
      %v1476 = vunpack.c.h.b16 %v380
      %v1477 = vunpack.c.l.b16 %v381
      %v1478 = vunpack.c.h.b16 %v381
      %v1479 = vunpack.c.l.b16 %v382
      %v1480 = vunpack.c.h.b16 %v382
      %v1481 = vunpack.c.l.b16 %v383
      %v1482 = vunpack.c.h.b16 %v383
      %v1483 = vunpack.c.l.b16 %v384
      %v1484 = vunpack.c.h.b16 %v384
      %v1485 = vunpack.c.l.b16 %v385
      %v1486 = vunpack.c.h.b16 %v385
      %v1487 = vunpack.c.l.b16 %v386
      %v1488 = vunpack.c.h.b16 %v386
      %v1489 = vunpack.c.l.b16 %v387
      %v1490 = vunpack.c.h.b16 %v387
      %v1491 = vunpack.c.l.b16 %v388
      %v1492 = vunpack.c.h.b16 %v388
      %v1493 = vunpack.c.l.b16 %v389
      %v1494 = vunpack.c.h.b16 %v389
      %v1495 = vunpack.c.l.b16 %v390
      %v1496 = vunpack.c.h.b16 %v390
      %v1497 = vunpack.c.l.b16 %v391
      %v1498 = vunpack.c.h.b16 %v391
      %v1499 = vunpack.c.l.b16 %v392
      %v1500 = vunpack.c.h.b16 %v392
      %v1501 = vunpack.c.l.b16 %v393
      %v1502 = vunpack.c.h.b16 %v393
      %v1503 = vunpack.c.l.b16 %v394
      %v1504 = vunpack.c.h.b16 %v394
      %v1505 = vunpack.c.l.b16 %v395
      %v1506 = vunpack.c.h.b16 %v395
      %v1507 = vunpack.c.l.b16 %v396
      %v1508 = vunpack.c.h.b16 %v396
      %v1509 = vunpack.c.l.b16 %v397
      %v1510 = vunpack.c.h.b16 %v397
      %v1511 = vunpack.c.l.b16 %v398
      %v1512 = vunpack.c.h.b16 %v398
      %v1513 = vunpack.c.l.b16 %v399
      %v1514 = vunpack.c.h.b16 %v399
      %v1515 = vunpack.c.l.b16 %v400
      %v1516 = vunpack.c.h.b16 %v400
      %v1517 = vunpack.c.l.b16 %v401
      %v1518 = vunpack.c.h.b16 %v401
      %v1519 = vunpack.c.l.b16 %v402
      %v1520 = vunpack.c.h.b16 %v402
      %v1521 = vunpack.c.l.b16 %v403
      %v1522 = vunpack.c.h.b16 %v403
      %v1523 = vunpack.c.l.b16 %v404
      %v1524 = vunpack.c.h.b16 %v404
      %v1525 = vunpack.c.l.b16 %v405
      %v1526 = vunpack.c.h.b16 %v405
      %v1527 = vunpack.c.l.b16 %v406
      %v1528 = vunpack.c.h.b16 %v406
      %v1529 = vunpack.c.l.b16 %v407
      %v1530 = vunpack.c.h.b16 %v407
      %v1531 = vunpack.c.l.b16 %v408
      %v1532 = vunpack.c.h.b16 %v408
      %v1533 = vunpack.c.l.b16 %v409
      %v1534 = vunpack.c.h.b16 %v409
      %v1535 = vunpack.c.l.b16 %v410
      %v1536 = vunpack.c.h.b16 %v410
      %v1537 = vunpack.c.l.b16 %v411
      %v1538 = vunpack.c.h.b16 %v411
      %v1539 = vunpack.c.l.b16 %v412
      %v1540 = vunpack.c.h.b16 %v412
      %v1541 = vunpack.c.l.b16 %v413
      %v1542 = vunpack.c.h.b16 %v413
      %v1543 = vunpack.c.l.b16 %v414
      %v1544 = vunpack.c.h.b16 %v414
      %v1545 = vunpack.c.l.b16 %v415
      %v1546 = vunpack.c.h.b16 %v415
      %v1547 = vunpack.c.l.b16 %v416
      %v1548 = vunpack.c.h.b16 %v416
      %v1549 = vunpack.c.l.b16 %v417
      %v1550 = vunpack.c.h.b16 %v417
      %v1551 = vunpack.c.l.b16 %v418
      %v1552 = vunpack.c.h.b16 %v418
      %v1553 = vunpack.c.l.b16 %v419
      %v1554 = vunpack.c.h.b16 %v419
      %v1555 = vunpack.c.l.b16 %v420
      %v1556 = vunpack.c.h.b16 %v420
      %v1557 = vunpack.c.l.b16 %v421
      %v1558 = vunpack.c.h.b16 %v421
      %v1559 = vunpack.c.l.b16 %v422
      %v1560 = vunpack.c.h.b16 %v422
      %v1561 = vunpack.c.l.b16 %v423
      %v1562 = vunpack.c.h.b16 %v423
      %v1563 = vunpack.c.l.b16 %v424
      %v1564 = vunpack.c.h.b16 %v424
      %v1565 = vunpack.c.l.b16 %v425
      %v1566 = vunpack.c.h.b16 %v425
      %v1567 = vunpack.c.l.b16 %v426
      %v1568 = vunpack.c.h.b16 %v426
      %v1569 = vunpack.c.l.b16 %v427
      %v1570 = vunpack.c.h.b16 %v427
      %v1571 = vunpack.c.l.b16 %v428
      %v1572 = vunpack.c.h.b16 %v428
      %v1573 = vunpack.c.l.b16 %v429
      %v1574 = vunpack.c.h.b16 %v429
      %v1575 = vunpack.c.l.b16 %v430
      %v1576 = vunpack.c.h.b16 %v430
      %v1577 = vunpack.c.l.b16 %v431
      %v1578 = vunpack.c.h.b16 %v431
      %v1579 = vunpack.c.l.b16 %v432
      %v1580 = vunpack.c.h.b16 %v432
      %v1581 = vunpack.c.l.b16 %v433
      %v1582 = vunpack.c.h.b16 %v433
      %v1583 = vunpack.c.l.b16 %v434
      %v1584 = vunpack.c.h.b16 %v434
      %v1585 = vunpack.c.l.b16 %v435
      %v1586 = vunpack.c.h.b16 %v435
      %v1587 = vunpack.c.l.b16 %v436
      %v1588 = vunpack.c.h.b16 %v436
      %v1589 = vunpack.c.l.b16 %v437
      %v1590 = vunpack.c.h.b16 %v437
      %v1591 = vunpack.c.l.b16 %v438
      %v1592 = vunpack.c.h.b16 %v438
      %v1593 = vunpack.c.l.b16 %v439
      %v1594 = vunpack.c.h.b16 %v439
      %v1595 = vunpack.c.l.b16 %v440
      %v1596 = vunpack.c.h.b16 %v440
      %v1597 = vunpack.c.l.b16 %v441
      %v1598 = vunpack.c.h.b16 %v441
      %v1599 = vunpack.c.l.b16 %v442
      %v1600 = vunpack.c.h.b16 %v442
      %v1601 = vunpack.c.l.b16 %v443
      %v1602 = vunpack.c.h.b16 %v443
      %v1603 = vunpack.c.l.b16 %v444
      %v1604 = vunpack.c.h.b16 %v444
      %v1605 = vunpack.c.l.b16 %v445
      %v1606 = vunpack.c.h.b16 %v445
      %v1607 = vunpack.c.l.b16 %v446
      %v1608 = vunpack.c.h.b16 %v446
      %v1609 = vunpack.c.l.b16 %v447
      %v1610 = vunpack.c.h.b16 %v447
      %v1611 = vunpack.c.l.b16 %v448
      %v1612 = vunpack.c.h.b16 %v448
      %v1613 = vunpack.c.l.b16 %v449
      %v1614 = vunpack.c.h.b16 %v449
      %v1615 = vunpack.c.l.b16 %v450
      %v1616 = vunpack.c.h.b16 %v450
      %v1617 = vunpack.c.l.b16 %v451
      %v1618 = vunpack.c.h.b16 %v451
      %v1619 = vunpack.c.l.b16 %v452
      %v1620 = vunpack.c.h.b16 %v452
      %v1621 = vunpack.c.l.b16 %v453
      %v1622 = vunpack.c.h.b16 %v453
      %v1623 = vunpack.c.l.b16 %v454
      %v1624 = vunpack.c.h.b16 %v454
      %v1625 = vunpack.c.l.b16 %v455
      %v1626 = vunpack.c.h.b16 %v455
      %v1627 = vunpack.c.l.b16 %v456
      %v1628 = vunpack.c.h.b16 %v456
      %v1629 = vunpack.c.l.b16 %v457
      %v1630 = vunpack.c.h.b16 %v457
      %v1631 = vunpack.c.l.b16 %v458
      %v1632 = vunpack.c.h.b16 %v458
      %v1633 = vunpack.c.l.b16 %v459
      %v1634 = vunpack.c.h.b16 %v459
      %v1635 = vunpack.c.l.b16 %v460
      %v1636 = vunpack.c.h.b16 %v460
      %v1637 = vunpack.c.l.b16 %v461
      %v1638 = vunpack.c.h.b16 %v461
      %v1639 = vunpack.c.l.b16 %v462
      %v1640 = vunpack.c.h.b16 %v462
      %v1641 = vunpack.c.l.b16 %v463
      %v1642 = vunpack.c.h.b16 %v463
      %v1643 = vunpack.c.l.b16 %v464
      %v1644 = vunpack.c.h.b16 %v464
      %v1645 = vunpack.c.l.b16 %v465
      %v1646 = vunpack.c.h.b16 %v465
      %v1647 = vunpack.c.l.b16 %v466
      %v1648 = vunpack.c.h.b16 %v466
      %v1649 = vunpack.c.l.b16 %v467
      %v1650 = vunpack.c.h.b16 %v467
      %v1651 = vunpack.c.l.b16 %v468
      %v1652 = vunpack.c.h.b16 %v468
      %v1653 = vunpack.c.l.b16 %v469
      %v1654 = vunpack.c.h.b16 %v469
      %v1655 = vunpack.c.l.b16 %v470
      %v1656 = vunpack.c.h.b16 %v470
      %v1657 = vunpack.c.l.b16 %v471
      %v1658 = vunpack.c.h.b16 %v471
      %v1659 = vunpack.c.l.b16 %v472
      %v1660 = vunpack.c.h.b16 %v472
      %v1661 = vunpack.c.l.b16 %v473
      %v1662 = vunpack.c.h.b16 %v473
      %v1663 = vunpack.c.l.b16 %v474
      %v1664 = vunpack.c.h.b16 %v474
      %v1665 = vunpack.c.l.b16 %v475
      %v1666 = vunpack.c.h.b16 %v475
      %v1667 = vunpack.c.l.b16 %v476
      %v1668 = vunpack.c.h.b16 %v476
      %v1669 = vunpack.c.l.b16 %v477
      %v1670 = vunpack.c.h.b16 %v477
      %v1671 = vunpack.c.l.b16 %v478
      %v1672 = vunpack.c.h.b16 %v478
      %v1673 = vunpack.c.l.b16 %v479
      %v1674 = vunpack.c.h.b16 %v479
      %v1675 = vunpack.c.l.b16 %v480
      %v1676 = vunpack.c.h.b16 %v480
      %v1677 = vunpack.c.l.b16 %v481
      %v1678 = vunpack.c.h.b16 %v481
      %v1679 = vunpack.c.l.b16 %v482
      %v1680 = vunpack.c.h.b16 %v482
      %v1681 = vunpack.c.l.b16 %v483
      %v1682 = vunpack.c.h.b16 %v483
      %v1683 = vunpack.c.l.b16 %v484
      %v1684 = vunpack.c.h.b16 %v484
      %v1685 = vunpack.c.l.b16 %v485
      %v1686 = vunpack.c.h.b16 %v485
      %v1687 = vunpack.c.l.b16 %v486
      %v1688 = vunpack.c.h.b16 %v486
      %v1689 = vunpack.c.l.b16 %v487
      %v1690 = vunpack.c.h.b16 %v487
      %v1691 = vunpack.c.l.b16 %v488
      %v1692 = vunpack.c.h.b16 %v488
      %v1693 = vunpack.c.l.b16 %v489
      %v1694 = vunpack.c.h.b16 %v489
      %v1695 = vunpack.c.l.b16 %v490
      %v1696 = vunpack.c.h.b16 %v490
      %v1697 = vunpack.c.l.b16 %v491
      %v1698 = vunpack.c.h.b16 %v491
      %v1699 = vunpack.c.l.b16 %v492
      %v1700 = vunpack.c.h.b16 %v492
      %v1701 = vunpack.c.l.b16 %v493
      %v1702 = vunpack.c.h.b16 %v493
      %v1703 = vunpack.c.l.b16 %v494
      %v1704 = vunpack.c.h.b16 %v494
      %v1705 = vunpack.c.l.b16 %v495
      %v1706 = vunpack.c.h.b16 %v495
      %v1707 = vunpack.c.l.b16 %v496
      %v1708 = vunpack.c.h.b16 %v496
      %v1709 = vunpack.c.l.b16 %v497
      %v1710 = vunpack.c.h.b16 %v497
      %v1711 = vunpack.c.l.b16 %v498
      %v1712 = vunpack.c.h.b16 %v498
      %v1713 = vunpack.c.l.b16 %v499
      %v1714 = vunpack.c.h.b16 %v499
      %v1715 = vunpack.c.l.b16 %v500
      %v1716 = vunpack.c.h.b16 %v500
      %v1717 = vunpack.c.l.b16 %v501
      %v1718 = vunpack.c.h.b16 %v501
      %v1719 = vunpack.c.l.b16 %v502
      %v1720 = vunpack.c.h.b16 %v502
      %v1721 = vunpack.c.l.b16 %v503
      %v1722 = vunpack.c.h.b16 %v503
      %v1723 = vunpack.c.l.b16 %v504
      %v1724 = vunpack.c.h.b16 %v504
      %v1725 = vunpack.c.l.b16 %v505
      %v1726 = vunpack.c.h.b16 %v505
      %v1727 = vunpack.c.l.b16 %v506
      %v1728 = vunpack.c.h.b16 %v506
      %v1729 = vunpack.c.l.b16 %v507
      %v1730 = vunpack.c.h.b16 %v507
      %v1731 = vunpack.c.l.b16 %v508
      %v1732 = vunpack.c.h.b16 %v508
      %v1733 = vunpack.c.l.b16 %v509
      %v1734 = vunpack.c.h.b16 %v509
      %v1735 = vunpack.c.l.b16 %v510
      %v1736 = vunpack.c.h.b16 %v510
      %v1737 = vunpack.c.l.b16 %v511
      %v1738 = vunpack.c.h.b16 %v511
      %v1739 = vunpack.c.l.b16 %v512
      %v1740 = vunpack.c.h.b16 %v512
      %v1741 = vunpack.c.l.b16 %v513
      %v1742 = vunpack.c.h.b16 %v513
      %v1743 = vunpack.c.l.b16 %v514
      %v1744 = vunpack.c.h.b16 %v514
      %v1745 = vunpack.c.l.b16 %v515
      %v1746 = vunpack.c.h.b16 %v515
      %v1747 = vunpack.c.l.b16 %v516
      %v1748 = vunpack.c.h.b16 %v516
      %v1749 = vunpack.c.l.b16 %v517
      %v1750 = vunpack.c.h.b16 %v517
      %v1751 = vunpack.c.l.b16 %v518
      %v1752 = vunpack.c.h.b16 %v518
      %v1753 = vunpack.c.l.b16 %v519
      %v1754 = vunpack.c.h.b16 %v519
      %v1755 = vunpack.c.l.b16 %v520
      %v1756 = vunpack.c.h.b16 %v520
      %v1757 = vunpack.c.l.b16 %v521
      %v1758 = vunpack.c.h.b16 %v521
      %v1759 = vunpack.c.l.b16 %v522
      %v1760 = vunpack.c.h.b16 %v522
      %v1761 = vunpack.c.l.b16 %v523
      %v1762 = vunpack.c.h.b16 %v523
      %v1763 = vunpack.c.l.b16 %v524
      %v1764 = vunpack.c.h.b16 %v524
      %v1765 = vunpack.c.l.b16 %v525
      %v1766 = vunpack.c.h.b16 %v525
      %v1767 = vunpack.c.l.b16 %v526
      %v1768 = vunpack.c.h.b16 %v526
      %v1769 = vunpack.c.l.b16 %v527
      %v1770 = vunpack.c.h.b16 %v527
      %v1771 = vunpack.c.l.b16 %v528
      %v1772 = vunpack.c.h.b16 %v528
      %v1773 = vunpack.c.l.b16 %v529
      %v1774 = vunpack.c.h.b16 %v529
      %v1775 = vunpack.c.l.b16 %v530
      %v1776 = vunpack.c.h.b16 %v530
      %v1777 = vunpack.c.l.b16 %v531
      %v1778 = vunpack.c.h.b16 %v531
      %v1779 = vunpack.c.l.b16 %v532
      %v1780 = vunpack.c.h.b16 %v532
      %v1781 = vunpack.c.l.b16 %v533
      %v1782 = vunpack.c.h.b16 %v533
      %v1783 = vunpack.c.l.b16 %v534
      %v1784 = vunpack.c.h.b16 %v534
      %v1785 = vunpack.c.l.b16 %v535
      %v1786 = vunpack.c.h.b16 %v535
      %v1787 = vunpack.c.l.b16 %v536
      %v1788 = vunpack.c.h.b16 %v536
      %v1789 = vunpack.c.l.b16 %v537
      %v1790 = vunpack.c.h.b16 %v537
      %v1791 = vunpack.c.l.b16 %v538
      %v1792 = vunpack.c.h.b16 %v538
      %v1793 = vunpack.c.l.b16 %v539
      %v1794 = vunpack.c.h.b16 %v539
      %v1795 = vunpack.c.l.b16 %v540
      %v1796 = vunpack.c.h.b16 %v540
      %v1797 = vunpack.c.l.b16 %v541
      %v1798 = vunpack.c.h.b16 %v541
      %v1799 = vunpack.c.l.b16 %v542
      %v1800 = vunpack.c.h.b16 %v542
      %v1801 = vunpack.c.l.b16 %v543
      %v1802 = vunpack.c.h.b16 %v543
      %v1803 = vunpack.c.l.b16 %v544
      %v1804 = vunpack.c.h.b16 %v544
      %v1805 = vunpack.c.l.b16 %v545
      %v1806 = vunpack.c.h.b16 %v545
      %v1807 = vunpack.c.l.b16 %v546
      %v1808 = vunpack.c.h.b16 %v546
      %v1809 = vunpack.c.l.b16 %v547
      %v1810 = vunpack.c.h.b16 %v547
      %v1811 = vunpack.c.l.b16 %v548
      %v1812 = vunpack.c.h.b16 %v548
      %v1813 = vunpack.c.l.b16 %v549
      %v1814 = vunpack.c.h.b16 %v549
      %v1815 = vunpack.c.l.b16 %v550
      %v1816 = vunpack.c.h.b16 %v550
      %v1817 = vunpack.c.l.b16 %v551
      %v1818 = vunpack.c.h.b16 %v551
      %v1819 = vunpack.c.l.b16 %v552
      %v1820 = vunpack.c.h.b16 %v552
      %v1821 = vunpack.c.l.b16 %v553
      %v1822 = vunpack.c.h.b16 %v553
      %v1823 = vunpack.c.l.b16 %v554
      %v1824 = vunpack.c.h.b16 %v554
      %v1825 = vunpack.c.l.b16 %v555
      %v1826 = vunpack.c.h.b16 %v555
      %v1827 = vunpack.c.l.b16 %v556
      %v1828 = vunpack.c.h.b16 %v556
      %v1829 = vunpack.c.l.b16 %v557
      %v1830 = vunpack.c.h.b16 %v557
      %v1831 = vunpack.c.l.b16 %v558
      %v1832 = vunpack.c.h.b16 %v558
      %v1833 = vunpack.c.l.b16 %v559
      %v1834 = vunpack.c.h.b16 %v559
      %v1835 = vunpack.c.l.b16 %v560
      %v1836 = vunpack.c.h.b16 %v560
      %v1837 = vunpack.c.l.b16 %v561
      %v1838 = vunpack.c.h.b16 %v561
      %v1839 = vunpack.c.l.b16 %v562
      %v1840 = vunpack.c.h.b16 %v562
      %v1841 = vunpack.c.l.b16 %v563
      %v1842 = vunpack.c.h.b16 %v563
      %v1843 = vunpack.c.l.b16 %v564
      %v1844 = vunpack.c.h.b16 %v564
      %v1845 = vunpack.c.l.b16 %v565
      %v1846 = vunpack.c.h.b16 %v565
      %v1847 = vunpack.c.l.b16 %v566
      %v1848 = vunpack.c.h.b16 %v566
      %v1849 = vunpack.c.l.b16 %v567
      %v1850 = vunpack.c.h.b16 %v567
      %v1851 = vunpack.c.l.b16 %v568
      %v1852 = vunpack.c.h.b16 %v568
      %v1853 = vunpack.c.l.b16 %v569
      %v1854 = vunpack.c.h.b16 %v569
      %v1855 = vunpack.c.l.b16 %v570
      %v1856 = vunpack.c.h.b16 %v570
      %v1857 = vunpack.c.l.b16 %v571
      %v1858 = vunpack.c.h.b16 %v571
      %v1859 = vunpack.c.l.b16 %v572
      %v1860 = vunpack.c.h.b16 %v572
      %v1861 = vunpack.c.l.b16 %v573
      %v1862 = vunpack.c.h.b16 %v573
      %v1863 = vunpack.c.l.b16 %v574
      %v1864 = vunpack.c.h.b16 %v574
      %v1865 = vunpack.c.l.b16 %v575
      %v1866 = vunpack.c.h.b16 %v575
      %v1867 = vunpack.c.l.b16 %v576
      %v1868 = vunpack.c.h.b16 %v576
      %v1869 = vunpack.c.l.b16 %v577
      %v1870 = vunpack.c.h.b16 %v577
      %v1871 = vunpack.c.l.b16 %v578
      %v1872 = vunpack.c.h.b16 %v578
      %v1873 = vunpack.c.l.b16 %v579
      %v1874 = vunpack.c.h.b16 %v579
      %v1875 = vunpack.c.l.b16 %v580
      %v1876 = vunpack.c.h.b16 %v580
      %v1877 = vunpack.c.l.b16 %v581
      %v1878 = vunpack.c.h.b16 %v581
      %v1879 = vunpack.c.l.b16 %v582
      %v1880 = vunpack.c.h.b16 %v582
      %v1881 = vunpack.c.l.b16 %v583
      %v1882 = vunpack.c.h.b16 %v583
      %v1883 = vunpack.c.l.b16 %v584
      %v1884 = vunpack.c.h.b16 %v584
      %v1885 = vunpack.c.l.b16 %v585
      %v1886 = vunpack.c.h.b16 %v585
      %v1887 = vunpack.c.l.b16 %v586
      %v1888 = vunpack.c.h.b16 %v586
      %v1889 = vunpack.c.l.b16 %v587
      %v1890 = vunpack.c.h.b16 %v587
      %v1891 = vunpack.c.l.b16 %v588
      %v1892 = vunpack.c.h.b16 %v588
      %v1893 = vunpack.c.l.b16 %v589
      %v1894 = vunpack.c.h.b16 %v589
      %v1895 = vunpack.c.l.b16 %v590
      %v1896 = vunpack.c.h.b16 %v590
      %v1897 = vunpack.c.l.b16 %v591
      %v1898 = vunpack.c.h.b16 %v591
      %v1899 = vunpack.c.l.b16 %v592
      %v1900 = vunpack.c.h.b16 %v592
      %v1901 = vunpack.c.l.b16 %v593
      %v1902 = vunpack.c.h.b16 %v593
      %v1903 = vunpack.c.l.b16 %v594
      %v1904 = vunpack.c.h.b16 %v594
      %v1905 = vunpack.c.l.b16 %v595
      %v1906 = vunpack.c.h.b16 %v595
      %v1907 = vunpack.c.l.b16 %v596
      %v1908 = vunpack.c.h.b16 %v596
      %v1909 = vunpack.c.l.b16 %v597
      %v1910 = vunpack.c.h.b16 %v597
      %v1911 = vunpack.c.l.b16 %v598
      %v1912 = vunpack.c.h.b16 %v598
      %v1913 = vunpack.c.l.b16 %v599
      %v1914 = vunpack.c.h.b16 %v599
      %v1915 = vunpack.c.l.b16 %v600
      %v1916 = vunpack.c.h.b16 %v600
      %v1917 = vunpack.c.l.b16 %v601
      %v1918 = vunpack.c.h.b16 %v601
      %v1919 = vunpack.c.l.b16 %v602
      %v1920 = vunpack.c.h.b16 %v602
      %v1921 = vunpack.c.l.b16 %v603
      %v1922 = vunpack.c.h.b16 %v603
      %v1923 = vunpack.c.l.b16 %v604
      %v1924 = vunpack.c.h.b16 %v604
      %v1925 = vunpack.c.l.b16 %v605
      %v1926 = vunpack.c.h.b16 %v605
      %v1927 = vunpack.c.l.b16 %v606
      %v1928 = vunpack.c.h.b16 %v606
      %v1929 = vunpack.c.l.b16 %v607
      %v1930 = vunpack.c.h.b16 %v607
      %v1931 = vunpack.c.l.b16 %v608
      %v1932 = vunpack.c.h.b16 %v608
      %v1933 = vunpack.c.l.b16 %v609
      %v1934 = vunpack.c.h.b16 %v609
      %v1935 = vunpack.c.l.b16 %v610
      %v1936 = vunpack.c.h.b16 %v610
      %v1937 = vunpack.c.l.b16 %v611
      %v1938 = vunpack.c.h.b16 %v611
      %v1939 = vunpack.c.l.b16 %v612
      %v1940 = vunpack.c.h.b16 %v612
      %v1941 = vunpack.c.l.b16 %v613
      %v1942 = vunpack.c.h.b16 %v613
      %v1943 = vunpack.c.l.b16 %v614
      %v1944 = vunpack.c.h.b16 %v614
      %v1945 = vunpack.c.l.b16 %v615
      %v1946 = vunpack.c.h.b16 %v615
      %v1947 = vunpack.c.l.b16 %v616
      %v1948 = vunpack.c.h.b16 %v616
      %v1949 = vunpack.c.l.b16 %v617
      %v1950 = vunpack.c.h.b16 %v617
      %v1951 = vunpack.c.l.b16 %v618
      %v1952 = vunpack.c.h.b16 %v618
      %v1953 = vunpack.c.l.b16 %v619
      %v1954 = vunpack.c.h.b16 %v619
      %v1955 = vunpack.c.l.b16 %v620
      %v1956 = vunpack.c.h.b16 %v620
      %v1957 = vunpack.c.l.b16 %v621
      %v1958 = vunpack.c.h.b16 %v621
      %v1959 = vunpack.c.l.b16 %v622
      %v1960 = vunpack.c.h.b16 %v622
      %v1961 = vunpack.c.l.b16 %v623
      %v1962 = vunpack.c.h.b16 %v623
      %v1963 = vunpack.c.l.b16 %v624
      %v1964 = vunpack.c.h.b16 %v624
      %v1965 = vunpack.c.l.b16 %v625
      %v1966 = vunpack.c.h.b16 %v625
      %v1967 = vunpack.c.l.b16 %v626
      %v1968 = vunpack.c.h.b16 %v626
      %v1969 = vunpack.c.l.b16 %v627
      %v1970 = vunpack.c.h.b16 %v627
      %v1971 = vunpack.c.l.b16 %v628
      %v1972 = vunpack.c.h.b16 %v628
      %v1973 = vunpack.c.l.b16 %v629
      %v1974 = vunpack.c.h.b16 %v629
      %v1975 = vunpack.c.l.b16 %v630
      %v1976 = vunpack.c.h.b16 %v630
      %v1977 = vunpack.c.l.b16 %v631
      %v1978 = vunpack.c.h.b16 %v631
      %v1979 = vunpack.c.l.b16 %v632
      %v1980 = vunpack.c.h.b16 %v632
      %v1981 = vunpack.c.l.b16 %v633
      %v1982 = vunpack.c.h.b16 %v633
      %v1983 = vunpack.c.l.b16 %v634
      %v1984 = vunpack.c.h.b16 %v634
      %v1985 = vunpack.c.l.b16 %v635
      %v1986 = vunpack.c.h.b16 %v635
      %v1987 = vunpack.c.l.b16 %v636
      %v1988 = vunpack.c.h.b16 %v636
      %v1989 = vunpack.c.l.b16 %v637
      %v1990 = vunpack.c.h.b16 %v637
      %v1991 = vunpack.c.l.b16 %v638
      %v1992 = vunpack.c.h.b16 %v638
      %v1993 = vunpack.c.l.b16 %v639
      %v1994 = vunpack.c.h.b16 %v639
      %v1995 = vunpack.c.l.b16 %v640
      %v1996 = vunpack.c.h.b16 %v640
      %v1997 = vunpack.c.l.b16 %v641
      %v1998 = vunpack.c.h.b16 %v641
      %v1999 = vunpack.c.l.b16 %v642
      %v2000 = vunpack.c.h.b16 %v642
      %v2001 = vunpack.c.l.b16 %v643
      %v2002 = vunpack.c.h.b16 %v643
      %v2003 = vunpack.c.l.b16 %v644
      %v2004 = vunpack.c.h.b16 %v644
      %v2005 = vunpack.c.l.b16 %v645
      %v2006 = vunpack.c.h.b16 %v645
      %v2007 = vunpack.c.l.b16 %v646
      %v2008 = vunpack.c.h.b16 %v646
      %v2009 = vunpack.c.l.b16 %v647
      %v2010 = vunpack.c.h.b16 %v647
      %v2011 = vunpack.c.l.b16 %v648
      %v2012 = vunpack.c.h.b16 %v648
      %v2013 = vunpack.c.l.b16 %v649
      %v2014 = vunpack.c.h.b16 %v649
      %v2015 = vunpack.c.l.b16 %v650
      %v2016 = vunpack.c.h.b16 %v650
      %v2017 = vunpack.c.l.b16 %v651
      %v2018 = vunpack.c.h.b16 %v651
      %v2019 = vunpack.c.l.b16 %v652
      %v2020 = vunpack.c.h.b16 %v652
      %v2021 = vunpack.c.l.b16 %v653
      %v2022 = vunpack.c.h.b16 %v653
      %v2023 = vunpack.c.l.b16 %v654
      %v2024 = vunpack.c.h.b16 %v654
      %v2025 = vunpack.c.l.b16 %v655
      %v2026 = vunpack.c.h.b16 %v655
      %v2027 = vunpack.c.l.b16 %v656
      %v2028 = vunpack.c.h.b16 %v656
      %v2029 = vunpack.c.l.b16 %v657
      %v2030 = vunpack.c.h.b16 %v657
      %v2031 = vunpack.c.l.b16 %v658
      %v2032 = vunpack.c.h.b16 %v658
      %v2033 = vunpack.c.l.b16 %v659
      %v2034 = vunpack.c.h.b16 %v659
      %v2035 = vunpack.c.l.b16 %v660
      %v2036 = vunpack.c.h.b16 %v660
      %v2037 = vunpack.c.l.b16 %v661
      %v2038 = vunpack.c.h.b16 %v661
      %v2039 = vunpack.c.l.b16 %v662
      %v2040 = vunpack.c.h.b16 %v662
      %v2041 = vunpack.c.l.b16 %v663
      %v2042 = vunpack.c.h.b16 %v663
      %v2043 = vunpack.c.l.b16 %v664
      %v2044 = vunpack.c.h.b16 %v664
      %v2045 = vunpack.c.l.b16 %v665
      %v2046 = vunpack.c.h.b16 %v665
      %v2047 = vunpack.c.l.b16 %v666
      %v2048 = vunpack.c.h.b16 %v666
      %v2049 = vunpack.c.l.b16 %v667
      %v2050 = vunpack.c.h.b16 %v667
      %v2051 = vunpack.c.l.b16 %v668
      %v2052 = vunpack.c.h.b16 %v668
      %v2053 = vunpack.c.l.b16 %v669
      %v2054 = vunpack.c.h.b16 %v669
      %v2055 = vunpack.c.l.b16 %v670
      %v2056 = vunpack.c.h.b16 %v670
      %v2057 = vunpack.c.l.b16 %v671
      %v2058 = vunpack.c.h.b16 %v671
      %v2059 = vunpack.c.l.b16 %v672
      %v2060 = vunpack.c.h.b16 %v672
      %v2061 = vunpack.c.l.b16 %v673
      %v2062 = vunpack.c.h.b16 %v673
      %v2063 = vunpack.c.l.b16 %v674
      %v2064 = vunpack.c.h.b16 %v674
      %v2065 = vunpack.c.l.b16 %v675
      %v2066 = vunpack.c.h.b16 %v675
      %v2067 = vunpack.c.l.b16 %v676
      %v2068 = vunpack.c.h.b16 %v676
      %v2069 = vunpack.c.l.b16 %v677
      %v2070 = vunpack.c.h.b16 %v677
      %v2071 = vunpack.c.l.b16 %v678
      %v2072 = vunpack.c.h.b16 %v678
      %v2073 = vunpack.c.l.b16 %v679
      %v2074 = vunpack.c.h.b16 %v679
      %v2075 = vunpack.c.l.b16 %v680
      %v2076 = vunpack.c.h.b16 %v680
      %v2077 = vunpack.c.l.b16 %v681
      %v2078 = vunpack.c.h.b16 %v681
      %v2079 = vunpack.c.l.b16 %v682
      %v2080 = vunpack.c.h.b16 %v682
      %v2081 = vunpack.c.l.b16 %v683
      %v2082 = vunpack.c.h.b16 %v683
      %v2083 = vunpack.c.l.b16 %v684
      %v2084 = vunpack.c.h.b16 %v684
      %v2085 = vunpack.c.l.b16 %v685
      %v2086 = vunpack.c.h.b16 %v685
      %v2087 = vunpack.c.l.b16 %v686
      %v2088 = vunpack.c.h.b16 %v686
      %v2089 = vunpack.c.l.b16 %v687
      %v2090 = vunpack.c.h.b16 %v687
      %v2091 = vunpack.c.l.b16 %v688
      %v2092 = vunpack.c.h.b16 %v688
      %v2093 = vunpack.c.l.b16 %v689
      %v2094 = vunpack.c.h.b16 %v689
      %v2095 = vunpack.c.l.b16 %v690
      %v2096 = vunpack.c.h.b16 %v690
      %v2097 = vunpack.c.l.b16 %v691
      %v2098 = vunpack.c.h.b16 %v691
      %v2099 = vunpack.c.l.b16 %v692
      %v2100 = vunpack.c.h.b16 %v692
      %v2101 = vunpack.c.l.b16 %v693
      %v2102 = vunpack.c.h.b16 %v693
      %v2103 = vunpack.c.l.b16 %v694
      %v2104 = vunpack.c.h.b16 %v694
      %v2105 = vunpack.c.l.b16 %v695
      %v2106 = vunpack.c.h.b16 %v695
      %v2107 = vunpack.c.l.b16 %v696
      %v2108 = vunpack.c.h.b16 %v696
      %v2109 = vunpack.c.l.b16 %v697
      %v2110 = vunpack.c.h.b16 %v697
      %v2111 = vunpack.c.l.b16 %v698
      %v2112 = vunpack.c.h.b16 %v698
      %v2113 = vunpack.c.l.b16 %v699
      %v2114 = vunpack.c.h.b16 %v699
      %v2115 = vunpack.c.l.b16 %v700
      %v2116 = vunpack.c.h.b16 %v700
      %v2117 = vunpack.c.l.b16 %v701
      %v2118 = vunpack.c.h.b16 %v701
      %v2119 = vunpack.c.l.b16 %v702
      %v2120 = vunpack.c.h.b16 %v702
      %v2121 = vunpack.c.l.b16 %v703
      %v2122 = vunpack.c.h.b16 %v703
      %v2123 = vunpack.c.l.b16 %v704
      %v2124 = vunpack.c.h.b16 %v704
      %v2125 = vunpack.c.l.b16 %v705
      %v2126 = vunpack.c.h.b16 %v705
      %v2127 = vunpack.c.l.b16 %v706
      %v2128 = vunpack.c.h.b16 %v706
      %v2129 = vunpack.c.l.b16 %v707
      %v2130 = vunpack.c.h.b16 %v707
      %v2131 = vunpack.c.l.b16 %v708
      %v2132 = vunpack.c.h.b16 %v708
      %v2133 = vunpack.c.l.b16 %v709
      %v2134 = vunpack.c.h.b16 %v709
      %v2135 = vunpack.c.l.b16 %v710
      %v2136 = vunpack.c.h.b16 %v710
      %v2137 = vunpack.c.l.b16 %v711
      %v2138 = vunpack.c.h.b16 %v711
      %v2139 = vunpack.c.l.b16 %v712
      %v2140 = vunpack.c.h.b16 %v712
      %v2141 = vunpack.c.l.b16 %v713
      %v2142 = vunpack.c.h.b16 %v713
      %v2143 = vunpack.c.l.b16 %v714
      %v2144 = vunpack.c.h.b16 %v714
      %v2145 = vunpack.c.l.b16 %v715
      %v2146 = vunpack.c.h.b16 %v715
      %v2147 = vunpack.c.l.b16 %v716
      %v2148 = vunpack.c.h.b16 %v716
      %v2149 = vunpack.c.l.b16 %v717
      %v2150 = vunpack.c.h.b16 %v717
      %v2151 = vunpack.c.l.b16 %v718
      %v2152 = vunpack.c.h.b16 %v718
      %v2153 = vunpack.c.l.b16 %v719
      %v2154 = vunpack.c.h.b16 %v719
      %v2155 = vunpack.c.l.b16 %v720
      %v2156 = vunpack.c.h.b16 %v720
      %v2157 = vunpack.c.l.b16 %v721
      %v2158 = vunpack.c.h.b16 %v721
      %v2159 = vunpack.c.l.b16 %v722
      %v2160 = vunpack.c.h.b16 %v722
      %v2161 = vunpack.c.l.b16 %v723
      %v2162 = vunpack.c.h.b16 %v723
      %v2163 = vunpack.c.l.b16 %v724
      %v2164 = vunpack.c.h.b16 %v724
      %v2165 = vunpack.c.l.b16 %v725
      %v2166 = vunpack.c.h.b16 %v725
      %v2167 = vunpack.c.l.b16 %v726
      %v2168 = vunpack.c.h.b16 %v726
      %v2169 = vunpack.c.l.b16 %v727
      %v2170 = vunpack.c.h.b16 %v727
      %v2171 = vunpack.c.l.b16 %v728
      %v2172 = vunpack.c.h.b16 %v728
      %v2173 = vunpack.c.l.b16 %v729
      %v2174 = vunpack.c.h.b16 %v729
      %v2175 = vunpack.c.l.b16 %v730
      %v2176 = vunpack.c.h.b16 %v730
      %v2177 = vunpack.c.l.b16 %v731
      %v2178 = vunpack.c.h.b16 %v731
      %v2179 = vunpack.c.l.b16 %v732
      %v2180 = vunpack.c.h.b16 %v732
      %v2181 = vunpack.c.l.b16 %v733
      %v2182 = vunpack.c.h.b16 %v733
      %v2183 = vunpack.c.l.b16 %v734
      %v2184 = vunpack.c.h.b16 %v734
      %v2185 = vunpack.c.l.b16 %v735
      %v2186 = vunpack.c.h.b16 %v735
      %v2187 = vunpack.c.l.b16 %v736
      %v2188 = vunpack.c.h.b16 %v736
      %v2189 = vunpack.c.l.b16 %v737
      %v2190 = vunpack.c.h.b16 %v737
      %v2191 = vunpack.c.l.b16 %v738
      %v2192 = vunpack.c.h.b16 %v738
      %v2193 = vunpack.c.l.b16 %v739
      %v2194 = vunpack.c.h.b16 %v739
      %v2195 = vunpack.c.l.b16 %v740
      %v2196 = vunpack.c.h.b16 %v740
      %v2197 = vunpack.c.l.b16 %v741
      %v2198 = vunpack.c.h.b16 %v741
      %v2199 = vunpack.c.l.b16 %v742
      %v2200 = vunpack.c.h.b16 %v742
      %v2201 = vunpack.c.l.b16 %v743
      %v2202 = vunpack.c.h.b16 %v743
      %v2203 = vunpack.c.l.b16 %v744
      %v2204 = vunpack.c.h.b16 %v744
      %v2205 = vunpack.c.l.b16 %v745
      %v2206 = vunpack.c.h.b16 %v745
      %v2207 = vunpack.c.l.b16 %v746
      %v2208 = vunpack.c.h.b16 %v746
      %v2209 = vunpack.c.l.b16 %v747
      %v2210 = vunpack.c.h.b16 %v747
      %v2211 = vunpack.c.l.b16 %v748
      %v2212 = vunpack.c.h.b16 %v748
      %v2213 = vunpack.c.l.b16 %v749
      %v2214 = vunpack.c.h.b16 %v749
      %v2215 = vunpack.c.l.b16 %v750
      %v2216 = vunpack.c.h.b16 %v750
      %v2217 = vunpack.c.l.b16 %v751
      %v2218 = vunpack.c.h.b16 %v751
      %v2219 = vunpack.c.l.b16 %v752
      %v2220 = vunpack.c.h.b16 %v752
      %v2221 = vunpack.c.l.b16 %v753
      %v2222 = vunpack.c.h.b16 %v753
      %v2223 = vunpack.c.l.b16 %v754
      %v2224 = vunpack.c.h.b16 %v754
      %v2225 = vunpack.c.l.b16 %v755
      %v2226 = vunpack.c.h.b16 %v755
      %v2227 = vunpack.c.l.b16 %v756
      %v2228 = vunpack.c.h.b16 %v756
      %v2229 = vunpack.c.l.b16 %v757
      %v2230 = vunpack.c.h.b16 %v757
      %v2231 = vunpack.c.l.b16 %v758
      %v2232 = vunpack.c.h.b16 %v758
      %v2233 = vpack.c.b16 %v1457, %v1449
      %v2234 = vpack.c.b16 %v1458, %v1450
      %v2235 = vpack.c.b16 %v1459, %v1451
      %v2236 = vpack.c.b16 %v1460, %v1452
      %v2237 = vpack.c.b16 %v1461, %v1453
      %v2238 = vpack.c.b16 %v1462, %v1454
      %v2239 = vpack.c.b16 %v1463, %v1455
      %v2240 = vpack.c.b16 %v1464, %v1456
      %v2241 = vpack.c.b16 %v1473, %v1465
      %v2242 = vpack.c.b16 %v1474, %v1466
      %v2243 = vpack.c.b16 %v1475, %v1467
      %v2244 = vpack.c.b16 %v1476, %v1468
      %v2245 = vpack.c.b16 %v1477, %v1469
      %v2246 = vpack.c.b16 %v1478, %v1470
      %v2247 = vpack.c.b16 %v1479, %v1471
      %v2248 = vpack.c.b16 %v1480, %v1472
      %v2249 = vpack.c.b16 %v1489, %v1481
      %v2250 = vpack.c.b16 %v1490, %v1482
      %v2251 = vpack.c.b16 %v1491, %v1483
      %v2252 = vpack.c.b16 %v1492, %v1484
      %v2253 = vpack.c.b16 %v1493, %v1485
      %v2254 = vpack.c.b16 %v1494, %v1486
      %v2255 = vpack.c.b16 %v1495, %v1487
      %v2256 = vpack.c.b16 %v1496, %v1488
      %v2257 = vpack.c.b16 %v1505, %v1497
      %v2258 = vpack.c.b16 %v1506, %v1498
      %v2259 = vpack.c.b16 %v1507, %v1499
      %v2260 = vpack.c.b16 %v1508, %v1500
      %v2261 = vpack.c.b16 %v1509, %v1501
      %v2262 = vpack.c.b16 %v1510, %v1502
      %v2263 = vpack.c.b16 %v1511, %v1503
      %v2264 = vpack.c.b16 %v1512, %v1504
      %v2265 = vpack.c.b16 %v1521, %v1513
      %v2266 = vpack.c.b16 %v1522, %v1514
      %v2267 = vpack.c.b16 %v1523, %v1515
      %v2268 = vpack.c.b16 %v1524, %v1516
      %v2269 = vpack.c.b16 %v1525, %v1517
      %v2270 = vpack.c.b16 %v1526, %v1518
      %v2271 = vpack.c.b16 %v1527, %v1519
      %v2272 = vpack.c.b16 %v1528, %v1520
      %v2273 = vpack.c.b16 %v1537, %v1529
      %v2274 = vpack.c.b16 %v1538, %v1530
      %v2275 = vpack.c.b16 %v1539, %v1531
      %v2276 = vpack.c.b16 %v1540, %v1532
      %v2277 = vpack.c.b16 %v1541, %v1533
      %v2278 = vpack.c.b16 %v1542, %v1534
      %v2279 = vpack.c.b16 %v1543, %v1535
      %v2280 = vpack.c.b16 %v1544, %v1536
      %v2281 = vpack.c.b16 %v1553, %v1545
      %v2282 = vpack.c.b16 %v1554, %v1546
      %v2283 = vpack.c.b16 %v1555, %v1547
      %v2284 = vpack.c.b16 %v1556, %v1548
      %v2285 = vpack.c.b16 %v1557, %v1549
      %v2286 = vpack.c.b16 %v1558, %v1550
      %v2287 = vpack.c.b16 %v1559, %v1551
      %v2288 = vpack.c.b16 %v1560, %v1552
      %v2289 = vpack.c.b16 %v1569, %v1561
      %v2290 = vpack.c.b16 %v1570, %v1562
      %v2291 = vpack.c.b16 %v1571, %v1563
      %v2292 = vpack.c.b16 %v1572, %v1564
      %v2293 = vpack.c.b16 %v1573, %v1565
      %v2294 = vpack.c.b16 %v1574, %v1566
      %v2295 = vpack.c.b16 %v1575, %v1567
      %v2296 = vpack.c.b16 %v1576, %v1568
      %v2297 = vpack.c.b16 %v1585, %v1577
      %v2298 = vpack.c.b16 %v1586, %v1578
      %v2299 = vpack.c.b16 %v1587, %v1579
      %v2300 = vpack.c.b16 %v1588, %v1580
      %v2301 = vpack.c.b16 %v1589, %v1581
      %v2302 = vpack.c.b16 %v1590, %v1582
      %v2303 = vpack.c.b16 %v1591, %v1583
      %v2304 = vpack.c.b16 %v1592, %v1584
      %v2305 = vpack.c.b16 %v1601, %v1593
      %v2306 = vpack.c.b16 %v1602, %v1594
      %v2307 = vpack.c.b16 %v1603, %v1595
      %v2308 = vpack.c.b16 %v1604, %v1596
      %v2309 = vpack.c.b16 %v1605, %v1597
      %v2310 = vpack.c.b16 %v1606, %v1598
      %v2311 = vpack.c.b16 %v1607, %v1599
      %v2312 = vpack.c.b16 %v1608, %v1600
      %v2313 = vpack.c.b16 %v1617, %v1609
      %v2314 = vpack.c.b16 %v1618, %v1610
      %v2315 = vpack.c.b16 %v1619, %v1611
      %v2316 = vpack.c.b16 %v1620, %v1612
      %v2317 = vpack.c.b16 %v1621, %v1613
      %v2318 = vpack.c.b16 %v1622, %v1614
      %v2319 = vpack.c.b16 %v1623, %v1615
      %v2320 = vpack.c.b16 %v1624, %v1616
      %v2321 = vpack.c.b16 %v1633, %v1625
      %v2322 = vpack.c.b16 %v1634, %v1626
      %v2323 = vpack.c.b16 %v1635, %v1627
      %v2324 = vpack.c.b16 %v1636, %v1628
      %v2325 = vpack.c.b16 %v1637, %v1629
      %v2326 = vpack.c.b16 %v1638, %v1630
      %v2327 = vpack.c.b16 %v1639, %v1631
      %v2328 = vpack.c.b16 %v1640, %v1632
      %v2329 = vpack.c.b16 %v1649, %v1641
      %v2330 = vpack.c.b16 %v1650, %v1642
      %v2331 = vpack.c.b16 %v1651, %v1643
      %v2332 = vpack.c.b16 %v1652, %v1644
      %v2333 = vpack.c.b16 %v1653, %v1645
      %v2334 = vpack.c.b16 %v1654, %v1646
      %v2335 = vpack.c.b16 %v1655, %v1647
      %v2336 = vpack.c.b16 %v1656, %v1648
      %v2337 = vpack.c.b16 %v1665, %v1657
      %v2338 = vpack.c.b16 %v1666, %v1658
      %v2339 = vpack.c.b16 %v1667, %v1659
      %v2340 = vpack.c.b16 %v1668, %v1660
      %v2341 = vpack.c.b16 %v1669, %v1661
      %v2342 = vpack.c.b16 %v1670, %v1662
      %v2343 = vpack.c.b16 %v1671, %v1663
      %v2344 = vpack.c.b16 %v1672, %v1664
      %v2345 = vpack.c.b16 %v1681, %v1673
      %v2346 = vpack.c.b16 %v1682, %v1674
      %v2347 = vpack.c.b16 %v1683, %v1675
      %v2348 = vpack.c.b16 %v1684, %v1676
      %v2349 = vpack.c.b16 %v1685, %v1677
      %v2350 = vpack.c.b16 %v1686, %v1678
      %v2351 = vpack.c.b16 %v1687, %v1679
      %v2352 = vpack.c.b16 %v1688, %v1680
      %v2353 = vpack.c.b16 %v1697, %v1689
      %v2354 = vpack.c.b16 %v1698, %v1690
      %v2355 = vpack.c.b16 %v1699, %v1691
      %v2356 = vpack.c.b16 %v1700, %v1692
      %v2357 = vpack.c.b16 %v1701, %v1693
      %v2358 = vpack.c.b16 %v1702, %v1694
      %v2359 = vpack.c.b16 %v1703, %v1695
      %v2360 = vpack.c.b16 %v1704, %v1696
      %v2361 = vpack.c.b16 %v1713, %v1705
      %v2362 = vpack.c.b16 %v1714, %v1706
      %v2363 = vpack.c.b16 %v1715, %v1707
      %v2364 = vpack.c.b16 %v1716, %v1708
      %v2365 = vpack.c.b16 %v1717, %v1709
      %v2366 = vpack.c.b16 %v1718, %v1710
      %v2367 = vpack.c.b16 %v1719, %v1711
      %v2368 = vpack.c.b16 %v1720, %v1712
      %v2369 = vpack.c.b16 %v1729, %v1721
      %v2370 = vpack.c.b16 %v1730, %v1722
      %v2371 = vpack.c.b16 %v1731, %v1723
      %v2372 = vpack.c.b16 %v1732, %v1724
      %v2373 = vpack.c.b16 %v1733, %v1725
      %v2374 = vpack.c.b16 %v1734, %v1726
      %v2375 = vpack.c.b16 %v1735, %v1727
      %v2376 = vpack.c.b16 %v1736, %v1728
      %v2377 = vpack.c.b16 %v1745, %v1737
      %v2378 = vpack.c.b16 %v1746, %v1738
      %v2379 = vpack.c.b16 %v1747, %v1739
      %v2380 = vpack.c.b16 %v1748, %v1740
      %v2381 = vpack.c.b16 %v1749, %v1741
      %v2382 = vpack.c.b16 %v1750, %v1742
      %v2383 = vpack.c.b16 %v1751, %v1743
      %v2384 = vpack.c.b16 %v1752, %v1744
      %v2385 = vpack.c.b16 %v1761, %v1753
      %v2386 = vpack.c.b16 %v1762, %v1754
      %v2387 = vpack.c.b16 %v1763, %v1755
      %v2388 = vpack.c.b16 %v1764, %v1756
      %v2389 = vpack.c.b16 %v1765, %v1757
      %v2390 = vpack.c.b16 %v1766, %v1758
      %v2391 = vpack.c.b16 %v1767, %v1759
      %v2392 = vpack.c.b16 %v1768, %v1760
      %v2393 = vpack.c.b16 %v1777, %v1769
      %v2394 = vpack.c.b16 %v1778, %v1770
      %v2395 = vpack.c.b16 %v1779, %v1771
      %v2396 = vpack.c.b16 %v1780, %v1772
      %v2397 = vpack.c.b16 %v1781, %v1773
      %v2398 = vpack.c.b16 %v1782, %v1774
      %v2399 = vpack.c.b16 %v1783, %v1775
      %v2400 = vpack.c.b16 %v1784, %v1776
      %v2401 = vpack.c.b16 %v1793, %v1785
      %v2402 = vpack.c.b16 %v1794, %v1786
      %v2403 = vpack.c.b16 %v1795, %v1787
      %v2404 = vpack.c.b16 %v1796, %v1788
      %v2405 = vpack.c.b16 %v1797, %v1789
      %v2406 = vpack.c.b16 %v1798, %v1790
      %v2407 = vpack.c.b16 %v1799, %v1791
      %v2408 = vpack.c.b16 %v1800, %v1792
      %v2409 = vpack.c.b16 %v1809, %v1801
      %v2410 = vpack.c.b16 %v1810, %v1802
      %v2411 = vpack.c.b16 %v1811, %v1803
      %v2412 = vpack.c.b16 %v1812, %v1804
      %v2413 = vpack.c.b16 %v1813, %v1805
      %v2414 = vpack.c.b16 %v1814, %v1806
      %v2415 = vpack.c.b16 %v1815, %v1807
      %v2416 = vpack.c.b16 %v1816, %v1808
      %v2417 = vpack.c.b16 %v1825, %v1817
      %v2418 = vpack.c.b16 %v1826, %v1818
      %v2419 = vpack.c.b16 %v1827, %v1819
      %v2420 = vpack.c.b16 %v1828, %v1820
      %v2421 = vpack.c.b16 %v1829, %v1821
      %v2422 = vpack.c.b16 %v1830, %v1822
      %v2423 = vpack.c.b16 %v1831, %v1823
      %v2424 = vpack.c.b16 %v1832, %v1824
      %v2425 = vpack.c.b16 %v1841, %v1833
      %v2426 = vpack.c.b16 %v1842, %v1834
      %v2427 = vpack.c.b16 %v1843, %v1835
      %v2428 = vpack.c.b16 %v1844, %v1836
      %v2429 = vpack.c.b16 %v1845, %v1837
      %v2430 = vpack.c.b16 %v1846, %v1838
      %v2431 = vpack.c.b16 %v1847, %v1839
      %v2432 = vpack.c.b16 %v1848, %v1840
      %v2433 = vpack.c.b16 %v1857, %v1849
      %v2434 = vpack.c.b16 %v1858, %v1850
      %v2435 = vpack.c.b16 %v1859, %v1851
      %v2436 = vpack.c.b16 %v1860, %v1852
      %v2437 = vpack.c.b16 %v1861, %v1853
      %v2438 = vpack.c.b16 %v1862, %v1854
      %v2439 = vpack.c.b16 %v1863, %v1855
      %v2440 = vpack.c.b16 %v1864, %v1856
      %v2441 = vpack.c.b16 %v1873, %v1865
      %v2442 = vpack.c.b16 %v1874, %v1866
      %v2443 = vpack.c.b16 %v1875, %v1867
      %v2444 = vpack.c.b16 %v1876, %v1868
      %v2445 = vpack.c.b16 %v1877, %v1869
      %v2446 = vpack.c.b16 %v1878, %v1870
      %v2447 = vpack.c.b16 %v1879, %v1871
      %v2448 = vpack.c.b16 %v1880, %v1872
      %v2449 = vpack.c.b16 %v1889, %v1881
      %v2450 = vpack.c.b16 %v1890, %v1882
      %v2451 = vpack.c.b16 %v1891, %v1883
      %v2452 = vpack.c.b16 %v1892, %v1884
      %v2453 = vpack.c.b16 %v1893, %v1885
      %v2454 = vpack.c.b16 %v1894, %v1886
      %v2455 = vpack.c.b16 %v1895, %v1887
      %v2456 = vpack.c.b16 %v1896, %v1888
      %v2457 = vpack.c.b16 %v1905, %v1897
      %v2458 = vpack.c.b16 %v1906, %v1898
      %v2459 = vpack.c.b16 %v1907, %v1899
      %v2460 = vpack.c.b16 %v1908, %v1900
      %v2461 = vpack.c.b16 %v1909, %v1901
      %v2462 = vpack.c.b16 %v1910, %v1902
      %v2463 = vpack.c.b16 %v1911, %v1903
      %v2464 = vpack.c.b16 %v1912, %v1904
      %v2465 = vpack.c.b16 %v1921, %v1913
      %v2466 = vpack.c.b16 %v1922, %v1914
      %v2467 = vpack.c.b16 %v1923, %v1915
      %v2468 = vpack.c.b16 %v1924, %v1916
      %v2469 = vpack.c.b16 %v1925, %v1917
      %v2470 = vpack.c.b16 %v1926, %v1918
      %v2471 = vpack.c.b16 %v1927, %v1919
      %v2472 = vpack.c.b16 %v1928, %v1920
      %v2473 = vpack.c.b16 %v1937, %v1929
      %v2474 = vpack.c.b16 %v1938, %v1930
      %v2475 = vpack.c.b16 %v1939, %v1931
      %v2476 = vpack.c.b16 %v1940, %v1932
      %v2477 = vpack.c.b16 %v1941, %v1933
      %v2478 = vpack.c.b16 %v1942, %v1934
      %v2479 = vpack.c.b16 %v1943, %v1935
      %v2480 = vpack.c.b16 %v1944, %v1936
      %v2481 = vpack.c.b16 %v1953, %v1945
      %v2482 = vpack.c.b16 %v1954, %v1946
      %v2483 = vpack.c.b16 %v1955, %v1947
      %v2484 = vpack.c.b16 %v1956, %v1948
      %v2485 = vpack.c.b16 %v1957, %v1949
      %v2486 = vpack.c.b16 %v1958, %v1950
      %v2487 = vpack.c.b16 %v1959, %v1951
      %v2488 = vpack.c.b16 %v1960, %v1952
      %v2489 = vpack.c.b16 %v1969, %v1961
      %v2490 = vpack.c.b16 %v1970, %v1962
      %v2491 = vpack.c.b16 %v1971, %v1963
      %v2492 = vpack.c.b16 %v1972, %v1964
      %v2493 = vpack.c.b16 %v1973, %v1965
      %v2494 = vpack.c.b16 %v1974, %v1966
      %v2495 = vpack.c.b16 %v1975, %v1967
      %v2496 = vpack.c.b16 %v1976, %v1968
      %v2497 = vpack.c.b16 %v1985, %v1977
      %v2498 = vpack.c.b16 %v1986, %v1978
      %v2499 = vpack.c.b16 %v1987, %v1979
      %v2500 = vpack.c.b16 %v1988, %v1980
      %v2501 = vpack.c.b16 %v1989, %v1981
      %v2502 = vpack.c.b16 %v1990, %v1982
      %v2503 = vpack.c.b16 %v1991, %v1983
      %v2504 = vpack.c.b16 %v1992, %v1984
      %v2505 = vpack.c.b16 %v2001, %v1993
      %v2506 = vpack.c.b16 %v2002, %v1994
      %v2507 = vpack.c.b16 %v2003, %v1995
      %v2508 = vpack.c.b16 %v2004, %v1996
      %v2509 = vpack.c.b16 %v2005, %v1997
      %v2510 = vpack.c.b16 %v2006, %v1998
      %v2511 = vpack.c.b16 %v2007, %v1999
      %v2512 = vpack.c.b16 %v2008, %v2000
      %v2513 = vpack.c.b16 %v2017, %v2009
      %v2514 = vpack.c.b16 %v2018, %v2010
      %v2515 = vpack.c.b16 %v2019, %v2011
      %v2516 = vpack.c.b16 %v2020, %v2012
      %v2517 = vpack.c.b16 %v2021, %v2013
      %v2518 = vpack.c.b16 %v2022, %v2014
      %v2519 = vpack.c.b16 %v2023, %v2015
      %v2520 = vpack.c.b16 %v2024, %v2016
      %v2521 = vpack.c.b16 %v2033, %v2025
      %v2522 = vpack.c.b16 %v2034, %v2026
      %v2523 = vpack.c.b16 %v2035, %v2027
      %v2524 = vpack.c.b16 %v2036, %v2028
      %v2525 = vpack.c.b16 %v2037, %v2029
      %v2526 = vpack.c.b16 %v2038, %v2030
      %v2527 = vpack.c.b16 %v2039, %v2031
      %v2528 = vpack.c.b16 %v2040, %v2032
      %v2529 = vpack.c.b16 %v2049, %v2041
      %v2530 = vpack.c.b16 %v2050, %v2042
      %v2531 = vpack.c.b16 %v2051, %v2043
      %v2532 = vpack.c.b16 %v2052, %v2044
      %v2533 = vpack.c.b16 %v2053, %v2045
      %v2534 = vpack.c.b16 %v2054, %v2046
      %v2535 = vpack.c.b16 %v2055, %v2047
      %v2536 = vpack.c.b16 %v2056, %v2048
      %v2537 = vpack.c.b16 %v2065, %v2057
      %v2538 = vpack.c.b16 %v2066, %v2058
      %v2539 = vpack.c.b16 %v2067, %v2059
      %v2540 = vpack.c.b16 %v2068, %v2060
      %v2541 = vpack.c.b16 %v2069, %v2061
      %v2542 = vpack.c.b16 %v2070, %v2062
      %v2543 = vpack.c.b16 %v2071, %v2063
      %v2544 = vpack.c.b16 %v2072, %v2064
      %v2545 = vpack.c.b16 %v2081, %v2073
      %v2546 = vpack.c.b16 %v2082, %v2074
      %v2547 = vpack.c.b16 %v2083, %v2075
      %v2548 = vpack.c.b16 %v2084, %v2076
      %v2549 = vpack.c.b16 %v2085, %v2077
      %v2550 = vpack.c.b16 %v2086, %v2078
      %v2551 = vpack.c.b16 %v2087, %v2079
      %v2552 = vpack.c.b16 %v2088, %v2080
      %v2553 = vpack.c.b16 %v2097, %v2089
      %v2554 = vpack.c.b16 %v2098, %v2090
      %v2555 = vpack.c.b16 %v2099, %v2091
      %v2556 = vpack.c.b16 %v2100, %v2092
      %v2557 = vpack.c.b16 %v2101, %v2093
      %v2558 = vpack.c.b16 %v2102, %v2094
      %v2559 = vpack.c.b16 %v2103, %v2095
      %v2560 = vpack.c.b16 %v2104, %v2096
      %v2561 = vpack.c.b16 %v2113, %v2105
      %v2562 = vpack.c.b16 %v2114, %v2106
      %v2563 = vpack.c.b16 %v2115, %v2107
      %v2564 = vpack.c.b16 %v2116, %v2108
      %v2565 = vpack.c.b16 %v2117, %v2109
      %v2566 = vpack.c.b16 %v2118, %v2110
      %v2567 = vpack.c.b16 %v2119, %v2111
      %v2568 = vpack.c.b16 %v2120, %v2112
      %v2569 = vpack.c.b16 %v2129, %v2121
      %v2570 = vpack.c.b16 %v2130, %v2122
      %v2571 = vpack.c.b16 %v2131, %v2123
      %v2572 = vpack.c.b16 %v2132, %v2124
      %v2573 = vpack.c.b16 %v2133, %v2125
      %v2574 = vpack.c.b16 %v2134, %v2126
      %v2575 = vpack.c.b16 %v2135, %v2127
      %v2576 = vpack.c.b16 %v2136, %v2128
      %v2577 = vpack.c.b16 %v2145, %v2137
      %v2578 = vpack.c.b16 %v2146, %v2138
      %v2579 = vpack.c.b16 %v2147, %v2139
      %v2580 = vpack.c.b16 %v2148, %v2140
      %v2581 = vpack.c.b16 %v2149, %v2141
      %v2582 = vpack.c.b16 %v2150, %v2142
      %v2583 = vpack.c.b16 %v2151, %v2143
      %v2584 = vpack.c.b16 %v2152, %v2144
      %v2585 = vpack.c.b16 %v2161, %v2153
      %v2586 = vpack.c.b16 %v2162, %v2154
      %v2587 = vpack.c.b16 %v2163, %v2155
      %v2588 = vpack.c.b16 %v2164, %v2156
      %v2589 = vpack.c.b16 %v2165, %v2157
      %v2590 = vpack.c.b16 %v2166, %v2158
      %v2591 = vpack.c.b16 %v2167, %v2159
      %v2592 = vpack.c.b16 %v2168, %v2160
      %v2593 = vpack.c.b16 %v2177, %v2169
      %v2594 = vpack.c.b16 %v2178, %v2170
      %v2595 = vpack.c.b16 %v2179, %v2171
      %v2596 = vpack.c.b16 %v2180, %v2172
      %v2597 = vpack.c.b16 %v2181, %v2173
      %v2598 = vpack.c.b16 %v2182, %v2174
      %v2599 = vpack.c.b16 %v2183, %v2175
      %v2600 = vpack.c.b16 %v2184, %v2176
      %v2601 = vpack.c.b16 %v2193, %v2185
      %v2602 = vpack.c.b16 %v2194, %v2186
      %v2603 = vpack.c.b16 %v2195, %v2187
      %v2604 = vpack.c.b16 %v2196, %v2188
      %v2605 = vpack.c.b16 %v2197, %v2189
      %v2606 = vpack.c.b16 %v2198, %v2190
      %v2607 = vpack.c.b16 %v2199, %v2191
      %v2608 = vpack.c.b16 %v2200, %v2192
      %v2609 = vpack.c.b16 %v2209, %v2201
      %v2610 = vpack.c.b16 %v2210, %v2202
      %v2611 = vpack.c.b16 %v2211, %v2203
      %v2612 = vpack.c.b16 %v2212, %v2204
      %v2613 = vpack.c.b16 %v2213, %v2205
      %v2614 = vpack.c.b16 %v2214, %v2206
      %v2615 = vpack.c.b16 %v2215, %v2207
      %v2616 = vpack.c.b16 %v2216, %v2208
      %v2617 = vpack.c.b16 %v2225, %v2217
      %v2618 = vpack.c.b16 %v2226, %v2218
      %v2619 = vpack.c.b16 %v2227, %v2219
      %v2620 = vpack.c.b16 %v2228, %v2220
      %v2621 = vpack.c.b16 %v2229, %v2221
      %v2622 = vpack.c.b16 %v2230, %v2222
      %v2623 = vpack.c.b16 %v2231, %v2223
      %v2624 = vpack.c.b16 %v2232, %v2224
      %vm3017 = vcmask 130048
      %v3019 = vsel %vm3017, %v959, 0
      %v3022 = vsel %vm3017, %v966, 0
      %v3025 = vsel %vm3017, %v973, 0
      %v3028 = vsel %vm3017, %v980, 0
      %v3031 = vsel %vm3017, %v987, 0
      %v3034 = vsel %vm3017, %v994, 0
      %v3037 = vsel %vm3017, %v1001, 0
      %v3040 = vsel %vm3017, %v1008, 0
      %3042 = vmatpush.bf16.msra.mxu0 %v2289
      %3043 = vmatpush.bf16.msra.mxu0 %v2281
      %3044 = vmatpush.bf16.msra.mxu0 %v2273
      %3045 = vmatpush.bf16.msra.mxu0 %v2265
      %3046 = vmatpush.bf16.msra.mxu0 %v2257
      %3047 = vmatpush.bf16.msra.mxu0 %v2249
      %3048 = vmatpush.bf16.msra.mxu0 %v2241
      %3049 = vmatpush.bf16.msra.mxu0 %v2233
      %3050 = vmatmul.bf16.gmra.mxu0 %v953
      %v3051 = vpop.f32.mrf.mxu0
      %v3052 = vadd.f32 %v761, %v3051
      %v3053 = vpop.f32.mrf.mxu0
      %v3054 = vadd.f32 %v761, %v3053
      %3055 = vmatmul.bf16.gmra.mxu0 %v960
      %v3056 = vpop.f32.mrf.mxu0
      %v3057 = vadd.f32 %v761, %v3056
      %v3058 = vpop.f32.mrf.mxu0
      %v3059 = vadd.f32 %v761, %v3058
      %3060 = vmatmul.bf16.gmra.mxu0 %v967
      %v3061 = vpop.f32.mrf.mxu0
      %v3062 = vadd.f32 %v761, %v3061
      %v3063 = vpop.f32.mrf.mxu0
      %v3064 = vadd.f32 %v761, %v3063
      %3065 = vmatmul.bf16.gmra.mxu0 %v974
      %v3066 = vpop.f32.mrf.mxu0
      %v3067 = vadd.f32 %v761, %v3066
      %v3068 = vpop.f32.mrf.mxu0
      %v3069 = vadd.f32 %v761, %v3068
      %3070 = vmatmul.bf16.gmra.mxu0 %v981
      %v3071 = vpop.f32.mrf.mxu0
      %v3072 = vadd.f32 %v761, %v3071
      %v3073 = vpop.f32.mrf.mxu0
      %v3074 = vadd.f32 %v761, %v3073
      %3075 = vmatmul.bf16.gmra.mxu0 %v988
      %v3076 = vpop.f32.mrf.mxu0
      %v3077 = vadd.f32 %v761, %v3076
      %v3078 = vpop.f32.mrf.mxu0
      %v3079 = vadd.f32 %v761, %v3078
      %3080 = vmatmul.bf16.gmra.mxu0 %v995
      %v3081 = vpop.f32.mrf.mxu0
      %v3082 = vadd.f32 %v761, %v3081
      %v3083 = vpop.f32.mrf.mxu0
      %v3084 = vadd.f32 %v761, %v3083
      %3085 = vmatmul.bf16.gmra.mxu0 %v1002
      %v3086 = vpop.f32.mrf.mxu0
      %v3087 = vadd.f32 %v761, %v3086
      %v3088 = vpop.f32.mrf.mxu0
      %v3089 = vadd.f32 %v761, %v3088
      %3090 = vdwg.mxu0
      %3091 = vmatpush.bf16.msra.mxu0 %v2353
      %3092 = vmatpush.bf16.msra.mxu0 %v2345
      %3093 = vmatpush.bf16.msra.mxu0 %v2337
      %3094 = vmatpush.bf16.msra.mxu0 %v2329
      %3095 = vmatpush.bf16.msra.mxu0 %v2321
      %3096 = vmatpush.bf16.msra.mxu0 %v2313
      %3097 = vmatpush.bf16.msra.mxu0 %v2305
      %3098 = vmatpush.bf16.msra.mxu0 %v2297
      %3099 = vmatmul.bf16.gmra.mxu0 %v954
      %v3100 = vpop.f32.mrf.mxu0
      %v3101 = vadd.f32 %v3052, %v3100
      %v3102 = vpop.f32.mrf.mxu0
      %v3103 = vadd.f32 %v3054, %v3102
      %3104 = vmatmul.bf16.gmra.mxu0 %v961
      %v3105 = vpop.f32.mrf.mxu0
      %v3106 = vadd.f32 %v3057, %v3105
      %v3107 = vpop.f32.mrf.mxu0
      %v3108 = vadd.f32 %v3059, %v3107
      %3109 = vmatmul.bf16.gmra.mxu0 %v968
      %v3110 = vpop.f32.mrf.mxu0
      %v3111 = vadd.f32 %v3062, %v3110
      %v3112 = vpop.f32.mrf.mxu0
      %v3113 = vadd.f32 %v3064, %v3112
      %3114 = vmatmul.bf16.gmra.mxu0 %v975
      %v3115 = vpop.f32.mrf.mxu0
      %v3116 = vadd.f32 %v3067, %v3115
      %v3117 = vpop.f32.mrf.mxu0
      %v3118 = vadd.f32 %v3069, %v3117
      %3119 = vmatmul.bf16.gmra.mxu0 %v982
      %v3120 = vpop.f32.mrf.mxu0
      %v3121 = vadd.f32 %v3072, %v3120
      %v3122 = vpop.f32.mrf.mxu0
      %v3123 = vadd.f32 %v3074, %v3122
      %3124 = vmatmul.bf16.gmra.mxu0 %v989
      %v3125 = vpop.f32.mrf.mxu0
      %v3126 = vadd.f32 %v3077, %v3125
      %v3127 = vpop.f32.mrf.mxu0
      %v3128 = vadd.f32 %v3079, %v3127
      %3129 = vmatmul.bf16.gmra.mxu0 %v996
      %v3130 = vpop.f32.mrf.mxu0
      %v3131 = vadd.f32 %v3082, %v3130
      %v3132 = vpop.f32.mrf.mxu0
      %v3133 = vadd.f32 %v3084, %v3132
      %3134 = vmatmul.bf16.gmra.mxu0 %v1003
      %v3135 = vpop.f32.mrf.mxu0
      %v3136 = vadd.f32 %v3087, %v3135
      %v3137 = vpop.f32.mrf.mxu0
      %v3138 = vadd.f32 %v3089, %v3137
      %3139 = vdwg.mxu0
      %3140 = vmatpush.bf16.msra.mxu0 %v2417
      %3141 = vmatpush.bf16.msra.mxu0 %v2409
      %3142 = vmatpush.bf16.msra.mxu0 %v2401
      %3143 = vmatpush.bf16.msra.mxu0 %v2393
      %3144 = vmatpush.bf16.msra.mxu0 %v2385
      %3145 = vmatpush.bf16.msra.mxu0 %v2377
      %3146 = vmatpush.bf16.msra.mxu0 %v2369
      %3147 = vmatpush.bf16.msra.mxu0 %v2361
      %3148 = vmatmul.bf16.gmra.mxu0 %v955
      %v3149 = vpop.f32.mrf.mxu0
      %v3150 = vadd.f32 %v3101, %v3149
      %v3151 = vpop.f32.mrf.mxu0
      %v3152 = vadd.f32 %v3103, %v3151
      %3153 = vmatmul.bf16.gmra.mxu0 %v962
      %v3154 = vpop.f32.mrf.mxu0
      %v3155 = vadd.f32 %v3106, %v3154
      %v3156 = vpop.f32.mrf.mxu0
      %v3157 = vadd.f32 %v3108, %v3156
      %3158 = vmatmul.bf16.gmra.mxu0 %v969
      %v3159 = vpop.f32.mrf.mxu0
      %v3160 = vadd.f32 %v3111, %v3159
      %v3161 = vpop.f32.mrf.mxu0
      %v3162 = vadd.f32 %v3113, %v3161
      %3163 = vmatmul.bf16.gmra.mxu0 %v976
      %v3164 = vpop.f32.mrf.mxu0
      %v3165 = vadd.f32 %v3116, %v3164
      %v3166 = vpop.f32.mrf.mxu0
      %v3167 = vadd.f32 %v3118, %v3166
      %3168 = vmatmul.bf16.gmra.mxu0 %v983
      %v3169 = vpop.f32.mrf.mxu0
      %v3170 = vadd.f32 %v3121, %v3169
      %v3171 = vpop.f32.mrf.mxu0
      %v3172 = vadd.f32 %v3123, %v3171
      %3173 = vmatmul.bf16.gmra.mxu0 %v990
      %v3174 = vpop.f32.mrf.mxu0
      %v3175 = vadd.f32 %v3126, %v3174
      %v3176 = vpop.f32.mrf.mxu0
      %v3177 = vadd.f32 %v3128, %v3176
      %3178 = vmatmul.bf16.gmra.mxu0 %v997
      %v3179 = vpop.f32.mrf.mxu0
      %v3180 = vadd.f32 %v3131, %v3179
      %v3181 = vpop.f32.mrf.mxu0
      %v3182 = vadd.f32 %v3133, %v3181
      %3183 = vmatmul.bf16.gmra.mxu0 %v1004
      %v3184 = vpop.f32.mrf.mxu0
      %v3185 = vadd.f32 %v3136, %v3184
      %v3186 = vpop.f32.mrf.mxu0
      %v3187 = vadd.f32 %v3138, %v3186
      %3188 = vdwg.mxu0
      %3189 = vmatpush.bf16.msra.mxu0 %v2481
      %3190 = vmatpush.bf16.msra.mxu0 %v2473
      %3191 = vmatpush.bf16.msra.mxu0 %v2465
      %3192 = vmatpush.bf16.msra.mxu0 %v2457
      %3193 = vmatpush.bf16.msra.mxu0 %v2449
      %3194 = vmatpush.bf16.msra.mxu0 %v2441
      %3195 = vmatpush.bf16.msra.mxu0 %v2433
      %3196 = vmatpush.bf16.msra.mxu0 %v2425
      %3197 = vmatmul.bf16.gmra.mxu0 %v956
      %v3198 = vpop.f32.mrf.mxu0
      %v3199 = vadd.f32 %v3150, %v3198
      %v3200 = vpop.f32.mrf.mxu0
      %v3201 = vadd.f32 %v3152, %v3200
      %3202 = vmatmul.bf16.gmra.mxu0 %v963
      %v3203 = vpop.f32.mrf.mxu0
      %v3204 = vadd.f32 %v3155, %v3203
      %v3205 = vpop.f32.mrf.mxu0
      %v3206 = vadd.f32 %v3157, %v3205
      %3207 = vmatmul.bf16.gmra.mxu0 %v970
      %v3208 = vpop.f32.mrf.mxu0
      %v3209 = vadd.f32 %v3160, %v3208
      %v3210 = vpop.f32.mrf.mxu0
      %v3211 = vadd.f32 %v3162, %v3210
      %3212 = vmatmul.bf16.gmra.mxu0 %v977
      %v3213 = vpop.f32.mrf.mxu0
      %v3214 = vadd.f32 %v3165, %v3213
      %v3215 = vpop.f32.mrf.mxu0
      %v3216 = vadd.f32 %v3167, %v3215
      %3217 = vmatmul.bf16.gmra.mxu0 %v984
      %v3218 = vpop.f32.mrf.mxu0
      %v3219 = vadd.f32 %v3170, %v3218
      %v3220 = vpop.f32.mrf.mxu0
      %v3221 = vadd.f32 %v3172, %v3220
      %3222 = vmatmul.bf16.gmra.mxu0 %v991
      %v3223 = vpop.f32.mrf.mxu0
      %v3224 = vadd.f32 %v3175, %v3223
      %v3225 = vpop.f32.mrf.mxu0
      %v3226 = vadd.f32 %v3177, %v3225
      %3227 = vmatmul.bf16.gmra.mxu0 %v998
      %v3228 = vpop.f32.mrf.mxu0
      %v3229 = vadd.f32 %v3180, %v3228
      %v3230 = vpop.f32.mrf.mxu0
      %v3231 = vadd.f32 %v3182, %v3230
      %3232 = vmatmul.bf16.gmra.mxu0 %v1005
      %v3233 = vpop.f32.mrf.mxu0
      %v3234 = vadd.f32 %v3185, %v3233
      %v3235 = vpop.f32.mrf.mxu0
      %v3236 = vadd.f32 %v3187, %v3235
      %3237 = vdwg.mxu0
      %3238 = vmatpush.bf16.msra.mxu0 %v2545
      %3239 = vmatpush.bf16.msra.mxu0 %v2537
      %3240 = vmatpush.bf16.msra.mxu0 %v2529
      %3241 = vmatpush.bf16.msra.mxu0 %v2521
      %3242 = vmatpush.bf16.msra.mxu0 %v2513
      %3243 = vmatpush.bf16.msra.mxu0 %v2505
      %3244 = vmatpush.bf16.msra.mxu0 %v2497
      %3245 = vmatpush.bf16.msra.mxu0 %v2489
      %3246 = vmatmul.bf16.gmra.mxu0 %v957
      %v3247 = vpop.f32.mrf.mxu0
      %v3248 = vadd.f32 %v3199, %v3247
      %v3249 = vpop.f32.mrf.mxu0
      %v3250 = vadd.f32 %v3201, %v3249
      %3251 = vmatmul.bf16.gmra.mxu0 %v964
      %v3252 = vpop.f32.mrf.mxu0
      %v3253 = vadd.f32 %v3204, %v3252
      %v3254 = vpop.f32.mrf.mxu0
      %v3255 = vadd.f32 %v3206, %v3254
      %3256 = vmatmul.bf16.gmra.mxu0 %v971
      %v3257 = vpop.f32.mrf.mxu0
      %v3258 = vadd.f32 %v3209, %v3257
      %v3259 = vpop.f32.mrf.mxu0
      %v3260 = vadd.f32 %v3211, %v3259
      %3261 = vmatmul.bf16.gmra.mxu0 %v978
      %v3262 = vpop.f32.mrf.mxu0
      %v3263 = vadd.f32 %v3214, %v3262
      %v3264 = vpop.f32.mrf.mxu0
      %v3265 = vadd.f32 %v3216, %v3264
      %3266 = vmatmul.bf16.gmra.mxu0 %v985
      %v3267 = vpop.f32.mrf.mxu0
      %v3268 = vadd.f32 %v3219, %v3267
      %v3269 = vpop.f32.mrf.mxu0
      %v3270 = vadd.f32 %v3221, %v3269
      %3271 = vmatmul.bf16.gmra.mxu0 %v992
      %v3272 = vpop.f32.mrf.mxu0
      %v3273 = vadd.f32 %v3224, %v3272
      %v3274 = vpop.f32.mrf.mxu0
      %v3275 = vadd.f32 %v3226, %v3274
      %3276 = vmatmul.bf16.gmra.mxu0 %v999
      %v3277 = vpop.f32.mrf.mxu0
      %v3278 = vadd.f32 %v3229, %v3277
      %v3279 = vpop.f32.mrf.mxu0
      %v3280 = vadd.f32 %v3231, %v3279
      %3281 = vmatmul.bf16.gmra.mxu0 %v1006
      %v3282 = vpop.f32.mrf.mxu0
      %v3283 = vadd.f32 %v3234, %v3282
      %v3284 = vpop.f32.mrf.mxu0
      %v3285 = vadd.f32 %v3236, %v3284
      %3286 = vdwg.mxu0
      %3287 = vmatpush.bf16.msra.mxu0 %v2609
      %3288 = vmatpush.bf16.msra.mxu0 %v2601
      %3289 = vmatpush.bf16.msra.mxu0 %v2593
      %3290 = vmatpush.bf16.msra.mxu0 %v2585
      %3291 = vmatpush.bf16.msra.mxu0 %v2577
      %3292 = vmatpush.bf16.msra.mxu0 %v2569
      %3293 = vmatpush.bf16.msra.mxu0 %v2561
      %3294 = vmatpush.bf16.msra.mxu0 %v2553
      %3295 = vmatmul.bf16.gmra.mxu0 %v958
      %v3296 = vpop.f32.mrf.mxu0
      %v3297 = vadd.f32 %v3248, %v3296
      %v3298 = vpop.f32.mrf.mxu0
      %v3299 = vadd.f32 %v3250, %v3298
      %3300 = vmatmul.bf16.gmra.mxu0 %v965
      %v3301 = vpop.f32.mrf.mxu0
      %v3302 = vadd.f32 %v3253, %v3301
      %v3303 = vpop.f32.mrf.mxu0
      %v3304 = vadd.f32 %v3255, %v3303
      %3305 = vmatmul.bf16.gmra.mxu0 %v972
      %v3306 = vpop.f32.mrf.mxu0
      %v3307 = vadd.f32 %v3258, %v3306
      %v3308 = vpop.f32.mrf.mxu0
      %v3309 = vadd.f32 %v3260, %v3308
      %3310 = vmatmul.bf16.gmra.mxu0 %v979
      %v3311 = vpop.f32.mrf.mxu0
      %v3312 = vadd.f32 %v3263, %v3311
      %v3313 = vpop.f32.mrf.mxu0
      %v3314 = vadd.f32 %v3265, %v3313
      %3315 = vmatmul.bf16.gmra.mxu0 %v986
      %v3316 = vpop.f32.mrf.mxu0
      %v3317 = vadd.f32 %v3268, %v3316
      %v3318 = vpop.f32.mrf.mxu0
      %v3319 = vadd.f32 %v3270, %v3318
      %3320 = vmatmul.bf16.gmra.mxu0 %v993
      %v3321 = vpop.f32.mrf.mxu0
      %v3322 = vadd.f32 %v3273, %v3321
      %v3323 = vpop.f32.mrf.mxu0
      %v3324 = vadd.f32 %v3275, %v3323
      %3325 = vmatmul.bf16.gmra.mxu0 %v1000
      %v3326 = vpop.f32.mrf.mxu0
      %v3327 = vadd.f32 %v3278, %v3326
      %v3328 = vpop.f32.mrf.mxu0
      %v3329 = vadd.f32 %v3280, %v3328
      %3330 = vmatmul.bf16.gmra.mxu0 %v1007
      %v3331 = vpop.f32.mrf.mxu0
      %v3332 = vadd.f32 %v3283, %v3331
      %v3333 = vpop.f32.mrf.mxu0
      %v3334 = vadd.f32 %v3285, %v3333
      %3335 = vdwg.mxu0
      %3336 = vmatpush.bf16.msra.mxu0 0
      %3337 = vmatpush.bf16.msra.mxu0 0
      %3338 = vmatpush.bf16.msra.mxu0 0
      %3339 = vmatpush.bf16.msra.mxu0 0
      %3340 = vmatpush.bf16.msra.mxu0 0
      %3341 = vmatpush.bf16.msra.mxu0 0
      %3342 = vmatpush.bf16.msra.mxu0 0
      %3343 = vmatpush.bf16.msra.mxu0 %v2617
      %3344 = vmatmul.bf16.gmra.mxu0 %v3019
      %v3345 = vpop.f32.mrf.mxu0
      %v3346 = vadd.f32 %v3297, %v3345
      %v3347 = vpop.f32.mrf.mxu0
      %v3348 = vadd.f32 %v3299, %v3347
      %3349 = vmatmul.bf16.gmra.mxu0 %v3022
      %v3350 = vpop.f32.mrf.mxu0
      %v3351 = vadd.f32 %v3302, %v3350
      %v3352 = vpop.f32.mrf.mxu0
      %v3353 = vadd.f32 %v3304, %v3352
      %3354 = vmatmul.bf16.gmra.mxu0 %v3025
      %v3355 = vpop.f32.mrf.mxu0
      %v3356 = vadd.f32 %v3307, %v3355
      %v3357 = vpop.f32.mrf.mxu0
      %v3358 = vadd.f32 %v3309, %v3357
      %3359 = vmatmul.bf16.gmra.mxu0 %v3028
      %v3360 = vpop.f32.mrf.mxu0
      %v3361 = vadd.f32 %v3312, %v3360
      %v3362 = vpop.f32.mrf.mxu0
      %v3363 = vadd.f32 %v3314, %v3362
      %3364 = vmatmul.bf16.gmra.mxu0 %v3031
      %v3365 = vpop.f32.mrf.mxu0
      %v3366 = vadd.f32 %v3317, %v3365
      %v3367 = vpop.f32.mrf.mxu0
      %v3368 = vadd.f32 %v3319, %v3367
      %3369 = vmatmul.bf16.gmra.mxu0 %v3034
      %v3370 = vpop.f32.mrf.mxu0
      %v3371 = vadd.f32 %v3322, %v3370
      %v3372 = vpop.f32.mrf.mxu0
      %v3373 = vadd.f32 %v3324, %v3372
      %3374 = vmatmul.bf16.gmra.mxu0 %v3037
      %v3375 = vpop.f32.mrf.mxu0
      %v3376 = vadd.f32 %v3327, %v3375
      %v3377 = vpop.f32.mrf.mxu0
      %v3378 = vadd.f32 %v3329, %v3377
      %3379 = vmatmul.bf16.gmra.mxu0 %v3040
      %v3380 = vpop.f32.mrf.mxu0
      %v3381 = vadd.f32 %v3332, %v3380
      %v3382 = vpop.f32.mrf.mxu0
      %v3383 = vadd.f32 %v3334, %v3382
      %3384 = vdwg.mxu0
      %3385 = vmatpush.bf16.msra.mxu0 %v2290
      %3386 = vmatpush.bf16.msra.mxu0 %v2282
      %3387 = vmatpush.bf16.msra.mxu0 %v2274
      %3388 = vmatpush.bf16.msra.mxu0 %v2266
      %3389 = vmatpush.bf16.msra.mxu0 %v2258
      %3390 = vmatpush.bf16.msra.mxu0 %v2250
      %3391 = vmatpush.bf16.msra.mxu0 %v2242
      %3392 = vmatpush.bf16.msra.mxu0 %v2234
      %3393 = vmatmul.bf16.gmra.mxu0 %v953
      %v3394 = vpop.f32.mrf.mxu0
      %v3395 = vadd.f32 %v762, %v3394
      %v3396 = vpop.f32.mrf.mxu0
      %v3397 = vadd.f32 %v762, %v3396
      %3398 = vmatmul.bf16.gmra.mxu0 %v960
      %v3399 = vpop.f32.mrf.mxu0
      %v3400 = vadd.f32 %v762, %v3399
      %v3401 = vpop.f32.mrf.mxu0
      %v3402 = vadd.f32 %v762, %v3401
      %3403 = vmatmul.bf16.gmra.mxu0 %v967
      %v3404 = vpop.f32.mrf.mxu0
      %v3405 = vadd.f32 %v762, %v3404
      %v3406 = vpop.f32.mrf.mxu0
      %v3407 = vadd.f32 %v762, %v3406
      %3408 = vmatmul.bf16.gmra.mxu0 %v974
      %v3409 = vpop.f32.mrf.mxu0
      %v3410 = vadd.f32 %v762, %v3409
      %v3411 = vpop.f32.mrf.mxu0
      %v3412 = vadd.f32 %v762, %v3411
      %3413 = vmatmul.bf16.gmra.mxu0 %v981
      %v3414 = vpop.f32.mrf.mxu0
      %v3415 = vadd.f32 %v762, %v3414
      %v3416 = vpop.f32.mrf.mxu0
      %v3417 = vadd.f32 %v762, %v3416
      %3418 = vmatmul.bf16.gmra.mxu0 %v988
      %v3419 = vpop.f32.mrf.mxu0
      %v3420 = vadd.f32 %v762, %v3419
      %v3421 = vpop.f32.mrf.mxu0
      %v3422 = vadd.f32 %v762, %v3421
      %3423 = vmatmul.bf16.gmra.mxu0 %v995
      %v3424 = vpop.f32.mrf.mxu0
      %v3425 = vadd.f32 %v762, %v3424
      %v3426 = vpop.f32.mrf.mxu0
      %v3427 = vadd.f32 %v762, %v3426
      %3428 = vmatmul.bf16.gmra.mxu0 %v1002
      %v3429 = vpop.f32.mrf.mxu0
      %v3430 = vadd.f32 %v762, %v3429
      %v3431 = vpop.f32.mrf.mxu0
      %v3432 = vadd.f32 %v762, %v3431
      %3433 = vdwg.mxu0
      %3434 = vmatpush.bf16.msra.mxu0 %v2354
      %3435 = vmatpush.bf16.msra.mxu0 %v2346
      %3436 = vmatpush.bf16.msra.mxu0 %v2338
      %3437 = vmatpush.bf16.msra.mxu0 %v2330
      %3438 = vmatpush.bf16.msra.mxu0 %v2322
      %3439 = vmatpush.bf16.msra.mxu0 %v2314
      %3440 = vmatpush.bf16.msra.mxu0 %v2306
      %3441 = vmatpush.bf16.msra.mxu0 %v2298
      %3442 = vmatmul.bf16.gmra.mxu0 %v954
      %v3443 = vpop.f32.mrf.mxu0
      %v3444 = vadd.f32 %v3395, %v3443
      %v3445 = vpop.f32.mrf.mxu0
      %v3446 = vadd.f32 %v3397, %v3445
      %3447 = vmatmul.bf16.gmra.mxu0 %v961
      %v3448 = vpop.f32.mrf.mxu0
      %v3449 = vadd.f32 %v3400, %v3448
      %v3450 = vpop.f32.mrf.mxu0
      %v3451 = vadd.f32 %v3402, %v3450
      %3452 = vmatmul.bf16.gmra.mxu0 %v968
      %v3453 = vpop.f32.mrf.mxu0
      %v3454 = vadd.f32 %v3405, %v3453
      %v3455 = vpop.f32.mrf.mxu0
      %v3456 = vadd.f32 %v3407, %v3455
      %3457 = vmatmul.bf16.gmra.mxu0 %v975
      %v3458 = vpop.f32.mrf.mxu0
      %v3459 = vadd.f32 %v3410, %v3458
      %v3460 = vpop.f32.mrf.mxu0
      %v3461 = vadd.f32 %v3412, %v3460
      %3462 = vmatmul.bf16.gmra.mxu0 %v982
      %v3463 = vpop.f32.mrf.mxu0
      %v3464 = vadd.f32 %v3415, %v3463
      %v3465 = vpop.f32.mrf.mxu0
      %v3466 = vadd.f32 %v3417, %v3465
      %3467 = vmatmul.bf16.gmra.mxu0 %v989
      %v3468 = vpop.f32.mrf.mxu0
      %v3469 = vadd.f32 %v3420, %v3468
      %v3470 = vpop.f32.mrf.mxu0
      %v3471 = vadd.f32 %v3422, %v3470
      %3472 = vmatmul.bf16.gmra.mxu0 %v996
      %v3473 = vpop.f32.mrf.mxu0
      %v3474 = vadd.f32 %v3425, %v3473
      %v3475 = vpop.f32.mrf.mxu0
      %v3476 = vadd.f32 %v3427, %v3475
      %3477 = vmatmul.bf16.gmra.mxu0 %v1003
      %v3478 = vpop.f32.mrf.mxu0
      %v3479 = vadd.f32 %v3430, %v3478
      %v3480 = vpop.f32.mrf.mxu0
      %v3481 = vadd.f32 %v3432, %v3480
      %3482 = vdwg.mxu0
      %3483 = vmatpush.bf16.msra.mxu0 %v2418
      %3484 = vmatpush.bf16.msra.mxu0 %v2410
      %3485 = vmatpush.bf16.msra.mxu0 %v2402
      %3486 = vmatpush.bf16.msra.mxu0 %v2394
      %3487 = vmatpush.bf16.msra.mxu0 %v2386
      %3488 = vmatpush.bf16.msra.mxu0 %v2378
      %3489 = vmatpush.bf16.msra.mxu0 %v2370
      %3490 = vmatpush.bf16.msra.mxu0 %v2362
      %3491 = vmatmul.bf16.gmra.mxu0 %v955
      %v3492 = vpop.f32.mrf.mxu0
      %v3493 = vadd.f32 %v3444, %v3492
      %v3494 = vpop.f32.mrf.mxu0
      %v3495 = vadd.f32 %v3446, %v3494
      %3496 = vmatmul.bf16.gmra.mxu0 %v962
      %v3497 = vpop.f32.mrf.mxu0
      %v3498 = vadd.f32 %v3449, %v3497
      %v3499 = vpop.f32.mrf.mxu0
      %v3500 = vadd.f32 %v3451, %v3499
      %3501 = vmatmul.bf16.gmra.mxu0 %v969
      %v3502 = vpop.f32.mrf.mxu0
      %v3503 = vadd.f32 %v3454, %v3502
      %v3504 = vpop.f32.mrf.mxu0
      %v3505 = vadd.f32 %v3456, %v3504
      %3506 = vmatmul.bf16.gmra.mxu0 %v976
      %v3507 = vpop.f32.mrf.mxu0
      %v3508 = vadd.f32 %v3459, %v3507
      %v3509 = vpop.f32.mrf.mxu0
      %v3510 = vadd.f32 %v3461, %v3509
      %3511 = vmatmul.bf16.gmra.mxu0 %v983
      %v3512 = vpop.f32.mrf.mxu0
      %v3513 = vadd.f32 %v3464, %v3512
      %v3514 = vpop.f32.mrf.mxu0
      %v3515 = vadd.f32 %v3466, %v3514
      %3516 = vmatmul.bf16.gmra.mxu0 %v990
      %v3517 = vpop.f32.mrf.mxu0
      %v3518 = vadd.f32 %v3469, %v3517
      %v3519 = vpop.f32.mrf.mxu0
      %v3520 = vadd.f32 %v3471, %v3519
      %3521 = vmatmul.bf16.gmra.mxu0 %v997
      %v3522 = vpop.f32.mrf.mxu0
      %v3523 = vadd.f32 %v3474, %v3522
      %v3524 = vpop.f32.mrf.mxu0
      %v3525 = vadd.f32 %v3476, %v3524
      %3526 = vmatmul.bf16.gmra.mxu0 %v1004
      %v3527 = vpop.f32.mrf.mxu0
      %v3528 = vadd.f32 %v3479, %v3527
      %v3529 = vpop.f32.mrf.mxu0
      %v3530 = vadd.f32 %v3481, %v3529
      %3531 = vdwg.mxu0
      %3532 = vmatpush.bf16.msra.mxu0 %v2482
      %3533 = vmatpush.bf16.msra.mxu0 %v2474
      %3534 = vmatpush.bf16.msra.mxu0 %v2466
      %3535 = vmatpush.bf16.msra.mxu0 %v2458
      %3536 = vmatpush.bf16.msra.mxu0 %v2450
      %3537 = vmatpush.bf16.msra.mxu0 %v2442
      %3538 = vmatpush.bf16.msra.mxu0 %v2434
      %3539 = vmatpush.bf16.msra.mxu0 %v2426
      %3540 = vmatmul.bf16.gmra.mxu0 %v956
      %v3541 = vpop.f32.mrf.mxu0
      %v3542 = vadd.f32 %v3493, %v3541
      %v3543 = vpop.f32.mrf.mxu0
      %v3544 = vadd.f32 %v3495, %v3543
      %3545 = vmatmul.bf16.gmra.mxu0 %v963
      %v3546 = vpop.f32.mrf.mxu0
      %v3547 = vadd.f32 %v3498, %v3546
      %v3548 = vpop.f32.mrf.mxu0
      %v3549 = vadd.f32 %v3500, %v3548
      %3550 = vmatmul.bf16.gmra.mxu0 %v970
      %v3551 = vpop.f32.mrf.mxu0
      %v3552 = vadd.f32 %v3503, %v3551
      %v3553 = vpop.f32.mrf.mxu0
      %v3554 = vadd.f32 %v3505, %v3553
      %3555 = vmatmul.bf16.gmra.mxu0 %v977
      %v3556 = vpop.f32.mrf.mxu0
      %v3557 = vadd.f32 %v3508, %v3556
      %v3558 = vpop.f32.mrf.mxu0
      %v3559 = vadd.f32 %v3510, %v3558
      %3560 = vmatmul.bf16.gmra.mxu0 %v984
      %v3561 = vpop.f32.mrf.mxu0
      %v3562 = vadd.f32 %v3513, %v3561
      %v3563 = vpop.f32.mrf.mxu0
      %v3564 = vadd.f32 %v3515, %v3563
      %3565 = vmatmul.bf16.gmra.mxu0 %v991
      %v3566 = vpop.f32.mrf.mxu0
      %v3567 = vadd.f32 %v3518, %v3566
      %v3568 = vpop.f32.mrf.mxu0
      %v3569 = vadd.f32 %v3520, %v3568
      %3570 = vmatmul.bf16.gmra.mxu0 %v998
      %v3571 = vpop.f32.mrf.mxu0
      %v3572 = vadd.f32 %v3523, %v3571
      %v3573 = vpop.f32.mrf.mxu0
      %v3574 = vadd.f32 %v3525, %v3573
      %3575 = vmatmul.bf16.gmra.mxu0 %v1005
      %v3576 = vpop.f32.mrf.mxu0
      %v3577 = vadd.f32 %v3528, %v3576
      %v3578 = vpop.f32.mrf.mxu0
      %v3579 = vadd.f32 %v3530, %v3578
      %3580 = vdwg.mxu0
      %3581 = vmatpush.bf16.msra.mxu0 %v2546
      %3582 = vmatpush.bf16.msra.mxu0 %v2538
      %3583 = vmatpush.bf16.msra.mxu0 %v2530
      %3584 = vmatpush.bf16.msra.mxu0 %v2522
      %3585 = vmatpush.bf16.msra.mxu0 %v2514
      %3586 = vmatpush.bf16.msra.mxu0 %v2506
      %3587 = vmatpush.bf16.msra.mxu0 %v2498
      %3588 = vmatpush.bf16.msra.mxu0 %v2490
      %3589 = vmatmul.bf16.gmra.mxu0 %v957
      %v3590 = vpop.f32.mrf.mxu0
      %v3591 = vadd.f32 %v3542, %v3590
      %v3592 = vpop.f32.mrf.mxu0
      %v3593 = vadd.f32 %v3544, %v3592
      %3594 = vmatmul.bf16.gmra.mxu0 %v964
      %v3595 = vpop.f32.mrf.mxu0
      %v3596 = vadd.f32 %v3547, %v3595
      %v3597 = vpop.f32.mrf.mxu0
      %v3598 = vadd.f32 %v3549, %v3597
      %3599 = vmatmul.bf16.gmra.mxu0 %v971
      %v3600 = vpop.f32.mrf.mxu0
      %v3601 = vadd.f32 %v3552, %v3600
      %v3602 = vpop.f32.mrf.mxu0
      %v3603 = vadd.f32 %v3554, %v3602
      %3604 = vmatmul.bf16.gmra.mxu0 %v978
      %v3605 = vpop.f32.mrf.mxu0
      %v3606 = vadd.f32 %v3557, %v3605
      %v3607 = vpop.f32.mrf.mxu0
      %v3608 = vadd.f32 %v3559, %v3607
      %3609 = vmatmul.bf16.gmra.mxu0 %v985
      %v3610 = vpop.f32.mrf.mxu0
      %v3611 = vadd.f32 %v3562, %v3610
      %v3612 = vpop.f32.mrf.mxu0
      %v3613 = vadd.f32 %v3564, %v3612
      %3614 = vmatmul.bf16.gmra.mxu0 %v992
      %v3615 = vpop.f32.mrf.mxu0
      %v3616 = vadd.f32 %v3567, %v3615
      %v3617 = vpop.f32.mrf.mxu0
      %v3618 = vadd.f32 %v3569, %v3617
      %3619 = vmatmul.bf16.gmra.mxu0 %v999
      %v3620 = vpop.f32.mrf.mxu0
      %v3621 = vadd.f32 %v3572, %v3620
      %v3622 = vpop.f32.mrf.mxu0
      %v3623 = vadd.f32 %v3574, %v3622
      %3624 = vmatmul.bf16.gmra.mxu0 %v1006
      %v3625 = vpop.f32.mrf.mxu0
      %v3626 = vadd.f32 %v3577, %v3625
      %v3627 = vpop.f32.mrf.mxu0
      %v3628 = vadd.f32 %v3579, %v3627
      %3629 = vdwg.mxu0
      %3630 = vmatpush.bf16.msra.mxu0 %v2610
      %3631 = vmatpush.bf16.msra.mxu0 %v2602
      %3632 = vmatpush.bf16.msra.mxu0 %v2594
      %3633 = vmatpush.bf16.msra.mxu0 %v2586
      %3634 = vmatpush.bf16.msra.mxu0 %v2578
      %3635 = vmatpush.bf16.msra.mxu0 %v2570
      %3636 = vmatpush.bf16.msra.mxu0 %v2562
      %3637 = vmatpush.bf16.msra.mxu0 %v2554
      %3638 = vmatmul.bf16.gmra.mxu0 %v958
      %v3639 = vpop.f32.mrf.mxu0
      %v3640 = vadd.f32 %v3591, %v3639
      %v3641 = vpop.f32.mrf.mxu0
      %v3642 = vadd.f32 %v3593, %v3641
      %3643 = vmatmul.bf16.gmra.mxu0 %v965
      %v3644 = vpop.f32.mrf.mxu0
      %v3645 = vadd.f32 %v3596, %v3644
      %v3646 = vpop.f32.mrf.mxu0
      %v3647 = vadd.f32 %v3598, %v3646
      %3648 = vmatmul.bf16.gmra.mxu0 %v972
      %v3649 = vpop.f32.mrf.mxu0
      %v3650 = vadd.f32 %v3601, %v3649
      %v3651 = vpop.f32.mrf.mxu0
      %v3652 = vadd.f32 %v3603, %v3651
      %3653 = vmatmul.bf16.gmra.mxu0 %v979
      %v3654 = vpop.f32.mrf.mxu0
      %v3655 = vadd.f32 %v3606, %v3654
      %v3656 = vpop.f32.mrf.mxu0
      %v3657 = vadd.f32 %v3608, %v3656
      %3658 = vmatmul.bf16.gmra.mxu0 %v986
      %v3659 = vpop.f32.mrf.mxu0
      %v3660 = vadd.f32 %v3611, %v3659
      %v3661 = vpop.f32.mrf.mxu0
      %v3662 = vadd.f32 %v3613, %v3661
      %3663 = vmatmul.bf16.gmra.mxu0 %v993
      %v3664 = vpop.f32.mrf.mxu0
      %v3665 = vadd.f32 %v3616, %v3664
      %v3666 = vpop.f32.mrf.mxu0
      %v3667 = vadd.f32 %v3618, %v3666
      %3668 = vmatmul.bf16.gmra.mxu0 %v1000
      %v3669 = vpop.f32.mrf.mxu0
      %v3670 = vadd.f32 %v3621, %v3669
      %v3671 = vpop.f32.mrf.mxu0
      %v3672 = vadd.f32 %v3623, %v3671
      %3673 = vmatmul.bf16.gmra.mxu0 %v1007
      %v3674 = vpop.f32.mrf.mxu0
      %v3675 = vadd.f32 %v3626, %v3674
      %v3676 = vpop.f32.mrf.mxu0
      %v3677 = vadd.f32 %v3628, %v3676
      %3678 = vdwg.mxu0
      %3679 = vmatpush.bf16.msra.mxu0 0
      %3680 = vmatpush.bf16.msra.mxu0 0
      %3681 = vmatpush.bf16.msra.mxu0 0
      %3682 = vmatpush.bf16.msra.mxu0 0
      %3683 = vmatpush.bf16.msra.mxu0 0
      %3684 = vmatpush.bf16.msra.mxu0 0
      %3685 = vmatpush.bf16.msra.mxu0 0
      %3686 = vmatpush.bf16.msra.mxu0 %v2618
      %3687 = vmatmul.bf16.gmra.mxu0 %v3019
      %v3688 = vpop.f32.mrf.mxu0
      %v3689 = vadd.f32 %v3640, %v3688
      %v3690 = vpop.f32.mrf.mxu0
      %v3691 = vadd.f32 %v3642, %v3690
      %3692 = vmatmul.bf16.gmra.mxu0 %v3022
      %v3693 = vpop.f32.mrf.mxu0
      %v3694 = vadd.f32 %v3645, %v3693
      %v3695 = vpop.f32.mrf.mxu0
      %v3696 = vadd.f32 %v3647, %v3695
      %3697 = vmatmul.bf16.gmra.mxu0 %v3025
      %v3698 = vpop.f32.mrf.mxu0
      %v3699 = vadd.f32 %v3650, %v3698
      %v3700 = vpop.f32.mrf.mxu0
      %v3701 = vadd.f32 %v3652, %v3700
      %3702 = vmatmul.bf16.gmra.mxu0 %v3028
      %v3703 = vpop.f32.mrf.mxu0
      %v3704 = vadd.f32 %v3655, %v3703
      %v3705 = vpop.f32.mrf.mxu0
      %v3706 = vadd.f32 %v3657, %v3705
      %3707 = vmatmul.bf16.gmra.mxu0 %v3031
      %v3708 = vpop.f32.mrf.mxu0
      %v3709 = vadd.f32 %v3660, %v3708
      %v3710 = vpop.f32.mrf.mxu0
      %v3711 = vadd.f32 %v3662, %v3710
      %3712 = vmatmul.bf16.gmra.mxu0 %v3034
      %v3713 = vpop.f32.mrf.mxu0
      %v3714 = vadd.f32 %v3665, %v3713
      %v3715 = vpop.f32.mrf.mxu0
      %v3716 = vadd.f32 %v3667, %v3715
      %3717 = vmatmul.bf16.gmra.mxu0 %v3037
      %v3718 = vpop.f32.mrf.mxu0
      %v3719 = vadd.f32 %v3670, %v3718
      %v3720 = vpop.f32.mrf.mxu0
      %v3721 = vadd.f32 %v3672, %v3720
      %3722 = vmatmul.bf16.gmra.mxu0 %v3040
      %v3723 = vpop.f32.mrf.mxu0
      %v3724 = vadd.f32 %v3675, %v3723
      %v3725 = vpop.f32.mrf.mxu0
      %v3726 = vadd.f32 %v3677, %v3725
      %3727 = vdwg.mxu0
      %3728 = vmatpush.bf16.msra.mxu0 %v2291
      %3729 = vmatpush.bf16.msra.mxu0 %v2283
      %3730 = vmatpush.bf16.msra.mxu0 %v2275
      %3731 = vmatpush.bf16.msra.mxu0 %v2267
      %3732 = vmatpush.bf16.msra.mxu0 %v2259
      %3733 = vmatpush.bf16.msra.mxu0 %v2251
      %3734 = vmatpush.bf16.msra.mxu0 %v2243
      %3735 = vmatpush.bf16.msra.mxu0 %v2235
      %3736 = vmatmul.bf16.gmra.mxu0 %v953
      %v3737 = vpop.f32.mrf.mxu0
      %v3738 = vadd.f32 %v763, %v3737
      %v3739 = vpop.f32.mrf.mxu0
      %v3740 = vadd.f32 %v763, %v3739
      %3741 = vmatmul.bf16.gmra.mxu0 %v960
      %v3742 = vpop.f32.mrf.mxu0
      %v3743 = vadd.f32 %v763, %v3742
      %v3744 = vpop.f32.mrf.mxu0
      %v3745 = vadd.f32 %v763, %v3744
      %3746 = vmatmul.bf16.gmra.mxu0 %v967
      %v3747 = vpop.f32.mrf.mxu0
      %v3748 = vadd.f32 %v763, %v3747
      %v3749 = vpop.f32.mrf.mxu0
      %v3750 = vadd.f32 %v763, %v3749
      %3751 = vmatmul.bf16.gmra.mxu0 %v974
      %v3752 = vpop.f32.mrf.mxu0
      %v3753 = vadd.f32 %v763, %v3752
      %v3754 = vpop.f32.mrf.mxu0
      %v3755 = vadd.f32 %v763, %v3754
      %3756 = vmatmul.bf16.gmra.mxu0 %v981
      %v3757 = vpop.f32.mrf.mxu0
      %v3758 = vadd.f32 %v763, %v3757
      %v3759 = vpop.f32.mrf.mxu0
      %v3760 = vadd.f32 %v763, %v3759
      %3761 = vmatmul.bf16.gmra.mxu0 %v988
      %v3762 = vpop.f32.mrf.mxu0
      %v3763 = vadd.f32 %v763, %v3762
      %v3764 = vpop.f32.mrf.mxu0
      %v3765 = vadd.f32 %v763, %v3764
      %3766 = vmatmul.bf16.gmra.mxu0 %v995
      %v3767 = vpop.f32.mrf.mxu0
      %v3768 = vadd.f32 %v763, %v3767
      %v3769 = vpop.f32.mrf.mxu0
      %v3770 = vadd.f32 %v763, %v3769
      %3771 = vmatmul.bf16.gmra.mxu0 %v1002
      %v3772 = vpop.f32.mrf.mxu0
      %v3773 = vadd.f32 %v763, %v3772
      %v3774 = vpop.f32.mrf.mxu0
      %v3775 = vadd.f32 %v763, %v3774
      %3776 = vdwg.mxu0
      %3777 = vmatpush.bf16.msra.mxu0 %v2355
      %3778 = vmatpush.bf16.msra.mxu0 %v2347
      %3779 = vmatpush.bf16.msra.mxu0 %v2339
      %3780 = vmatpush.bf16.msra.mxu0 %v2331
      %3781 = vmatpush.bf16.msra.mxu0 %v2323
      %3782 = vmatpush.bf16.msra.mxu0 %v2315
      %3783 = vmatpush.bf16.msra.mxu0 %v2307
      %3784 = vmatpush.bf16.msra.mxu0 %v2299
      %3785 = vmatmul.bf16.gmra.mxu0 %v954
      %v3786 = vpop.f32.mrf.mxu0
      %v3787 = vadd.f32 %v3738, %v3786
      %v3788 = vpop.f32.mrf.mxu0
      %v3789 = vadd.f32 %v3740, %v3788
      %3790 = vmatmul.bf16.gmra.mxu0 %v961
      %v3791 = vpop.f32.mrf.mxu0
      %v3792 = vadd.f32 %v3743, %v3791
      %v3793 = vpop.f32.mrf.mxu0
      %v3794 = vadd.f32 %v3745, %v3793
      %3795 = vmatmul.bf16.gmra.mxu0 %v968
      %v3796 = vpop.f32.mrf.mxu0
      %v3797 = vadd.f32 %v3748, %v3796
      %v3798 = vpop.f32.mrf.mxu0
      %v3799 = vadd.f32 %v3750, %v3798
      %3800 = vmatmul.bf16.gmra.mxu0 %v975
      %v3801 = vpop.f32.mrf.mxu0
      %v3802 = vadd.f32 %v3753, %v3801
      %v3803 = vpop.f32.mrf.mxu0
      %v3804 = vadd.f32 %v3755, %v3803
      %3805 = vmatmul.bf16.gmra.mxu0 %v982
      %v3806 = vpop.f32.mrf.mxu0
      %v3807 = vadd.f32 %v3758, %v3806
      %v3808 = vpop.f32.mrf.mxu0
      %v3809 = vadd.f32 %v3760, %v3808
      %3810 = vmatmul.bf16.gmra.mxu0 %v989
      %v3811 = vpop.f32.mrf.mxu0
      %v3812 = vadd.f32 %v3763, %v3811
      %v3813 = vpop.f32.mrf.mxu0
      %v3814 = vadd.f32 %v3765, %v3813
      %3815 = vmatmul.bf16.gmra.mxu0 %v996
      %v3816 = vpop.f32.mrf.mxu0
      %v3817 = vadd.f32 %v3768, %v3816
      %v3818 = vpop.f32.mrf.mxu0
      %v3819 = vadd.f32 %v3770, %v3818
      %3820 = vmatmul.bf16.gmra.mxu0 %v1003
      %v3821 = vpop.f32.mrf.mxu0
      %v3822 = vadd.f32 %v3773, %v3821
      %v3823 = vpop.f32.mrf.mxu0
      %v3824 = vadd.f32 %v3775, %v3823
      %3825 = vdwg.mxu0
      %3826 = vmatpush.bf16.msra.mxu0 %v2419
      %3827 = vmatpush.bf16.msra.mxu0 %v2411
      %3828 = vmatpush.bf16.msra.mxu0 %v2403
      %3829 = vmatpush.bf16.msra.mxu0 %v2395
      %3830 = vmatpush.bf16.msra.mxu0 %v2387
      %3831 = vmatpush.bf16.msra.mxu0 %v2379
      %3832 = vmatpush.bf16.msra.mxu0 %v2371
      %3833 = vmatpush.bf16.msra.mxu0 %v2363
      %3834 = vmatmul.bf16.gmra.mxu0 %v955
      %v3835 = vpop.f32.mrf.mxu0
      %v3836 = vadd.f32 %v3787, %v3835
      %v3837 = vpop.f32.mrf.mxu0
      %v3838 = vadd.f32 %v3789, %v3837
      %3839 = vmatmul.bf16.gmra.mxu0 %v962
      %v3840 = vpop.f32.mrf.mxu0
      %v3841 = vadd.f32 %v3792, %v3840
      %v3842 = vpop.f32.mrf.mxu0
      %v3843 = vadd.f32 %v3794, %v3842
      %3844 = vmatmul.bf16.gmra.mxu0 %v969
      %v3845 = vpop.f32.mrf.mxu0
      %v3846 = vadd.f32 %v3797, %v3845
      %v3847 = vpop.f32.mrf.mxu0
      %v3848 = vadd.f32 %v3799, %v3847
      %3849 = vmatmul.bf16.gmra.mxu0 %v976
      %v3850 = vpop.f32.mrf.mxu0
      %v3851 = vadd.f32 %v3802, %v3850
      %v3852 = vpop.f32.mrf.mxu0
      %v3853 = vadd.f32 %v3804, %v3852
      %3854 = vmatmul.bf16.gmra.mxu0 %v983
      %v3855 = vpop.f32.mrf.mxu0
      %v3856 = vadd.f32 %v3807, %v3855
      %v3857 = vpop.f32.mrf.mxu0
      %v3858 = vadd.f32 %v3809, %v3857
      %3859 = vmatmul.bf16.gmra.mxu0 %v990
      %v3860 = vpop.f32.mrf.mxu0
      %v3861 = vadd.f32 %v3812, %v3860
      %v3862 = vpop.f32.mrf.mxu0
      %v3863 = vadd.f32 %v3814, %v3862
      %3864 = vmatmul.bf16.gmra.mxu0 %v997
      %v3865 = vpop.f32.mrf.mxu0
      %v3866 = vadd.f32 %v3817, %v3865
      %v3867 = vpop.f32.mrf.mxu0
      %v3868 = vadd.f32 %v3819, %v3867
      %3869 = vmatmul.bf16.gmra.mxu0 %v1004
      %v3870 = vpop.f32.mrf.mxu0
      %v3871 = vadd.f32 %v3822, %v3870
      %v3872 = vpop.f32.mrf.mxu0
      %v3873 = vadd.f32 %v3824, %v3872
      %3874 = vdwg.mxu0
      %3875 = vmatpush.bf16.msra.mxu0 %v2483
      %3876 = vmatpush.bf16.msra.mxu0 %v2475
      %3877 = vmatpush.bf16.msra.mxu0 %v2467
      %3878 = vmatpush.bf16.msra.mxu0 %v2459
      %3879 = vmatpush.bf16.msra.mxu0 %v2451
      %3880 = vmatpush.bf16.msra.mxu0 %v2443
      %3881 = vmatpush.bf16.msra.mxu0 %v2435
      %3882 = vmatpush.bf16.msra.mxu0 %v2427
      %3883 = vmatmul.bf16.gmra.mxu0 %v956
      %v3884 = vpop.f32.mrf.mxu0
      %v3885 = vadd.f32 %v3836, %v3884
      %v3886 = vpop.f32.mrf.mxu0
      %v3887 = vadd.f32 %v3838, %v3886
      %3888 = vmatmul.bf16.gmra.mxu0 %v963
      %v3889 = vpop.f32.mrf.mxu0
      %v3890 = vadd.f32 %v3841, %v3889
      %v3891 = vpop.f32.mrf.mxu0
      %v3892 = vadd.f32 %v3843, %v3891
      %3893 = vmatmul.bf16.gmra.mxu0 %v970
      %v3894 = vpop.f32.mrf.mxu0
      %v3895 = vadd.f32 %v3846, %v3894
      %v3896 = vpop.f32.mrf.mxu0
      %v3897 = vadd.f32 %v3848, %v3896
      %3898 = vmatmul.bf16.gmra.mxu0 %v977
      %v3899 = vpop.f32.mrf.mxu0
      %v3900 = vadd.f32 %v3851, %v3899
      %v3901 = vpop.f32.mrf.mxu0
      %v3902 = vadd.f32 %v3853, %v3901
      %3903 = vmatmul.bf16.gmra.mxu0 %v984
      %v3904 = vpop.f32.mrf.mxu0
      %v3905 = vadd.f32 %v3856, %v3904
      %v3906 = vpop.f32.mrf.mxu0
      %v3907 = vadd.f32 %v3858, %v3906
      %3908 = vmatmul.bf16.gmra.mxu0 %v991
      %v3909 = vpop.f32.mrf.mxu0
      %v3910 = vadd.f32 %v3861, %v3909
      %v3911 = vpop.f32.mrf.mxu0
      %v3912 = vadd.f32 %v3863, %v3911
      %3913 = vmatmul.bf16.gmra.mxu0 %v998
      %v3914 = vpop.f32.mrf.mxu0
      %v3915 = vadd.f32 %v3866, %v3914
      %v3916 = vpop.f32.mrf.mxu0
      %v3917 = vadd.f32 %v3868, %v3916
      %3918 = vmatmul.bf16.gmra.mxu0 %v1005
      %v3919 = vpop.f32.mrf.mxu0
      %v3920 = vadd.f32 %v3871, %v3919
      %v3921 = vpop.f32.mrf.mxu0
      %v3922 = vadd.f32 %v3873, %v3921
      %3923 = vdwg.mxu0
      %3924 = vmatpush.bf16.msra.mxu0 %v2547
      %3925 = vmatpush.bf16.msra.mxu0 %v2539
      %3926 = vmatpush.bf16.msra.mxu0 %v2531
      %3927 = vmatpush.bf16.msra.mxu0 %v2523
      %3928 = vmatpush.bf16.msra.mxu0 %v2515
      %3929 = vmatpush.bf16.msra.mxu0 %v2507
      %3930 = vmatpush.bf16.msra.mxu0 %v2499
      %3931 = vmatpush.bf16.msra.mxu0 %v2491
      %3932 = vmatmul.bf16.gmra.mxu0 %v957
      %v3933 = vpop.f32.mrf.mxu0
      %v3934 = vadd.f32 %v3885, %v3933
      %v3935 = vpop.f32.mrf.mxu0
      %v3936 = vadd.f32 %v3887, %v3935
      %3937 = vmatmul.bf16.gmra.mxu0 %v964
      %v3938 = vpop.f32.mrf.mxu0
      %v3939 = vadd.f32 %v3890, %v3938
      %v3940 = vpop.f32.mrf.mxu0
      %v3941 = vadd.f32 %v3892, %v3940
      %3942 = vmatmul.bf16.gmra.mxu0 %v971
      %v3943 = vpop.f32.mrf.mxu0
      %v3944 = vadd.f32 %v3895, %v3943
      %v3945 = vpop.f32.mrf.mxu0
      %v3946 = vadd.f32 %v3897, %v3945
      %3947 = vmatmul.bf16.gmra.mxu0 %v978
      %v3948 = vpop.f32.mrf.mxu0
      %v3949 = vadd.f32 %v3900, %v3948
      %v3950 = vpop.f32.mrf.mxu0
      %v3951 = vadd.f32 %v3902, %v3950
      %3952 = vmatmul.bf16.gmra.mxu0 %v985
      %v3953 = vpop.f32.mrf.mxu0
      %v3954 = vadd.f32 %v3905, %v3953
      %v3955 = vpop.f32.mrf.mxu0
      %v3956 = vadd.f32 %v3907, %v3955
      %3957 = vmatmul.bf16.gmra.mxu0 %v992
      %v3958 = vpop.f32.mrf.mxu0
      %v3959 = vadd.f32 %v3910, %v3958
      %v3960 = vpop.f32.mrf.mxu0
      %v3961 = vadd.f32 %v3912, %v3960
      %3962 = vmatmul.bf16.gmra.mxu0 %v999
      %v3963 = vpop.f32.mrf.mxu0
      %v3964 = vadd.f32 %v3915, %v3963
      %v3965 = vpop.f32.mrf.mxu0
      %v3966 = vadd.f32 %v3917, %v3965
      %3967 = vmatmul.bf16.gmra.mxu0 %v1006
      %v3968 = vpop.f32.mrf.mxu0
      %v3969 = vadd.f32 %v3920, %v3968
      %v3970 = vpop.f32.mrf.mxu0
      %v3971 = vadd.f32 %v3922, %v3970
      %3972 = vdwg.mxu0
      %3973 = vmatpush.bf16.msra.mxu0 %v2611
      %3974 = vmatpush.bf16.msra.mxu0 %v2603
      %3975 = vmatpush.bf16.msra.mxu0 %v2595
      %3976 = vmatpush.bf16.msra.mxu0 %v2587
      %3977 = vmatpush.bf16.msra.mxu0 %v2579
      %3978 = vmatpush.bf16.msra.mxu0 %v2571
      %3979 = vmatpush.bf16.msra.mxu0 %v2563
      %3980 = vmatpush.bf16.msra.mxu0 %v2555
      %3981 = vmatmul.bf16.gmra.mxu0 %v958
      %v3982 = vpop.f32.mrf.mxu0
      %v3983 = vadd.f32 %v3934, %v3982
      %v3984 = vpop.f32.mrf.mxu0
      %v3985 = vadd.f32 %v3936, %v3984
      %3986 = vmatmul.bf16.gmra.mxu0 %v965
      %v3987 = vpop.f32.mrf.mxu0
      %v3988 = vadd.f32 %v3939, %v3987
      %v3989 = vpop.f32.mrf.mxu0
      %v3990 = vadd.f32 %v3941, %v3989
      %3991 = vmatmul.bf16.gmra.mxu0 %v972
      %v3992 = vpop.f32.mrf.mxu0
      %v3993 = vadd.f32 %v3944, %v3992
      %v3994 = vpop.f32.mrf.mxu0
      %v3995 = vadd.f32 %v3946, %v3994
      %3996 = vmatmul.bf16.gmra.mxu0 %v979
      %v3997 = vpop.f32.mrf.mxu0
      %v3998 = vadd.f32 %v3949, %v3997
      %v3999 = vpop.f32.mrf.mxu0
      %v4000 = vadd.f32 %v3951, %v3999
      %4001 = vmatmul.bf16.gmra.mxu0 %v986
      %v4002 = vpop.f32.mrf.mxu0
      %v4003 = vadd.f32 %v3954, %v4002
      %v4004 = vpop.f32.mrf.mxu0
      %v4005 = vadd.f32 %v3956, %v4004
      %4006 = vmatmul.bf16.gmra.mxu0 %v993
      %v4007 = vpop.f32.mrf.mxu0
      %v4008 = vadd.f32 %v3959, %v4007
      %v4009 = vpop.f32.mrf.mxu0
      %v4010 = vadd.f32 %v3961, %v4009
      %4011 = vmatmul.bf16.gmra.mxu0 %v1000
      %v4012 = vpop.f32.mrf.mxu0
      %v4013 = vadd.f32 %v3964, %v4012
      %v4014 = vpop.f32.mrf.mxu0
      %v4015 = vadd.f32 %v3966, %v4014
      %4016 = vmatmul.bf16.gmra.mxu0 %v1007
      %v4017 = vpop.f32.mrf.mxu0
      %v4018 = vadd.f32 %v3969, %v4017
      %v4019 = vpop.f32.mrf.mxu0
      %v4020 = vadd.f32 %v3971, %v4019
      %4021 = vdwg.mxu0
      %4022 = vmatpush.bf16.msra.mxu0 0
      %4023 = vmatpush.bf16.msra.mxu0 0
      %4024 = vmatpush.bf16.msra.mxu0 0
      %4025 = vmatpush.bf16.msra.mxu0 0
      %4026 = vmatpush.bf16.msra.mxu0 0
      %4027 = vmatpush.bf16.msra.mxu0 0
      %4028 = vmatpush.bf16.msra.mxu0 0
      %4029 = vmatpush.bf16.msra.mxu0 %v2619
      %4030 = vmatmul.bf16.gmra.mxu0 %v3019
      %v4031 = vpop.f32.mrf.mxu0
      %v4032 = vadd.f32 %v3983, %v4031
      %v4033 = vpop.f32.mrf.mxu0
      %v4034 = vadd.f32 %v3985, %v4033
      %4035 = vmatmul.bf16.gmra.mxu0 %v3022
      %v4036 = vpop.f32.mrf.mxu0
      %v4037 = vadd.f32 %v3988, %v4036
      %v4038 = vpop.f32.mrf.mxu0
      %v4039 = vadd.f32 %v3990, %v4038
      %4040 = vmatmul.bf16.gmra.mxu0 %v3025
      %v4041 = vpop.f32.mrf.mxu0
      %v4042 = vadd.f32 %v3993, %v4041
      %v4043 = vpop.f32.mrf.mxu0
      %v4044 = vadd.f32 %v3995, %v4043
      %4045 = vmatmul.bf16.gmra.mxu0 %v3028
      %v4046 = vpop.f32.mrf.mxu0
      %v4047 = vadd.f32 %v3998, %v4046
      %v4048 = vpop.f32.mrf.mxu0
      %v4049 = vadd.f32 %v4000, %v4048
      %4050 = vmatmul.bf16.gmra.mxu0 %v3031
      %v4051 = vpop.f32.mrf.mxu0
      %v4052 = vadd.f32 %v4003, %v4051
      %v4053 = vpop.f32.mrf.mxu0
      %v4054 = vadd.f32 %v4005, %v4053
      %4055 = vmatmul.bf16.gmra.mxu0 %v3034
      %v4056 = vpop.f32.mrf.mxu0
      %v4057 = vadd.f32 %v4008, %v4056
      %v4058 = vpop.f32.mrf.mxu0
      %v4059 = vadd.f32 %v4010, %v4058
      %4060 = vmatmul.bf16.gmra.mxu0 %v3037
      %v4061 = vpop.f32.mrf.mxu0
      %v4062 = vadd.f32 %v4013, %v4061
      %v4063 = vpop.f32.mrf.mxu0
      %v4064 = vadd.f32 %v4015, %v4063
      %4065 = vmatmul.bf16.gmra.mxu0 %v3040
      %v4066 = vpop.f32.mrf.mxu0
      %v4067 = vadd.f32 %v4018, %v4066
      %v4068 = vpop.f32.mrf.mxu0
      %v4069 = vadd.f32 %v4020, %v4068
      %4070 = vdwg.mxu0
      %4071 = vmatpush.bf16.msra.mxu0 %v2292
      %4072 = vmatpush.bf16.msra.mxu0 %v2284
      %4073 = vmatpush.bf16.msra.mxu0 %v2276
      %4074 = vmatpush.bf16.msra.mxu0 %v2268
      %4075 = vmatpush.bf16.msra.mxu0 %v2260
      %4076 = vmatpush.bf16.msra.mxu0 %v2252
      %4077 = vmatpush.bf16.msra.mxu0 %v2244
      %4078 = vmatpush.bf16.msra.mxu0 %v2236
      %4079 = vmatmul.bf16.gmra.mxu0 %v953
      %v4080 = vpop.f32.mrf.mxu0
      %v4081 = vadd.f32 %v764, %v4080
      %v4082 = vpop.f32.mrf.mxu0
      %v4083 = vadd.f32 %v764, %v4082
      %4084 = vmatmul.bf16.gmra.mxu0 %v960
      %v4085 = vpop.f32.mrf.mxu0
      %v4086 = vadd.f32 %v764, %v4085
      %v4087 = vpop.f32.mrf.mxu0
      %v4088 = vadd.f32 %v764, %v4087
      %4089 = vmatmul.bf16.gmra.mxu0 %v967
      %v4090 = vpop.f32.mrf.mxu0
      %v4091 = vadd.f32 %v764, %v4090
      %v4092 = vpop.f32.mrf.mxu0
      %v4093 = vadd.f32 %v764, %v4092
      %4094 = vmatmul.bf16.gmra.mxu0 %v974
      %v4095 = vpop.f32.mrf.mxu0
      %v4096 = vadd.f32 %v764, %v4095
      %v4097 = vpop.f32.mrf.mxu0
      %v4098 = vadd.f32 %v764, %v4097
      %4099 = vmatmul.bf16.gmra.mxu0 %v981
      %v4100 = vpop.f32.mrf.mxu0
      %v4101 = vadd.f32 %v764, %v4100
      %v4102 = vpop.f32.mrf.mxu0
      %v4103 = vadd.f32 %v764, %v4102
      %4104 = vmatmul.bf16.gmra.mxu0 %v988
      %v4105 = vpop.f32.mrf.mxu0
      %v4106 = vadd.f32 %v764, %v4105
      %v4107 = vpop.f32.mrf.mxu0
      %v4108 = vadd.f32 %v764, %v4107
      %4109 = vmatmul.bf16.gmra.mxu0 %v995
      %v4110 = vpop.f32.mrf.mxu0
      %v4111 = vadd.f32 %v764, %v4110
      %v4112 = vpop.f32.mrf.mxu0
      %v4113 = vadd.f32 %v764, %v4112
      %4114 = vmatmul.bf16.gmra.mxu0 %v1002
      %v4115 = vpop.f32.mrf.mxu0
      %v4116 = vadd.f32 %v764, %v4115
      %v4117 = vpop.f32.mrf.mxu0
      %v4118 = vadd.f32 %v764, %v4117
      %4119 = vdwg.mxu0
      %4120 = vmatpush.bf16.msra.mxu0 %v2356
      %4121 = vmatpush.bf16.msra.mxu0 %v2348
      %4122 = vmatpush.bf16.msra.mxu0 %v2340
      %4123 = vmatpush.bf16.msra.mxu0 %v2332
      %4124 = vmatpush.bf16.msra.mxu0 %v2324
      %4125 = vmatpush.bf16.msra.mxu0 %v2316
      %4126 = vmatpush.bf16.msra.mxu0 %v2308
      %4127 = vmatpush.bf16.msra.mxu0 %v2300
      %4128 = vmatmul.bf16.gmra.mxu0 %v954
      %v4129 = vpop.f32.mrf.mxu0
      %v4130 = vadd.f32 %v4081, %v4129
      %v4131 = vpop.f32.mrf.mxu0
      %v4132 = vadd.f32 %v4083, %v4131
      %4133 = vmatmul.bf16.gmra.mxu0 %v961
      %v4134 = vpop.f32.mrf.mxu0
      %v4135 = vadd.f32 %v4086, %v4134
      %v4136 = vpop.f32.mrf.mxu0
      %v4137 = vadd.f32 %v4088, %v4136
      %4138 = vmatmul.bf16.gmra.mxu0 %v968
      %v4139 = vpop.f32.mrf.mxu0
      %v4140 = vadd.f32 %v4091, %v4139
      %v4141 = vpop.f32.mrf.mxu0
      %v4142 = vadd.f32 %v4093, %v4141
      %4143 = vmatmul.bf16.gmra.mxu0 %v975
      %v4144 = vpop.f32.mrf.mxu0
      %v4145 = vadd.f32 %v4096, %v4144
      %v4146 = vpop.f32.mrf.mxu0
      %v4147 = vadd.f32 %v4098, %v4146
      %4148 = vmatmul.bf16.gmra.mxu0 %v982
      %v4149 = vpop.f32.mrf.mxu0
      %v4150 = vadd.f32 %v4101, %v4149
      %v4151 = vpop.f32.mrf.mxu0
      %v4152 = vadd.f32 %v4103, %v4151
      %4153 = vmatmul.bf16.gmra.mxu0 %v989
      %v4154 = vpop.f32.mrf.mxu0
      %v4155 = vadd.f32 %v4106, %v4154
      %v4156 = vpop.f32.mrf.mxu0
      %v4157 = vadd.f32 %v4108, %v4156
      %4158 = vmatmul.bf16.gmra.mxu0 %v996
      %v4159 = vpop.f32.mrf.mxu0
      %v4160 = vadd.f32 %v4111, %v4159
      %v4161 = vpop.f32.mrf.mxu0
      %v4162 = vadd.f32 %v4113, %v4161
      %4163 = vmatmul.bf16.gmra.mxu0 %v1003
      %v4164 = vpop.f32.mrf.mxu0
      %v4165 = vadd.f32 %v4116, %v4164
      %v4166 = vpop.f32.mrf.mxu0
      %v4167 = vadd.f32 %v4118, %v4166
      %4168 = vdwg.mxu0
      %4169 = vmatpush.bf16.msra.mxu0 %v2420
      %4170 = vmatpush.bf16.msra.mxu0 %v2412
      %4171 = vmatpush.bf16.msra.mxu0 %v2404
      %4172 = vmatpush.bf16.msra.mxu0 %v2396
      %4173 = vmatpush.bf16.msra.mxu0 %v2388
      %4174 = vmatpush.bf16.msra.mxu0 %v2380
      %4175 = vmatpush.bf16.msra.mxu0 %v2372
      %4176 = vmatpush.bf16.msra.mxu0 %v2364
      %4177 = vmatmul.bf16.gmra.mxu0 %v955
      %v4178 = vpop.f32.mrf.mxu0
      %v4179 = vadd.f32 %v4130, %v4178
      %v4180 = vpop.f32.mrf.mxu0
      %v4181 = vadd.f32 %v4132, %v4180
      %4182 = vmatmul.bf16.gmra.mxu0 %v962
      %v4183 = vpop.f32.mrf.mxu0
      %v4184 = vadd.f32 %v4135, %v4183
      %v4185 = vpop.f32.mrf.mxu0
      %v4186 = vadd.f32 %v4137, %v4185
      %4187 = vmatmul.bf16.gmra.mxu0 %v969
      %v4188 = vpop.f32.mrf.mxu0
      %v4189 = vadd.f32 %v4140, %v4188
      %v4190 = vpop.f32.mrf.mxu0
      %v4191 = vadd.f32 %v4142, %v4190
      %4192 = vmatmul.bf16.gmra.mxu0 %v976
      %v4193 = vpop.f32.mrf.mxu0
      %v4194 = vadd.f32 %v4145, %v4193
      %v4195 = vpop.f32.mrf.mxu0
      %v4196 = vadd.f32 %v4147, %v4195
      %4197 = vmatmul.bf16.gmra.mxu0 %v983
      %v4198 = vpop.f32.mrf.mxu0
      %v4199 = vadd.f32 %v4150, %v4198
      %v4200 = vpop.f32.mrf.mxu0
      %v4201 = vadd.f32 %v4152, %v4200
      %4202 = vmatmul.bf16.gmra.mxu0 %v990
      %v4203 = vpop.f32.mrf.mxu0
      %v4204 = vadd.f32 %v4155, %v4203
      %v4205 = vpop.f32.mrf.mxu0
      %v4206 = vadd.f32 %v4157, %v4205
      %4207 = vmatmul.bf16.gmra.mxu0 %v997
      %v4208 = vpop.f32.mrf.mxu0
      %v4209 = vadd.f32 %v4160, %v4208
      %v4210 = vpop.f32.mrf.mxu0
      %v4211 = vadd.f32 %v4162, %v4210
      %4212 = vmatmul.bf16.gmra.mxu0 %v1004
      %v4213 = vpop.f32.mrf.mxu0
      %v4214 = vadd.f32 %v4165, %v4213
      %v4215 = vpop.f32.mrf.mxu0
      %v4216 = vadd.f32 %v4167, %v4215
      %4217 = vdwg.mxu0
      %4218 = vmatpush.bf16.msra.mxu0 %v2484
      %4219 = vmatpush.bf16.msra.mxu0 %v2476
      %4220 = vmatpush.bf16.msra.mxu0 %v2468
      %4221 = vmatpush.bf16.msra.mxu0 %v2460
      %4222 = vmatpush.bf16.msra.mxu0 %v2452
      %4223 = vmatpush.bf16.msra.mxu0 %v2444
      %4224 = vmatpush.bf16.msra.mxu0 %v2436
      %4225 = vmatpush.bf16.msra.mxu0 %v2428
      %4226 = vmatmul.bf16.gmra.mxu0 %v956
      %v4227 = vpop.f32.mrf.mxu0
      %v4228 = vadd.f32 %v4179, %v4227
      %v4229 = vpop.f32.mrf.mxu0
      %v4230 = vadd.f32 %v4181, %v4229
      %4231 = vmatmul.bf16.gmra.mxu0 %v963
      %v4232 = vpop.f32.mrf.mxu0
      %v4233 = vadd.f32 %v4184, %v4232
      %v4234 = vpop.f32.mrf.mxu0
      %v4235 = vadd.f32 %v4186, %v4234
      %4236 = vmatmul.bf16.gmra.mxu0 %v970
      %v4237 = vpop.f32.mrf.mxu0
      %v4238 = vadd.f32 %v4189, %v4237
      %v4239 = vpop.f32.mrf.mxu0
      %v4240 = vadd.f32 %v4191, %v4239
      %4241 = vmatmul.bf16.gmra.mxu0 %v977
      %v4242 = vpop.f32.mrf.mxu0
      %v4243 = vadd.f32 %v4194, %v4242
      %v4244 = vpop.f32.mrf.mxu0
      %v4245 = vadd.f32 %v4196, %v4244
      %4246 = vmatmul.bf16.gmra.mxu0 %v984
      %v4247 = vpop.f32.mrf.mxu0
      %v4248 = vadd.f32 %v4199, %v4247
      %v4249 = vpop.f32.mrf.mxu0
      %v4250 = vadd.f32 %v4201, %v4249
      %4251 = vmatmul.bf16.gmra.mxu0 %v991
      %v4252 = vpop.f32.mrf.mxu0
      %v4253 = vadd.f32 %v4204, %v4252
      %v4254 = vpop.f32.mrf.mxu0
      %v4255 = vadd.f32 %v4206, %v4254
      %4256 = vmatmul.bf16.gmra.mxu0 %v998
      %v4257 = vpop.f32.mrf.mxu0
      %v4258 = vadd.f32 %v4209, %v4257
      %v4259 = vpop.f32.mrf.mxu0
      %v4260 = vadd.f32 %v4211, %v4259
      %4261 = vmatmul.bf16.gmra.mxu0 %v1005
      %v4262 = vpop.f32.mrf.mxu0
      %v4263 = vadd.f32 %v4214, %v4262
      %v4264 = vpop.f32.mrf.mxu0
      %v4265 = vadd.f32 %v4216, %v4264
      %4266 = vdwg.mxu0
      %4267 = vmatpush.bf16.msra.mxu0 %v2548
      %4268 = vmatpush.bf16.msra.mxu0 %v2540
      %4269 = vmatpush.bf16.msra.mxu0 %v2532
      %4270 = vmatpush.bf16.msra.mxu0 %v2524
      %4271 = vmatpush.bf16.msra.mxu0 %v2516
      %4272 = vmatpush.bf16.msra.mxu0 %v2508
      %4273 = vmatpush.bf16.msra.mxu0 %v2500
      %4274 = vmatpush.bf16.msra.mxu0 %v2492
      %4275 = vmatmul.bf16.gmra.mxu0 %v957
      %v4276 = vpop.f32.mrf.mxu0
      %v4277 = vadd.f32 %v4228, %v4276
      %v4278 = vpop.f32.mrf.mxu0
      %v4279 = vadd.f32 %v4230, %v4278
      %4280 = vmatmul.bf16.gmra.mxu0 %v964
      %v4281 = vpop.f32.mrf.mxu0
      %v4282 = vadd.f32 %v4233, %v4281
      %v4283 = vpop.f32.mrf.mxu0
      %v4284 = vadd.f32 %v4235, %v4283
      %4285 = vmatmul.bf16.gmra.mxu0 %v971
      %v4286 = vpop.f32.mrf.mxu0
      %v4287 = vadd.f32 %v4238, %v4286
      %v4288 = vpop.f32.mrf.mxu0
      %v4289 = vadd.f32 %v4240, %v4288
      %4290 = vmatmul.bf16.gmra.mxu0 %v978
      %v4291 = vpop.f32.mrf.mxu0
      %v4292 = vadd.f32 %v4243, %v4291
      %v4293 = vpop.f32.mrf.mxu0
      %v4294 = vadd.f32 %v4245, %v4293
      %4295 = vmatmul.bf16.gmra.mxu0 %v985
      %v4296 = vpop.f32.mrf.mxu0
      %v4297 = vadd.f32 %v4248, %v4296
      %v4298 = vpop.f32.mrf.mxu0
      %v4299 = vadd.f32 %v4250, %v4298
      %4300 = vmatmul.bf16.gmra.mxu0 %v992
      %v4301 = vpop.f32.mrf.mxu0
      %v4302 = vadd.f32 %v4253, %v4301
      %v4303 = vpop.f32.mrf.mxu0
      %v4304 = vadd.f32 %v4255, %v4303
      %4305 = vmatmul.bf16.gmra.mxu0 %v999
      %v4306 = vpop.f32.mrf.mxu0
      %v4307 = vadd.f32 %v4258, %v4306
      %v4308 = vpop.f32.mrf.mxu0
      %v4309 = vadd.f32 %v4260, %v4308
      %4310 = vmatmul.bf16.gmra.mxu0 %v1006
      %v4311 = vpop.f32.mrf.mxu0
      %v4312 = vadd.f32 %v4263, %v4311
      %v4313 = vpop.f32.mrf.mxu0
      %v4314 = vadd.f32 %v4265, %v4313
      %4315 = vdwg.mxu0
      %4316 = vmatpush.bf16.msra.mxu0 %v2612
      %4317 = vmatpush.bf16.msra.mxu0 %v2604
      %4318 = vmatpush.bf16.msra.mxu0 %v2596
      %4319 = vmatpush.bf16.msra.mxu0 %v2588
      %4320 = vmatpush.bf16.msra.mxu0 %v2580
      %4321 = vmatpush.bf16.msra.mxu0 %v2572
      %4322 = vmatpush.bf16.msra.mxu0 %v2564
      %4323 = vmatpush.bf16.msra.mxu0 %v2556
      %4324 = vmatmul.bf16.gmra.mxu0 %v958
      %v4325 = vpop.f32.mrf.mxu0
      %v4326 = vadd.f32 %v4277, %v4325
      %v4327 = vpop.f32.mrf.mxu0
      %v4328 = vadd.f32 %v4279, %v4327
      %4329 = vmatmul.bf16.gmra.mxu0 %v965
      %v4330 = vpop.f32.mrf.mxu0
      %v4331 = vadd.f32 %v4282, %v4330
      %v4332 = vpop.f32.mrf.mxu0
      %v4333 = vadd.f32 %v4284, %v4332
      %4334 = vmatmul.bf16.gmra.mxu0 %v972
      %v4335 = vpop.f32.mrf.mxu0
      %v4336 = vadd.f32 %v4287, %v4335
      %v4337 = vpop.f32.mrf.mxu0
      %v4338 = vadd.f32 %v4289, %v4337
      %4339 = vmatmul.bf16.gmra.mxu0 %v979
      %v4340 = vpop.f32.mrf.mxu0
      %v4341 = vadd.f32 %v4292, %v4340
      %v4342 = vpop.f32.mrf.mxu0
      %v4343 = vadd.f32 %v4294, %v4342
      %4344 = vmatmul.bf16.gmra.mxu0 %v986
      %v4345 = vpop.f32.mrf.mxu0
      %v4346 = vadd.f32 %v4297, %v4345
      %v4347 = vpop.f32.mrf.mxu0
      %v4348 = vadd.f32 %v4299, %v4347
      %4349 = vmatmul.bf16.gmra.mxu0 %v993
      %v4350 = vpop.f32.mrf.mxu0
      %v4351 = vadd.f32 %v4302, %v4350
      %v4352 = vpop.f32.mrf.mxu0
      %v4353 = vadd.f32 %v4304, %v4352
      %4354 = vmatmul.bf16.gmra.mxu0 %v1000
      %v4355 = vpop.f32.mrf.mxu0
      %v4356 = vadd.f32 %v4307, %v4355
      %v4357 = vpop.f32.mrf.mxu0
      %v4358 = vadd.f32 %v4309, %v4357
      %4359 = vmatmul.bf16.gmra.mxu0 %v1007
      %v4360 = vpop.f32.mrf.mxu0
      %v4361 = vadd.f32 %v4312, %v4360
      %v4362 = vpop.f32.mrf.mxu0
      %v4363 = vadd.f32 %v4314, %v4362
      %4364 = vdwg.mxu0
      %4365 = vmatpush.bf16.msra.mxu0 0
      %4366 = vmatpush.bf16.msra.mxu0 0
      %4367 = vmatpush.bf16.msra.mxu0 0
      %4368 = vmatpush.bf16.msra.mxu0 0
      %4369 = vmatpush.bf16.msra.mxu0 0
      %4370 = vmatpush.bf16.msra.mxu0 0
      %4371 = vmatpush.bf16.msra.mxu0 0
      %4372 = vmatpush.bf16.msra.mxu0 %v2620
      %4373 = vmatmul.bf16.gmra.mxu0 %v3019
      %v4374 = vpop.f32.mrf.mxu0
      %v4375 = vadd.f32 %v4326, %v4374
      %v4376 = vpop.f32.mrf.mxu0
      %v4377 = vadd.f32 %v4328, %v4376
      %4378 = vmatmul.bf16.gmra.mxu0 %v3022
      %v4379 = vpop.f32.mrf.mxu0
      %v4380 = vadd.f32 %v4331, %v4379
      %v4381 = vpop.f32.mrf.mxu0
      %v4382 = vadd.f32 %v4333, %v4381
      %4383 = vmatmul.bf16.gmra.mxu0 %v3025
      %v4384 = vpop.f32.mrf.mxu0
      %v4385 = vadd.f32 %v4336, %v4384
      %v4386 = vpop.f32.mrf.mxu0
      %v4387 = vadd.f32 %v4338, %v4386
      %4388 = vmatmul.bf16.gmra.mxu0 %v3028
      %v4389 = vpop.f32.mrf.mxu0
      %v4390 = vadd.f32 %v4341, %v4389
      %v4391 = vpop.f32.mrf.mxu0
      %v4392 = vadd.f32 %v4343, %v4391
      %4393 = vmatmul.bf16.gmra.mxu0 %v3031
      %v4394 = vpop.f32.mrf.mxu0
      %v4395 = vadd.f32 %v4346, %v4394
      %v4396 = vpop.f32.mrf.mxu0
      %v4397 = vadd.f32 %v4348, %v4396
      %4398 = vmatmul.bf16.gmra.mxu0 %v3034
      %v4399 = vpop.f32.mrf.mxu0
      %v4400 = vadd.f32 %v4351, %v4399
      %v4401 = vpop.f32.mrf.mxu0
      %v4402 = vadd.f32 %v4353, %v4401
      %4403 = vmatmul.bf16.gmra.mxu0 %v3037
      %v4404 = vpop.f32.mrf.mxu0
      %v4405 = vadd.f32 %v4356, %v4404
      %v4406 = vpop.f32.mrf.mxu0
      %v4407 = vadd.f32 %v4358, %v4406
      %4408 = vmatmul.bf16.gmra.mxu0 %v3040
      %v4409 = vpop.f32.mrf.mxu0
      %v4410 = vadd.f32 %v4361, %v4409
      %v4411 = vpop.f32.mrf.mxu0
      %v4412 = vadd.f32 %v4363, %v4411
      %4413 = vdwg.mxu0
      %4414 = vmatpush.bf16.msra.mxu0 %v2293
      %4415 = vmatpush.bf16.msra.mxu0 %v2285
      %4416 = vmatpush.bf16.msra.mxu0 %v2277
      %4417 = vmatpush.bf16.msra.mxu0 %v2269
      %4418 = vmatpush.bf16.msra.mxu0 %v2261
      %4419 = vmatpush.bf16.msra.mxu0 %v2253
      %4420 = vmatpush.bf16.msra.mxu0 %v2245
      %4421 = vmatpush.bf16.msra.mxu0 %v2237
      %4422 = vmatmul.bf16.gmra.mxu0 %v953
      %v4423 = vpop.f32.mrf.mxu0
      %v4424 = vadd.f32 %v765, %v4423
      %v4425 = vpop.f32.mrf.mxu0
      %v4426 = vadd.f32 %v765, %v4425
      %4427 = vmatmul.bf16.gmra.mxu0 %v960
      %v4428 = vpop.f32.mrf.mxu0
      %v4429 = vadd.f32 %v765, %v4428
      %v4430 = vpop.f32.mrf.mxu0
      %v4431 = vadd.f32 %v765, %v4430
      %4432 = vmatmul.bf16.gmra.mxu0 %v967
      %v4433 = vpop.f32.mrf.mxu0
      %v4434 = vadd.f32 %v765, %v4433
      %v4435 = vpop.f32.mrf.mxu0
      %v4436 = vadd.f32 %v765, %v4435
      %4437 = vmatmul.bf16.gmra.mxu0 %v974
      %v4438 = vpop.f32.mrf.mxu0
      %v4439 = vadd.f32 %v765, %v4438
      %v4440 = vpop.f32.mrf.mxu0
      %v4441 = vadd.f32 %v765, %v4440
      %4442 = vmatmul.bf16.gmra.mxu0 %v981
      %v4443 = vpop.f32.mrf.mxu0
      %v4444 = vadd.f32 %v765, %v4443
      %v4445 = vpop.f32.mrf.mxu0
      %v4446 = vadd.f32 %v765, %v4445
      %4447 = vmatmul.bf16.gmra.mxu0 %v988
      %v4448 = vpop.f32.mrf.mxu0
      %v4449 = vadd.f32 %v765, %v4448
      %v4450 = vpop.f32.mrf.mxu0
      %v4451 = vadd.f32 %v765, %v4450
      %4452 = vmatmul.bf16.gmra.mxu0 %v995
      %v4453 = vpop.f32.mrf.mxu0
      %v4454 = vadd.f32 %v765, %v4453
      %v4455 = vpop.f32.mrf.mxu0
      %v4456 = vadd.f32 %v765, %v4455
      %4457 = vmatmul.bf16.gmra.mxu0 %v1002
      %v4458 = vpop.f32.mrf.mxu0
      %v4459 = vadd.f32 %v765, %v4458
      %v4460 = vpop.f32.mrf.mxu0
      %v4461 = vadd.f32 %v765, %v4460
      %4462 = vdwg.mxu0
      %4463 = vmatpush.bf16.msra.mxu0 %v2357
      %4464 = vmatpush.bf16.msra.mxu0 %v2349
      %4465 = vmatpush.bf16.msra.mxu0 %v2341
      %4466 = vmatpush.bf16.msra.mxu0 %v2333
      %4467 = vmatpush.bf16.msra.mxu0 %v2325
      %4468 = vmatpush.bf16.msra.mxu0 %v2317
      %4469 = vmatpush.bf16.msra.mxu0 %v2309
      %4470 = vmatpush.bf16.msra.mxu0 %v2301
      %4471 = vmatmul.bf16.gmra.mxu0 %v954
      %v4472 = vpop.f32.mrf.mxu0
      %v4473 = vadd.f32 %v4424, %v4472
      %v4474 = vpop.f32.mrf.mxu0
      %v4475 = vadd.f32 %v4426, %v4474
      %4476 = vmatmul.bf16.gmra.mxu0 %v961
      %v4477 = vpop.f32.mrf.mxu0
      %v4478 = vadd.f32 %v4429, %v4477
      %v4479 = vpop.f32.mrf.mxu0
      %v4480 = vadd.f32 %v4431, %v4479
      %4481 = vmatmul.bf16.gmra.mxu0 %v968
      %v4482 = vpop.f32.mrf.mxu0
      %v4483 = vadd.f32 %v4434, %v4482
      %v4484 = vpop.f32.mrf.mxu0
      %v4485 = vadd.f32 %v4436, %v4484
      %4486 = vmatmul.bf16.gmra.mxu0 %v975
      %v4487 = vpop.f32.mrf.mxu0
      %v4488 = vadd.f32 %v4439, %v4487
      %v4489 = vpop.f32.mrf.mxu0
      %v4490 = vadd.f32 %v4441, %v4489
      %4491 = vmatmul.bf16.gmra.mxu0 %v982
      %v4492 = vpop.f32.mrf.mxu0
      %v4493 = vadd.f32 %v4444, %v4492
      %v4494 = vpop.f32.mrf.mxu0
      %v4495 = vadd.f32 %v4446, %v4494
      %4496 = vmatmul.bf16.gmra.mxu0 %v989
      %v4497 = vpop.f32.mrf.mxu0
      %v4498 = vadd.f32 %v4449, %v4497
      %v4499 = vpop.f32.mrf.mxu0
      %v4500 = vadd.f32 %v4451, %v4499
      %4501 = vmatmul.bf16.gmra.mxu0 %v996
      %v4502 = vpop.f32.mrf.mxu0
      %v4503 = vadd.f32 %v4454, %v4502
      %v4504 = vpop.f32.mrf.mxu0
      %v4505 = vadd.f32 %v4456, %v4504
      %4506 = vmatmul.bf16.gmra.mxu0 %v1003
      %v4507 = vpop.f32.mrf.mxu0
      %v4508 = vadd.f32 %v4459, %v4507
      %v4509 = vpop.f32.mrf.mxu0
      %v4510 = vadd.f32 %v4461, %v4509
      %4511 = vdwg.mxu0
      %4512 = vmatpush.bf16.msra.mxu0 %v2421
      %4513 = vmatpush.bf16.msra.mxu0 %v2413
      %4514 = vmatpush.bf16.msra.mxu0 %v2405
      %4515 = vmatpush.bf16.msra.mxu0 %v2397
      %4516 = vmatpush.bf16.msra.mxu0 %v2389
      %4517 = vmatpush.bf16.msra.mxu0 %v2381
      %4518 = vmatpush.bf16.msra.mxu0 %v2373
      %4519 = vmatpush.bf16.msra.mxu0 %v2365
      %4520 = vmatmul.bf16.gmra.mxu0 %v955
      %v4521 = vpop.f32.mrf.mxu0
      %v4522 = vadd.f32 %v4473, %v4521
      %v4523 = vpop.f32.mrf.mxu0
      %v4524 = vadd.f32 %v4475, %v4523
      %4525 = vmatmul.bf16.gmra.mxu0 %v962
      %v4526 = vpop.f32.mrf.mxu0
      %v4527 = vadd.f32 %v4478, %v4526
      %v4528 = vpop.f32.mrf.mxu0
      %v4529 = vadd.f32 %v4480, %v4528
      %4530 = vmatmul.bf16.gmra.mxu0 %v969
      %v4531 = vpop.f32.mrf.mxu0
      %v4532 = vadd.f32 %v4483, %v4531
      %v4533 = vpop.f32.mrf.mxu0
      %v4534 = vadd.f32 %v4485, %v4533
      %4535 = vmatmul.bf16.gmra.mxu0 %v976
      %v4536 = vpop.f32.mrf.mxu0
      %v4537 = vadd.f32 %v4488, %v4536
      %v4538 = vpop.f32.mrf.mxu0
      %v4539 = vadd.f32 %v4490, %v4538
      %4540 = vmatmul.bf16.gmra.mxu0 %v983
      %v4541 = vpop.f32.mrf.mxu0
      %v4542 = vadd.f32 %v4493, %v4541
      %v4543 = vpop.f32.mrf.mxu0
      %v4544 = vadd.f32 %v4495, %v4543
      %4545 = vmatmul.bf16.gmra.mxu0 %v990
      %v4546 = vpop.f32.mrf.mxu0
      %v4547 = vadd.f32 %v4498, %v4546
      %v4548 = vpop.f32.mrf.mxu0
      %v4549 = vadd.f32 %v4500, %v4548
      %4550 = vmatmul.bf16.gmra.mxu0 %v997
      %v4551 = vpop.f32.mrf.mxu0
      %v4552 = vadd.f32 %v4503, %v4551
      %v4553 = vpop.f32.mrf.mxu0
      %v4554 = vadd.f32 %v4505, %v4553
      %4555 = vmatmul.bf16.gmra.mxu0 %v1004
      %v4556 = vpop.f32.mrf.mxu0
      %v4557 = vadd.f32 %v4508, %v4556
      %v4558 = vpop.f32.mrf.mxu0
      %v4559 = vadd.f32 %v4510, %v4558
      %4560 = vdwg.mxu0
      %4561 = vmatpush.bf16.msra.mxu0 %v2485
      %4562 = vmatpush.bf16.msra.mxu0 %v2477
      %4563 = vmatpush.bf16.msra.mxu0 %v2469
      %4564 = vmatpush.bf16.msra.mxu0 %v2461
      %4565 = vmatpush.bf16.msra.mxu0 %v2453
      %4566 = vmatpush.bf16.msra.mxu0 %v2445
      %4567 = vmatpush.bf16.msra.mxu0 %v2437
      %4568 = vmatpush.bf16.msra.mxu0 %v2429
      %4569 = vmatmul.bf16.gmra.mxu0 %v956
      %v4570 = vpop.f32.mrf.mxu0
      %v4571 = vadd.f32 %v4522, %v4570
      %v4572 = vpop.f32.mrf.mxu0
      %v4573 = vadd.f32 %v4524, %v4572
      %4574 = vmatmul.bf16.gmra.mxu0 %v963
      %v4575 = vpop.f32.mrf.mxu0
      %v4576 = vadd.f32 %v4527, %v4575
      %v4577 = vpop.f32.mrf.mxu0
      %v4578 = vadd.f32 %v4529, %v4577
      %4579 = vmatmul.bf16.gmra.mxu0 %v970
      %v4580 = vpop.f32.mrf.mxu0
      %v4581 = vadd.f32 %v4532, %v4580
      %v4582 = vpop.f32.mrf.mxu0
      %v4583 = vadd.f32 %v4534, %v4582
      %4584 = vmatmul.bf16.gmra.mxu0 %v977
      %v4585 = vpop.f32.mrf.mxu0
      %v4586 = vadd.f32 %v4537, %v4585
      %v4587 = vpop.f32.mrf.mxu0
      %v4588 = vadd.f32 %v4539, %v4587
      %4589 = vmatmul.bf16.gmra.mxu0 %v984
      %v4590 = vpop.f32.mrf.mxu0
      %v4591 = vadd.f32 %v4542, %v4590
      %v4592 = vpop.f32.mrf.mxu0
      %v4593 = vadd.f32 %v4544, %v4592
      %4594 = vmatmul.bf16.gmra.mxu0 %v991
      %v4595 = vpop.f32.mrf.mxu0
      %v4596 = vadd.f32 %v4547, %v4595
      %v4597 = vpop.f32.mrf.mxu0
      %v4598 = vadd.f32 %v4549, %v4597
      %4599 = vmatmul.bf16.gmra.mxu0 %v998
      %v4600 = vpop.f32.mrf.mxu0
      %v4601 = vadd.f32 %v4552, %v4600
      %v4602 = vpop.f32.mrf.mxu0
      %v4603 = vadd.f32 %v4554, %v4602
      %4604 = vmatmul.bf16.gmra.mxu0 %v1005
      %v4605 = vpop.f32.mrf.mxu0
      %v4606 = vadd.f32 %v4557, %v4605
      %v4607 = vpop.f32.mrf.mxu0
      %v4608 = vadd.f32 %v4559, %v4607
      %4609 = vdwg.mxu0
      %4610 = vmatpush.bf16.msra.mxu0 %v2549
      %4611 = vmatpush.bf16.msra.mxu0 %v2541
      %4612 = vmatpush.bf16.msra.mxu0 %v2533
      %4613 = vmatpush.bf16.msra.mxu0 %v2525
      %4614 = vmatpush.bf16.msra.mxu0 %v2517
      %4615 = vmatpush.bf16.msra.mxu0 %v2509
      %4616 = vmatpush.bf16.msra.mxu0 %v2501
      %4617 = vmatpush.bf16.msra.mxu0 %v2493
      %4618 = vmatmul.bf16.gmra.mxu0 %v957
      %v4619 = vpop.f32.mrf.mxu0
      %v4620 = vadd.f32 %v4571, %v4619
      %v4621 = vpop.f32.mrf.mxu0
      %v4622 = vadd.f32 %v4573, %v4621
      %4623 = vmatmul.bf16.gmra.mxu0 %v964
      %v4624 = vpop.f32.mrf.mxu0
      %v4625 = vadd.f32 %v4576, %v4624
      %v4626 = vpop.f32.mrf.mxu0
      %v4627 = vadd.f32 %v4578, %v4626
      %4628 = vmatmul.bf16.gmra.mxu0 %v971
      %v4629 = vpop.f32.mrf.mxu0
      %v4630 = vadd.f32 %v4581, %v4629
      %v4631 = vpop.f32.mrf.mxu0
      %v4632 = vadd.f32 %v4583, %v4631
      %4633 = vmatmul.bf16.gmra.mxu0 %v978
      %v4634 = vpop.f32.mrf.mxu0
      %v4635 = vadd.f32 %v4586, %v4634
      %v4636 = vpop.f32.mrf.mxu0
      %v4637 = vadd.f32 %v4588, %v4636
      %4638 = vmatmul.bf16.gmra.mxu0 %v985
      %v4639 = vpop.f32.mrf.mxu0
      %v4640 = vadd.f32 %v4591, %v4639
      %v4641 = vpop.f32.mrf.mxu0
      %v4642 = vadd.f32 %v4593, %v4641
      %4643 = vmatmul.bf16.gmra.mxu0 %v992
      %v4644 = vpop.f32.mrf.mxu0
      %v4645 = vadd.f32 %v4596, %v4644
      %v4646 = vpop.f32.mrf.mxu0
      %v4647 = vadd.f32 %v4598, %v4646
      %4648 = vmatmul.bf16.gmra.mxu0 %v999
      %v4649 = vpop.f32.mrf.mxu0
      %v4650 = vadd.f32 %v4601, %v4649
      %v4651 = vpop.f32.mrf.mxu0
      %v4652 = vadd.f32 %v4603, %v4651
      %4653 = vmatmul.bf16.gmra.mxu0 %v1006
      %v4654 = vpop.f32.mrf.mxu0
      %v4655 = vadd.f32 %v4606, %v4654
      %v4656 = vpop.f32.mrf.mxu0
      %v4657 = vadd.f32 %v4608, %v4656
      %4658 = vdwg.mxu0
      %4659 = vmatpush.bf16.msra.mxu0 %v2613
      %4660 = vmatpush.bf16.msra.mxu0 %v2605
      %4661 = vmatpush.bf16.msra.mxu0 %v2597
      %4662 = vmatpush.bf16.msra.mxu0 %v2589
      %4663 = vmatpush.bf16.msra.mxu0 %v2581
      %4664 = vmatpush.bf16.msra.mxu0 %v2573
      %4665 = vmatpush.bf16.msra.mxu0 %v2565
      %4666 = vmatpush.bf16.msra.mxu0 %v2557
      %4667 = vmatmul.bf16.gmra.mxu0 %v958
      %v4668 = vpop.f32.mrf.mxu0
      %v4669 = vadd.f32 %v4620, %v4668
      %v4670 = vpop.f32.mrf.mxu0
      %v4671 = vadd.f32 %v4622, %v4670
      %4672 = vmatmul.bf16.gmra.mxu0 %v965
      %v4673 = vpop.f32.mrf.mxu0
      %v4674 = vadd.f32 %v4625, %v4673
      %v4675 = vpop.f32.mrf.mxu0
      %v4676 = vadd.f32 %v4627, %v4675
      %4677 = vmatmul.bf16.gmra.mxu0 %v972
      %v4678 = vpop.f32.mrf.mxu0
      %v4679 = vadd.f32 %v4630, %v4678
      %v4680 = vpop.f32.mrf.mxu0
      %v4681 = vadd.f32 %v4632, %v4680
      %4682 = vmatmul.bf16.gmra.mxu0 %v979
      %v4683 = vpop.f32.mrf.mxu0
      %v4684 = vadd.f32 %v4635, %v4683
      %v4685 = vpop.f32.mrf.mxu0
      %v4686 = vadd.f32 %v4637, %v4685
      %4687 = vmatmul.bf16.gmra.mxu0 %v986
      %v4688 = vpop.f32.mrf.mxu0
      %v4689 = vadd.f32 %v4640, %v4688
      %v4690 = vpop.f32.mrf.mxu0
      %v4691 = vadd.f32 %v4642, %v4690
      %4692 = vmatmul.bf16.gmra.mxu0 %v993
      %v4693 = vpop.f32.mrf.mxu0
      %v4694 = vadd.f32 %v4645, %v4693
      %v4695 = vpop.f32.mrf.mxu0
      %v4696 = vadd.f32 %v4647, %v4695
      %4697 = vmatmul.bf16.gmra.mxu0 %v1000
      %v4698 = vpop.f32.mrf.mxu0
      %v4699 = vadd.f32 %v4650, %v4698
      %v4700 = vpop.f32.mrf.mxu0
      %v4701 = vadd.f32 %v4652, %v4700
      %4702 = vmatmul.bf16.gmra.mxu0 %v1007
      %v4703 = vpop.f32.mrf.mxu0
      %v4704 = vadd.f32 %v4655, %v4703
      %v4705 = vpop.f32.mrf.mxu0
      %v4706 = vadd.f32 %v4657, %v4705
      %4707 = vdwg.mxu0
      %4708 = vmatpush.bf16.msra.mxu0 0
      %4709 = vmatpush.bf16.msra.mxu0 0
      %4710 = vmatpush.bf16.msra.mxu0 0
      %4711 = vmatpush.bf16.msra.mxu0 0
      %4712 = vmatpush.bf16.msra.mxu0 0
      %4713 = vmatpush.bf16.msra.mxu0 0
      %4714 = vmatpush.bf16.msra.mxu0 0
      %4715 = vmatpush.bf16.msra.mxu0 %v2621
      %4716 = vmatmul.bf16.gmra.mxu0 %v3019
      %v4717 = vpop.f32.mrf.mxu0
      %v4718 = vadd.f32 %v4669, %v4717
      %v4719 = vpop.f32.mrf.mxu0
      %v4720 = vadd.f32 %v4671, %v4719
      %4721 = vmatmul.bf16.gmra.mxu0 %v3022
      %v4722 = vpop.f32.mrf.mxu0
      %v4723 = vadd.f32 %v4674, %v4722
      %v4724 = vpop.f32.mrf.mxu0
      %v4725 = vadd.f32 %v4676, %v4724
      %4726 = vmatmul.bf16.gmra.mxu0 %v3025
      %v4727 = vpop.f32.mrf.mxu0
      %v4728 = vadd.f32 %v4679, %v4727
      %v4729 = vpop.f32.mrf.mxu0
      %v4730 = vadd.f32 %v4681, %v4729
      %4731 = vmatmul.bf16.gmra.mxu0 %v3028
      %v4732 = vpop.f32.mrf.mxu0
      %v4733 = vadd.f32 %v4684, %v4732
      %v4734 = vpop.f32.mrf.mxu0
      %v4735 = vadd.f32 %v4686, %v4734
      %4736 = vmatmul.bf16.gmra.mxu0 %v3031
      %v4737 = vpop.f32.mrf.mxu0
      %v4738 = vadd.f32 %v4689, %v4737
      %v4739 = vpop.f32.mrf.mxu0
      %v4740 = vadd.f32 %v4691, %v4739
      %4741 = vmatmul.bf16.gmra.mxu0 %v3034
      %v4742 = vpop.f32.mrf.mxu0
      %v4743 = vadd.f32 %v4694, %v4742
      %v4744 = vpop.f32.mrf.mxu0
      %v4745 = vadd.f32 %v4696, %v4744
      %4746 = vmatmul.bf16.gmra.mxu0 %v3037
      %v4747 = vpop.f32.mrf.mxu0
      %v4748 = vadd.f32 %v4699, %v4747
      %v4749 = vpop.f32.mrf.mxu0
      %v4750 = vadd.f32 %v4701, %v4749
      %4751 = vmatmul.bf16.gmra.mxu0 %v3040
      %v4752 = vpop.f32.mrf.mxu0
      %v4753 = vadd.f32 %v4704, %v4752
      %v4754 = vpop.f32.mrf.mxu0
      %v4755 = vadd.f32 %v4706, %v4754
      %4756 = vdwg.mxu0
      %4757 = vmatpush.bf16.msra.mxu0 %v2294
      %4758 = vmatpush.bf16.msra.mxu0 %v2286
      %4759 = vmatpush.bf16.msra.mxu0 %v2278
      %4760 = vmatpush.bf16.msra.mxu0 %v2270
      %4761 = vmatpush.bf16.msra.mxu0 %v2262
      %4762 = vmatpush.bf16.msra.mxu0 %v2254
      %4763 = vmatpush.bf16.msra.mxu0 %v2246
      %4764 = vmatpush.bf16.msra.mxu0 %v2238
      %4765 = vmatmul.bf16.gmra.mxu0 %v953
      %v4766 = vpop.f32.mrf.mxu0
      %v4767 = vadd.f32 %v766, %v4766
      %v4768 = vpop.f32.mrf.mxu0
      %v4769 = vadd.f32 %v766, %v4768
      %4770 = vmatmul.bf16.gmra.mxu0 %v960
      %v4771 = vpop.f32.mrf.mxu0
      %v4772 = vadd.f32 %v766, %v4771
      %v4773 = vpop.f32.mrf.mxu0
      %v4774 = vadd.f32 %v766, %v4773
      %4775 = vmatmul.bf16.gmra.mxu0 %v967
      %v4776 = vpop.f32.mrf.mxu0
      %v4777 = vadd.f32 %v766, %v4776
      %v4778 = vpop.f32.mrf.mxu0
      %v4779 = vadd.f32 %v766, %v4778
      %4780 = vmatmul.bf16.gmra.mxu0 %v974
      %v4781 = vpop.f32.mrf.mxu0
      %v4782 = vadd.f32 %v766, %v4781
      %v4783 = vpop.f32.mrf.mxu0
      %v4784 = vadd.f32 %v766, %v4783
      %4785 = vmatmul.bf16.gmra.mxu0 %v981
      %v4786 = vpop.f32.mrf.mxu0
      %v4787 = vadd.f32 %v766, %v4786
      %v4788 = vpop.f32.mrf.mxu0
      %v4789 = vadd.f32 %v766, %v4788
      %4790 = vmatmul.bf16.gmra.mxu0 %v988
      %v4791 = vpop.f32.mrf.mxu0
      %v4792 = vadd.f32 %v766, %v4791
      %v4793 = vpop.f32.mrf.mxu0
      %v4794 = vadd.f32 %v766, %v4793
      %4795 = vmatmul.bf16.gmra.mxu0 %v995
      %v4796 = vpop.f32.mrf.mxu0
      %v4797 = vadd.f32 %v766, %v4796
      %v4798 = vpop.f32.mrf.mxu0
      %v4799 = vadd.f32 %v766, %v4798
      %4800 = vmatmul.bf16.gmra.mxu0 %v1002
      %v4801 = vpop.f32.mrf.mxu0
      %v4802 = vadd.f32 %v766, %v4801
      %v4803 = vpop.f32.mrf.mxu0
      %v4804 = vadd.f32 %v766, %v4803
      %4805 = vdwg.mxu0
      %4806 = vmatpush.bf16.msra.mxu0 %v2358
      %4807 = vmatpush.bf16.msra.mxu0 %v2350
      %4808 = vmatpush.bf16.msra.mxu0 %v2342
      %4809 = vmatpush.bf16.msra.mxu0 %v2334
      %4810 = vmatpush.bf16.msra.mxu0 %v2326
      %4811 = vmatpush.bf16.msra.mxu0 %v2318
      %4812 = vmatpush.bf16.msra.mxu0 %v2310
      %4813 = vmatpush.bf16.msra.mxu0 %v2302
      %4814 = vmatmul.bf16.gmra.mxu0 %v954
      %v4815 = vpop.f32.mrf.mxu0
      %v4816 = vadd.f32 %v4767, %v4815
      %v4817 = vpop.f32.mrf.mxu0
      %v4818 = vadd.f32 %v4769, %v4817
      %4819 = vmatmul.bf16.gmra.mxu0 %v961
      %v4820 = vpop.f32.mrf.mxu0
      %v4821 = vadd.f32 %v4772, %v4820
      %v4822 = vpop.f32.mrf.mxu0
      %v4823 = vadd.f32 %v4774, %v4822
      %4824 = vmatmul.bf16.gmra.mxu0 %v968
      %v4825 = vpop.f32.mrf.mxu0
      %v4826 = vadd.f32 %v4777, %v4825
      %v4827 = vpop.f32.mrf.mxu0
      %v4828 = vadd.f32 %v4779, %v4827
      %4829 = vmatmul.bf16.gmra.mxu0 %v975
      %v4830 = vpop.f32.mrf.mxu0
      %v4831 = vadd.f32 %v4782, %v4830
      %v4832 = vpop.f32.mrf.mxu0
      %v4833 = vadd.f32 %v4784, %v4832
      %4834 = vmatmul.bf16.gmra.mxu0 %v982
      %v4835 = vpop.f32.mrf.mxu0
      %v4836 = vadd.f32 %v4787, %v4835
      %v4837 = vpop.f32.mrf.mxu0
      %v4838 = vadd.f32 %v4789, %v4837
      %4839 = vmatmul.bf16.gmra.mxu0 %v989
      %v4840 = vpop.f32.mrf.mxu0
      %v4841 = vadd.f32 %v4792, %v4840
      %v4842 = vpop.f32.mrf.mxu0
      %v4843 = vadd.f32 %v4794, %v4842
      %4844 = vmatmul.bf16.gmra.mxu0 %v996
      %v4845 = vpop.f32.mrf.mxu0
      %v4846 = vadd.f32 %v4797, %v4845
      %v4847 = vpop.f32.mrf.mxu0
      %v4848 = vadd.f32 %v4799, %v4847
      %4849 = vmatmul.bf16.gmra.mxu0 %v1003
      %v4850 = vpop.f32.mrf.mxu0
      %v4851 = vadd.f32 %v4802, %v4850
      %v4852 = vpop.f32.mrf.mxu0
      %v4853 = vadd.f32 %v4804, %v4852
      %4854 = vdwg.mxu0
      %4855 = vmatpush.bf16.msra.mxu0 %v2422
      %4856 = vmatpush.bf16.msra.mxu0 %v2414
      %4857 = vmatpush.bf16.msra.mxu0 %v2406
      %4858 = vmatpush.bf16.msra.mxu0 %v2398
      %4859 = vmatpush.bf16.msra.mxu0 %v2390
      %4860 = vmatpush.bf16.msra.mxu0 %v2382
      %4861 = vmatpush.bf16.msra.mxu0 %v2374
      %4862 = vmatpush.bf16.msra.mxu0 %v2366
      %4863 = vmatmul.bf16.gmra.mxu0 %v955
      %v4864 = vpop.f32.mrf.mxu0
      %v4865 = vadd.f32 %v4816, %v4864
      %v4866 = vpop.f32.mrf.mxu0
      %v4867 = vadd.f32 %v4818, %v4866
      %4868 = vmatmul.bf16.gmra.mxu0 %v962
      %v4869 = vpop.f32.mrf.mxu0
      %v4870 = vadd.f32 %v4821, %v4869
      %v4871 = vpop.f32.mrf.mxu0
      %v4872 = vadd.f32 %v4823, %v4871
      %4873 = vmatmul.bf16.gmra.mxu0 %v969
      %v4874 = vpop.f32.mrf.mxu0
      %v4875 = vadd.f32 %v4826, %v4874
      %v4876 = vpop.f32.mrf.mxu0
      %v4877 = vadd.f32 %v4828, %v4876
      %4878 = vmatmul.bf16.gmra.mxu0 %v976
      %v4879 = vpop.f32.mrf.mxu0
      %v4880 = vadd.f32 %v4831, %v4879
      %v4881 = vpop.f32.mrf.mxu0
      %v4882 = vadd.f32 %v4833, %v4881
      %4883 = vmatmul.bf16.gmra.mxu0 %v983
      %v4884 = vpop.f32.mrf.mxu0
      %v4885 = vadd.f32 %v4836, %v4884
      %v4886 = vpop.f32.mrf.mxu0
      %v4887 = vadd.f32 %v4838, %v4886
      %4888 = vmatmul.bf16.gmra.mxu0 %v990
      %v4889 = vpop.f32.mrf.mxu0
      %v4890 = vadd.f32 %v4841, %v4889
      %v4891 = vpop.f32.mrf.mxu0
      %v4892 = vadd.f32 %v4843, %v4891
      %4893 = vmatmul.bf16.gmra.mxu0 %v997
      %v4894 = vpop.f32.mrf.mxu0
      %v4895 = vadd.f32 %v4846, %v4894
      %v4896 = vpop.f32.mrf.mxu0
      %v4897 = vadd.f32 %v4848, %v4896
      %4898 = vmatmul.bf16.gmra.mxu0 %v1004
      %v4899 = vpop.f32.mrf.mxu0
      %v4900 = vadd.f32 %v4851, %v4899
      %v4901 = vpop.f32.mrf.mxu0
      %v4902 = vadd.f32 %v4853, %v4901
      %4903 = vdwg.mxu0
      %4904 = vmatpush.bf16.msra.mxu0 %v2486
      %4905 = vmatpush.bf16.msra.mxu0 %v2478
      %4906 = vmatpush.bf16.msra.mxu0 %v2470
      %4907 = vmatpush.bf16.msra.mxu0 %v2462
      %4908 = vmatpush.bf16.msra.mxu0 %v2454
      %4909 = vmatpush.bf16.msra.mxu0 %v2446
      %4910 = vmatpush.bf16.msra.mxu0 %v2438
      %4911 = vmatpush.bf16.msra.mxu0 %v2430
      %4912 = vmatmul.bf16.gmra.mxu0 %v956
      %v4913 = vpop.f32.mrf.mxu0
      %v4914 = vadd.f32 %v4865, %v4913
      %v4915 = vpop.f32.mrf.mxu0
      %v4916 = vadd.f32 %v4867, %v4915
      %4917 = vmatmul.bf16.gmra.mxu0 %v963
      %v4918 = vpop.f32.mrf.mxu0
      %v4919 = vadd.f32 %v4870, %v4918
      %v4920 = vpop.f32.mrf.mxu0
      %v4921 = vadd.f32 %v4872, %v4920
      %4922 = vmatmul.bf16.gmra.mxu0 %v970
      %v4923 = vpop.f32.mrf.mxu0
      %v4924 = vadd.f32 %v4875, %v4923
      %v4925 = vpop.f32.mrf.mxu0
      %v4926 = vadd.f32 %v4877, %v4925
      %4927 = vmatmul.bf16.gmra.mxu0 %v977
      %v4928 = vpop.f32.mrf.mxu0
      %v4929 = vadd.f32 %v4880, %v4928
      %v4930 = vpop.f32.mrf.mxu0
      %v4931 = vadd.f32 %v4882, %v4930
      %4932 = vmatmul.bf16.gmra.mxu0 %v984
      %v4933 = vpop.f32.mrf.mxu0
      %v4934 = vadd.f32 %v4885, %v4933
      %v4935 = vpop.f32.mrf.mxu0
      %v4936 = vadd.f32 %v4887, %v4935
      %4937 = vmatmul.bf16.gmra.mxu0 %v991
      %v4938 = vpop.f32.mrf.mxu0
      %v4939 = vadd.f32 %v4890, %v4938
      %v4940 = vpop.f32.mrf.mxu0
      %v4941 = vadd.f32 %v4892, %v4940
      %4942 = vmatmul.bf16.gmra.mxu0 %v998
      %v4943 = vpop.f32.mrf.mxu0
      %v4944 = vadd.f32 %v4895, %v4943
      %v4945 = vpop.f32.mrf.mxu0
      %v4946 = vadd.f32 %v4897, %v4945
      %4947 = vmatmul.bf16.gmra.mxu0 %v1005
      %v4948 = vpop.f32.mrf.mxu0
      %v4949 = vadd.f32 %v4900, %v4948
      %v4950 = vpop.f32.mrf.mxu0
      %v4951 = vadd.f32 %v4902, %v4950
      %4952 = vdwg.mxu0
      %4953 = vmatpush.bf16.msra.mxu0 %v2550
      %4954 = vmatpush.bf16.msra.mxu0 %v2542
      %4955 = vmatpush.bf16.msra.mxu0 %v2534
      %4956 = vmatpush.bf16.msra.mxu0 %v2526
      %4957 = vmatpush.bf16.msra.mxu0 %v2518
      %4958 = vmatpush.bf16.msra.mxu0 %v2510
      %4959 = vmatpush.bf16.msra.mxu0 %v2502
      %4960 = vmatpush.bf16.msra.mxu0 %v2494
      %4961 = vmatmul.bf16.gmra.mxu0 %v957
      %v4962 = vpop.f32.mrf.mxu0
      %v4963 = vadd.f32 %v4914, %v4962
      %v4964 = vpop.f32.mrf.mxu0
      %v4965 = vadd.f32 %v4916, %v4964
      %4966 = vmatmul.bf16.gmra.mxu0 %v964
      %v4967 = vpop.f32.mrf.mxu0
      %v4968 = vadd.f32 %v4919, %v4967
      %v4969 = vpop.f32.mrf.mxu0
      %v4970 = vadd.f32 %v4921, %v4969
      %4971 = vmatmul.bf16.gmra.mxu0 %v971
      %v4972 = vpop.f32.mrf.mxu0
      %v4973 = vadd.f32 %v4924, %v4972
      %v4974 = vpop.f32.mrf.mxu0
      %v4975 = vadd.f32 %v4926, %v4974
      %4976 = vmatmul.bf16.gmra.mxu0 %v978
      %v4977 = vpop.f32.mrf.mxu0
      %v4978 = vadd.f32 %v4929, %v4977
      %v4979 = vpop.f32.mrf.mxu0
      %v4980 = vadd.f32 %v4931, %v4979
      %4981 = vmatmul.bf16.gmra.mxu0 %v985
      %v4982 = vpop.f32.mrf.mxu0
      %v4983 = vadd.f32 %v4934, %v4982
      %v4984 = vpop.f32.mrf.mxu0
      %v4985 = vadd.f32 %v4936, %v4984
      %4986 = vmatmul.bf16.gmra.mxu0 %v992
      %v4987 = vpop.f32.mrf.mxu0
      %v4988 = vadd.f32 %v4939, %v4987
      %v4989 = vpop.f32.mrf.mxu0
      %v4990 = vadd.f32 %v4941, %v4989
      %4991 = vmatmul.bf16.gmra.mxu0 %v999
      %v4992 = vpop.f32.mrf.mxu0
      %v4993 = vadd.f32 %v4944, %v4992
      %v4994 = vpop.f32.mrf.mxu0
      %v4995 = vadd.f32 %v4946, %v4994
      %4996 = vmatmul.bf16.gmra.mxu0 %v1006
      %v4997 = vpop.f32.mrf.mxu0
      %v4998 = vadd.f32 %v4949, %v4997
      %v4999 = vpop.f32.mrf.mxu0
      %v5000 = vadd.f32 %v4951, %v4999
      %5001 = vdwg.mxu0
      %5002 = vmatpush.bf16.msra.mxu0 %v2614
      %5003 = vmatpush.bf16.msra.mxu0 %v2606
      %5004 = vmatpush.bf16.msra.mxu0 %v2598
      %5005 = vmatpush.bf16.msra.mxu0 %v2590
      %5006 = vmatpush.bf16.msra.mxu0 %v2582
      %5007 = vmatpush.bf16.msra.mxu0 %v2574
      %5008 = vmatpush.bf16.msra.mxu0 %v2566
      %5009 = vmatpush.bf16.msra.mxu0 %v2558
      %5010 = vmatmul.bf16.gmra.mxu0 %v958
      %v5011 = vpop.f32.mrf.mxu0
      %v5012 = vadd.f32 %v4963, %v5011
      %v5013 = vpop.f32.mrf.mxu0
      %v5014 = vadd.f32 %v4965, %v5013
      %5015 = vmatmul.bf16.gmra.mxu0 %v965
      %v5016 = vpop.f32.mrf.mxu0
      %v5017 = vadd.f32 %v4968, %v5016
      %v5018 = vpop.f32.mrf.mxu0
      %v5019 = vadd.f32 %v4970, %v5018
      %5020 = vmatmul.bf16.gmra.mxu0 %v972
      %v5021 = vpop.f32.mrf.mxu0
      %v5022 = vadd.f32 %v4973, %v5021
      %v5023 = vpop.f32.mrf.mxu0
      %v5024 = vadd.f32 %v4975, %v5023
      %5025 = vmatmul.bf16.gmra.mxu0 %v979
      %v5026 = vpop.f32.mrf.mxu0
      %v5027 = vadd.f32 %v4978, %v5026
      %v5028 = vpop.f32.mrf.mxu0
      %v5029 = vadd.f32 %v4980, %v5028
      %5030 = vmatmul.bf16.gmra.mxu0 %v986
      %v5031 = vpop.f32.mrf.mxu0
      %v5032 = vadd.f32 %v4983, %v5031
      %v5033 = vpop.f32.mrf.mxu0
      %v5034 = vadd.f32 %v4985, %v5033
      %5035 = vmatmul.bf16.gmra.mxu0 %v993
      %v5036 = vpop.f32.mrf.mxu0
      %v5037 = vadd.f32 %v4988, %v5036
      %v5038 = vpop.f32.mrf.mxu0
      %v5039 = vadd.f32 %v4990, %v5038
      %5040 = vmatmul.bf16.gmra.mxu0 %v1000
      %v5041 = vpop.f32.mrf.mxu0
      %v5042 = vadd.f32 %v4993, %v5041
      %v5043 = vpop.f32.mrf.mxu0
      %v5044 = vadd.f32 %v4995, %v5043
      %5045 = vmatmul.bf16.gmra.mxu0 %v1007
      %v5046 = vpop.f32.mrf.mxu0
      %v5047 = vadd.f32 %v4998, %v5046
      %v5048 = vpop.f32.mrf.mxu0
      %v5049 = vadd.f32 %v5000, %v5048
      %5050 = vdwg.mxu0
      %5051 = vmatpush.bf16.msra.mxu0 0
      %5052 = vmatpush.bf16.msra.mxu0 0
      %5053 = vmatpush.bf16.msra.mxu0 0
      %5054 = vmatpush.bf16.msra.mxu0 0
      %5055 = vmatpush.bf16.msra.mxu0 0
      %5056 = vmatpush.bf16.msra.mxu0 0
      %5057 = vmatpush.bf16.msra.mxu0 0
      %5058 = vmatpush.bf16.msra.mxu0 %v2622
      %5059 = vmatmul.bf16.gmra.mxu0 %v3019
      %v5060 = vpop.f32.mrf.mxu0
      %v5061 = vadd.f32 %v5012, %v5060
      %v5062 = vpop.f32.mrf.mxu0
      %v5063 = vadd.f32 %v5014, %v5062
      %5064 = vmatmul.bf16.gmra.mxu0 %v3022
      %v5065 = vpop.f32.mrf.mxu0
      %v5066 = vadd.f32 %v5017, %v5065
      %v5067 = vpop.f32.mrf.mxu0
      %v5068 = vadd.f32 %v5019, %v5067
      %5069 = vmatmul.bf16.gmra.mxu0 %v3025
      %v5070 = vpop.f32.mrf.mxu0
      %v5071 = vadd.f32 %v5022, %v5070
      %v5072 = vpop.f32.mrf.mxu0
      %v5073 = vadd.f32 %v5024, %v5072
      %5074 = vmatmul.bf16.gmra.mxu0 %v3028
      %v5075 = vpop.f32.mrf.mxu0
      %v5076 = vadd.f32 %v5027, %v5075
      %v5077 = vpop.f32.mrf.mxu0
      %v5078 = vadd.f32 %v5029, %v5077
      %5079 = vmatmul.bf16.gmra.mxu0 %v3031
      %v5080 = vpop.f32.mrf.mxu0
      %v5081 = vadd.f32 %v5032, %v5080
      %v5082 = vpop.f32.mrf.mxu0
      %v5083 = vadd.f32 %v5034, %v5082
      %5084 = vmatmul.bf16.gmra.mxu0 %v3034
      %v5085 = vpop.f32.mrf.mxu0
      %v5086 = vadd.f32 %v5037, %v5085
      %v5087 = vpop.f32.mrf.mxu0
      %v5088 = vadd.f32 %v5039, %v5087
      %5089 = vmatmul.bf16.gmra.mxu0 %v3037
      %v5090 = vpop.f32.mrf.mxu0
      %v5091 = vadd.f32 %v5042, %v5090
      %v5092 = vpop.f32.mrf.mxu0
      %v5093 = vadd.f32 %v5044, %v5092
      %5094 = vmatmul.bf16.gmra.mxu0 %v3040
      %v5095 = vpop.f32.mrf.mxu0
      %v5096 = vadd.f32 %v5047, %v5095
      %v5097 = vpop.f32.mrf.mxu0
      %v5098 = vadd.f32 %v5049, %v5097
      %5099 = vdwg.mxu0
      %5100 = vmatpush.bf16.msra.mxu0 %v2295
      %5101 = vmatpush.bf16.msra.mxu0 %v2287
      %5102 = vmatpush.bf16.msra.mxu0 %v2279
      %5103 = vmatpush.bf16.msra.mxu0 %v2271
      %5104 = vmatpush.bf16.msra.mxu0 %v2263
      %5105 = vmatpush.bf16.msra.mxu0 %v2255
      %5106 = vmatpush.bf16.msra.mxu0 %v2247
      %5107 = vmatpush.bf16.msra.mxu0 %v2239
      %5108 = vmatmul.bf16.gmra.mxu0 %v953
      %v5109 = vpop.f32.mrf.mxu0
      %v5110 = vadd.f32 %v767, %v5109
      %v5111 = vpop.f32.mrf.mxu0
      %v5112 = vadd.f32 %v767, %v5111
      %5113 = vmatmul.bf16.gmra.mxu0 %v960
      %v5114 = vpop.f32.mrf.mxu0
      %v5115 = vadd.f32 %v767, %v5114
      %v5116 = vpop.f32.mrf.mxu0
      %v5117 = vadd.f32 %v767, %v5116
      %5118 = vmatmul.bf16.gmra.mxu0 %v967
      %v5119 = vpop.f32.mrf.mxu0
      %v5120 = vadd.f32 %v767, %v5119
      %v5121 = vpop.f32.mrf.mxu0
      %v5122 = vadd.f32 %v767, %v5121
      %5123 = vmatmul.bf16.gmra.mxu0 %v974
      %v5124 = vpop.f32.mrf.mxu0
      %v5125 = vadd.f32 %v767, %v5124
      %v5126 = vpop.f32.mrf.mxu0
      %v5127 = vadd.f32 %v767, %v5126
      %5128 = vmatmul.bf16.gmra.mxu0 %v981
      %v5129 = vpop.f32.mrf.mxu0
      %v5130 = vadd.f32 %v767, %v5129
      %v5131 = vpop.f32.mrf.mxu0
      %v5132 = vadd.f32 %v767, %v5131
      %5133 = vmatmul.bf16.gmra.mxu0 %v988
      %v5134 = vpop.f32.mrf.mxu0
      %v5135 = vadd.f32 %v767, %v5134
      %v5136 = vpop.f32.mrf.mxu0
      %v5137 = vadd.f32 %v767, %v5136
      %5138 = vmatmul.bf16.gmra.mxu0 %v995
      %v5139 = vpop.f32.mrf.mxu0
      %v5140 = vadd.f32 %v767, %v5139
      %v5141 = vpop.f32.mrf.mxu0
      %v5142 = vadd.f32 %v767, %v5141
      %5143 = vmatmul.bf16.gmra.mxu0 %v1002
      %v5144 = vpop.f32.mrf.mxu0
      %v5145 = vadd.f32 %v767, %v5144
      %v5146 = vpop.f32.mrf.mxu0
      %v5147 = vadd.f32 %v767, %v5146
      %5148 = vdwg.mxu0
      %5149 = vmatpush.bf16.msra.mxu0 %v2359
      %5150 = vmatpush.bf16.msra.mxu0 %v2351
      %5151 = vmatpush.bf16.msra.mxu0 %v2343
      %5152 = vmatpush.bf16.msra.mxu0 %v2335
      %5153 = vmatpush.bf16.msra.mxu0 %v2327
      %5154 = vmatpush.bf16.msra.mxu0 %v2319
      %5155 = vmatpush.bf16.msra.mxu0 %v2311
      %5156 = vmatpush.bf16.msra.mxu0 %v2303
      %5157 = vmatmul.bf16.gmra.mxu0 %v954
      %v5158 = vpop.f32.mrf.mxu0
      %v5159 = vadd.f32 %v5110, %v5158
      %v5160 = vpop.f32.mrf.mxu0
      %v5161 = vadd.f32 %v5112, %v5160
      %5162 = vmatmul.bf16.gmra.mxu0 %v961
      %v5163 = vpop.f32.mrf.mxu0
      %v5164 = vadd.f32 %v5115, %v5163
      %v5165 = vpop.f32.mrf.mxu0
      %v5166 = vadd.f32 %v5117, %v5165
      %5167 = vmatmul.bf16.gmra.mxu0 %v968
      %v5168 = vpop.f32.mrf.mxu0
      %v5169 = vadd.f32 %v5120, %v5168
      %v5170 = vpop.f32.mrf.mxu0
      %v5171 = vadd.f32 %v5122, %v5170
      %5172 = vmatmul.bf16.gmra.mxu0 %v975
      %v5173 = vpop.f32.mrf.mxu0
      %v5174 = vadd.f32 %v5125, %v5173
      %v5175 = vpop.f32.mrf.mxu0
      %v5176 = vadd.f32 %v5127, %v5175
      %5177 = vmatmul.bf16.gmra.mxu0 %v982
      %v5178 = vpop.f32.mrf.mxu0
      %v5179 = vadd.f32 %v5130, %v5178
      %v5180 = vpop.f32.mrf.mxu0
      %v5181 = vadd.f32 %v5132, %v5180
      %5182 = vmatmul.bf16.gmra.mxu0 %v989
      %v5183 = vpop.f32.mrf.mxu0
      %v5184 = vadd.f32 %v5135, %v5183
      %v5185 = vpop.f32.mrf.mxu0
      %v5186 = vadd.f32 %v5137, %v5185
      %5187 = vmatmul.bf16.gmra.mxu0 %v996
      %v5188 = vpop.f32.mrf.mxu0
      %v5189 = vadd.f32 %v5140, %v5188
      %v5190 = vpop.f32.mrf.mxu0
      %v5191 = vadd.f32 %v5142, %v5190
      %5192 = vmatmul.bf16.gmra.mxu0 %v1003
      %v5193 = vpop.f32.mrf.mxu0
      %v5194 = vadd.f32 %v5145, %v5193
      %v5195 = vpop.f32.mrf.mxu0
      %v5196 = vadd.f32 %v5147, %v5195
      %5197 = vdwg.mxu0
      %5198 = vmatpush.bf16.msra.mxu0 %v2423
      %5199 = vmatpush.bf16.msra.mxu0 %v2415
      %5200 = vmatpush.bf16.msra.mxu0 %v2407
      %5201 = vmatpush.bf16.msra.mxu0 %v2399
      %5202 = vmatpush.bf16.msra.mxu0 %v2391
      %5203 = vmatpush.bf16.msra.mxu0 %v2383
      %5204 = vmatpush.bf16.msra.mxu0 %v2375
      %5205 = vmatpush.bf16.msra.mxu0 %v2367
      %5206 = vmatmul.bf16.gmra.mxu0 %v955
      %v5207 = vpop.f32.mrf.mxu0
      %v5208 = vadd.f32 %v5159, %v5207
      %v5209 = vpop.f32.mrf.mxu0
      %v5210 = vadd.f32 %v5161, %v5209
      %5211 = vmatmul.bf16.gmra.mxu0 %v962
      %v5212 = vpop.f32.mrf.mxu0
      %v5213 = vadd.f32 %v5164, %v5212
      %v5214 = vpop.f32.mrf.mxu0
      %v5215 = vadd.f32 %v5166, %v5214
      %5216 = vmatmul.bf16.gmra.mxu0 %v969
      %v5217 = vpop.f32.mrf.mxu0
      %v5218 = vadd.f32 %v5169, %v5217
      %v5219 = vpop.f32.mrf.mxu0
      %v5220 = vadd.f32 %v5171, %v5219
      %5221 = vmatmul.bf16.gmra.mxu0 %v976
      %v5222 = vpop.f32.mrf.mxu0
      %v5223 = vadd.f32 %v5174, %v5222
      %v5224 = vpop.f32.mrf.mxu0
      %v5225 = vadd.f32 %v5176, %v5224
      %5226 = vmatmul.bf16.gmra.mxu0 %v983
      %v5227 = vpop.f32.mrf.mxu0
      %v5228 = vadd.f32 %v5179, %v5227
      %v5229 = vpop.f32.mrf.mxu0
      %v5230 = vadd.f32 %v5181, %v5229
      %5231 = vmatmul.bf16.gmra.mxu0 %v990
      %v5232 = vpop.f32.mrf.mxu0
      %v5233 = vadd.f32 %v5184, %v5232
      %v5234 = vpop.f32.mrf.mxu0
      %v5235 = vadd.f32 %v5186, %v5234
      %5236 = vmatmul.bf16.gmra.mxu0 %v997
      %v5237 = vpop.f32.mrf.mxu0
      %v5238 = vadd.f32 %v5189, %v5237
      %v5239 = vpop.f32.mrf.mxu0
      %v5240 = vadd.f32 %v5191, %v5239
      %5241 = vmatmul.bf16.gmra.mxu0 %v1004
      %v5242 = vpop.f32.mrf.mxu0
      %v5243 = vadd.f32 %v5194, %v5242
      %v5244 = vpop.f32.mrf.mxu0
      %v5245 = vadd.f32 %v5196, %v5244
      %5246 = vdwg.mxu0
      %5247 = vmatpush.bf16.msra.mxu0 %v2487
      %5248 = vmatpush.bf16.msra.mxu0 %v2479
      %5249 = vmatpush.bf16.msra.mxu0 %v2471
      %5250 = vmatpush.bf16.msra.mxu0 %v2463
      %5251 = vmatpush.bf16.msra.mxu0 %v2455
      %5252 = vmatpush.bf16.msra.mxu0 %v2447
      %5253 = vmatpush.bf16.msra.mxu0 %v2439
      %5254 = vmatpush.bf16.msra.mxu0 %v2431
      %5255 = vmatmul.bf16.gmra.mxu0 %v956
      %v5256 = vpop.f32.mrf.mxu0
      %v5257 = vadd.f32 %v5208, %v5256
      %v5258 = vpop.f32.mrf.mxu0
      %v5259 = vadd.f32 %v5210, %v5258
      %5260 = vmatmul.bf16.gmra.mxu0 %v963
      %v5261 = vpop.f32.mrf.mxu0
      %v5262 = vadd.f32 %v5213, %v5261
      %v5263 = vpop.f32.mrf.mxu0
      %v5264 = vadd.f32 %v5215, %v5263
      %5265 = vmatmul.bf16.gmra.mxu0 %v970
      %v5266 = vpop.f32.mrf.mxu0
      %v5267 = vadd.f32 %v5218, %v5266
      %v5268 = vpop.f32.mrf.mxu0
      %v5269 = vadd.f32 %v5220, %v5268
      %5270 = vmatmul.bf16.gmra.mxu0 %v977
      %v5271 = vpop.f32.mrf.mxu0
      %v5272 = vadd.f32 %v5223, %v5271
      %v5273 = vpop.f32.mrf.mxu0
      %v5274 = vadd.f32 %v5225, %v5273
      %5275 = vmatmul.bf16.gmra.mxu0 %v984
      %v5276 = vpop.f32.mrf.mxu0
      %v5277 = vadd.f32 %v5228, %v5276
      %v5278 = vpop.f32.mrf.mxu0
      %v5279 = vadd.f32 %v5230, %v5278
      %5280 = vmatmul.bf16.gmra.mxu0 %v991
      %v5281 = vpop.f32.mrf.mxu0
      %v5282 = vadd.f32 %v5233, %v5281
      %v5283 = vpop.f32.mrf.mxu0
      %v5284 = vadd.f32 %v5235, %v5283
      %5285 = vmatmul.bf16.gmra.mxu0 %v998
      %v5286 = vpop.f32.mrf.mxu0
      %v5287 = vadd.f32 %v5238, %v5286
      %v5288 = vpop.f32.mrf.mxu0
      %v5289 = vadd.f32 %v5240, %v5288
      %5290 = vmatmul.bf16.gmra.mxu0 %v1005
      %v5291 = vpop.f32.mrf.mxu0
      %v5292 = vadd.f32 %v5243, %v5291
      %v5293 = vpop.f32.mrf.mxu0
      %v5294 = vadd.f32 %v5245, %v5293
      %5295 = vdwg.mxu0
      %5296 = vmatpush.bf16.msra.mxu0 %v2551
      %5297 = vmatpush.bf16.msra.mxu0 %v2543
      %5298 = vmatpush.bf16.msra.mxu0 %v2535
      %5299 = vmatpush.bf16.msra.mxu0 %v2527
      %5300 = vmatpush.bf16.msra.mxu0 %v2519
      %5301 = vmatpush.bf16.msra.mxu0 %v2511
      %5302 = vmatpush.bf16.msra.mxu0 %v2503
      %5303 = vmatpush.bf16.msra.mxu0 %v2495
      %5304 = vmatmul.bf16.gmra.mxu0 %v957
      %v5305 = vpop.f32.mrf.mxu0
      %v5306 = vadd.f32 %v5257, %v5305
      %v5307 = vpop.f32.mrf.mxu0
      %v5308 = vadd.f32 %v5259, %v5307
      %5309 = vmatmul.bf16.gmra.mxu0 %v964
      %v5310 = vpop.f32.mrf.mxu0
      %v5311 = vadd.f32 %v5262, %v5310
      %v5312 = vpop.f32.mrf.mxu0
      %v5313 = vadd.f32 %v5264, %v5312
      %5314 = vmatmul.bf16.gmra.mxu0 %v971
      %v5315 = vpop.f32.mrf.mxu0
      %v5316 = vadd.f32 %v5267, %v5315
      %v5317 = vpop.f32.mrf.mxu0
      %v5318 = vadd.f32 %v5269, %v5317
      %5319 = vmatmul.bf16.gmra.mxu0 %v978
      %v5320 = vpop.f32.mrf.mxu0
      %v5321 = vadd.f32 %v5272, %v5320
      %v5322 = vpop.f32.mrf.mxu0
      %v5323 = vadd.f32 %v5274, %v5322
      %5324 = vmatmul.bf16.gmra.mxu0 %v985
      %v5325 = vpop.f32.mrf.mxu0
      %v5326 = vadd.f32 %v5277, %v5325
      %v5327 = vpop.f32.mrf.mxu0
      %v5328 = vadd.f32 %v5279, %v5327
      %5329 = vmatmul.bf16.gmra.mxu0 %v992
      %v5330 = vpop.f32.mrf.mxu0
      %v5331 = vadd.f32 %v5282, %v5330
      %v5332 = vpop.f32.mrf.mxu0
      %v5333 = vadd.f32 %v5284, %v5332
      %5334 = vmatmul.bf16.gmra.mxu0 %v999
      %v5335 = vpop.f32.mrf.mxu0
      %v5336 = vadd.f32 %v5287, %v5335
      %v5337 = vpop.f32.mrf.mxu0
      %v5338 = vadd.f32 %v5289, %v5337
      %5339 = vmatmul.bf16.gmra.mxu0 %v1006
      %v5340 = vpop.f32.mrf.mxu0
      %v5341 = vadd.f32 %v5292, %v5340
      %v5342 = vpop.f32.mrf.mxu0
      %v5343 = vadd.f32 %v5294, %v5342
      %5344 = vdwg.mxu0
      %5345 = vmatpush.bf16.msra.mxu0 %v2615
      %5346 = vmatpush.bf16.msra.mxu0 %v2607
      %5347 = vmatpush.bf16.msra.mxu0 %v2599
      %5348 = vmatpush.bf16.msra.mxu0 %v2591
      %5349 = vmatpush.bf16.msra.mxu0 %v2583
      %5350 = vmatpush.bf16.msra.mxu0 %v2575
      %5351 = vmatpush.bf16.msra.mxu0 %v2567
      %5352 = vmatpush.bf16.msra.mxu0 %v2559
      %5353 = vmatmul.bf16.gmra.mxu0 %v958
      %v5354 = vpop.f32.mrf.mxu0
      %v5355 = vadd.f32 %v5306, %v5354
      %v5356 = vpop.f32.mrf.mxu0
      %v5357 = vadd.f32 %v5308, %v5356
      %5358 = vmatmul.bf16.gmra.mxu0 %v965
      %v5359 = vpop.f32.mrf.mxu0
      %v5360 = vadd.f32 %v5311, %v5359
      %v5361 = vpop.f32.mrf.mxu0
      %v5362 = vadd.f32 %v5313, %v5361
      %5363 = vmatmul.bf16.gmra.mxu0 %v972
      %v5364 = vpop.f32.mrf.mxu0
      %v5365 = vadd.f32 %v5316, %v5364
      %v5366 = vpop.f32.mrf.mxu0
      %v5367 = vadd.f32 %v5318, %v5366
      %5368 = vmatmul.bf16.gmra.mxu0 %v979
      %v5369 = vpop.f32.mrf.mxu0
      %v5370 = vadd.f32 %v5321, %v5369
      %v5371 = vpop.f32.mrf.mxu0
      %v5372 = vadd.f32 %v5323, %v5371
      %5373 = vmatmul.bf16.gmra.mxu0 %v986
      %v5374 = vpop.f32.mrf.mxu0
      %v5375 = vadd.f32 %v5326, %v5374
      %v5376 = vpop.f32.mrf.mxu0
      %v5377 = vadd.f32 %v5328, %v5376
      %5378 = vmatmul.bf16.gmra.mxu0 %v993
      %v5379 = vpop.f32.mrf.mxu0
      %v5380 = vadd.f32 %v5331, %v5379
      %v5381 = vpop.f32.mrf.mxu0
      %v5382 = vadd.f32 %v5333, %v5381
      %5383 = vmatmul.bf16.gmra.mxu0 %v1000
      %v5384 = vpop.f32.mrf.mxu0
      %v5385 = vadd.f32 %v5336, %v5384
      %v5386 = vpop.f32.mrf.mxu0
      %v5387 = vadd.f32 %v5338, %v5386
      %5388 = vmatmul.bf16.gmra.mxu0 %v1007
      %v5389 = vpop.f32.mrf.mxu0
      %v5390 = vadd.f32 %v5341, %v5389
      %v5391 = vpop.f32.mrf.mxu0
      %v5392 = vadd.f32 %v5343, %v5391
      %5393 = vdwg.mxu0
      %5394 = vmatpush.bf16.msra.mxu0 0
      %5395 = vmatpush.bf16.msra.mxu0 0
      %5396 = vmatpush.bf16.msra.mxu0 0
      %5397 = vmatpush.bf16.msra.mxu0 0
      %5398 = vmatpush.bf16.msra.mxu0 0
      %5399 = vmatpush.bf16.msra.mxu0 0
      %5400 = vmatpush.bf16.msra.mxu0 0
      %5401 = vmatpush.bf16.msra.mxu0 %v2623
      %5402 = vmatmul.bf16.gmra.mxu0 %v3019
      %v5403 = vpop.f32.mrf.mxu0
      %v5404 = vadd.f32 %v5355, %v5403
      %v5405 = vpop.f32.mrf.mxu0
      %v5406 = vadd.f32 %v5357, %v5405
      %5407 = vmatmul.bf16.gmra.mxu0 %v3022
      %v5408 = vpop.f32.mrf.mxu0
      %v5409 = vadd.f32 %v5360, %v5408
      %v5410 = vpop.f32.mrf.mxu0
      %v5411 = vadd.f32 %v5362, %v5410
      %5412 = vmatmul.bf16.gmra.mxu0 %v3025
      %v5413 = vpop.f32.mrf.mxu0
      %v5414 = vadd.f32 %v5365, %v5413
      %v5415 = vpop.f32.mrf.mxu0
      %v5416 = vadd.f32 %v5367, %v5415
      %5417 = vmatmul.bf16.gmra.mxu0 %v3028
      %v5418 = vpop.f32.mrf.mxu0
      %v5419 = vadd.f32 %v5370, %v5418
      %v5420 = vpop.f32.mrf.mxu0
      %v5421 = vadd.f32 %v5372, %v5420
      %5422 = vmatmul.bf16.gmra.mxu0 %v3031
      %v5423 = vpop.f32.mrf.mxu0
      %v5424 = vadd.f32 %v5375, %v5423
      %v5425 = vpop.f32.mrf.mxu0
      %v5426 = vadd.f32 %v5377, %v5425
      %5427 = vmatmul.bf16.gmra.mxu0 %v3034
      %v5428 = vpop.f32.mrf.mxu0
      %v5429 = vadd.f32 %v5380, %v5428
      %v5430 = vpop.f32.mrf.mxu0
      %v5431 = vadd.f32 %v5382, %v5430
      %5432 = vmatmul.bf16.gmra.mxu0 %v3037
      %v5433 = vpop.f32.mrf.mxu0
      %v5434 = vadd.f32 %v5385, %v5433
      %v5435 = vpop.f32.mrf.mxu0
      %v5436 = vadd.f32 %v5387, %v5435
      %5437 = vmatmul.bf16.gmra.mxu0 %v3040
      %v5438 = vpop.f32.mrf.mxu0
      %v5439 = vadd.f32 %v5390, %v5438
      %v5440 = vpop.f32.mrf.mxu0
      %v5441 = vadd.f32 %v5392, %v5440
      %5442 = vdwg.mxu0
      %5443 = vmatpush.bf16.msra.mxu0 %v2296
      %5444 = vmatpush.bf16.msra.mxu0 %v2288
      %5445 = vmatpush.bf16.msra.mxu0 %v2280
      %5446 = vmatpush.bf16.msra.mxu0 %v2272
      %5447 = vmatpush.bf16.msra.mxu0 %v2264
      %5448 = vmatpush.bf16.msra.mxu0 %v2256
      %5449 = vmatpush.bf16.msra.mxu0 %v2248
      %5450 = vmatpush.bf16.msra.mxu0 %v2240
      %5451 = vmatmul.bf16.gmra.mxu0 %v953
      %v5452 = vpop.f32.mrf.mxu0
      %v5453 = vadd.f32 %v768, %v5452
      %v5454 = vpop.f32.mrf.mxu0
      %v5455 = vadd.f32 %v768, %v5454
      %5456 = vmatmul.bf16.gmra.mxu0 %v960
      %v5457 = vpop.f32.mrf.mxu0
      %v5458 = vadd.f32 %v768, %v5457
      %v5459 = vpop.f32.mrf.mxu0
      %v5460 = vadd.f32 %v768, %v5459
      %5461 = vmatmul.bf16.gmra.mxu0 %v967
      %v5462 = vpop.f32.mrf.mxu0
      %v5463 = vadd.f32 %v768, %v5462
      %v5464 = vpop.f32.mrf.mxu0
      %v5465 = vadd.f32 %v768, %v5464
      %5466 = vmatmul.bf16.gmra.mxu0 %v974
      %v5467 = vpop.f32.mrf.mxu0
      %v5468 = vadd.f32 %v768, %v5467
      %v5469 = vpop.f32.mrf.mxu0
      %v5470 = vadd.f32 %v768, %v5469
      %5471 = vmatmul.bf16.gmra.mxu0 %v981
      %v5472 = vpop.f32.mrf.mxu0
      %v5473 = vadd.f32 %v768, %v5472
      %v5474 = vpop.f32.mrf.mxu0
      %v5475 = vadd.f32 %v768, %v5474
      %5476 = vmatmul.bf16.gmra.mxu0 %v988
      %v5477 = vpop.f32.mrf.mxu0
      %v5478 = vadd.f32 %v768, %v5477
      %v5479 = vpop.f32.mrf.mxu0
      %v5480 = vadd.f32 %v768, %v5479
      %5481 = vmatmul.bf16.gmra.mxu0 %v995
      %v5482 = vpop.f32.mrf.mxu0
      %v5483 = vadd.f32 %v768, %v5482
      %v5484 = vpop.f32.mrf.mxu0
      %v5485 = vadd.f32 %v768, %v5484
      %5486 = vmatmul.bf16.gmra.mxu0 %v1002
      %v5487 = vpop.f32.mrf.mxu0
      %v5488 = vadd.f32 %v768, %v5487
      %v5489 = vpop.f32.mrf.mxu0
      %v5490 = vadd.f32 %v768, %v5489
      %5491 = vdwg.mxu0
      %5492 = vmatpush.bf16.msra.mxu0 %v2360
      %5493 = vmatpush.bf16.msra.mxu0 %v2352
      %5494 = vmatpush.bf16.msra.mxu0 %v2344
      %5495 = vmatpush.bf16.msra.mxu0 %v2336
      %5496 = vmatpush.bf16.msra.mxu0 %v2328
      %5497 = vmatpush.bf16.msra.mxu0 %v2320
      %5498 = vmatpush.bf16.msra.mxu0 %v2312
      %5499 = vmatpush.bf16.msra.mxu0 %v2304
      %5500 = vmatmul.bf16.gmra.mxu0 %v954
      %v5501 = vpop.f32.mrf.mxu0
      %v5502 = vadd.f32 %v5453, %v5501
      %v5503 = vpop.f32.mrf.mxu0
      %v5504 = vadd.f32 %v5455, %v5503
      %5505 = vmatmul.bf16.gmra.mxu0 %v961
      %v5506 = vpop.f32.mrf.mxu0
      %v5507 = vadd.f32 %v5458, %v5506
      %v5508 = vpop.f32.mrf.mxu0
      %v5509 = vadd.f32 %v5460, %v5508
      %5510 = vmatmul.bf16.gmra.mxu0 %v968
      %v5511 = vpop.f32.mrf.mxu0
      %v5512 = vadd.f32 %v5463, %v5511
      %v5513 = vpop.f32.mrf.mxu0
      %v5514 = vadd.f32 %v5465, %v5513
      %5515 = vmatmul.bf16.gmra.mxu0 %v975
      %v5516 = vpop.f32.mrf.mxu0
      %v5517 = vadd.f32 %v5468, %v5516
      %v5518 = vpop.f32.mrf.mxu0
      %v5519 = vadd.f32 %v5470, %v5518
      %5520 = vmatmul.bf16.gmra.mxu0 %v982
      %v5521 = vpop.f32.mrf.mxu0
      %v5522 = vadd.f32 %v5473, %v5521
      %v5523 = vpop.f32.mrf.mxu0
      %v5524 = vadd.f32 %v5475, %v5523
      %5525 = vmatmul.bf16.gmra.mxu0 %v989
      %v5526 = vpop.f32.mrf.mxu0
      %v5527 = vadd.f32 %v5478, %v5526
      %v5528 = vpop.f32.mrf.mxu0
      %v5529 = vadd.f32 %v5480, %v5528
      %5530 = vmatmul.bf16.gmra.mxu0 %v996
      %v5531 = vpop.f32.mrf.mxu0
      %v5532 = vadd.f32 %v5483, %v5531
      %v5533 = vpop.f32.mrf.mxu0
      %v5534 = vadd.f32 %v5485, %v5533
      %5535 = vmatmul.bf16.gmra.mxu0 %v1003
      %v5536 = vpop.f32.mrf.mxu0
      %v5537 = vadd.f32 %v5488, %v5536
      %v5538 = vpop.f32.mrf.mxu0
      %v5539 = vadd.f32 %v5490, %v5538
      %5540 = vdwg.mxu0
      %5541 = vmatpush.bf16.msra.mxu0 %v2424
      %5542 = vmatpush.bf16.msra.mxu0 %v2416
      %5543 = vmatpush.bf16.msra.mxu0 %v2408
      %5544 = vmatpush.bf16.msra.mxu0 %v2400
      %5545 = vmatpush.bf16.msra.mxu0 %v2392
      %5546 = vmatpush.bf16.msra.mxu0 %v2384
      %5547 = vmatpush.bf16.msra.mxu0 %v2376
      %5548 = vmatpush.bf16.msra.mxu0 %v2368
      %5549 = vmatmul.bf16.gmra.mxu0 %v955
      %v5550 = vpop.f32.mrf.mxu0
      %v5551 = vadd.f32 %v5502, %v5550
      %v5552 = vpop.f32.mrf.mxu0
      %v5553 = vadd.f32 %v5504, %v5552
      %5554 = vmatmul.bf16.gmra.mxu0 %v962
      %v5555 = vpop.f32.mrf.mxu0
      %v5556 = vadd.f32 %v5507, %v5555
      %v5557 = vpop.f32.mrf.mxu0
      %v5558 = vadd.f32 %v5509, %v5557
      %5559 = vmatmul.bf16.gmra.mxu0 %v969
      %v5560 = vpop.f32.mrf.mxu0
      %v5561 = vadd.f32 %v5512, %v5560
      %v5562 = vpop.f32.mrf.mxu0
      %v5563 = vadd.f32 %v5514, %v5562
      %5564 = vmatmul.bf16.gmra.mxu0 %v976
      %v5565 = vpop.f32.mrf.mxu0
      %v5566 = vadd.f32 %v5517, %v5565
      %v5567 = vpop.f32.mrf.mxu0
      %v5568 = vadd.f32 %v5519, %v5567
      %5569 = vmatmul.bf16.gmra.mxu0 %v983
      %v5570 = vpop.f32.mrf.mxu0
      %v5571 = vadd.f32 %v5522, %v5570
      %v5572 = vpop.f32.mrf.mxu0
      %v5573 = vadd.f32 %v5524, %v5572
      %5574 = vmatmul.bf16.gmra.mxu0 %v990
      %v5575 = vpop.f32.mrf.mxu0
      %v5576 = vadd.f32 %v5527, %v5575
      %v5577 = vpop.f32.mrf.mxu0
      %v5578 = vadd.f32 %v5529, %v5577
      %5579 = vmatmul.bf16.gmra.mxu0 %v997
      %v5580 = vpop.f32.mrf.mxu0
      %v5581 = vadd.f32 %v5532, %v5580
      %v5582 = vpop.f32.mrf.mxu0
      %v5583 = vadd.f32 %v5534, %v5582
      %5584 = vmatmul.bf16.gmra.mxu0 %v1004
      %v5585 = vpop.f32.mrf.mxu0
      %v5586 = vadd.f32 %v5537, %v5585
      %v5587 = vpop.f32.mrf.mxu0
      %v5588 = vadd.f32 %v5539, %v5587
      %5589 = vdwg.mxu0
      %5590 = vmatpush.bf16.msra.mxu0 %v2488
      %5591 = vmatpush.bf16.msra.mxu0 %v2480
      %5592 = vmatpush.bf16.msra.mxu0 %v2472
      %5593 = vmatpush.bf16.msra.mxu0 %v2464
      %5594 = vmatpush.bf16.msra.mxu0 %v2456
      %5595 = vmatpush.bf16.msra.mxu0 %v2448
      %5596 = vmatpush.bf16.msra.mxu0 %v2440
      %5597 = vmatpush.bf16.msra.mxu0 %v2432
      %5598 = vmatmul.bf16.gmra.mxu0 %v956
      %v5599 = vpop.f32.mrf.mxu0
      %v5600 = vadd.f32 %v5551, %v5599
      %v5601 = vpop.f32.mrf.mxu0
      %v5602 = vadd.f32 %v5553, %v5601
      %5603 = vmatmul.bf16.gmra.mxu0 %v963
      %v5604 = vpop.f32.mrf.mxu0
      %v5605 = vadd.f32 %v5556, %v5604
      %v5606 = vpop.f32.mrf.mxu0
      %v5607 = vadd.f32 %v5558, %v5606
      %5608 = vmatmul.bf16.gmra.mxu0 %v970
      %v5609 = vpop.f32.mrf.mxu0
      %v5610 = vadd.f32 %v5561, %v5609
      %v5611 = vpop.f32.mrf.mxu0
      %v5612 = vadd.f32 %v5563, %v5611
      %5613 = vmatmul.bf16.gmra.mxu0 %v977
      %v5614 = vpop.f32.mrf.mxu0
      %v5615 = vadd.f32 %v5566, %v5614
      %v5616 = vpop.f32.mrf.mxu0
      %v5617 = vadd.f32 %v5568, %v5616
      %5618 = vmatmul.bf16.gmra.mxu0 %v984
      %v5619 = vpop.f32.mrf.mxu0
      %v5620 = vadd.f32 %v5571, %v5619
      %v5621 = vpop.f32.mrf.mxu0
      %v5622 = vadd.f32 %v5573, %v5621
      %5623 = vmatmul.bf16.gmra.mxu0 %v991
      %v5624 = vpop.f32.mrf.mxu0
      %v5625 = vadd.f32 %v5576, %v5624
      %v5626 = vpop.f32.mrf.mxu0
      %v5627 = vadd.f32 %v5578, %v5626
      %5628 = vmatmul.bf16.gmra.mxu0 %v998
      %v5629 = vpop.f32.mrf.mxu0
      %v5630 = vadd.f32 %v5581, %v5629
      %v5631 = vpop.f32.mrf.mxu0
      %v5632 = vadd.f32 %v5583, %v5631
      %5633 = vmatmul.bf16.gmra.mxu0 %v1005
      %v5634 = vpop.f32.mrf.mxu0
      %v5635 = vadd.f32 %v5586, %v5634
      %v5636 = vpop.f32.mrf.mxu0
      %v5637 = vadd.f32 %v5588, %v5636
      %5638 = vdwg.mxu0
      %5639 = vmatpush.bf16.msra.mxu0 %v2552
      %5640 = vmatpush.bf16.msra.mxu0 %v2544
      %5641 = vmatpush.bf16.msra.mxu0 %v2536
      %5642 = vmatpush.bf16.msra.mxu0 %v2528
      %5643 = vmatpush.bf16.msra.mxu0 %v2520
      %5644 = vmatpush.bf16.msra.mxu0 %v2512
      %5645 = vmatpush.bf16.msra.mxu0 %v2504
      %5646 = vmatpush.bf16.msra.mxu0 %v2496
      %5647 = vmatmul.bf16.gmra.mxu0 %v957
      %v5648 = vpop.f32.mrf.mxu0
      %v5649 = vadd.f32 %v5600, %v5648
      %v5650 = vpop.f32.mrf.mxu0
      %v5651 = vadd.f32 %v5602, %v5650
      %5652 = vmatmul.bf16.gmra.mxu0 %v964
      %v5653 = vpop.f32.mrf.mxu0
      %v5654 = vadd.f32 %v5605, %v5653
      %v5655 = vpop.f32.mrf.mxu0
      %v5656 = vadd.f32 %v5607, %v5655
      %5657 = vmatmul.bf16.gmra.mxu0 %v971
      %v5658 = vpop.f32.mrf.mxu0
      %v5659 = vadd.f32 %v5610, %v5658
      %v5660 = vpop.f32.mrf.mxu0
      %v5661 = vadd.f32 %v5612, %v5660
      %5662 = vmatmul.bf16.gmra.mxu0 %v978
      %v5663 = vpop.f32.mrf.mxu0
      %v5664 = vadd.f32 %v5615, %v5663
      %v5665 = vpop.f32.mrf.mxu0
      %v5666 = vadd.f32 %v5617, %v5665
      %5667 = vmatmul.bf16.gmra.mxu0 %v985
      %v5668 = vpop.f32.mrf.mxu0
      %v5669 = vadd.f32 %v5620, %v5668
      %v5670 = vpop.f32.mrf.mxu0
      %v5671 = vadd.f32 %v5622, %v5670
      %5672 = vmatmul.bf16.gmra.mxu0 %v992
      %v5673 = vpop.f32.mrf.mxu0
      %v5674 = vadd.f32 %v5625, %v5673
      %v5675 = vpop.f32.mrf.mxu0
      %v5676 = vadd.f32 %v5627, %v5675
      %5677 = vmatmul.bf16.gmra.mxu0 %v999
      %v5678 = vpop.f32.mrf.mxu0
      %v5679 = vadd.f32 %v5630, %v5678
      %v5680 = vpop.f32.mrf.mxu0
      %v5681 = vadd.f32 %v5632, %v5680
      %5682 = vmatmul.bf16.gmra.mxu0 %v1006
      %v5683 = vpop.f32.mrf.mxu0
      %v5684 = vadd.f32 %v5635, %v5683
      %v5685 = vpop.f32.mrf.mxu0
      %v5686 = vadd.f32 %v5637, %v5685
      %5687 = vdwg.mxu0
      %5688 = vmatpush.bf16.msra.mxu0 %v2616
      %5689 = vmatpush.bf16.msra.mxu0 %v2608
      %5690 = vmatpush.bf16.msra.mxu0 %v2600
      %5691 = vmatpush.bf16.msra.mxu0 %v2592
      %5692 = vmatpush.bf16.msra.mxu0 %v2584
      %5693 = vmatpush.bf16.msra.mxu0 %v2576
      %5694 = vmatpush.bf16.msra.mxu0 %v2568
      %5695 = vmatpush.bf16.msra.mxu0 %v2560
      %5696 = vmatmul.bf16.gmra.mxu0 %v958
      %v5697 = vpop.f32.mrf.mxu0
      %v5698 = vadd.f32 %v5649, %v5697
      %v5699 = vpop.f32.mrf.mxu0
      %v5700 = vadd.f32 %v5651, %v5699
      %5701 = vmatmul.bf16.gmra.mxu0 %v965
      %v5702 = vpop.f32.mrf.mxu0
      %v5703 = vadd.f32 %v5654, %v5702
      %v5704 = vpop.f32.mrf.mxu0
      %v5705 = vadd.f32 %v5656, %v5704
      %5706 = vmatmul.bf16.gmra.mxu0 %v972
      %v5707 = vpop.f32.mrf.mxu0
      %v5708 = vadd.f32 %v5659, %v5707
      %v5709 = vpop.f32.mrf.mxu0
      %v5710 = vadd.f32 %v5661, %v5709
      %5711 = vmatmul.bf16.gmra.mxu0 %v979
      %v5712 = vpop.f32.mrf.mxu0
      %v5713 = vadd.f32 %v5664, %v5712
      %v5714 = vpop.f32.mrf.mxu0
      %v5715 = vadd.f32 %v5666, %v5714
      %5716 = vmatmul.bf16.gmra.mxu0 %v986
      %v5717 = vpop.f32.mrf.mxu0
      %v5718 = vadd.f32 %v5669, %v5717
      %v5719 = vpop.f32.mrf.mxu0
      %v5720 = vadd.f32 %v5671, %v5719
      %5721 = vmatmul.bf16.gmra.mxu0 %v993
      %v5722 = vpop.f32.mrf.mxu0
      %v5723 = vadd.f32 %v5674, %v5722
      %v5724 = vpop.f32.mrf.mxu0
      %v5725 = vadd.f32 %v5676, %v5724
      %5726 = vmatmul.bf16.gmra.mxu0 %v1000
      %v5727 = vpop.f32.mrf.mxu0
      %v5728 = vadd.f32 %v5679, %v5727
      %v5729 = vpop.f32.mrf.mxu0
      %v5730 = vadd.f32 %v5681, %v5729
      %5731 = vmatmul.bf16.gmra.mxu0 %v1007
      %v5732 = vpop.f32.mrf.mxu0
      %v5733 = vadd.f32 %v5684, %v5732
      %v5734 = vpop.f32.mrf.mxu0
      %v5735 = vadd.f32 %v5686, %v5734
      %5736 = vdwg.mxu0
      %5737 = vmatpush.bf16.msra.mxu0 0
      %5738 = vmatpush.bf16.msra.mxu0 0
      %5739 = vmatpush.bf16.msra.mxu0 0
      %5740 = vmatpush.bf16.msra.mxu0 0
      %5741 = vmatpush.bf16.msra.mxu0 0
      %5742 = vmatpush.bf16.msra.mxu0 0
      %5743 = vmatpush.bf16.msra.mxu0 0
      %5744 = vmatpush.bf16.msra.mxu0 %v2624
      %5745 = vmatmul.bf16.gmra.mxu0 %v3019
      %v5746 = vpop.f32.mrf.mxu0
      %v5747 = vadd.f32 %v5698, %v5746
      %v5748 = vpop.f32.mrf.mxu0
      %v5749 = vadd.f32 %v5700, %v5748
      %5750 = vmatmul.bf16.gmra.mxu0 %v3022
      %v5751 = vpop.f32.mrf.mxu0
      %v5752 = vadd.f32 %v5703, %v5751
      %v5753 = vpop.f32.mrf.mxu0
      %v5754 = vadd.f32 %v5705, %v5753
      %5755 = vmatmul.bf16.gmra.mxu0 %v3025
      %v5756 = vpop.f32.mrf.mxu0
      %v5757 = vadd.f32 %v5708, %v5756
      %v5758 = vpop.f32.mrf.mxu0
      %v5759 = vadd.f32 %v5710, %v5758
      %5760 = vmatmul.bf16.gmra.mxu0 %v3028
      %v5761 = vpop.f32.mrf.mxu0
      %v5762 = vadd.f32 %v5713, %v5761
      %v5763 = vpop.f32.mrf.mxu0
      %v5764 = vadd.f32 %v5715, %v5763
      %5765 = vmatmul.bf16.gmra.mxu0 %v3031
      %v5766 = vpop.f32.mrf.mxu0
      %v5767 = vadd.f32 %v5718, %v5766
      %v5768 = vpop.f32.mrf.mxu0
      %v5769 = vadd.f32 %v5720, %v5768
      %5770 = vmatmul.bf16.gmra.mxu0 %v3034
      %v5771 = vpop.f32.mrf.mxu0
      %v5772 = vadd.f32 %v5723, %v5771
      %v5773 = vpop.f32.mrf.mxu0
      %v5774 = vadd.f32 %v5725, %v5773
      %5775 = vmatmul.bf16.gmra.mxu0 %v3037
      %v5776 = vpop.f32.mrf.mxu0
      %v5777 = vadd.f32 %v5728, %v5776
      %v5778 = vpop.f32.mrf.mxu0
      %v5779 = vadd.f32 %v5730, %v5778
      %5780 = vmatmul.bf16.gmra.mxu0 %v3040
      %v5781 = vpop.f32.mrf.mxu0
      %v5782 = vadd.f32 %v5733, %v5781
      %v5783 = vpop.f32.mrf.mxu0
      %v5784 = vadd.f32 %v5735, %v5783
      %5785 = vdwg.mxu0
      %v5786 = vmax.f32 %v3346, 0.0
      %v5787 = vmax.f32 %v3689, 0.0
      %v5788 = vmax.f32 %v4032, 0.0
      %v5789 = vmax.f32 %v4375, 0.0
      %v5790 = vmax.f32 %v4718, 0.0
      %v5791 = vmax.f32 %v5061, 0.0
      %v5792 = vmax.f32 %v5404, 0.0
      %v5793 = vmax.f32 %v5747, 0.0
      %v5794 = vmax.f32 %v3348, 0.0
      %v5795 = vmax.f32 %v3691, 0.0
      %v5796 = vmax.f32 %v4034, 0.0
      %v5797 = vmax.f32 %v4377, 0.0
      %v5798 = vmax.f32 %v4720, 0.0
      %v5799 = vmax.f32 %v5063, 0.0
      %v5800 = vmax.f32 %v5406, 0.0
      %v5801 = vmax.f32 %v5749, 0.0
      %v5802 = vmax.f32 %v3351, 0.0
      %v5803 = vmax.f32 %v3694, 0.0
      %v5804 = vmax.f32 %v4037, 0.0
      %v5805 = vmax.f32 %v4380, 0.0
      %v5806 = vmax.f32 %v4723, 0.0
      %v5807 = vmax.f32 %v5066, 0.0
      %v5808 = vmax.f32 %v5409, 0.0
      %v5809 = vmax.f32 %v5752, 0.0
      %v5810 = vmax.f32 %v3353, 0.0
      %v5811 = vmax.f32 %v3696, 0.0
      %v5812 = vmax.f32 %v4039, 0.0
      %v5813 = vmax.f32 %v4382, 0.0
      %v5814 = vmax.f32 %v4725, 0.0
      %v5815 = vmax.f32 %v5068, 0.0
      %v5816 = vmax.f32 %v5411, 0.0
      %v5817 = vmax.f32 %v5754, 0.0
      %v5818 = vmax.f32 %v3356, 0.0
      %v5819 = vmax.f32 %v3699, 0.0
      %v5820 = vmax.f32 %v4042, 0.0
      %v5821 = vmax.f32 %v4385, 0.0
      %v5822 = vmax.f32 %v4728, 0.0
      %v5823 = vmax.f32 %v5071, 0.0
      %v5824 = vmax.f32 %v5414, 0.0
      %v5825 = vmax.f32 %v5757, 0.0
      %v5826 = vmax.f32 %v3358, 0.0
      %v5827 = vmax.f32 %v3701, 0.0
      %v5828 = vmax.f32 %v4044, 0.0
      %v5829 = vmax.f32 %v4387, 0.0
      %v5830 = vmax.f32 %v4730, 0.0
      %v5831 = vmax.f32 %v5073, 0.0
      %v5832 = vmax.f32 %v5416, 0.0
      %v5833 = vmax.f32 %v5759, 0.0
      %v5834 = vmax.f32 %v3361, 0.0
      %v5835 = vmax.f32 %v3704, 0.0
      %v5836 = vmax.f32 %v4047, 0.0
      %v5837 = vmax.f32 %v4390, 0.0
      %v5838 = vmax.f32 %v4733, 0.0
      %v5839 = vmax.f32 %v5076, 0.0
      %v5840 = vmax.f32 %v5419, 0.0
      %v5841 = vmax.f32 %v5762, 0.0
      %v5842 = vmax.f32 %v3363, 0.0
      %v5843 = vmax.f32 %v3706, 0.0
      %v5844 = vmax.f32 %v4049, 0.0
      %v5845 = vmax.f32 %v4392, 0.0
      %v5846 = vmax.f32 %v4735, 0.0
      %v5847 = vmax.f32 %v5078, 0.0
      %v5848 = vmax.f32 %v5421, 0.0
      %v5849 = vmax.f32 %v5764, 0.0
      %v5850 = vmax.f32 %v3366, 0.0
      %v5851 = vmax.f32 %v3709, 0.0
      %v5852 = vmax.f32 %v4052, 0.0
      %v5853 = vmax.f32 %v4395, 0.0
      %v5854 = vmax.f32 %v4738, 0.0
      %v5855 = vmax.f32 %v5081, 0.0
      %v5856 = vmax.f32 %v5424, 0.0
      %v5857 = vmax.f32 %v5767, 0.0
      %v5858 = vmax.f32 %v3368, 0.0
      %v5859 = vmax.f32 %v3711, 0.0
      %v5860 = vmax.f32 %v4054, 0.0
      %v5861 = vmax.f32 %v4397, 0.0
      %v5862 = vmax.f32 %v4740, 0.0
      %v5863 = vmax.f32 %v5083, 0.0
      %v5864 = vmax.f32 %v5426, 0.0
      %v5865 = vmax.f32 %v5769, 0.0
      %v5866 = vmax.f32 %v3371, 0.0
      %v5867 = vmax.f32 %v3714, 0.0
      %v5868 = vmax.f32 %v4057, 0.0
      %v5869 = vmax.f32 %v4400, 0.0
      %v5870 = vmax.f32 %v4743, 0.0
      %v5871 = vmax.f32 %v5086, 0.0
      %v5872 = vmax.f32 %v5429, 0.0
      %v5873 = vmax.f32 %v5772, 0.0
      %v5874 = vmax.f32 %v3373, 0.0
      %v5875 = vmax.f32 %v3716, 0.0
      %v5876 = vmax.f32 %v4059, 0.0
      %v5877 = vmax.f32 %v4402, 0.0
      %v5878 = vmax.f32 %v4745, 0.0
      %v5879 = vmax.f32 %v5088, 0.0
      %v5880 = vmax.f32 %v5431, 0.0
      %v5881 = vmax.f32 %v5774, 0.0
      %v5882 = vmax.f32 %v3376, 0.0
      %v5883 = vmax.f32 %v3719, 0.0
      %v5884 = vmax.f32 %v4062, 0.0
      %v5885 = vmax.f32 %v4405, 0.0
      %v5886 = vmax.f32 %v4748, 0.0
      %v5887 = vmax.f32 %v5091, 0.0
      %v5888 = vmax.f32 %v5434, 0.0
      %v5889 = vmax.f32 %v5777, 0.0
      %v5890 = vmax.f32 %v3378, 0.0
      %v5891 = vmax.f32 %v3721, 0.0
      %v5892 = vmax.f32 %v4064, 0.0
      %v5893 = vmax.f32 %v4407, 0.0
      %v5894 = vmax.f32 %v4750, 0.0
      %v5895 = vmax.f32 %v5093, 0.0
      %v5896 = vmax.f32 %v5436, 0.0
      %v5897 = vmax.f32 %v5779, 0.0
      %v5898 = vmax.f32 %v3381, 0.0
      %v5899 = vmax.f32 %v3724, 0.0
      %v5900 = vmax.f32 %v4067, 0.0
      %v5901 = vmax.f32 %v4410, 0.0
      %v5902 = vmax.f32 %v4753, 0.0
      %v5903 = vmax.f32 %v5096, 0.0
      %v5904 = vmax.f32 %v5439, 0.0
      %v5905 = vmax.f32 %v5782, 0.0
      %v5906 = vmax.f32 %v3383, 0.0
      %v5907 = vmax.f32 %v3726, 0.0
      %v5908 = vmax.f32 %v4069, 0.0
      %v5909 = vmax.f32 %v4412, 0.0
      %v5910 = vmax.f32 %v4755, 0.0
      %v5911 = vmax.f32 %v5098, 0.0
      %v5912 = vmax.f32 %v5441, 0.0
      %v5913 = vmax.f32 %v5784, 0.0
      %v5914 = vpack.c.bf16 %v5794, %v5786
      %v5915 = vpack.c.bf16 %v5795, %v5787
      %v5916 = vpack.c.bf16 %v5796, %v5788
      %v5917 = vpack.c.bf16 %v5797, %v5789
      %v5918 = vpack.c.bf16 %v5798, %v5790
      %v5919 = vpack.c.bf16 %v5799, %v5791
      %v5920 = vpack.c.bf16 %v5800, %v5792
      %v5921 = vpack.c.bf16 %v5801, %v5793
      %v5922 = vpack.c.bf16 %v5810, %v5802
      %v5923 = vpack.c.bf16 %v5811, %v5803
      %v5924 = vpack.c.bf16 %v5812, %v5804
      %v5925 = vpack.c.bf16 %v5813, %v5805
      %v5926 = vpack.c.bf16 %v5814, %v5806
      %v5927 = vpack.c.bf16 %v5815, %v5807
      %v5928 = vpack.c.bf16 %v5816, %v5808
      %v5929 = vpack.c.bf16 %v5817, %v5809
      %v5930 = vpack.c.bf16 %v5826, %v5818
      %v5931 = vpack.c.bf16 %v5827, %v5819
      %v5932 = vpack.c.bf16 %v5828, %v5820
      %v5933 = vpack.c.bf16 %v5829, %v5821
      %v5934 = vpack.c.bf16 %v5830, %v5822
      %v5935 = vpack.c.bf16 %v5831, %v5823
      %v5936 = vpack.c.bf16 %v5832, %v5824
      %v5937 = vpack.c.bf16 %v5833, %v5825
      %v5938 = vpack.c.bf16 %v5842, %v5834
      %v5939 = vpack.c.bf16 %v5843, %v5835
      %v5940 = vpack.c.bf16 %v5844, %v5836
      %v5941 = vpack.c.bf16 %v5845, %v5837
      %v5942 = vpack.c.bf16 %v5846, %v5838
      %v5943 = vpack.c.bf16 %v5847, %v5839
      %v5944 = vpack.c.bf16 %v5848, %v5840
      %v5945 = vpack.c.bf16 %v5849, %v5841
      %v5946 = vpack.c.bf16 %v5858, %v5850
      %v5947 = vpack.c.bf16 %v5859, %v5851
      %v5948 = vpack.c.bf16 %v5860, %v5852
      %v5949 = vpack.c.bf16 %v5861, %v5853
      %v5950 = vpack.c.bf16 %v5862, %v5854
      %v5951 = vpack.c.bf16 %v5863, %v5855
      %v5952 = vpack.c.bf16 %v5864, %v5856
      %v5953 = vpack.c.bf16 %v5865, %v5857
      %v5954 = vpack.c.bf16 %v5874, %v5866
      %v5955 = vpack.c.bf16 %v5875, %v5867
      %v5956 = vpack.c.bf16 %v5876, %v5868
      %v5957 = vpack.c.bf16 %v5877, %v5869
      %v5958 = vpack.c.bf16 %v5878, %v5870
      %v5959 = vpack.c.bf16 %v5879, %v5871
      %v5960 = vpack.c.bf16 %v5880, %v5872
      %v5961 = vpack.c.bf16 %v5881, %v5873
      %v5962 = vpack.c.bf16 %v5890, %v5882
      %v5963 = vpack.c.bf16 %v5891, %v5883
      %v5964 = vpack.c.bf16 %v5892, %v5884
      %v5965 = vpack.c.bf16 %v5893, %v5885
      %v5966 = vpack.c.bf16 %v5894, %v5886
      %v5967 = vpack.c.bf16 %v5895, %v5887
      %v5968 = vpack.c.bf16 %v5896, %v5888
      %v5969 = vpack.c.bf16 %v5897, %v5889
      %v5970 = vpack.c.bf16 %v5906, %v5898
      %v5971 = vpack.c.bf16 %v5907, %v5899
      %v5972 = vpack.c.bf16 %v5908, %v5900
      %v5973 = vpack.c.bf16 %v5909, %v5901
      %v5974 = vpack.c.bf16 %v5910, %v5902
      %v5975 = vpack.c.bf16 %v5911, %v5903
      %v5976 = vpack.c.bf16 %v5912, %v5904
      %v5977 = vpack.c.bf16 %v5913, %v5905
      %v5978 = vld [vmem:[%s3] sm:$0xf]
      %v5979 = vld [vmem:[%s3 + $0x4] sm:$0xf]
      %v5980 = vld [vmem:[%s3 + $0x8] sm:$0xf]
      %v5981 = vld [vmem:[%s3 + $0xc] sm:$0xf]
      %v5982 = vld [vmem:[%s3 + $0x10] sm:$0xf]
      %v5983 = vld [vmem:[%s3 + $0x14] sm:$0xf]
      %v5984 = vld [vmem:[%s3 + $0x18] sm:$0xf]
      %v5985 = vld [vmem:[%s3 + $0x1c] sm:$0xf]
      %v5986 = vld [vmem:[%s3 + $0x20] sm:$0xf]
      %v5987 = vld [vmem:[%s3 + $0x24] sm:$0xf]
      %v5988 = vld [vmem:[%s3 + $0x28] sm:$0xf]
      %v5989 = vld [vmem:[%s3 + $0x2c] sm:$0xf]
      %v5990 = vld [vmem:[%s3 + $0x30] sm:$0xf]
      %v5991 = vld [vmem:[%s3 + $0x34] sm:$0xf]
      %v5992 = vld [vmem:[%s3 + $0x38] sm:$0xf]
      %v5993 = vld [vmem:[%s3 + $0x3c] sm:$0xf]
      %v5994 = vld [vmem:[%s3 + $0x40] sm:$0xf]
      %v5995 = vld [vmem:[%s3 + $0x44] sm:$0xf]
      %v5996 = vld [vmem:[%s3 + $0x48] sm:$0xf]
      %v5997 = vld [vmem:[%s3 + $0x4c] sm:$0xf]
      %v5998 = vld [vmem:[%s3 + $0x50] sm:$0xf]
      %v5999 = vld [vmem:[%s3 + $0x54] sm:$0xf]
      %v6000 = vld [vmem:[%s3 + $0x58] sm:$0xf]
      %v6001 = vld [vmem:[%s3 + $0x5c] sm:$0xf]
      %v6002 = vld [vmem:[%s3 + $0x60] sm:$0xf]
      %v6003 = vld [vmem:[%s3 + $0x64] sm:$0xf]
      %v6004 = vld [vmem:[%s3 + $0x68] sm:$0xf]
      %v6005 = vld [vmem:[%s3 + $0x6c] sm:$0xf]
      %v6006 = vld [vmem:[%s3 + $0x70] sm:$0xf]
      %v6007 = vld [vmem:[%s3 + $0x74] sm:$0xf]
      %v6008 = vld [vmem:[%s3 + $0x78] sm:$0xf]
      %v6009 = vld [vmem:[%s3 + $0x7c] sm:$0xf]
      %v6010 = vld [vmem:[%s3 + $0x80] sm:$0xf]
      %v6011 = vld [vmem:[%s3 + $0x84] sm:$0xf]
      %v6012 = vld [vmem:[%s3 + $0x88] sm:$0xf]
      %v6013 = vld [vmem:[%s3 + $0x8c] sm:$0xf]
      %v6014 = vld [vmem:[%s3 + $0x90] sm:$0xf]
      %v6015 = vld [vmem:[%s3 + $0x94] sm:$0xf]
      %v6016 = vld [vmem:[%s3 + $0x98] sm:$0xf]
      %v6017 = vld [vmem:[%s3 + $0x9c] sm:$0xf]
      %v6018 = vld [vmem:[%s3 + $0xa0] sm:$0xf]
      %v6019 = vld [vmem:[%s3 + $0xa4] sm:$0xf]
      %v6020 = vld [vmem:[%s3 + $0xa8] sm:$0xf]
      %v6021 = vld [vmem:[%s3 + $0xac] sm:$0xf]
      %v6022 = vld [vmem:[%s3 + $0xb0] sm:$0xf]
      %v6023 = vld [vmem:[%s3 + $0xb4] sm:$0xf]
      %v6024 = vld [vmem:[%s3 + $0xb8] sm:$0xf]
      %v6025 = vld [vmem:[%s3 + $0xbc] sm:$0xf]
      %v6026 = vld [vmem:[%s3 + $0xc0] sm:$0xf]
      %v6027 = vld [vmem:[%s3 + $0xc4] sm:$0xf]
      %v6028 = vld [vmem:[%s3 + $0xc8] sm:$0xf]
      %v6029 = vld [vmem:[%s3 + $0xcc] sm:$0xf]
      %v6030 = vld [vmem:[%s3 + $0xd0] sm:$0xf]
      %v6031 = vld [vmem:[%s3 + $0xd4] sm:$0xf]
      %v6032 = vld [vmem:[%s3 + $0xd8] sm:$0xf]
      %v6033 = vld [vmem:[%s3 + $0xdc] sm:$0xf]
      %v6034 = vld [vmem:[%s3 + $0xe0] sm:$0xf]
      %v6035 = vld [vmem:[%s3 + $0xe4] sm:$0xf]
      %v6036 = vld [vmem:[%s3 + $0xe8] sm:$0xf]
      %v6037 = vld [vmem:[%s3 + $0xec] sm:$0xf]
      %v6038 = vld [vmem:[%s3 + $0xf0] sm:$0xf]
      %v6039 = vld [vmem:[%s3 + $0xf4] sm:$0xf]
      %v6040 = vld [vmem:[%s3 + $0xf8] sm:$0xf]
      %v6041 = vld [vmem:[%s3 + $0xfc] sm:$0xf]
      %v6042 = vld [vmem:[%s3 + $0x100] sm:$0xf]
      %v6043 = vld [vmem:[%s3 + $0x104] sm:$0xf]
      %v6044 = vld [vmem:[%s3 + $0x108] sm:$0xf]
      %v6045 = vld [vmem:[%s3 + $0x10c] sm:$0xf]
      %v6046 = vld [vmem:[%s3 + $0x110] sm:$0xf]
      %v6047 = vld [vmem:[%s3 + $0x114] sm:$0xf]
      %v6048 = vld [vmem:[%s3 + $0x118] sm:$0xf]
      %v6049 = vld [vmem:[%s3 + $0x11c] sm:$0xf]
      %v6050 = vld [vmem:[%s3 + $0x120] sm:$0xf]
      %v6051 = vld [vmem:[%s3 + $0x124] sm:$0xf]
      %v6052 = vld [vmem:[%s3 + $0x128] sm:$0xf]
      %v6053 = vld [vmem:[%s3 + $0x12c] sm:$0xf]
      %v6054 = vld [vmem:[%s3 + $0x130] sm:$0xf]
      %v6055 = vld [vmem:[%s3 + $0x134] sm:$0xf]
      %v6056 = vld [vmem:[%s3 + $0x138] sm:$0xf]
      %v6057 = vld [vmem:[%s3 + $0x13c] sm:$0xf]
      %v6058 = vld [vmem:[%s3 + $0x140] sm:$0xf]
      %v6059 = vld [vmem:[%s3 + $0x144] sm:$0xf]
      %v6060 = vld [vmem:[%s3 + $0x148] sm:$0xf]
      %v6061 = vld [vmem:[%s3 + $0x14c] sm:$0xf]
      %v6062 = vld [vmem:[%s3 + $0x150] sm:$0xf]
      %v6063 = vld [vmem:[%s3 + $0x154] sm:$0xf]
      %v6064 = vld [vmem:[%s3 + $0x158] sm:$0xf]
      %v6065 = vld [vmem:[%s3 + $0x15c] sm:$0xf]
      %v6066 = vld [vmem:[%s3 + $0x160] sm:$0xf]
      %v6067 = vld [vmem:[%s3 + $0x164] sm:$0xf]
      %v6068 = vld [vmem:[%s3 + $0x168] sm:$0xf]
      %v6069 = vld [vmem:[%s3 + $0x16c] sm:$0xf]
      %v6070 = vld [vmem:[%s3 + $0x170] sm:$0xf]
      %v6071 = vld [vmem:[%s3 + $0x174] sm:$0xf]
      %v6072 = vld [vmem:[%s3 + $0x178] sm:$0xf]
      %v6073 = vld [vmem:[%s3 + $0x17c] sm:$0xf]
      %v6074 = vld [vmem:[%s3 + $0x180] sm:$0xf]
      %v6075 = vld [vmem:[%s3 + $0x184] sm:$0xf]
      %v6076 = vld [vmem:[%s3 + $0x188] sm:$0xf]
      %v6077 = vld [vmem:[%s3 + $0x18c] sm:$0xf]
      %v6078 = vld [vmem:[%s3 + $0x190] sm:$0xf]
      %v6079 = vld [vmem:[%s3 + $0x194] sm:$0xf]
      %v6080 = vld [vmem:[%s3 + $0x198] sm:$0xf]
      %v6081 = vld [vmem:[%s3 + $0x19c] sm:$0xf]
      %v6082 = vld [vmem:[%s3 + $0x1a0] sm:$0xf]
      %v6083 = vld [vmem:[%s3 + $0x1a4] sm:$0xf]
      %v6084 = vld [vmem:[%s3 + $0x1a8] sm:$0xf]
      %v6085 = vld [vmem:[%s3 + $0x1ac] sm:$0xf]
      %v6086 = vld [vmem:[%s3 + $0x1b0] sm:$0xf]
      %v6087 = vld [vmem:[%s3 + $0x1b4] sm:$0xf]
      %v6088 = vld [vmem:[%s3 + $0x1b8] sm:$0xf]
      %v6089 = vld [vmem:[%s3 + $0x1bc] sm:$0xf]
      %v6090 = vld [vmem:[%s3 + $0x1c0] sm:$0xf]
      %v6091 = vld [vmem:[%s3 + $0x1c4] sm:$0xf]
      %v6092 = vld [vmem:[%s3 + $0x1c8] sm:$0xf]
      %v6093 = vld [vmem:[%s3 + $0x1cc] sm:$0xf]
      %v6094 = vld [vmem:[%s3 + $0x1d0] sm:$0xf]
      %v6095 = vld [vmem:[%s3 + $0x1d4] sm:$0xf]
      %v6096 = vld [vmem:[%s3 + $0x1d8] sm:$0xf]
      %v6097 = vld [vmem:[%s3 + $0x1dc] sm:$0xf]
      %v6098 = vld [vmem:[%s3 + $0x1e0] sm:$0xf]
      %v6099 = vld [vmem:[%s3 + $0x1e4] sm:$0xf]
      %v6100 = vld [vmem:[%s3 + $0x1e8] sm:$0xf]
      %v6101 = vld [vmem:[%s3 + $0x1ec] sm:$0xf]
      %v6102 = vld [vmem:[%s3 + $0x1f0] sm:$0xf]
      %v6103 = vld [vmem:[%s3 + $0x1f4] sm:$0xf]
      %v6104 = vld [vmem:[%s3 + $0x1f8] sm:$0xf]
      %v6105 = vld [vmem:[%s3 + $0x1fc] sm:$0xf]
      %v6106 = vld [vmem:[%s4] sm:$0x1]
      %v6108 = vperm.slane %v6106, 0
      %v6238 = vunpack.c.l.b16 %v5978
      %v6239 = vunpack.c.l.b16 %v5979
      %v6240 = vunpack.c.l.b16 %v5980
      %v6241 = vunpack.c.l.b16 %v5981
      %v6242 = vunpack.c.l.b16 %v5982
      %v6243 = vunpack.c.l.b16 %v5983
      %v6244 = vunpack.c.l.b16 %v5984
      %v6245 = vunpack.c.l.b16 %v5985
      %v6246 = vunpack.c.l.b16 %v5986
      %v6247 = vunpack.c.l.b16 %v5987
      %v6248 = vunpack.c.l.b16 %v5988
      %v6249 = vunpack.c.l.b16 %v5989
      %v6250 = vunpack.c.l.b16 %v5990
      %v6251 = vunpack.c.l.b16 %v5991
      %v6252 = vunpack.c.l.b16 %v5992
      %v6253 = vunpack.c.l.b16 %v5993
      %v6254 = vunpack.c.l.b16 %v5994
      %v6255 = vunpack.c.l.b16 %v5995
      %v6256 = vunpack.c.l.b16 %v5996
      %v6257 = vunpack.c.l.b16 %v5997
      %v6258 = vunpack.c.l.b16 %v5998
      %v6259 = vunpack.c.l.b16 %v5999
      %v6260 = vunpack.c.l.b16 %v6000
      %v6261 = vunpack.c.l.b16 %v6001
      %v6262 = vunpack.c.l.b16 %v6002
      %v6263 = vunpack.c.l.b16 %v6003
      %v6264 = vunpack.c.l.b16 %v6004
      %v6265 = vunpack.c.l.b16 %v6005
      %v6266 = vunpack.c.l.b16 %v6006
      %v6267 = vunpack.c.l.b16 %v6007
      %v6268 = vunpack.c.l.b16 %v6008
      %v6269 = vunpack.c.l.b16 %v6009
      %v6270 = vunpack.c.l.b16 %v6010
      %v6271 = vunpack.c.l.b16 %v6011
      %v6272 = vunpack.c.l.b16 %v6012
      %v6273 = vunpack.c.l.b16 %v6013
      %v6274 = vunpack.c.l.b16 %v6014
      %v6275 = vunpack.c.l.b16 %v6015
      %v6276 = vunpack.c.l.b16 %v6016
      %v6277 = vunpack.c.l.b16 %v6017
      %v6278 = vunpack.c.l.b16 %v6018
      %v6279 = vunpack.c.l.b16 %v6019
      %v6280 = vunpack.c.l.b16 %v6020
      %v6281 = vunpack.c.l.b16 %v6021
      %v6282 = vunpack.c.l.b16 %v6022
      %v6283 = vunpack.c.l.b16 %v6023
      %v6284 = vunpack.c.l.b16 %v6024
      %v6285 = vunpack.c.l.b16 %v6025
      %v6286 = vunpack.c.l.b16 %v6026
      %v6287 = vunpack.c.l.b16 %v6027
      %v6288 = vunpack.c.l.b16 %v6028
      %v6289 = vunpack.c.l.b16 %v6029
      %v6290 = vunpack.c.l.b16 %v6030
      %v6291 = vunpack.c.l.b16 %v6031
      %v6292 = vunpack.c.l.b16 %v6032
      %v6293 = vunpack.c.l.b16 %v6033
      %v6294 = vunpack.c.l.b16 %v6034
      %v6295 = vunpack.c.l.b16 %v6035
      %v6296 = vunpack.c.l.b16 %v6036
      %v6297 = vunpack.c.l.b16 %v6037
      %v6298 = vunpack.c.l.b16 %v6038
      %v6299 = vunpack.c.l.b16 %v6039
      %v6300 = vunpack.c.l.b16 %v6040
      %v6301 = vunpack.c.l.b16 %v6041
      %v6302 = vunpack.c.l.b16 %v6042
      %v6303 = vunpack.c.l.b16 %v6043
      %v6304 = vunpack.c.l.b16 %v6044
      %v6305 = vunpack.c.l.b16 %v6045
      %v6306 = vunpack.c.l.b16 %v6046
      %v6307 = vunpack.c.l.b16 %v6047
      %v6308 = vunpack.c.l.b16 %v6048
      %v6309 = vunpack.c.l.b16 %v6049
      %v6310 = vunpack.c.l.b16 %v6050
      %v6311 = vunpack.c.l.b16 %v6051
      %v6312 = vunpack.c.l.b16 %v6052
      %v6313 = vunpack.c.l.b16 %v6053
      %v6314 = vunpack.c.l.b16 %v6054
      %v6315 = vunpack.c.l.b16 %v6055
      %v6316 = vunpack.c.l.b16 %v6056
      %v6317 = vunpack.c.l.b16 %v6057
      %v6318 = vunpack.c.l.b16 %v6058
      %v6319 = vunpack.c.l.b16 %v6059
      %v6320 = vunpack.c.l.b16 %v6060
      %v6321 = vunpack.c.l.b16 %v6061
      %v6322 = vunpack.c.l.b16 %v6062
      %v6323 = vunpack.c.l.b16 %v6063
      %v6324 = vunpack.c.l.b16 %v6064
      %v6325 = vunpack.c.l.b16 %v6065
      %v6326 = vunpack.c.l.b16 %v6066
      %v6327 = vunpack.c.l.b16 %v6067
      %v6328 = vunpack.c.l.b16 %v6068
      %v6329 = vunpack.c.l.b16 %v6069
      %v6330 = vunpack.c.l.b16 %v6070
      %v6331 = vunpack.c.l.b16 %v6071
      %v6332 = vunpack.c.l.b16 %v6072
      %v6333 = vunpack.c.l.b16 %v6073
      %v6334 = vunpack.c.l.b16 %v6074
      %v6335 = vunpack.c.l.b16 %v6075
      %v6336 = vunpack.c.l.b16 %v6076
      %v6337 = vunpack.c.l.b16 %v6077
      %v6338 = vunpack.c.l.b16 %v6078
      %v6339 = vunpack.c.l.b16 %v6079
      %v6340 = vunpack.c.l.b16 %v6080
      %v6341 = vunpack.c.l.b16 %v6081
      %v6342 = vunpack.c.l.b16 %v6082
      %v6343 = vunpack.c.l.b16 %v6083
      %v6344 = vunpack.c.l.b16 %v6084
      %v6345 = vunpack.c.l.b16 %v6085
      %v6346 = vunpack.c.l.b16 %v6086
      %v6347 = vunpack.c.l.b16 %v6087
      %v6348 = vunpack.c.l.b16 %v6088
      %v6349 = vunpack.c.l.b16 %v6089
      %v6350 = vunpack.c.l.b16 %v6090
      %v6351 = vunpack.c.l.b16 %v6091
      %v6352 = vunpack.c.l.b16 %v6092
      %v6353 = vunpack.c.l.b16 %v6093
      %v6354 = vunpack.c.l.b16 %v6094
      %v6355 = vunpack.c.l.b16 %v6095
      %v6356 = vunpack.c.l.b16 %v6096
      %v6357 = vunpack.c.l.b16 %v6097
      %v6358 = vunpack.c.l.b16 %v6098
      %v6359 = vunpack.c.l.b16 %v6099
      %v6360 = vunpack.c.l.b16 %v6100
      %v6361 = vunpack.c.l.b16 %v6101
      %v6362 = vunpack.c.l.b16 %v6102
      %v6363 = vunpack.c.l.b16 %v6103
      %v6364 = vunpack.c.l.b16 %v6104
      %v6365 = vunpack.c.l.b16 %v6105
      %v6366 = vpack.c.b16 %v6239, %v6238
      %v6367 = vpack.c.b16 %v6241, %v6240
      %v6368 = vpack.c.b16 %v6243, %v6242
      %v6369 = vpack.c.b16 %v6245, %v6244
      %v6370 = vpack.c.b16 %v6247, %v6246
      %v6371 = vpack.c.b16 %v6249, %v6248
      %v6372 = vpack.c.b16 %v6251, %v6250
      %v6373 = vpack.c.b16 %v6253, %v6252
      %v6374 = vpack.c.b16 %v6255, %v6254
      %v6375 = vpack.c.b16 %v6257, %v6256
      %v6376 = vpack.c.b16 %v6259, %v6258
      %v6377 = vpack.c.b16 %v6261, %v6260
      %v6378 = vpack.c.b16 %v6263, %v6262
      %v6379 = vpack.c.b16 %v6265, %v6264
      %v6380 = vpack.c.b16 %v6267, %v6266
      %v6381 = vpack.c.b16 %v6269, %v6268
      %v6382 = vpack.c.b16 %v6271, %v6270
      %v6383 = vpack.c.b16 %v6273, %v6272
      %v6384 = vpack.c.b16 %v6275, %v6274
      %v6385 = vpack.c.b16 %v6277, %v6276
      %v6386 = vpack.c.b16 %v6279, %v6278
      %v6387 = vpack.c.b16 %v6281, %v6280
      %v6388 = vpack.c.b16 %v6283, %v6282
      %v6389 = vpack.c.b16 %v6285, %v6284
      %v6390 = vpack.c.b16 %v6287, %v6286
      %v6391 = vpack.c.b16 %v6289, %v6288
      %v6392 = vpack.c.b16 %v6291, %v6290
      %v6393 = vpack.c.b16 %v6293, %v6292
      %v6394 = vpack.c.b16 %v6295, %v6294
      %v6395 = vpack.c.b16 %v6297, %v6296
      %v6396 = vpack.c.b16 %v6299, %v6298
      %v6397 = vpack.c.b16 %v6301, %v6300
      %v6398 = vpack.c.b16 %v6303, %v6302
      %v6399 = vpack.c.b16 %v6305, %v6304
      %v6400 = vpack.c.b16 %v6307, %v6306
      %v6401 = vpack.c.b16 %v6309, %v6308
      %v6402 = vpack.c.b16 %v6311, %v6310
      %v6403 = vpack.c.b16 %v6313, %v6312
      %v6404 = vpack.c.b16 %v6315, %v6314
      %v6405 = vpack.c.b16 %v6317, %v6316
      %v6406 = vpack.c.b16 %v6319, %v6318
      %v6407 = vpack.c.b16 %v6321, %v6320
      %v6408 = vpack.c.b16 %v6323, %v6322
      %v6409 = vpack.c.b16 %v6325, %v6324
      %v6410 = vpack.c.b16 %v6327, %v6326
      %v6411 = vpack.c.b16 %v6329, %v6328
      %v6412 = vpack.c.b16 %v6331, %v6330
      %v6413 = vpack.c.b16 %v6333, %v6332
      %v6414 = vpack.c.b16 %v6335, %v6334
      %v6415 = vpack.c.b16 %v6337, %v6336
      %v6416 = vpack.c.b16 %v6339, %v6338
      %v6417 = vpack.c.b16 %v6341, %v6340
      %v6418 = vpack.c.b16 %v6343, %v6342
      %v6419 = vpack.c.b16 %v6345, %v6344
      %v6420 = vpack.c.b16 %v6347, %v6346
      %v6421 = vpack.c.b16 %v6349, %v6348
      %v6422 = vpack.c.b16 %v6351, %v6350
      %v6423 = vpack.c.b16 %v6353, %v6352
      %v6424 = vpack.c.b16 %v6355, %v6354
      %v6425 = vpack.c.b16 %v6357, %v6356
      %v6426 = vpack.c.b16 %v6359, %v6358
      %v6427 = vpack.c.b16 %v6361, %v6360
      %v6428 = vpack.c.b16 %v6363, %v6362
      %v6429 = vpack.c.b16 %v6365, %v6364
      %6494 = vmatpush.bf16.msra.mxu0 %v6373
      %6495 = vmatpush.bf16.msra.mxu0 %v6372
      %6496 = vmatpush.bf16.msra.mxu0 %v6371
      %6497 = vmatpush.bf16.msra.mxu0 %v6370
      %6498 = vmatpush.bf16.msra.mxu0 %v6369
      %6499 = vmatpush.bf16.msra.mxu0 %v6368
      %6500 = vmatpush.bf16.msra.mxu0 %v6367
      %6501 = vmatpush.bf16.msra.mxu0 %v6366
      %6502 = vmatmul.bf16.gmra.mxu0 %v5914
      %v6503 = vpop.f32.mrf.mxu0
      %v6504 = vadd.f32 %v6108, %v6503
      %v6505 = vpop.f32.mrf.mxu0
      %v6506 = vadd.f32 %v6108, %v6505
      %6507 = vmatmul.bf16.gmra.mxu0 %v5922
      %v6508 = vpop.f32.mrf.mxu0
      %v6509 = vadd.f32 %v6108, %v6508
      %v6510 = vpop.f32.mrf.mxu0
      %v6511 = vadd.f32 %v6108, %v6510
      %6512 = vmatmul.bf16.gmra.mxu0 %v5930
      %v6513 = vpop.f32.mrf.mxu0
      %v6514 = vadd.f32 %v6108, %v6513
      %v6515 = vpop.f32.mrf.mxu0
      %v6516 = vadd.f32 %v6108, %v6515
      %6517 = vmatmul.bf16.gmra.mxu0 %v5938
      %v6518 = vpop.f32.mrf.mxu0
      %v6519 = vadd.f32 %v6108, %v6518
      %v6520 = vpop.f32.mrf.mxu0
      %v6521 = vadd.f32 %v6108, %v6520
      %6522 = vmatmul.bf16.gmra.mxu0 %v5946
      %v6523 = vpop.f32.mrf.mxu0
      %v6524 = vadd.f32 %v6108, %v6523
      %v6525 = vpop.f32.mrf.mxu0
      %v6526 = vadd.f32 %v6108, %v6525
      %6527 = vmatmul.bf16.gmra.mxu0 %v5954
      %v6528 = vpop.f32.mrf.mxu0
      %v6529 = vadd.f32 %v6108, %v6528
      %v6530 = vpop.f32.mrf.mxu0
      %v6531 = vadd.f32 %v6108, %v6530
      %6532 = vmatmul.bf16.gmra.mxu0 %v5962
      %v6533 = vpop.f32.mrf.mxu0
      %v6534 = vadd.f32 %v6108, %v6533
      %v6535 = vpop.f32.mrf.mxu0
      %v6536 = vadd.f32 %v6108, %v6535
      %6537 = vmatmul.bf16.gmra.mxu0 %v5970
      %v6538 = vpop.f32.mrf.mxu0
      %v6539 = vadd.f32 %v6108, %v6538
      %v6540 = vpop.f32.mrf.mxu0
      %v6541 = vadd.f32 %v6108, %v6540
      %6542 = vdwg.mxu0
      %6543 = vmatpush.bf16.msra.mxu0 %v6381
      %6544 = vmatpush.bf16.msra.mxu0 %v6380
      %6545 = vmatpush.bf16.msra.mxu0 %v6379
      %6546 = vmatpush.bf16.msra.mxu0 %v6378
      %6547 = vmatpush.bf16.msra.mxu0 %v6377
      %6548 = vmatpush.bf16.msra.mxu0 %v6376
      %6549 = vmatpush.bf16.msra.mxu0 %v6375
      %6550 = vmatpush.bf16.msra.mxu0 %v6374
      %6551 = vmatmul.bf16.gmra.mxu0 %v5915
      %v6552 = vpop.f32.mrf.mxu0
      %v6553 = vadd.f32 %v6504, %v6552
      %v6554 = vpop.f32.mrf.mxu0
      %v6555 = vadd.f32 %v6506, %v6554
      %6556 = vmatmul.bf16.gmra.mxu0 %v5923
      %v6557 = vpop.f32.mrf.mxu0
      %v6558 = vadd.f32 %v6509, %v6557
      %v6559 = vpop.f32.mrf.mxu0
      %v6560 = vadd.f32 %v6511, %v6559
      %6561 = vmatmul.bf16.gmra.mxu0 %v5931
      %v6562 = vpop.f32.mrf.mxu0
      %v6563 = vadd.f32 %v6514, %v6562
      %v6564 = vpop.f32.mrf.mxu0
      %v6565 = vadd.f32 %v6516, %v6564
      %6566 = vmatmul.bf16.gmra.mxu0 %v5939
      %v6567 = vpop.f32.mrf.mxu0
      %v6568 = vadd.f32 %v6519, %v6567
      %v6569 = vpop.f32.mrf.mxu0
      %v6570 = vadd.f32 %v6521, %v6569
      %6571 = vmatmul.bf16.gmra.mxu0 %v5947
      %v6572 = vpop.f32.mrf.mxu0
      %v6573 = vadd.f32 %v6524, %v6572
      %v6574 = vpop.f32.mrf.mxu0
      %v6575 = vadd.f32 %v6526, %v6574
      %6576 = vmatmul.bf16.gmra.mxu0 %v5955
      %v6577 = vpop.f32.mrf.mxu0
      %v6578 = vadd.f32 %v6529, %v6577
      %v6579 = vpop.f32.mrf.mxu0
      %v6580 = vadd.f32 %v6531, %v6579
      %6581 = vmatmul.bf16.gmra.mxu0 %v5963
      %v6582 = vpop.f32.mrf.mxu0
      %v6583 = vadd.f32 %v6534, %v6582
      %v6584 = vpop.f32.mrf.mxu0
      %v6585 = vadd.f32 %v6536, %v6584
      %6586 = vmatmul.bf16.gmra.mxu0 %v5971
      %v6587 = vpop.f32.mrf.mxu0
      %v6588 = vadd.f32 %v6539, %v6587
      %v6589 = vpop.f32.mrf.mxu0
      %v6590 = vadd.f32 %v6541, %v6589
      %6591 = vdwg.mxu0
      %6592 = vmatpush.bf16.msra.mxu0 %v6389
      %6593 = vmatpush.bf16.msra.mxu0 %v6388
      %6594 = vmatpush.bf16.msra.mxu0 %v6387
      %6595 = vmatpush.bf16.msra.mxu0 %v6386
      %6596 = vmatpush.bf16.msra.mxu0 %v6385
      %6597 = vmatpush.bf16.msra.mxu0 %v6384
      %6598 = vmatpush.bf16.msra.mxu0 %v6383
      %6599 = vmatpush.bf16.msra.mxu0 %v6382
      %6600 = vmatmul.bf16.gmra.mxu0 %v5916
      %v6601 = vpop.f32.mrf.mxu0
      %v6602 = vadd.f32 %v6553, %v6601
      %v6603 = vpop.f32.mrf.mxu0
      %v6604 = vadd.f32 %v6555, %v6603
      %6605 = vmatmul.bf16.gmra.mxu0 %v5924
      %v6606 = vpop.f32.mrf.mxu0
      %v6607 = vadd.f32 %v6558, %v6606
      %v6608 = vpop.f32.mrf.mxu0
      %v6609 = vadd.f32 %v6560, %v6608
      %6610 = vmatmul.bf16.gmra.mxu0 %v5932
      %v6611 = vpop.f32.mrf.mxu0
      %v6612 = vadd.f32 %v6563, %v6611
      %v6613 = vpop.f32.mrf.mxu0
      %v6614 = vadd.f32 %v6565, %v6613
      %6615 = vmatmul.bf16.gmra.mxu0 %v5940
      %v6616 = vpop.f32.mrf.mxu0
      %v6617 = vadd.f32 %v6568, %v6616
      %v6618 = vpop.f32.mrf.mxu0
      %v6619 = vadd.f32 %v6570, %v6618
      %6620 = vmatmul.bf16.gmra.mxu0 %v5948
      %v6621 = vpop.f32.mrf.mxu0
      %v6622 = vadd.f32 %v6573, %v6621
      %v6623 = vpop.f32.mrf.mxu0
      %v6624 = vadd.f32 %v6575, %v6623
      %6625 = vmatmul.bf16.gmra.mxu0 %v5956
      %v6626 = vpop.f32.mrf.mxu0
      %v6627 = vadd.f32 %v6578, %v6626
      %v6628 = vpop.f32.mrf.mxu0
      %v6629 = vadd.f32 %v6580, %v6628
      %6630 = vmatmul.bf16.gmra.mxu0 %v5964
      %v6631 = vpop.f32.mrf.mxu0
      %v6632 = vadd.f32 %v6583, %v6631
      %v6633 = vpop.f32.mrf.mxu0
      %v6634 = vadd.f32 %v6585, %v6633
      %6635 = vmatmul.bf16.gmra.mxu0 %v5972
      %v6636 = vpop.f32.mrf.mxu0
      %v6637 = vadd.f32 %v6588, %v6636
      %v6638 = vpop.f32.mrf.mxu0
      %v6639 = vadd.f32 %v6590, %v6638
      %6640 = vdwg.mxu0
      %6641 = vmatpush.bf16.msra.mxu0 %v6397
      %6642 = vmatpush.bf16.msra.mxu0 %v6396
      %6643 = vmatpush.bf16.msra.mxu0 %v6395
      %6644 = vmatpush.bf16.msra.mxu0 %v6394
      %6645 = vmatpush.bf16.msra.mxu0 %v6393
      %6646 = vmatpush.bf16.msra.mxu0 %v6392
      %6647 = vmatpush.bf16.msra.mxu0 %v6391
      %6648 = vmatpush.bf16.msra.mxu0 %v6390
      %6649 = vmatmul.bf16.gmra.mxu0 %v5917
      %v6650 = vpop.f32.mrf.mxu0
      %v6651 = vadd.f32 %v6602, %v6650
      %v6652 = vpop.f32.mrf.mxu0
      %v6653 = vadd.f32 %v6604, %v6652
      %6654 = vmatmul.bf16.gmra.mxu0 %v5925
      %v6655 = vpop.f32.mrf.mxu0
      %v6656 = vadd.f32 %v6607, %v6655
      %v6657 = vpop.f32.mrf.mxu0
      %v6658 = vadd.f32 %v6609, %v6657
      %6659 = vmatmul.bf16.gmra.mxu0 %v5933
      %v6660 = vpop.f32.mrf.mxu0
      %v6661 = vadd.f32 %v6612, %v6660
      %v6662 = vpop.f32.mrf.mxu0
      %v6663 = vadd.f32 %v6614, %v6662
      %6664 = vmatmul.bf16.gmra.mxu0 %v5941
      %v6665 = vpop.f32.mrf.mxu0
      %v6666 = vadd.f32 %v6617, %v6665
      %v6667 = vpop.f32.mrf.mxu0
      %v6668 = vadd.f32 %v6619, %v6667
      %6669 = vmatmul.bf16.gmra.mxu0 %v5949
      %v6670 = vpop.f32.mrf.mxu0
      %v6671 = vadd.f32 %v6622, %v6670
      %v6672 = vpop.f32.mrf.mxu0
      %v6673 = vadd.f32 %v6624, %v6672
      %6674 = vmatmul.bf16.gmra.mxu0 %v5957
      %v6675 = vpop.f32.mrf.mxu0
      %v6676 = vadd.f32 %v6627, %v6675
      %v6677 = vpop.f32.mrf.mxu0
      %v6678 = vadd.f32 %v6629, %v6677
      %6679 = vmatmul.bf16.gmra.mxu0 %v5965
      %v6680 = vpop.f32.mrf.mxu0
      %v6681 = vadd.f32 %v6632, %v6680
      %v6682 = vpop.f32.mrf.mxu0
      %v6683 = vadd.f32 %v6634, %v6682
      %6684 = vmatmul.bf16.gmra.mxu0 %v5973
      %v6685 = vpop.f32.mrf.mxu0
      %v6686 = vadd.f32 %v6637, %v6685
      %v6687 = vpop.f32.mrf.mxu0
      %v6688 = vadd.f32 %v6639, %v6687
      %6689 = vdwg.mxu0
      %6690 = vmatpush.bf16.msra.mxu0 %v6405
      %6691 = vmatpush.bf16.msra.mxu0 %v6404
      %6692 = vmatpush.bf16.msra.mxu0 %v6403
      %6693 = vmatpush.bf16.msra.mxu0 %v6402
      %6694 = vmatpush.bf16.msra.mxu0 %v6401
      %6695 = vmatpush.bf16.msra.mxu0 %v6400
      %6696 = vmatpush.bf16.msra.mxu0 %v6399
      %6697 = vmatpush.bf16.msra.mxu0 %v6398
      %6698 = vmatmul.bf16.gmra.mxu0 %v5918
      %v6699 = vpop.f32.mrf.mxu0
      %v6700 = vadd.f32 %v6651, %v6699
      %v6701 = vpop.f32.mrf.mxu0
      %v6702 = vadd.f32 %v6653, %v6701
      %6703 = vmatmul.bf16.gmra.mxu0 %v5926
      %v6704 = vpop.f32.mrf.mxu0
      %v6705 = vadd.f32 %v6656, %v6704
      %v6706 = vpop.f32.mrf.mxu0
      %v6707 = vadd.f32 %v6658, %v6706
      %6708 = vmatmul.bf16.gmra.mxu0 %v5934
      %v6709 = vpop.f32.mrf.mxu0
      %v6710 = vadd.f32 %v6661, %v6709
      %v6711 = vpop.f32.mrf.mxu0
      %v6712 = vadd.f32 %v6663, %v6711
      %6713 = vmatmul.bf16.gmra.mxu0 %v5942
      %v6714 = vpop.f32.mrf.mxu0
      %v6715 = vadd.f32 %v6666, %v6714
      %v6716 = vpop.f32.mrf.mxu0
      %v6717 = vadd.f32 %v6668, %v6716
      %6718 = vmatmul.bf16.gmra.mxu0 %v5950
      %v6719 = vpop.f32.mrf.mxu0
      %v6720 = vadd.f32 %v6671, %v6719
      %v6721 = vpop.f32.mrf.mxu0
      %v6722 = vadd.f32 %v6673, %v6721
      %6723 = vmatmul.bf16.gmra.mxu0 %v5958
      %v6724 = vpop.f32.mrf.mxu0
      %v6725 = vadd.f32 %v6676, %v6724
      %v6726 = vpop.f32.mrf.mxu0
      %v6727 = vadd.f32 %v6678, %v6726
      %6728 = vmatmul.bf16.gmra.mxu0 %v5966
      %v6729 = vpop.f32.mrf.mxu0
      %v6730 = vadd.f32 %v6681, %v6729
      %v6731 = vpop.f32.mrf.mxu0
      %v6732 = vadd.f32 %v6683, %v6731
      %6733 = vmatmul.bf16.gmra.mxu0 %v5974
      %v6734 = vpop.f32.mrf.mxu0
      %v6735 = vadd.f32 %v6686, %v6734
      %v6736 = vpop.f32.mrf.mxu0
      %v6737 = vadd.f32 %v6688, %v6736
      %6738 = vdwg.mxu0
      %6739 = vmatpush.bf16.msra.mxu0 %v6413
      %6740 = vmatpush.bf16.msra.mxu0 %v6412
      %6741 = vmatpush.bf16.msra.mxu0 %v6411
      %6742 = vmatpush.bf16.msra.mxu0 %v6410
      %6743 = vmatpush.bf16.msra.mxu0 %v6409
      %6744 = vmatpush.bf16.msra.mxu0 %v6408
      %6745 = vmatpush.bf16.msra.mxu0 %v6407
      %6746 = vmatpush.bf16.msra.mxu0 %v6406
      %6747 = vmatmul.bf16.gmra.mxu0 %v5919
      %v6748 = vpop.f32.mrf.mxu0
      %v6749 = vadd.f32 %v6700, %v6748
      %v6750 = vpop.f32.mrf.mxu0
      %v6751 = vadd.f32 %v6702, %v6750
      %6752 = vmatmul.bf16.gmra.mxu0 %v5927
      %v6753 = vpop.f32.mrf.mxu0
      %v6754 = vadd.f32 %v6705, %v6753
      %v6755 = vpop.f32.mrf.mxu0
      %v6756 = vadd.f32 %v6707, %v6755
      %6757 = vmatmul.bf16.gmra.mxu0 %v5935
      %v6758 = vpop.f32.mrf.mxu0
      %v6759 = vadd.f32 %v6710, %v6758
      %v6760 = vpop.f32.mrf.mxu0
      %v6761 = vadd.f32 %v6712, %v6760
      %6762 = vmatmul.bf16.gmra.mxu0 %v5943
      %v6763 = vpop.f32.mrf.mxu0
      %v6764 = vadd.f32 %v6715, %v6763
      %v6765 = vpop.f32.mrf.mxu0
      %v6766 = vadd.f32 %v6717, %v6765
      %6767 = vmatmul.bf16.gmra.mxu0 %v5951
      %v6768 = vpop.f32.mrf.mxu0
      %v6769 = vadd.f32 %v6720, %v6768
      %v6770 = vpop.f32.mrf.mxu0
      %v6771 = vadd.f32 %v6722, %v6770
      %6772 = vmatmul.bf16.gmra.mxu0 %v5959
      %v6773 = vpop.f32.mrf.mxu0
      %v6774 = vadd.f32 %v6725, %v6773
      %v6775 = vpop.f32.mrf.mxu0
      %v6776 = vadd.f32 %v6727, %v6775
      %6777 = vmatmul.bf16.gmra.mxu0 %v5967
      %v6778 = vpop.f32.mrf.mxu0
      %v6779 = vadd.f32 %v6730, %v6778
      %v6780 = vpop.f32.mrf.mxu0
      %v6781 = vadd.f32 %v6732, %v6780
      %6782 = vmatmul.bf16.gmra.mxu0 %v5975
      %v6783 = vpop.f32.mrf.mxu0
      %v6784 = vadd.f32 %v6735, %v6783
      %v6785 = vpop.f32.mrf.mxu0
      %v6786 = vadd.f32 %v6737, %v6785
      %6787 = vdwg.mxu0
      %6788 = vmatpush.bf16.msra.mxu0 %v6421
      %6789 = vmatpush.bf16.msra.mxu0 %v6420
      %6790 = vmatpush.bf16.msra.mxu0 %v6419
      %6791 = vmatpush.bf16.msra.mxu0 %v6418
      %6792 = vmatpush.bf16.msra.mxu0 %v6417
      %6793 = vmatpush.bf16.msra.mxu0 %v6416
      %6794 = vmatpush.bf16.msra.mxu0 %v6415
      %6795 = vmatpush.bf16.msra.mxu0 %v6414
      %6796 = vmatmul.bf16.gmra.mxu0 %v5920
      %v6797 = vpop.f32.mrf.mxu0
      %v6798 = vadd.f32 %v6749, %v6797
      %v6799 = vpop.f32.mrf.mxu0
      %v6800 = vadd.f32 %v6751, %v6799
      %6801 = vmatmul.bf16.gmra.mxu0 %v5928
      %v6802 = vpop.f32.mrf.mxu0
      %v6803 = vadd.f32 %v6754, %v6802
      %v6804 = vpop.f32.mrf.mxu0
      %v6805 = vadd.f32 %v6756, %v6804
      %6806 = vmatmul.bf16.gmra.mxu0 %v5936
      %v6807 = vpop.f32.mrf.mxu0
      %v6808 = vadd.f32 %v6759, %v6807
      %v6809 = vpop.f32.mrf.mxu0
      %v6810 = vadd.f32 %v6761, %v6809
      %6811 = vmatmul.bf16.gmra.mxu0 %v5944
      %v6812 = vpop.f32.mrf.mxu0
      %v6813 = vadd.f32 %v6764, %v6812
      %v6814 = vpop.f32.mrf.mxu0
      %v6815 = vadd.f32 %v6766, %v6814
      %6816 = vmatmul.bf16.gmra.mxu0 %v5952
      %v6817 = vpop.f32.mrf.mxu0
      %v6818 = vadd.f32 %v6769, %v6817
      %v6819 = vpop.f32.mrf.mxu0
      %v6820 = vadd.f32 %v6771, %v6819
      %6821 = vmatmul.bf16.gmra.mxu0 %v5960
      %v6822 = vpop.f32.mrf.mxu0
      %v6823 = vadd.f32 %v6774, %v6822
      %v6824 = vpop.f32.mrf.mxu0
      %v6825 = vadd.f32 %v6776, %v6824
      %6826 = vmatmul.bf16.gmra.mxu0 %v5968
      %v6827 = vpop.f32.mrf.mxu0
      %v6828 = vadd.f32 %v6779, %v6827
      %v6829 = vpop.f32.mrf.mxu0
      %v6830 = vadd.f32 %v6781, %v6829
      %6831 = vmatmul.bf16.gmra.mxu0 %v5976
      %v6832 = vpop.f32.mrf.mxu0
      %v6833 = vadd.f32 %v6784, %v6832
      %v6834 = vpop.f32.mrf.mxu0
      %v6835 = vadd.f32 %v6786, %v6834
      %6836 = vdwg.mxu0
      %6837 = vmatpush.bf16.msra.mxu0 %v6429
      %6838 = vmatpush.bf16.msra.mxu0 %v6428
      %6839 = vmatpush.bf16.msra.mxu0 %v6427
      %6840 = vmatpush.bf16.msra.mxu0 %v6426
      %6841 = vmatpush.bf16.msra.mxu0 %v6425
      %6842 = vmatpush.bf16.msra.mxu0 %v6424
      %6843 = vmatpush.bf16.msra.mxu0 %v6423
      %6844 = vmatpush.bf16.msra.mxu0 %v6422
      %6845 = vmatmul.bf16.gmra.mxu0 %v5921
      %v6846 = vpop.f32.mrf.mxu0
      %v6847 = vadd.f32 %v6798, %v6846
      %v6848 = vpop.f32.mrf.mxu0
      %v6849 = vadd.f32 %v6800, %v6848
      %6850 = vmatmul.bf16.gmra.mxu0 %v5929
      %v6851 = vpop.f32.mrf.mxu0
      %v6852 = vadd.f32 %v6803, %v6851
      %v6853 = vpop.f32.mrf.mxu0
      %v6854 = vadd.f32 %v6805, %v6853
      %6855 = vmatmul.bf16.gmra.mxu0 %v5937
      %v6856 = vpop.f32.mrf.mxu0
      %v6857 = vadd.f32 %v6808, %v6856
      %v6858 = vpop.f32.mrf.mxu0
      %v6859 = vadd.f32 %v6810, %v6858
      %6860 = vmatmul.bf16.gmra.mxu0 %v5945
      %v6861 = vpop.f32.mrf.mxu0
      %v6862 = vadd.f32 %v6813, %v6861
      %v6863 = vpop.f32.mrf.mxu0
      %v6864 = vadd.f32 %v6815, %v6863
      %6865 = vmatmul.bf16.gmra.mxu0 %v5953
      %v6866 = vpop.f32.mrf.mxu0
      %v6867 = vadd.f32 %v6818, %v6866
      %v6868 = vpop.f32.mrf.mxu0
      %v6869 = vadd.f32 %v6820, %v6868
      %6870 = vmatmul.bf16.gmra.mxu0 %v5961
      %v6871 = vpop.f32.mrf.mxu0
      %v6872 = vadd.f32 %v6823, %v6871
      %v6873 = vpop.f32.mrf.mxu0
      %v6874 = vadd.f32 %v6825, %v6873
      %6875 = vmatmul.bf16.gmra.mxu0 %v5969
      %v6876 = vpop.f32.mrf.mxu0
      %v6877 = vadd.f32 %v6828, %v6876
      %v6878 = vpop.f32.mrf.mxu0
      %v6879 = vadd.f32 %v6830, %v6878
      %6880 = vmatmul.bf16.gmra.mxu0 %v5977
      %v6881 = vpop.f32.mrf.mxu0
      %v6882 = vadd.f32 %v6833, %v6881
      %v6883 = vpop.f32.mrf.mxu0
      %v6884 = vadd.f32 %v6835, %v6883
      %6885 = vdwg.mxu0
      %6886 = vst [vmem:[%s294] sm:$0xff] %v6847
      %6887 = vst [vmem:[%s294 + $0x8] sm:$0xff] %v6849
      %6888 = vst [vmem:[%s294 + $0x10] sm:$0xff] %v6852
      %6889 = vst [vmem:[%s294 + $0x18] sm:$0xff] %v6854
      %6890 = vst [vmem:[%s294 + $0x20] sm:$0xff] %v6857
      %6891 = vst [vmem:[%s294 + $0x28] sm:$0xff] %v6859
      %6892 = vst [vmem:[%s294 + $0x30] sm:$0xff] %v6862
      %6893 = vst [vmem:[%s294 + $0x38] sm:$0xff] %v6864
      %6894 = vst [vmem:[%s294 + $0x40] sm:$0xff] %v6867
      %6895 = vst [vmem:[%s294 + $0x48] sm:$0xff] %v6869
      %6896 = vst [vmem:[%s294 + $0x50] sm:$0xff] %v6872
      %6897 = vst [vmem:[%s294 + $0x58] sm:$0xff] %v6874
      %6898 = vst [vmem:[%s294 + $0x60] sm:$0xff] %v6877
      %6899 = vst [vmem:[%s294 + $0x68] sm:$0xff] %v6879
      %6900 = vst [vmem:[%s294 + $0x70] sm:$0xff] %v6882
      %6901 = vst [vmem:[%s294 + $0x78] sm:$0xff] %v6884
      %s6902 = smul.u32 %s19, 128
      %v6903 = vlaneseq
      %v6904 = vshrl.u32 %v6903, 7
      %v6905 = vadd.s32 %v6904, 8
      %v6906 = vadd.s32 %v6904, 16
      %v6907 = vadd.s32 %v6904, 24
      %v6908 = vadd.s32 %v6904, 32
      %v6909 = vadd.s32 %v6904, 40
      %v6910 = vadd.s32 %v6904, 48
      %v6911 = vadd.s32 %v6904, 56
      %v6912 = vadd.s32 %v6904, 64
      %v6913 = vadd.s32 %v6904, 72
      %v6914 = vadd.s32 %v6904, 80
      %v6915 = vadd.s32 %v6904, 88
      %v6916 = vadd.s32 %v6904, 96
      %v6917 = vadd.s32 %v6904, 104
      %v6918 = vadd.s32 %v6904, 112
      %v6919 = vadd.s32 %v6904, 120
      %v6920 = vstv %s6902
      %v6921 = vadd.s32 %v6920, %v6904
      %v6922 = vadd.s32 %v6920, %v6905
      %v6923 = vadd.s32 %v6920, %v6906
      %v6924 = vadd.s32 %v6920, %v6907
      %v6925 = vadd.s32 %v6920, %v6908
      %v6926 = vadd.s32 %v6920, %v6909
      %v6927 = vadd.s32 %v6920, %v6910
      %v6928 = vadd.s32 %v6920, %v6911
      %v6929 = vadd.s32 %v6920, %v6912
      %v6930 = vadd.s32 %v6920, %v6913
      %v6931 = vadd.s32 %v6920, %v6914
      %v6932 = vadd.s32 %v6920, %v6915
      %v6933 = vadd.s32 %v6920, %v6916
      %v6934 = vadd.s32 %v6920, %v6917
      %v6935 = vadd.s32 %v6920, %v6918
      %v6936 = vadd.s32 %v6920, %v6919
      %vm6937 = vcmp.lt.s32.totalorder %v6921, 200
      %vm6938 = vcmp.lt.s32.totalorder %v6922, 200
      %vm6939 = vcmp.lt.s32.totalorder %v6923, 200
      %vm6940 = vcmp.lt.s32.totalorder %v6924, 200
      %vm6941 = vcmp.lt.s32.totalorder %v6925, 200
      %vm6942 = vcmp.lt.s32.totalorder %v6926, 200
      %vm6943 = vcmp.lt.s32.totalorder %v6927, 200
      %vm6944 = vcmp.lt.s32.totalorder %v6928, 200
      %vm6945 = vcmp.lt.s32.totalorder %v6929, 200
      %vm6946 = vcmp.lt.s32.totalorder %v6930, 200
      %vm6947 = vcmp.lt.s32.totalorder %v6931, 200
      %vm6948 = vcmp.lt.s32.totalorder %v6932, 200
      %vm6949 = vcmp.lt.s32.totalorder %v6933, 200
      %vm6950 = vcmp.lt.s32.totalorder %v6934, 200
      %vm6951 = vcmp.lt.s32.totalorder %v6935, 200
      %vm6952 = vcmp.lt.s32.totalorder %v6936, 200
      %v6953 = vsel %vm6937, %v6847, -inf
      %v6954 = vsel %vm6938, %v6849, -inf
      %v6955 = vsel %vm6939, %v6852, -inf
      %v6956 = vsel %vm6940, %v6854, -inf
      %v6957 = vsel %vm6941, %v6857, -inf
      %v6958 = vsel %vm6942, %v6859, -inf
      %v6959 = vsel %vm6943, %v6862, -inf
      %v6960 = vsel %vm6944, %v6864, -inf
      %v6961 = vsel %vm6945, %v6867, -inf
      %v6962 = vsel %vm6946, %v6869, -inf
      %v6963 = vsel %vm6947, %v6872, -inf
      %v6964 = vsel %vm6948, %v6874, -inf
      %v6965 = vsel %vm6949, %v6877, -inf
      %v6966 = vsel %vm6950, %v6879, -inf
      %v6967 = vsel %vm6951, %v6882, -inf
      %v6968 = vsel %vm6952, %v6884, -inf
      %v6969 = vmax.f32 %v6953, %v6957
      %v6970 = vmax.f32 %v6954, %v6958
      %v6971 = vmax.f32 %v6955, %v6959
      %v6972 = vmax.f32 %v6956, %v6960
      %v6973 = vmax.f32 %v6969, %v6961
      %v6974 = vmax.f32 %v6970, %v6962
      %v6975 = vmax.f32 %v6971, %v6963
      %v6976 = vmax.f32 %v6972, %v6964
      %v6977 = vmax.f32 %v6973, %v6965
      %v6978 = vmax.f32 %v6974, %v6966
      %v6979 = vmax.f32 %v6975, %v6967
      %v6980 = vmax.f32 %v6976, %v6968
      %v6981 = vmax.f32 %v6977, %v6978
      %v6982 = vmax.f32 %v6979, %v6980
      %v6983 = vmax.f32 %v6981, %v6982
      %v6984 = vrot.slane %v6983, 4
      %v6985 = vmax.f32 %v6983, %v6984
      %v6986 = vrot.slane %v6985, 2
      %v6987 = vmax.f32 %v6985, %v6986
      %v6988 = vrot.slane %v6987, 1
      %v6989 = vmax.f32 %v6987, %v6988
      %6990 = vst [vmem:[%s298] sm:$0x1] %v6989
      %v6991 = vsub.f32 %v6953, %v6989
      %v6992 = vsub.f32 %v6954, %v6989
      %v6993 = vsub.f32 %v6955, %v6989
      %v6994 = vsub.f32 %v6956, %v6989
      %v6995 = vsub.f32 %v6957, %v6989
      %v6996 = vsub.f32 %v6958, %v6989
      %v6997 = vsub.f32 %v6959, %v6989
      %v6998 = vsub.f32 %v6960, %v6989
      %v6999 = vsub.f32 %v6961, %v6989
      %v7000 = vsub.f32 %v6962, %v6989
      %v7001 = vsub.f32 %v6963, %v6989
      %v7002 = vsub.f32 %v6964, %v6989
      %v7003 = vsub.f32 %v6965, %v6989
      %v7004 = vsub.f32 %v6966, %v6989
      %v7005 = vsub.f32 %v6967, %v6989
      %v7006 = vsub.f32 %v6968, %v6989
      %v7007 = vmul.f32 %v6991, 1.442695
      %v7008 = vpow.pop %v7007
      %v7009 = vmul.f32 %v6992, 1.442695
      %v7010 = vpow.pop %v7009
      %v7011 = vmul.f32 %v6993, 1.442695
      %v7012 = vpow.pop %v7011
      %v7013 = vmul.f32 %v6994, 1.442695
      %v7014 = vpow.pop %v7013
      %v7015 = vmul.f32 %v6995, 1.442695
      %v7016 = vpow.pop %v7015
      %v7017 = vmul.f32 %v6996, 1.442695
      %v7018 = vpow.pop %v7017
      %v7019 = vmul.f32 %v6997, 1.442695
      %v7020 = vpow.pop %v7019
      %v7021 = vmul.f32 %v6998, 1.442695
      %v7022 = vpow.pop %v7021
      %v7023 = vmul.f32 %v6999, 1.442695
      %v7024 = vpow.pop %v7023
      %v7025 = vmul.f32 %v7000, 1.442695
      %v7026 = vpow.pop %v7025
      %v7027 = vmul.f32 %v7001, 1.442695
      %v7028 = vpow.pop %v7027
      %v7029 = vmul.f32 %v7002, 1.442695
      %v7030 = vpow.pop %v7029
      %v7031 = vmul.f32 %v7003, 1.442695
      %v7032 = vpow.pop %v7031
      %v7033 = vmul.f32 %v7004, 1.442695
      %v7034 = vpow.pop %v7033
      %v7035 = vmul.f32 %v7005, 1.442695
      %v7036 = vpow.pop %v7035
      %v7037 = vmul.f32 %v7006, 1.442695
      %v7038 = vpow.pop %v7037
      %v7039 = vadd.f32 %v7008, %v7010
      %v7040 = vadd.f32 %v7039, %v7012
      %v7041 = vadd.f32 %v7040, %v7014
      %v7042 = vadd.f32 %v7041, %v7016
      %v7043 = vadd.f32 %v7042, %v7018
      %v7044 = vadd.f32 %v7043, %v7020
      %v7045 = vadd.f32 %v7044, %v7022
      %v7046 = vadd.f32 %v7045, %v7024
      %v7047 = vadd.f32 %v7046, %v7026
      %v7048 = vadd.f32 %v7047, %v7028
      %v7049 = vadd.f32 %v7048, %v7030
      %v7050 = vadd.f32 %v7049, %v7032
      %v7051 = vadd.f32 %v7050, %v7034
      %v7052 = vadd.f32 %v7051, %v7036
      %v7053 = vadd.f32 %v7052, %v7038
      %v7054 = vrot.slane %v7053, 4
      %v7055 = vadd.f32 %v7053, %v7054
      %v7056 = vrot.slane %v7055, 2
      %v7057 = vadd.f32 %v7055, %v7056
      %v7058 = vrot.slane %v7057, 1
      %v7059 = vadd.f32 %v7057, %v7058
      %7060 = vst [vmem:[%s301] sm:$0x1] %v7059
      %s7061 = smul.u32 16, %s19
      %p7062 = scmp.lt.s32.totalorder %s7061, 31
      %s7063 = scalar_select %p7062, %s7061, 31
      %s7064 = smul.addr %s7063, 8
      %s7065 = scalar_lea.vmem %s5, %s7064
      %p7066 = scmp.lt.s32.totalorder %s19, 1
      %s7067 = scalar_select %p7066, %s19, 1
      %s7068 = scalar_lea.vmem %s6, %s7067
      %p7069 = scmp.lt.s32.totalorder %s19, 1
      %s7070 = scalar_select %p7069, %s19, 1
      %s7071 = scalar_lea.vmem %s7, %s7070
      // Predicated region
      $region41: #{net1seq_forward.2} parent=39 // pred_check
        %p7072 = pneg %p147
      $region42: #{net1seq_forward.2} parent=39 // pred_check_branch
        %7074 = sbr.rel (%p7072) target = $region44
      $region43: #{net1seq_forward.2} parent=39 // pred_region
        %s7075 = smul.u32 16, %s19
      $region44: #{net1seq_forward.2} parent=39 // pred_fallthru
        _
      // Predicated region
      $region45: #{net1seq_forward.2} parent=39 // pred_check
        %p7076 = pneg %p173
      $region46: #{net1seq_forward.2} parent=39 // pred_check_branch
        %7078 = sbr.rel (%p7076) target = $region48
      $region47: #{net1seq_forward.2} parent=39 // pred_region
        _
      $region48: #{net1seq_forward.2} parent=39 // pred_fallthru
        _
      // Predicated region
      $region49: #{net1seq_forward.2} parent=39 // pred_check
        %p7079 = pneg %p199
      $region50: #{net1seq_forward.2} parent=39 // pred_check_branch
        %7081 = sbr.rel (%p7079) target = $region52
      $region51: #{net1seq_forward.2} parent=39 // pred_region
        _
      $region52: #{net1seq_forward.2} parent=39 // pred_fallthru
        _
    $region40: #{net1seq_forward.2} parent=5 // pred_fallthru
      _
    %p7082 = scmp.le.s32.totalorder 2, %s14
    // Predicated region
    $region53: #{net1seq_forward.2} parent=5 // pred_check
      %p7083 = pneg %p7082
    $region54: #{net1seq_forward.2} parent=5 // pred_check_branch
      %7085 = sbr.rel (%p7083) target = $region56
    $region55: #{net1seq_forward.2} parent=5 // pred_region
      %s7086 = ssub.s32 %s14, 2
      // Predicated region
      $region57: #{net1seq_forward.2} parent=55 // pred_check
        %p7087 = pneg %p153
      $region58: #{net1seq_forward.2} parent=55 // pred_check_branch
        %7089 = sbr.rel (%p7087) target = $region60
      $region59: #{net1seq_forward.2} parent=55 // pred_region
        %s7090 = smul.u32 16, %s20
        %p7091 = scmp.lt.s32.totalorder %s7090, 31
        %s7092 = scalar_select %p7091, %s7090, 31
        %s7093 = smul.addr %s7092, 8
        %s7094 = scalar_lea.vmem %s5, %s7093
      $region60: #{net1seq_forward.2} parent=55 // pred_fallthru
        _
      // Predicated region
      $region61: #{net1seq_forward.2} parent=55 // pred_check
        %p7095 = pneg %p179
      $region62: #{net1seq_forward.2} parent=55 // pred_check_branch
        %7097 = sbr.rel (%p7095) target = $region64
      $region63: #{net1seq_forward.2} parent=55 // pred_region
        %p7098 = scmp.lt.s32.totalorder %s20, 1
        %s7099 = scalar_select %p7098, %s20, 1
        %s7100 = scalar_lea.vmem %s6, %s7099
      $region64: #{net1seq_forward.2} parent=55 // pred_fallthru
        _
      // Predicated region
      $region65: #{net1seq_forward.2} parent=55 // pred_check
        %p7101 = pneg %p205
      $region66: #{net1seq_forward.2} parent=55 // pred_check_branch
        %7103 = sbr.rel (%p7101) target = $region68
      $region67: #{net1seq_forward.2} parent=55 // pred_region
        %p7104 = scmp.lt.s32.totalorder %s20, 1
        %s7105 = scalar_select %p7104, %s20, 1
        %s7106 = scalar_lea.vmem %s7, %s7105
      $region68: #{net1seq_forward.2} parent=55 // pred_fallthru
        _
    $region56: #{net1seq_forward.2} parent=5 // pred_fallthru
      _
  $region6: #{net1seq_forward.2} parent=0 // loop_footer
    %s18 = sadd.s32 1, %s14
  $region7: #{net1seq_forward.2} parent=0 // loop_footer_branch
    %13 = sbr.rel target = $region3
  $region8: #{net1seq_forward.2} parent=0 // loop_exit
    _

</llo_original>
